<compile_context>
chip_gen: v6e
topology: v6e:2x2x1
jax: 0.10.0
libtpu: 0.0.40
codegen_flags: <defaults>
</compile_context>

<pallas_src>
import jax
import jax.numpy as jnp
from jax.experimental import pallas as pl
from jax.experimental.pallas import tpu as pltpu

# ---- scaled-down synthetic dimensions ---------------------------------------
# real model: resnet18 feat=512, mano base [512, 1024, 256], icosphere div=3.
B = 2
C, H, W = 3, 16, 16
IN_DIM = C * H * W            # 768
ENC_HID = 256
FEAT = 128                    # img_feature_size (512 for resnet18), scaled down
MANO_H1, MANO_H2 = 256, 128   # mano_base_neurons, scaled down
NCOMPS = 30
POSE_DIM = NCOMPS + 3         # 30 PCA comps + 3 global rotation
SHAPE_DIM = 10
N_VERTS = 778                 # MANO mesh vertex count
N_JOINTS = 21                 # MANO joints (center_idx = 0)
N_PTS = 642                   # icosphere with 3 subdivisions has 642 vertices
P_PAD = 648                   # 642 padded to a multiple of 8 sublanes
DEC_H1, DEC_H2 = 128, 64
OUT_FACTOR = 100.0

HEAD_DIM = POSE_DIM + SHAPE_DIM            # 43  (pose | shape)
TS_DIM = 4                                 # trans(3) | scale(1)
VJ_DIM = (N_VERTS + N_JOINTS) * 3          # 2397 (verts | joints)
VJ_PAD = 2432                              # 2397 -> multiple of 128
HEADS_PAD = 128                            # 43 -> 128
TS_PAD = 128                               # 4 -> 128
FUSED_DIM = VJ_PAD + HEADS_PAD + TS_PAD    # 2688: [vj | pose|shape | trans|scale]
SMALL_PAD = FUSED_DIM                      # lane-dense small-output width

# packed 128-row weight buffer column layout (all segment starts 128-aligned)
W128_M1D1 = 0                              # 384: [Wm1(256) | Wd1f(128)]
W128_FUSED = MANO_H1 + DEC_H1              # 384: [Wvj_comp(2432)|heads(128)|ts(128)]
W128_D2 = W128_FUSED + FUSED_DIM           # 3072: Wd2 padded to 128 cols
W128_D3 = W128_D2 + 128                    # 3200: Wd3 padded to 128 rows x 128 cols
W128_COLS = W128_D3 + 128                  # 3328

# packed bias buffer layout (all segments 128-aligned, f32)
BOFF_ENC1 = 0                              # 512: [be1 | ba1]
BOFF_ENC2 = BOFF_ENC1 + 2 * ENC_HID        # 512..768: [be2 | ba2]
BOFF_M1D1 = BOFF_ENC2 + 2 * FEAT           # 768..1152: [bm1 | bd1]
BOFF_M2 = BOFF_M1D1 + MANO_H1 + DEC_H1     # 1152..1280: bm2
BOFF_FUSED = BOFF_M2 + MANO_H2             # 1280..3968: [bvj_comp | bheads | bts]
BOFF_D2 = BOFF_FUSED + FUSED_DIM           # 3968..4096: bd2
BOFF_D3 = BOFF_D2 + 128                    # 4096..4224: bd3
B_TOTAL = BOFF_D3 + 128                    # 4224


# ---- the fused kernel --------------------------------------------------------
def obman_kernel(img_ref, pts_ref, w768_ref, w512_ref, w256_ref, w128_ref,
                 b_ref, small_ref, obj_ref):
    f32 = jnp.float32

    def bias(off, ln):
        return b_ref[:, off:off + ln]                       # (1, ln) f32

    def mm(x, w):
        # activations cast to bf16 right at the MXU, accumulate in f32
        return jnp.dot(x.astype(jnp.bfloat16), w, preferred_element_type=f32)

    x = img_ref[...]                                        # (B, IN_DIM) f32

    # --- base_net / atlas_base_net (fused: same image input) ------------------
    # TODO(synk): pretrained ResNet18 backbone replaced by a deterministic
    # 2-layer MLP encoder (same output feature size role).
    h1e = jnp.maximum(mm(x, w768_ref[...]) + bias(BOFF_ENC1, 2 * ENC_HID), 0.0)
    # layer 2 as blockdiag(We2, Wa2): one matmul -> [feat | afeat]
    fa = jnp.maximum(mm(h1e, w512_ref[...]) + bias(BOFF_ENC2, 2 * FEAT), 0.0)
    feat = fa[:, :FEAT]                                      # (B, 128)
    afeat = fa[:, FEAT:]                                     # (B, 128)

    # --- ManoBranch base layer1 + Atlas feat-projection (fused, same input) ---
    y = mm(feat, w128_ref[:, W128_M1D1:W128_M1D1 + MANO_H1 + DEC_H1]) \
        + bias(BOFF_M1D1, MANO_H1 + DEC_H1)                  # (B, 384)
    hm1 = jnp.maximum(y[:, :MANO_H1], 0.0)
    feat_term = y[:, MANO_H1:]                               # (B, 128)

    hm = jnp.maximum(mm(hm1, w256_ref[...]) + bias(BOFF_M2, MANO_H2), 0.0)

    # --- ONE fused matmul for verts|joints, pose|shape (rows 0:B from hm)
    #     and trans|scale (rows B:2B from afeat). Unused cross terms are never
    #     read. Wvj_comp = Wheads @ Wvj precomposed on host (MANO substitute).
    # TODO(synk): the real MANO layer (LBS from misc/mano pkl) is replaced by a
    # deterministic linear map [pose|shape] -> [verts|joints].
    stacked = jnp.concatenate([hm, afeat], axis=0)           # (2B, 128)
    fused = mm(stacked, w128_ref[:, W128_FUSED:W128_FUSED + FUSED_DIM]) \
        + bias(BOFF_FUSED, FUSED_DIM)                        # (2B, 2688)

    # 128-aligned direct stores of the small output (no unaligned concat)
    small_ref[:, 0:VJ_PAD + HEADS_PAD] = fused[:B, 0:VJ_PAD + HEADS_PAD]
    small_ref[:, VJ_PAD + HEADS_PAD:SMALL_PAD] = fused[B:, VJ_PAD + HEADS_PAD:SMALL_PAD]
    scale = fused[B:, VJ_PAD + HEADS_PAD + 3:VJ_PAD + HEADS_PAD + 4]   # (B, 1)

    # --- AtlasBranch sphere decoder (forward_inference), 2-D slab form --------
    # sphere @ Wd1x precomputed on host -> pts_ref (P_PAD, 128)
    h1 = jnp.maximum(pts_ref[...][None, :, :] + feat_term[:, None, :], 0.0)
    h1_2d = h1.reshape(B * P_PAD, DEC_H1)                    # free merge (648 % 8 == 0)
    h2 = jnp.maximum(mm(h1_2d, w128_ref[:, W128_D2:W128_D2 + 128])
                     + bias(BOFF_D2, 128), 0.0)              # (B*P, 128), cols 64: are 0
    raw = (mm(h2, w128_ref[:, W128_D3:W128_D3 + 128])
           + bias(BOFF_D3, 128)) * (1.0 / OUT_FACTOR)        # (B*P, 128), cols 3: are 0
    raw3 = raw.reshape(B, P_PAD, 128)

    # mean over the 642 real points only (padded rows masked out)
    rid = jax.lax.broadcasted_iota(jnp.int32, (P_PAD, 1), 0)
    valid = (rid < N_PTS).astype(f32)                        # (P_PAD, 1)
    mean = jnp.sum(raw3 * valid[None, :, :], axis=1, keepdims=True) * (1.0 / N_PTS)
    # NOTE: predicted trans is returned separately (not added to obj points),
    # matching AtlasBranch.forward_inference which returns objtrans on its own.
    obj_ref[...] = (raw3 - mean) * scale[:, :, None]          # (B, P_PAD, 128) lane-dense


# ---- parameter init + packing (deterministic, in-script) ----------------------
def _dense_init(key, fan_in, fan_out):
    kw, kb = jax.random.split(key)
    s = 1.0 / float(fan_in) ** 0.5
    w = jax.random.uniform(kw, (fan_in, fan_out), jnp.float32, -s, s)
    b = jax.random.uniform(kb, (1, fan_out), jnp.float32, -s, s)
    return w, b


def init_params(key):
    keys = iter(jax.random.split(key, 32))

    def d(fi, fo):
        return _dense_init(next(keys), fi, fo)

    We1, be1 = d(IN_DIM, ENC_HID); We2, be2 = d(ENC_HID, FEAT)
    Wa1, ba1 = d(IN_DIM, ENC_HID); Wa2, ba2 = d(ENC_HID, FEAT)
    Wm1, bm1 = d(FEAT, MANO_H1);   Wm2, bm2 = d(MANO_H1, MANO_H2)
    Wp, bp = d(MANO_H2, POSE_DIM); Wsh, bsh = d(MANO_H2, SHAPE_DIM)
    # MANO-layer substitute; the shape-branch biases are intentionally discarded
    # (single combined bias for the linear substitute).
    WvP, bv = d(POSE_DIM, N_VERTS * 3); WvS, _ = d(SHAPE_DIM, N_VERTS * 3)
    WjP, bj = d(POSE_DIM, N_JOINTS * 3); WjS, _ = d(SHAPE_DIM, N_JOINTS * 3)
    Wd1x, _ = d(3, DEC_H1); Wd1f, bd1 = d(FEAT, DEC_H1)
    Wd2, bd2 = d(DEC_H1, DEC_H2); Wd3, bd3 = d(DEC_H2, 3)
    Wt, bt = d(FEAT, 3); Wsc, bsc = d(FEAT, 1)

    def b16(a):
        return a.astype(jnp.bfloat16)

    # encoder layer 1: [We1 | Wa1]
    w768 = b16(jnp.concatenate([We1, Wa1], axis=1))                    # (768, 512)
    # encoder layer 2: blockdiag(We2, Wa2)
    w512 = jnp.zeros((2 * ENC_HID, 2 * FEAT), jnp.float32)
    w512 = w512.at[:ENC_HID, :FEAT].set(We2)
    w512 = w512.at[ENC_HID:, FEAT:].set(Wa2)
    w512 = b16(w512)                                                   # (512, 256)
    w256 = b16(Wm2)                                                    # (256, 128)

    # host precomposition of the MANO substitute: vj = hm @ (Wheads@Wvj) + ...
    Wheads = jnp.concatenate([Wp, Wsh], axis=1)                        # (128, 43)
    bheads = jnp.concatenate([bp, bsh], axis=1)                        # (1, 43)
    Wvj = jnp.concatenate(
        [jnp.concatenate([WvP, WjP], axis=1),
         jnp.concatenate([WvS, WjS], axis=1)], axis=0)                 # (43, 2397)
    bvj = jnp.concatenate([bv, bj], axis=1)                            # (1, 2397)
    Wvj_comp = Wheads @ Wvj                                            # (128, 2397)
    bvj_comp = bheads @ Wvj + bvj                                      # (1, 2397)

    m1d1_w = jnp.concatenate([Wm1, Wd1f], axis=1)                      # (128, 384)
    vj_block = jnp.pad(Wvj_comp, ((0, 0), (0, VJ_PAD - VJ_DIM)))       # (128, 2432)
    heads_block = jnp.pad(Wheads, ((0, 0), (0, HEADS_PAD - HEAD_DIM))) # (128, 128)
    ts_block = jnp.pad(jnp.concatenate([Wt, Wsc], axis=1),
                       ((0, 0), (0, TS_PAD - TS_DIM)))                 # (128, 128)
    d2_block = jnp.pad(Wd2, ((0, 0), (0, 128 - DEC_H2)))               # (128, 128)
    d3_block = jnp.pad(Wd3, ((0, 128 - DEC_H2), (0, 128 - 3)))         # (128, 128)
    w128 = b16(jnp.concatenate(
        [m1d1_w, vj_block, heads_block, ts_block, d2_block, d3_block], axis=1))
    assert w128.shape == (FEAT, W128_COLS)

    b_all = jnp.zeros((1, B_TOTAL), jnp.float32)
    b_all = b_all.at[:, BOFF_ENC1:BOFF_ENC1 + 2 * ENC_HID].set(
        jnp.concatenate([be1, ba1], axis=1))
    b_all = b_all.at[:, BOFF_ENC2:BOFF_ENC2 + 2 * FEAT].set(
        jnp.concatenate([be2, ba2], axis=1))
    b_all = b_all.at[:, BOFF_M1D1:BOFF_M1D1 + MANO_H1 + DEC_H1].set(
        jnp.concatenate([bm1, bd1], axis=1))
    b_all = b_all.at[:, BOFF_M2:BOFF_M2 + MANO_H2].set(bm2)
    b_all = b_all.at[:, BOFF_FUSED:BOFF_FUSED + VJ_DIM].set(bvj_comp)
    b_all = b_all.at[:, BOFF_FUSED + VJ_PAD:BOFF_FUSED + VJ_PAD + HEAD_DIM].set(bheads)
    b_all = b_all.at[:, BOFF_FUSED + VJ_PAD + HEADS_PAD:
                     BOFF_FUSED + VJ_PAD + HEADS_PAD + TS_DIM].set(
        jnp.concatenate([bt, bsc], axis=1))
    b_all = b_all.at[:, BOFF_D2:BOFF_D2 + DEC_H2].set(bd2)
    b_all = b_all.at[:, BOFF_D3:BOFF_D3 + 3].set(bd3)

    return dict(w768=w768, w512=w512, w256=w256, w128=w128,
                b_all=b_all, wd1x=Wd1x)


def fibonacci_sphere(n):
    # TODO(synk): real AtlasBranch uses an icosphere (3 subdivisions, 642 verts)
    # + test_faces; a deterministic Fibonacci sphere with 642 points stands in.
    i = jnp.arange(n, dtype=jnp.float32) + 0.5
    phi = jnp.arccos(1.0 - 2.0 * i / n)
    theta = jnp.pi * (1.0 + jnp.sqrt(5.0)) * i
    return jnp.stack([jnp.cos(theta) * jnp.sin(phi),
                      jnp.sin(theta) * jnp.sin(phi),
                      jnp.cos(phi)], axis=-1)            # (n, 3)


# ---- wrapper ------------------------------------------------------------------
def obman_forward(image_crop, params, pts_term):
    img_flat = image_crop.reshape(B, -1).astype(jnp.float32)   # NCHW -> (B, C*H*W)
    inputs = [img_flat, pts_term,
              params["w768"], params["w512"], params["w256"], params["w128"],
              params["b_all"]]

    out_shape = (
        jax.ShapeDtypeStruct((B, SMALL_PAD), jnp.float32),   # [verts|joints|pad|pose|shape|pad|trans|scale|pad]
        jax.ShapeDtypeStruct((B, P_PAD, 128), jnp.float32),  # obj points, lane-dense (real data in [..., :3])
    )
    vmem = pl.BlockSpec(memory_space=pltpu.MemorySpace.VMEM)
    small, obj = pl.pallas_call(
        obman_kernel,
        out_shape=out_shape,
        in_specs=[vmem] * len(inputs),
        out_specs=(vmem, vmem),
    )(*inputs)

    ov3 = N_VERTS * 3
    hand_verts = small[:, :ov3].reshape(B, N_VERTS, 3)
    hand_joints = small[:, ov3:VJ_DIM].reshape(B, N_JOINTS, 3)
    hand_pose = small[:, VJ_PAD:VJ_PAD + POSE_DIM]
    hand_shape = small[:, VJ_PAD + POSE_DIM:VJ_PAD + HEAD_DIM]
    obj_trans = small[:, VJ_PAD + HEADS_PAD:VJ_PAD + HEADS_PAD + 3]
    obj_scale = small[:, VJ_PAD + HEADS_PAD + 3:VJ_PAD + HEADS_PAD + 4]
    obj_verts = obj[:, :N_PTS, :3]

    root = hand_joints[:, :1, :]              # center_idx=0 -> root-relative
    hand_verts = hand_verts - root
    hand_joints = hand_joints - root
    return hand_verts, hand_joints, hand_shape, hand_pose, obj_verts, obj_trans, obj_scale


if __name__ == "__main__":
    key = jax.random.PRNGKey(0)
    k_img, k_par = jax.random.split(key)
    image_crop = jax.random.normal(k_img, (B, C, H, W), jnp.float32)  # NCHW, like PyTorch
    params = init_params(k_par)

    sphere_pts = fibonacci_sphere(N_PTS)                              # (642, 3)
    sphere_pad = jnp.pad(sphere_pts, ((0, P_PAD - N_PTS), (0, 0)))    # (648, 3)
    # constant sphere projection hoisted out of the kernel (no batch dependence)
    pts_term = (sphere_pad @ params["wd1x"]).astype(jnp.float32)      # (648, 128)

    fwd = jax.jit(lambda img: obman_forward(img, params, pts_term))
    outs = jax.block_until_ready(fwd(image_crop))

    hv, hj, hs, hp, ov, ot, osc = outs
    assert hv.shape == (B, N_VERTS, 3)
    assert hj.shape == (B, N_JOINTS, 3)
    assert hs.shape == (B, SHAPE_DIM)
    assert hp.shape == (B, POSE_DIM)
    assert ov.shape == (B, N_PTS, 3)
    assert ot.shape == (B, 3)
    assert osc.shape == (B, 1)
    assert all(bool(jnp.all(jnp.isfinite(o))) for o in outs)
    print("KERNEL_OK")
</pallas_src>

<mosaic_0001>
module attributes {stable_mosaic.version = 11 : i64} {
  func.func @obman_kernel(%arg0: memref<2x768xf32, #tpu.memory_space<vmem>>, %arg1: memref<648x128xf32, #tpu.memory_space<vmem>>, %arg2: memref<768x512xbf16, #tpu.memory_space<vmem>>, %arg3: memref<512x256xbf16, #tpu.memory_space<vmem>>, %arg4: memref<256x128xbf16, #tpu.memory_space<vmem>>, %arg5: memref<128x3328xbf16, #tpu.memory_space<vmem>>, %arg6: memref<1x4224xf32, #tpu.memory_space<vmem>>, %arg7: memref<2x2688xf32, #tpu.memory_space<vmem>>, %arg8: memref<2x648x128xf32, #tpu.memory_space<vmem>>) attributes {dimension_semantics = [], scalar_prefetch = 0 : i64, scratch_operands = 0 : i64, tpu.core_type = #tpu.core_type<tc>} {
    %c0 = arith.constant 0 : index
    %c0_0 = arith.constant 0 : index
    %0 = vector.load %arg0[%c0, %c0_0] : memref<2x768xf32, #tpu.memory_space<vmem>>, vector<2x768xf32>
    %c0_1 = arith.constant 0 : index
    %c0_2 = arith.constant 0 : index
    %1 = vector.load %arg2[%c0_1, %c0_2] : memref<768x512xbf16, #tpu.memory_space<vmem>>, vector<768x512xbf16>
    %2 = arith.truncf %0 : vector<2x768xf32> to vector<2x768xbf16>
    %cst = arith.constant dense<0.000000e+00> : vector<2x512xf32>
    %3 = tpu.matmul %2, %1, %cst {dimension_numbers = #tpu.dot_dimension_numbers<[1], [0], [0], [1], [0, 0, 1, 1], [], []>} : vector<2x768xbf16>, vector<768x512xbf16>, vector<2x512xf32> -> vector<2x512xf32>
    %c0_3 = arith.constant 0 : index
    %c0_4 = arith.constant 0 : index
    %4 = vector.load %arg6[%c0_3, %c0_4] : memref<1x4224xf32, #tpu.memory_space<vmem>>, vector<1x512xf32>
    %5 = vector.broadcast %4 : vector<1x512xf32> to vector<2x512xf32>
    %6 = arith.addf %3, %5 : vector<2x512xf32>
    %cst_5 = arith.constant 0.000000e+00 : f32
    %7 = vector.broadcast %cst_5 : f32 to vector<2x512xf32>
    %8 = arith.maximumf %6, %7 : vector<2x512xf32>
    %c0_6 = arith.constant 0 : index
    %c0_7 = arith.constant 0 : index
    %9 = vector.load %arg3[%c0_6, %c0_7] : memref<512x256xbf16, #tpu.memory_space<vmem>>, vector<512x256xbf16>
    %10 = arith.truncf %8 : vector<2x512xf32> to vector<2x512xbf16>
    %cst_8 = arith.constant dense<0.000000e+00> : vector<2x256xf32>
    %11 = tpu.matmul %10, %9, %cst_8 {dimension_numbers = #tpu.dot_dimension_numbers<[1], [0], [0], [1], [0, 0, 1, 1], [], []>} : vector<2x512xbf16>, vector<512x256xbf16>, vector<2x256xf32> -> vector<2x256xf32>
    %c0_9 = arith.constant 0 : index
    %c512 = arith.constant 512 : index
    %12 = vector.load %arg6[%c0_9, %c512] : memref<1x4224xf32, #tpu.memory_space<vmem>>, vector<1x256xf32>
    %13 = vector.broadcast %12 : vector<1x256xf32> to vector<2x256xf32>
    %14 = arith.addf %11, %13 : vector<2x256xf32>
    %cst_10 = arith.constant 0.000000e+00 : f32
    %15 = vector.broadcast %cst_10 : f32 to vector<2x256xf32>
    %16 = arith.maximumf %14, %15 : vector<2x256xf32>
    %17 = vector.extract_strided_slice %16 {offsets = [0, 0], sizes = [2, 128], strides = [1, 1]} : vector<2x256xf32> to vector<2x128xf32>
    %18 = vector.extract_strided_slice %16 {offsets = [0, 128], sizes = [2, 128], strides = [1, 1]} : vector<2x256xf32> to vector<2x128xf32>
    %c0_11 = arith.constant 0 : index
    %c0_12 = arith.constant 0 : index
    %19 = vector.load %arg5[%c0_11, %c0_12] : memref<128x3328xbf16, #tpu.memory_space<vmem>>, vector<128x384xbf16>
    %20 = arith.truncf %17 : vector<2x128xf32> to vector<2x128xbf16>
    %cst_13 = arith.constant dense<0.000000e+00> : vector<2x384xf32>
    %21 = tpu.matmul %20, %19, %cst_13 {dimension_numbers = #tpu.dot_dimension_numbers<[1], [0], [0], [1], [0, 0, 1, 1], [], []>} : vector<2x128xbf16>, vector<128x384xbf16>, vector<2x384xf32> -> vector<2x384xf32>
    %c0_14 = arith.constant 0 : index
    %c768 = arith.constant 768 : index
    %22 = vector.load %arg6[%c0_14, %c768] : memref<1x4224xf32, #tpu.memory_space<vmem>>, vector<1x384xf32>
    %23 = vector.broadcast %22 : vector<1x384xf32> to vector<2x384xf32>
    %24 = arith.addf %21, %23 : vector<2x384xf32>
    %25 = vector.extract_strided_slice %24 {offsets = [0, 0], sizes = [2, 256], strides = [1, 1]} : vector<2x384xf32> to vector<2x256xf32>
    %cst_15 = arith.constant 0.000000e+00 : f32
    %26 = vector.broadcast %cst_15 : f32 to vector<2x256xf32>
    %27 = arith.maximumf %25, %26 : vector<2x256xf32>
    %28 = vector.extract_strided_slice %24 {offsets = [0, 256], sizes = [2, 128], strides = [1, 1]} : vector<2x384xf32> to vector<2x128xf32>
    %c0_16 = arith.constant 0 : index
    %c0_17 = arith.constant 0 : index
    %29 = vector.load %arg4[%c0_16, %c0_17] : memref<256x128xbf16, #tpu.memory_space<vmem>>, vector<256x128xbf16>
    %30 = arith.truncf %27 : vector<2x256xf32> to vector<2x256xbf16>
    %cst_18 = arith.constant dense<0.000000e+00> : vector<2x128xf32>
    %31 = tpu.matmul %30, %29, %cst_18 {dimension_numbers = #tpu.dot_dimension_numbers<[1], [0], [0], [1], [0, 0, 1, 1], [], []>} : vector<2x256xbf16>, vector<256x128xbf16>, vector<2x128xf32> -> vector<2x128xf32>
    %c0_19 = arith.constant 0 : index
    %c1152 = arith.constant 1152 : index
    %32 = vector.load %arg6[%c0_19, %c1152] : memref<1x4224xf32, #tpu.memory_space<vmem>>, vector<1x128xf32>
    %33 = vector.broadcast %32 : vector<1x128xf32> to vector<2x128xf32>
    %34 = arith.addf %31, %33 : vector<2x128xf32>
    %cst_20 = arith.constant 0.000000e+00 : f32
    %35 = vector.broadcast %cst_20 : f32 to vector<2x128xf32>
    %36 = arith.maximumf %34, %35 : vector<2x128xf32>
    %37 = tpu.concatenate %36, %18 in 0 : vector<2x128xf32>, vector<2x128xf32> -> vector<4x128xf32>
    %c0_21 = arith.constant 0 : index
    %c384 = arith.constant 384 : index
    %38 = vector.load %arg5[%c0_21, %c384] : memref<128x3328xbf16, #tpu.memory_space<vmem>>, vector<128x2688xbf16>
    %39 = arith.truncf %37 : vector<4x128xf32> to vector<4x128xbf16>
    %cst_22 = arith.constant dense<0.000000e+00> : vector<4x2688xf32>
    %40 = tpu.matmul %39, %38, %cst_22 {dimension_numbers = #tpu.dot_dimension_numbers<[1], [0], [0], [1], [0, 0, 1, 1], [], []>} : vector<4x128xbf16>, vector<128x2688xbf16>, vector<4x2688xf32> -> vector<4x2688xf32>
    %c0_23 = arith.constant 0 : index
    %c1280 = arith.constant 1280 : index
    %41 = vector.load %arg6[%c0_23, %c1280] : memref<1x4224xf32, #tpu.memory_space<vmem>>, vector<1x2688xf32>
    %42 = vector.broadcast %41 : vector<1x2688xf32> to vector<4x2688xf32>
    %43 = arith.addf %40, %42 : vector<4x2688xf32>
    %44 = vector.extract_strided_slice %43 {offsets = [0, 0], sizes = [2, 2560], strides = [1, 1]} : vector<4x2688xf32> to vector<2x2560xf32>
    %c0_24 = arith.constant 0 : index
    %c0_25 = arith.constant 0 : index
    %45 = vector.load %arg7[%c0_24, %c0_25] : memref<2x2688xf32, #tpu.memory_space<vmem>>, vector<2x2560xf32>
    tpu.vector_store %arg7[%c0_24, %c0_25], %44 {strides = array<i32>} : memref<2x2688xf32, #tpu.memory_space<vmem>>, vector<2x2560xf32>,
    %46 = vector.extract_strided_slice %43 {offsets = [2, 2560], sizes = [2, 128], strides = [1, 1]} : vector<4x2688xf32> to vector<2x128xf32>
    %c0_26 = arith.constant 0 : index
    %c2560 = arith.constant 2560 : index
    %47 = vector.load %arg7[%c0_26, %c2560] : memref<2x2688xf32, #tpu.memory_space<vmem>>, vector<2x128xf32>
    tpu.vector_store %arg7[%c0_26, %c2560], %46 {strides = array<i32>} : memref<2x2688xf32, #tpu.memory_space<vmem>>, vector<2x128xf32>,
    %48 = vector.extract_strided_slice %43 {offsets = [2, 2563], sizes = [2, 1], strides = [1, 1]} : vector<4x2688xf32> to vector<2x1xf32>
    %c0_27 = arith.constant 0 : index
    %c0_28 = arith.constant 0 : index
    %49 = vector.load %arg1[%c0_27, %c0_28] : memref<648x128xf32, #tpu.memory_space<vmem>>, vector<648x128xf32>
    %50 = vector.shape_cast %49 : vector<648x128xf32> to vector<1x648x128xf32>
    %51 = vector.shape_cast %28 : vector<2x128xf32> to vector<2x1x128xf32>
    %52 = vector.broadcast %50 : vector<1x648x128xf32> to vector<2x648x128xf32>
    %53 = vector.broadcast %51 : vector<2x1x128xf32> to vector<2x648x128xf32>
    %54 = arith.addf %52, %53 : vector<2x648x128xf32>
    %cst_29 = arith.constant 0.000000e+00 : f32
    %55 = vector.broadcast %cst_29 : f32 to vector<2x648x128xf32>
    %56 = arith.maximumf %54, %55 : vector<2x648x128xf32>
    %57 = vector.shape_cast %56 : vector<2x648x128xf32> to vector<1296x128xf32>
    %c0_30 = arith.constant 0 : index
    %c3072 = arith.constant 3072 : index
    %58 = vector.load %arg5[%c0_30, %c3072] : memref<128x3328xbf16, #tpu.memory_space<vmem>>, vector<128x128xbf16>
    %59 = arith.truncf %57 : vector<1296x128xf32> to vector<1296x128xbf16>
    %cst_31 = arith.constant dense<0.000000e+00> : vector<1296x128xf32>
    %60 = tpu.matmul %59, %58, %cst_31 {dimension_numbers = #tpu.dot_dimension_numbers<[1], [0], [0], [1], [0, 0, 1, 1], [], []>} : vector<1296x128xbf16>, vector<128x128xbf16>, vector<1296x128xf32> -> vector<1296x128xf32>
    %c0_32 = arith.constant 0 : index
    %c3968 = arith.constant 3968 : index
    %61 = vector.load %arg6[%c0_32, %c3968] : memref<1x4224xf32, #tpu.memory_space<vmem>>, vector<1x128xf32>
    %62 = vector.broadcast %61 : vector<1x128xf32> to vector<1296x128xf32>
    %63 = arith.addf %60, %62 : vector<1296x128xf32>
    %cst_33 = arith.constant 0.000000e+00 : f32
    %64 = vector.broadcast %cst_33 : f32 to vector<1296x128xf32>
    %65 = arith.maximumf %63, %64 : vector<1296x128xf32>
    %c0_34 = arith.constant 0 : index
    %c3200 = arith.constant 3200 : index
    %66 = vector.load %arg5[%c0_34, %c3200] : memref<128x3328xbf16, #tpu.memory_space<vmem>>, vector<128x128xbf16>
    %67 = arith.truncf %65 : vector<1296x128xf32> to vector<1296x128xbf16>
    %cst_35 = arith.constant dense<0.000000e+00> : vector<1296x128xf32>
    %68 = tpu.matmul %67, %66, %cst_35 {dimension_numbers = #tpu.dot_dimension_numbers<[1], [0], [0], [1], [0, 0, 1, 1], [], []>} : vector<1296x128xbf16>, vector<128x128xbf16>, vector<1296x128xf32> -> vector<1296x128xf32>
    %c0_36 = arith.constant 0 : index
    %c4096 = arith.constant 4096 : index
    %69 = vector.load %arg6[%c0_36, %c4096] : memref<1x4224xf32, #tpu.memory_space<vmem>>, vector<1x128xf32>
    %70 = vector.broadcast %69 : vector<1x128xf32> to vector<1296x128xf32>
    %71 = arith.addf %68, %70 : vector<1296x128xf32>
    %cst_37 = arith.constant 0.00999999977 : f32
    %72 = vector.broadcast %cst_37 : f32 to vector<1296x128xf32>
    %73 = arith.mulf %71, %72 : vector<1296x128xf32>
    %74 = vector.shape_cast %73 : vector<1296x128xf32> to vector<2x648x128xf32>
    %75 = tpu.iota {dimensions = array<i32: 0>} : vector<648x1xi32>
    %c642_i32 = arith.constant 642 : i32
    %76 = vector.broadcast %c642_i32 : i32 to vector<648x1xi32>
    %77 = arith.cmpi slt, %75, %76 : vector<648x1xi32>
    %78 = arith.extui %77 : vector<648x1xi1> to vector<648x1xi32>
    %79 = arith.sitofp %78 : vector<648x1xi32> to vector<648x1xf32>
    %80 = vector.shape_cast %79 : vector<648x1xf32> to vector<1x648x1xf32>
    %81 = vector.broadcast %80 : vector<1x648x1xf32> to vector<2x648x128xf32>
    %82 = arith.mulf %74, %81 : vector<2x648x128xf32>
    %cst_38 = arith.constant dense<0.000000e+00> : vector<2x128xf32>
    %83 = vector.multi_reduction <add>, %82, %cst_38 [1] : vector<2x648x128xf32> to vector<2x128xf32>
    %84 = vector.shape_cast %83 : vector<2x128xf32> to vector<2x1x128xf32>
    %cst_39 = arith.constant 0.00155763235 : f32
    %85 = vector.broadcast %cst_39 : f32 to vector<2x1x128xf32>
    %86 = arith.mulf %84, %85 : vector<2x1x128xf32>
    %87 = vector.broadcast %86 : vector<2x1x128xf32> to vector<2x648x128xf32>
    %88 = arith.subf %74, %87 : vector<2x648x128xf32>
    %89 = vector.shape_cast %48 : vector<2x1xf32> to vector<2x1x1xf32>
    %90 = vector.broadcast %89 : vector<2x1x1xf32> to vector<2x648x128xf32>
    %91 = arith.mulf %88, %90 : vector<2x648x128xf32>
    %c0_40 = arith.constant 0 : index
    %c0_41 = arith.constant 0 : index
    %c0_42 = arith.constant 0 : index
    %92 = vector.load %arg8[%c0_40, %c0_41, %c0_42] : memref<2x648x128xf32, #tpu.memory_space<vmem>>, vector<2x648x128xf32>
    tpu.vector_store %arg8[%c0_40, %c0_41, %c0_42], %91 {strides = array<i32>} : memref<2x648x128xf32, #tpu.memory_space<vmem>>, vector<2x648x128xf32>,
    return
  }
}

</mosaic_0001>

<llo_original>
// kernel: _lambda_.1
$region0: #{_lambda_.1}
  #allocation0 [shape = 'u32[]', space=smem, size = 0x4, offset = 0x4, fixed_abs, tag = 'smem constant byte address 0x4 - core index']
  #allocation1 [shape = 'u32[144,128]{1,0:T(1,128)}', space=vmem, size = 0x12000, scoped, tag = 'internal scratch']
  %s0 = inlined_call_operand.vmem [shape: f32[2,768], index: 0, kind: input, shape index: {}]
  %s1 = inlined_call_operand.hbm [shape: f32[648,128], index: 1, kind: input, shape index: {}]
  %s2 = inlined_call_operand.hbm [shape: bf16[768,512], index: 2, kind: input, shape index: {}]
  %s3 = inlined_call_operand.hbm [shape: bf16[512,256], index: 3, kind: input, shape index: {}]
  %s4 = inlined_call_operand.hbm [shape: bf16[256,128], index: 4, kind: input, shape index: {}]
  %s5 = inlined_call_operand.hbm [shape: bf16[128,3328], index: 5, kind: input, shape index: {}]
  %s6 = inlined_call_operand.vmem [shape: f32[1,4224], index: 6, kind: input, shape index: {}]
  %s7 = inlined_call_operand.vmem [shape: f32[2,2688], index: 7, kind: output, shape index: {0}]
  %s8 = inlined_call_operand.vmem [shape: f32[2,648,128], index: 8, kind: output, shape index: {1}]
  %9 = xla_tuple %s7, %s8
  %s10 = sld [smem:[#allocation0]]
  $region66: #{_lambda_.1} parent=0
    _
  %s12 = ssub.s32 1, %s10
  %s13 = scalar_select 0, %s12, %s10
  $region1: #{_lambda_.1} parent=0
    #allocation2 [shape = 'u8[331776]{0}', space=vmem, size = 0x51000, scoped, tag = 'input window, operand 1, single buffered']
    #allocation3 [shape = 's32[1]{0}', space=sflag, size = 0x4, scoped, tag = 'scoped memory for _lambda_.1']
    #allocation4 [shape = 'u8[786432]{0}', space=vmem, size = 0xc0000, scoped, tag = 'input window, operand 2, single buffered']
    #allocation5 [shape = 's32[1]{0}', space=sflag, size = 0x4, scoped, tag = 'scoped memory for _lambda_.1']
    #allocation6 [shape = 'u8[262144]{0}', space=vmem, size = 0x40000, scoped, tag = 'input window, operand 3, single buffered']
    #allocation7 [shape = 'u8[65536]{0}', space=vmem, size = 0x10000, scoped, tag = 'input window, operand 4, single buffered']
    #allocation8 [shape = 's32[1]{0}', space=sflag, size = 0x4, scoped, tag = 'scoped memory for _lambda_.1']
    #allocation9 [shape = 'u8[851968]{0}', space=vmem, size = 0xd0000, scoped, tag = 'input window, operand 5, single buffered']
    %14 = vsyncpa [#allocation3], 0
    %15 = vsyncpa [#allocation5], 0
    %16 = vsyncpa [#allocation8], 0
    // Predicated region
    $region2: #{_lambda_.1} parent=1 // pred_check
      _
    $region3: #{_lambda_.1} parent=1 // pred_check_branch
      %18 = sbr.rel (0) target = $region5
    $region4: #{_lambda_.1} parent=1 // pred_region
      _
    $region5: #{_lambda_.1} parent=1 // pred_fallthru
      _
    // Predicated region
    $region6: #{_lambda_.1} parent=1 // pred_check
      _
    $region7: #{_lambda_.1} parent=1 // pred_check_branch
      %20 = sbr.rel (0) target = $region9
    $region8: #{_lambda_.1} parent=1 // pred_region
      %s22 = ssub.s32 10368, 10368
      %23 = vsyncadd [#allocation3], %s22
      %s24 = sshll.u32 [#allocation2], 4
      %s25 = int_to_ptr.vmem [resolvable:$true] %s24
      %30 = dma.hbm_to_vmem [thread:$0]  %s1, 10368, %s25, [#allocation3], 128, 128, 8
    $region9: #{_lambda_.1} parent=1 // pred_fallthru
      _
    // Predicated region
    $region10: #{_lambda_.1} parent=1 // pred_check
      _
    $region11: #{_lambda_.1} parent=1 // pred_check_branch
      %32 = sbr.rel (0) target = $region13
    $region12: #{_lambda_.1} parent=1 // pred_region
      %s34 = ssub.s32 24576, 24576
      %35 = vsyncadd [#allocation5], %s34
      %s36 = sshll.u32 [#allocation4], 4
      %s37 = int_to_ptr.vmem [resolvable:$true] %s36
      %42 = dma.hbm_to_vmem [thread:$0]  %s2, 24576, %s37, [#allocation5], 256, 256, 16
    $region13: #{_lambda_.1} parent=1 // pred_fallthru
      _
    // Predicated region
    $region14: #{_lambda_.1} parent=1 // pred_check
      _
    $region15: #{_lambda_.1} parent=1 // pred_check_branch
      %44 = sbr.rel (0) target = $region17
    $region16: #{_lambda_.1} parent=1 // pred_region
      %s46 = ssub.s32 8192, 8192
      %47 = vsyncadd [#allocation5], %s46
      %s48 = sshll.u32 [#allocation6], 4
      %s49 = int_to_ptr.vmem [resolvable:$true] %s48
      %54 = dma.hbm_to_vmem [thread:$0]  %s3, 8192, %s49, [#allocation5], 128, 128, 8
    $region17: #{_lambda_.1} parent=1 // pred_fallthru
      _
    // Predicated region
    $region18: #{_lambda_.1} parent=1 // pred_check
      _
    $region19: #{_lambda_.1} parent=1 // pred_check_branch
      %56 = sbr.rel (0) target = $region21
    $region20: #{_lambda_.1} parent=1 // pred_region
      %s58 = ssub.s32 2048, 2048
      %59 = vsyncadd [#allocation8], %s58
      %s60 = sshll.u32 [#allocation7], 4
      %s61 = int_to_ptr.vmem [resolvable:$true] %s60
      %66 = dma.hbm_to_vmem [thread:$0]  %s4, 2048, %s61, [#allocation8], 64, 64, 4
    $region21: #{_lambda_.1} parent=1 // pred_fallthru
      _
    // Predicated region
    $region22: #{_lambda_.1} parent=1 // pred_check
      _
    $region23: #{_lambda_.1} parent=1 // pred_check_branch
      %68 = sbr.rel (0) target = $region25
    $region24: #{_lambda_.1} parent=1 // pred_region
      %s70 = ssub.s32 26624, 26624
      %71 = vsyncadd [#allocation8], %s70
      %s72 = sshll.u32 [#allocation9], 4
      %s73 = int_to_ptr.vmem [resolvable:$true] %s72
      %78 = dma.hbm_to_vmem [thread:$0]  %s5, 26624, %s73, [#allocation8], 1664, 1664, 104
    $region25: #{_lambda_.1} parent=1 // pred_fallthru
      _
    // Predicated region
    $region26: #{_lambda_.1} parent=1 // pred_check
      _
    $region27: #{_lambda_.1} parent=1 // pred_check_branch
      %80 = sbr.rel (0) target = $region29
    $region28: #{_lambda_.1} parent=1 // pred_region
      _
    $region29: #{_lambda_.1} parent=1 // pred_fallthru
      _
    // Predicated region
    $region30: #{_lambda_.1} parent=1 // pred_check
      _
    $region31: #{_lambda_.1} parent=1 // pred_check_branch
      %82 = sbr.rel (0) target = $region33
    $region32: #{_lambda_.1} parent=1 // pred_region
      %83 = dma.done [#allocation3], 10368
    $region33: #{_lambda_.1} parent=1 // pred_fallthru
      _
    // Predicated region
    $region34: #{_lambda_.1} parent=1 // pred_check
      _
    $region35: #{_lambda_.1} parent=1 // pred_check_branch
      %85 = sbr.rel (0) target = $region37
    $region36: #{_lambda_.1} parent=1 // pred_region
      %86 = dma.done [#allocation5], 24576
    $region37: #{_lambda_.1} parent=1 // pred_fallthru
      _
    // Predicated region
    $region38: #{_lambda_.1} parent=1 // pred_check
      _
    $region39: #{_lambda_.1} parent=1 // pred_check_branch
      %88 = sbr.rel (0) target = $region41
    $region40: #{_lambda_.1} parent=1 // pred_region
      %89 = dma.done [#allocation5], 8192
    $region41: #{_lambda_.1} parent=1 // pred_fallthru
      _
    // Predicated region
    $region42: #{_lambda_.1} parent=1 // pred_check
      _
    $region43: #{_lambda_.1} parent=1 // pred_check_branch
      %91 = sbr.rel (0) target = $region45
    $region44: #{_lambda_.1} parent=1 // pred_region
      %92 = dma.done [#allocation8], 2048
    $region45: #{_lambda_.1} parent=1 // pred_fallthru
      _
    // Predicated region
    $region46: #{_lambda_.1} parent=1 // pred_check
      _
    $region47: #{_lambda_.1} parent=1 // pred_check_branch
      %94 = sbr.rel (0) target = $region49
    $region48: #{_lambda_.1} parent=1 // pred_region
      %95 = dma.done [#allocation8], 26624
    $region49: #{_lambda_.1} parent=1 // pred_fallthru
      _
    %v97 = vld [vmem:[%s0] sm:$0xff]
    %v98 = vld [vmem:[%s0 + $0x8] sm:$0xf]
    %v99 = vld [vmem:[#allocation4] sm:$0xff]
    %v100 = vld [vmem:[#allocation4 + $0x8] sm:$0xff]
    %v101 = vld [vmem:[#allocation4 + $0x10] sm:$0xff]
    %v102 = vld [vmem:[#allocation4 + $0x18] sm:$0xff]
    %v103 = vld [vmem:[#allocation4 + $0x20] sm:$0xff]
    %v104 = vld [vmem:[#allocation4 + $0x28] sm:$0xff]
    %v105 = vld [vmem:[#allocation4 + $0x30] sm:$0xff]
    %v106 = vld [vmem:[#allocation4 + $0x38] sm:$0xff]
    %v107 = vld [vmem:[#allocation4 + $0x40] sm:$0xff]
    %v108 = vld [vmem:[#allocation4 + $0x48] sm:$0xff]
    %v109 = vld [vmem:[#allocation4 + $0x50] sm:$0xff]
    %v110 = vld [vmem:[#allocation4 + $0x58] sm:$0xff]
    %v111 = vld [vmem:[#allocation4 + $0x60] sm:$0xff]
    %v112 = vld [vmem:[#allocation4 + $0x68] sm:$0xff]
    %v113 = vld [vmem:[#allocation4 + $0x70] sm:$0xff]
    %v114 = vld [vmem:[#allocation4 + $0x78] sm:$0xff]
    %v115 = vld [vmem:[#allocation4 + $0x80] sm:$0xff]
    %v116 = vld [vmem:[#allocation4 + $0x88] sm:$0xff]
    %v117 = vld [vmem:[#allocation4 + $0x90] sm:$0xff]
    %v118 = vld [vmem:[#allocation4 + $0x98] sm:$0xff]
    %v119 = vld [vmem:[#allocation4 + $0xa0] sm:$0xff]
    %v120 = vld [vmem:[#allocation4 + $0xa8] sm:$0xff]
    %v121 = vld [vmem:[#allocation4 + $0xb0] sm:$0xff]
    %v122 = vld [vmem:[#allocation4 + $0xb8] sm:$0xff]
    %v123 = vld [vmem:[#allocation4 + $0xc0] sm:$0xff]
    %v124 = vld [vmem:[#allocation4 + $0xc8] sm:$0xff]
    %v125 = vld [vmem:[#allocation4 + $0xd0] sm:$0xff]
    %v126 = vld [vmem:[#allocation4 + $0xd8] sm:$0xff]
    %v127 = vld [vmem:[#allocation4 + $0xe0] sm:$0xff]
    %v128 = vld [vmem:[#allocation4 + $0xe8] sm:$0xff]
    %v129 = vld [vmem:[#allocation4 + $0xf0] sm:$0xff]
    %v130 = vld [vmem:[#allocation4 + $0xf8] sm:$0xff]
    %v131 = vld [vmem:[#allocation4 + $0x100] sm:$0xff]
    %v132 = vld [vmem:[#allocation4 + $0x108] sm:$0xff]
    %v133 = vld [vmem:[#allocation4 + $0x110] sm:$0xff]
    %v134 = vld [vmem:[#allocation4 + $0x118] sm:$0xff]
    %v135 = vld [vmem:[#allocation4 + $0x120] sm:$0xff]
    %v136 = vld [vmem:[#allocation4 + $0x128] sm:$0xff]
    %v137 = vld [vmem:[#allocation4 + $0x130] sm:$0xff]
    %v138 = vld [vmem:[#allocation4 + $0x138] sm:$0xff]
    %v139 = vld [vmem:[#allocation4 + $0x140] sm:$0xff]
    %v140 = vld [vmem:[#allocation4 + $0x148] sm:$0xff]
    %v141 = vld [vmem:[#allocation4 + $0x150] sm:$0xff]
    %v142 = vld [vmem:[#allocation4 + $0x158] sm:$0xff]
    %v143 = vld [vmem:[#allocation4 + $0x160] sm:$0xff]
    %v144 = vld [vmem:[#allocation4 + $0x168] sm:$0xff]
    %v145 = vld [vmem:[#allocation4 + $0x170] sm:$0xff]
    %v146 = vld [vmem:[#allocation4 + $0x178] sm:$0xff]
    %v147 = vld [vmem:[#allocation4 + $0x180] sm:$0xff]
    %v148 = vld [vmem:[#allocation4 + $0x188] sm:$0xff]
    %v149 = vld [vmem:[#allocation4 + $0x190] sm:$0xff]
    %v150 = vld [vmem:[#allocation4 + $0x198] sm:$0xff]
    %v151 = vld [vmem:[#allocation4 + $0x1a0] sm:$0xff]
    %v152 = vld [vmem:[#allocation4 + $0x1a8] sm:$0xff]
    %v153 = vld [vmem:[#allocation4 + $0x1b0] sm:$0xff]
    %v154 = vld [vmem:[#allocation4 + $0x1b8] sm:$0xff]
    %v155 = vld [vmem:[#allocation4 + $0x1c0] sm:$0xff]
    %v156 = vld [vmem:[#allocation4 + $0x1c8] sm:$0xff]
    %v157 = vld [vmem:[#allocation4 + $0x1d0] sm:$0xff]
    %v158 = vld [vmem:[#allocation4 + $0x1d8] sm:$0xff]
    %v159 = vld [vmem:[#allocation4 + $0x1e0] sm:$0xff]
    %v160 = vld [vmem:[#allocation4 + $0x1e8] sm:$0xff]
    %v161 = vld [vmem:[#allocation4 + $0x1f0] sm:$0xff]
    %v162 = vld [vmem:[#allocation4 + $0x1f8] sm:$0xff]
    %v163 = vld [vmem:[#allocation4 + $0x200] sm:$0xff]
    %v164 = vld [vmem:[#allocation4 + $0x208] sm:$0xff]
    %v165 = vld [vmem:[#allocation4 + $0x210] sm:$0xff]
    %v166 = vld [vmem:[#allocation4 + $0x218] sm:$0xff]
    %v167 = vld [vmem:[#allocation4 + $0x220] sm:$0xff]
    %v168 = vld [vmem:[#allocation4 + $0x228] sm:$0xff]
    %v169 = vld [vmem:[#allocation4 + $0x230] sm:$0xff]
    %v170 = vld [vmem:[#allocation4 + $0x238] sm:$0xff]
    %v171 = vld [vmem:[#allocation4 + $0x240] sm:$0xff]
    %v172 = vld [vmem:[#allocation4 + $0x248] sm:$0xff]
    %v173 = vld [vmem:[#allocation4 + $0x250] sm:$0xff]
    %v174 = vld [vmem:[#allocation4 + $0x258] sm:$0xff]
    %v175 = vld [vmem:[#allocation4 + $0x260] sm:$0xff]
    %v176 = vld [vmem:[#allocation4 + $0x268] sm:$0xff]
    %v177 = vld [vmem:[#allocation4 + $0x270] sm:$0xff]
    %v178 = vld [vmem:[#allocation4 + $0x278] sm:$0xff]
    %v179 = vld [vmem:[#allocation4 + $0x280] sm:$0xff]
    %v180 = vld [vmem:[#allocation4 + $0x288] sm:$0xff]
    %v181 = vld [vmem:[#allocation4 + $0x290] sm:$0xff]
    %v182 = vld [vmem:[#allocation4 + $0x298] sm:$0xff]
    %v183 = vld [vmem:[#allocation4 + $0x2a0] sm:$0xff]
    %v184 = vld [vmem:[#allocation4 + $0x2a8] sm:$0xff]
    %v185 = vld [vmem:[#allocation4 + $0x2b0] sm:$0xff]
    %v186 = vld [vmem:[#allocation4 + $0x2b8] sm:$0xff]
    %v187 = vld [vmem:[#allocation4 + $0x2c0] sm:$0xff]
    %v188 = vld [vmem:[#allocation4 + $0x2c8] sm:$0xff]
    %v189 = vld [vmem:[#allocation4 + $0x2d0] sm:$0xff]
    %v190 = vld [vmem:[#allocation4 + $0x2d8] sm:$0xff]
    %v191 = vld [vmem:[#allocation4 + $0x2e0] sm:$0xff]
    %v192 = vld [vmem:[#allocation4 + $0x2e8] sm:$0xff]
    %v193 = vld [vmem:[#allocation4 + $0x2f0] sm:$0xff]
    %v194 = vld [vmem:[#allocation4 + $0x2f8] sm:$0xff]
    %v195 = vld [vmem:[#allocation4 + $0x300] sm:$0xff]
    %v196 = vld [vmem:[#allocation4 + $0x308] sm:$0xff]
    %v197 = vld [vmem:[#allocation4 + $0x310] sm:$0xff]
    %v198 = vld [vmem:[#allocation4 + $0x318] sm:$0xff]
    %v199 = vld [vmem:[#allocation4 + $0x320] sm:$0xff]
    %v200 = vld [vmem:[#allocation4 + $0x328] sm:$0xff]
    %v201 = vld [vmem:[#allocation4 + $0x330] sm:$0xff]
    %v202 = vld [vmem:[#allocation4 + $0x338] sm:$0xff]
    %v203 = vld [vmem:[#allocation4 + $0x340] sm:$0xff]
    %v204 = vld [vmem:[#allocation4 + $0x348] sm:$0xff]
    %v205 = vld [vmem:[#allocation4 + $0x350] sm:$0xff]
    %v206 = vld [vmem:[#allocation4 + $0x358] sm:$0xff]
    %v207 = vld [vmem:[#allocation4 + $0x360] sm:$0xff]
    %v208 = vld [vmem:[#allocation4 + $0x368] sm:$0xff]
    %v209 = vld [vmem:[#allocation4 + $0x370] sm:$0xff]
    %v210 = vld [vmem:[#allocation4 + $0x378] sm:$0xff]
    %v211 = vld [vmem:[#allocation4 + $0x380] sm:$0xff]
    %v212 = vld [vmem:[#allocation4 + $0x388] sm:$0xff]
    %v213 = vld [vmem:[#allocation4 + $0x390] sm:$0xff]
    %v214 = vld [vmem:[#allocation4 + $0x398] sm:$0xff]
    %v215 = vld [vmem:[#allocation4 + $0x3a0] sm:$0xff]
    %v216 = vld [vmem:[#allocation4 + $0x3a8] sm:$0xff]
    %v217 = vld [vmem:[#allocation4 + $0x3b0] sm:$0xff]
    %v218 = vld [vmem:[#allocation4 + $0x3b8] sm:$0xff]
    %v219 = vld [vmem:[#allocation4 + $0x3c0] sm:$0xff]
    %v220 = vld [vmem:[#allocation4 + $0x3c8] sm:$0xff]
    %v221 = vld [vmem:[#allocation4 + $0x3d0] sm:$0xff]
    %v222 = vld [vmem:[#allocation4 + $0x3d8] sm:$0xff]
    %v223 = vld [vmem:[#allocation4 + $0x3e0] sm:$0xff]
    %v224 = vld [vmem:[#allocation4 + $0x3e8] sm:$0xff]
    %v225 = vld [vmem:[#allocation4 + $0x3f0] sm:$0xff]
    %v226 = vld [vmem:[#allocation4 + $0x3f8] sm:$0xff]
    %v227 = vld [vmem:[#allocation4 + $0x400] sm:$0xff]
    %v228 = vld [vmem:[#allocation4 + $0x408] sm:$0xff]
    %v229 = vld [vmem:[#allocation4 + $0x410] sm:$0xff]
    %v230 = vld [vmem:[#allocation4 + $0x418] sm:$0xff]
    %v231 = vld [vmem:[#allocation4 + $0x420] sm:$0xff]
    %v232 = vld [vmem:[#allocation4 + $0x428] sm:$0xff]
    %v233 = vld [vmem:[#allocation4 + $0x430] sm:$0xff]
    %v234 = vld [vmem:[#allocation4 + $0x438] sm:$0xff]
    %v235 = vld [vmem:[#allocation4 + $0x440] sm:$0xff]
    %v236 = vld [vmem:[#allocation4 + $0x448] sm:$0xff]
    %v237 = vld [vmem:[#allocation4 + $0x450] sm:$0xff]
    %v238 = vld [vmem:[#allocation4 + $0x458] sm:$0xff]
    %v239 = vld [vmem:[#allocation4 + $0x460] sm:$0xff]
    %v240 = vld [vmem:[#allocation4 + $0x468] sm:$0xff]
    %v241 = vld [vmem:[#allocation4 + $0x470] sm:$0xff]
    %v242 = vld [vmem:[#allocation4 + $0x478] sm:$0xff]
    %v243 = vld [vmem:[#allocation4 + $0x480] sm:$0xff]
    %v244 = vld [vmem:[#allocation4 + $0x488] sm:$0xff]
    %v245 = vld [vmem:[#allocation4 + $0x490] sm:$0xff]
    %v246 = vld [vmem:[#allocation4 + $0x498] sm:$0xff]
    %v247 = vld [vmem:[#allocation4 + $0x4a0] sm:$0xff]
    %v248 = vld [vmem:[#allocation4 + $0x4a8] sm:$0xff]
    %v249 = vld [vmem:[#allocation4 + $0x4b0] sm:$0xff]
    %v250 = vld [vmem:[#allocation4 + $0x4b8] sm:$0xff]
    %v251 = vld [vmem:[#allocation4 + $0x4c0] sm:$0xff]
    %v252 = vld [vmem:[#allocation4 + $0x4c8] sm:$0xff]
    %v253 = vld [vmem:[#allocation4 + $0x4d0] sm:$0xff]
    %v254 = vld [vmem:[#allocation4 + $0x4d8] sm:$0xff]
    %v255 = vld [vmem:[#allocation4 + $0x4e0] sm:$0xff]
    %v256 = vld [vmem:[#allocation4 + $0x4e8] sm:$0xff]
    %v257 = vld [vmem:[#allocation4 + $0x4f0] sm:$0xff]
    %v258 = vld [vmem:[#allocation4 + $0x4f8] sm:$0xff]
    %v259 = vld [vmem:[#allocation4 + $0x500] sm:$0xff]
    %v260 = vld [vmem:[#allocation4 + $0x508] sm:$0xff]
    %v261 = vld [vmem:[#allocation4 + $0x510] sm:$0xff]
    %v262 = vld [vmem:[#allocation4 + $0x518] sm:$0xff]
    %v263 = vld [vmem:[#allocation4 + $0x520] sm:$0xff]
    %v264 = vld [vmem:[#allocation4 + $0x528] sm:$0xff]
    %v265 = vld [vmem:[#allocation4 + $0x530] sm:$0xff]
    %v266 = vld [vmem:[#allocation4 + $0x538] sm:$0xff]
    %v267 = vld [vmem:[#allocation4 + $0x540] sm:$0xff]
    %v268 = vld [vmem:[#allocation4 + $0x548] sm:$0xff]
    %v269 = vld [vmem:[#allocation4 + $0x550] sm:$0xff]
    %v270 = vld [vmem:[#allocation4 + $0x558] sm:$0xff]
    %v271 = vld [vmem:[#allocation4 + $0x560] sm:$0xff]
    %v272 = vld [vmem:[#allocation4 + $0x568] sm:$0xff]
    %v273 = vld [vmem:[#allocation4 + $0x570] sm:$0xff]
    %v274 = vld [vmem:[#allocation4 + $0x578] sm:$0xff]
    %v275 = vld [vmem:[#allocation4 + $0x580] sm:$0xff]
    %v276 = vld [vmem:[#allocation4 + $0x588] sm:$0xff]
    %v277 = vld [vmem:[#allocation4 + $0x590] sm:$0xff]
    %v278 = vld [vmem:[#allocation4 + $0x598] sm:$0xff]
    %v279 = vld [vmem:[#allocation4 + $0x5a0] sm:$0xff]
    %v280 = vld [vmem:[#allocation4 + $0x5a8] sm:$0xff]
    %v281 = vld [vmem:[#allocation4 + $0x5b0] sm:$0xff]
    %v282 = vld [vmem:[#allocation4 + $0x5b8] sm:$0xff]
    %v283 = vld [vmem:[#allocation4 + $0x5c0] sm:$0xff]
    %v284 = vld [vmem:[#allocation4 + $0x5c8] sm:$0xff]
    %v285 = vld [vmem:[#allocation4 + $0x5d0] sm:$0xff]
    %v286 = vld [vmem:[#allocation4 + $0x5d8] sm:$0xff]
    %v287 = vld [vmem:[#allocation4 + $0x5e0] sm:$0xff]
    %v288 = vld [vmem:[#allocation4 + $0x5e8] sm:$0xff]
    %v289 = vld [vmem:[#allocation4 + $0x5f0] sm:$0xff]
    %v290 = vld [vmem:[#allocation4 + $0x5f8] sm:$0xff]
    %v293 = vcombine.high %v97, %v97
    %v295 = vunpack.c.l.s4 1983009808
    %v296 = vunpack.c.0.s8 %v295
    %v297 = vlaneseq
    %v298 = vshrl.u32 %v297, 7
    %v299 = vsub.s32 %v296, %v298
    %v300 = vrot.slane %v97, %v299
    %v302 = vunpack.c.l.s4 1983009808
    %v303 = vunpack.c.0.s8 %v302
    %v304 = vlaneseq
    %v305 = vshrl.u32 %v304, 7
    %v306 = vsub.s32 %v303, %v305
    %v307 = vrot.slane %v293, %v306
    %v308 = vcombine.high %v300, %v300
    %v309 = vcombine.high %v307, %v307
    %v311 = vunpack.c.l.s4 1983009808
    %v312 = vunpack.c.0.s8 %v311
    %v313 = vlaneseq
    %v314 = vshrl.u32 %v313, 7
    %v315 = vsub.s32 %v312, %v314
    %v316 = vrot.slane %v98, %v315
    %v317 = vcombine.high %v316, %v316
    %v324 = vpack.c.bf16 %v300, %v300
    %v325 = vpack.c.bf16 %v308, %v308
    %v326 = vpack.c.bf16 %v307, %v307
    %v327 = vpack.c.bf16 %v309, %v309
    %v328 = vpack.c.bf16 %v316, %v316
    %v329 = vpack.c.bf16 %v317, %v317
    %v330 = vld [vmem:[%s6] sm:$0xf]
    %v332 = vlaneseq
    %v333 = vshrl.u32 %v332, 7
    %v334 = vsub.s32 0, %v333
    %v335 = vrot.slane %v330, %v334
    %v336 = vlaneseq
    %v337 = vshrl.u32 %v336, 7
    %v338 = vsub.s32 1, %v337
    %v339 = vrot.slane %v330, %v338
    %v340 = vlaneseq
    %v341 = vshrl.u32 %v340, 7
    %v342 = vsub.s32 2, %v341
    %v343 = vrot.slane %v330, %v342
    %v344 = vlaneseq
    %v345 = vshrl.u32 %v344, 7
    %v346 = vsub.s32 3, %v345
    %v347 = vrot.slane %v330, %v346
    %v544 = vunpack.c.l.b16 %v99
    %v545 = vunpack.c.h.b16 %v99
    %v546 = vunpack.c.l.b16 %v100
    %v547 = vunpack.c.h.b16 %v100
    %v548 = vunpack.c.l.b16 %v101
    %v549 = vunpack.c.h.b16 %v101
    %v550 = vunpack.c.l.b16 %v102
    %v551 = vunpack.c.h.b16 %v102
    %v552 = vunpack.c.l.b16 %v103
    %v553 = vunpack.c.h.b16 %v103
    %v554 = vunpack.c.l.b16 %v104
    %v555 = vunpack.c.h.b16 %v104
    %v556 = vunpack.c.l.b16 %v105
    %v557 = vunpack.c.h.b16 %v105
    %v558 = vunpack.c.l.b16 %v106
    %v559 = vunpack.c.h.b16 %v106
    %v560 = vunpack.c.l.b16 %v107
    %v561 = vunpack.c.h.b16 %v107
    %v562 = vunpack.c.l.b16 %v108
    %v563 = vunpack.c.h.b16 %v108
    %v564 = vunpack.c.l.b16 %v109
    %v565 = vunpack.c.h.b16 %v109
    %v566 = vunpack.c.l.b16 %v110
    %v567 = vunpack.c.h.b16 %v110
    %v568 = vunpack.c.l.b16 %v111
    %v569 = vunpack.c.h.b16 %v111
    %v570 = vunpack.c.l.b16 %v112
    %v571 = vunpack.c.h.b16 %v112
    %v572 = vunpack.c.l.b16 %v113
    %v573 = vunpack.c.h.b16 %v113
    %v574 = vunpack.c.l.b16 %v114
    %v575 = vunpack.c.h.b16 %v114
    %v576 = vunpack.c.l.b16 %v115
    %v577 = vunpack.c.h.b16 %v115
    %v578 = vunpack.c.l.b16 %v116
    %v579 = vunpack.c.h.b16 %v116
    %v580 = vunpack.c.l.b16 %v117
    %v581 = vunpack.c.h.b16 %v117
    %v582 = vunpack.c.l.b16 %v118
    %v583 = vunpack.c.h.b16 %v118
    %v584 = vunpack.c.l.b16 %v119
    %v585 = vunpack.c.h.b16 %v119
    %v586 = vunpack.c.l.b16 %v120
    %v587 = vunpack.c.h.b16 %v120
    %v588 = vunpack.c.l.b16 %v121
    %v589 = vunpack.c.h.b16 %v121
    %v590 = vunpack.c.l.b16 %v122
    %v591 = vunpack.c.h.b16 %v122
    %v592 = vunpack.c.l.b16 %v123
    %v593 = vunpack.c.h.b16 %v123
    %v594 = vunpack.c.l.b16 %v124
    %v595 = vunpack.c.h.b16 %v124
    %v596 = vunpack.c.l.b16 %v125
    %v597 = vunpack.c.h.b16 %v125
    %v598 = vunpack.c.l.b16 %v126
    %v599 = vunpack.c.h.b16 %v126
    %v600 = vunpack.c.l.b16 %v127
    %v601 = vunpack.c.h.b16 %v127
    %v602 = vunpack.c.l.b16 %v128
    %v603 = vunpack.c.h.b16 %v128
    %v604 = vunpack.c.l.b16 %v129
    %v605 = vunpack.c.h.b16 %v129
    %v606 = vunpack.c.l.b16 %v130
    %v607 = vunpack.c.h.b16 %v130
    %v608 = vunpack.c.l.b16 %v131
    %v609 = vunpack.c.h.b16 %v131
    %v610 = vunpack.c.l.b16 %v132
    %v611 = vunpack.c.h.b16 %v132
    %v612 = vunpack.c.l.b16 %v133
    %v613 = vunpack.c.h.b16 %v133
    %v614 = vunpack.c.l.b16 %v134
    %v615 = vunpack.c.h.b16 %v134
    %v616 = vunpack.c.l.b16 %v135
    %v617 = vunpack.c.h.b16 %v135
    %v618 = vunpack.c.l.b16 %v136
    %v619 = vunpack.c.h.b16 %v136
    %v620 = vunpack.c.l.b16 %v137
    %v621 = vunpack.c.h.b16 %v137
    %v622 = vunpack.c.l.b16 %v138
    %v623 = vunpack.c.h.b16 %v138
    %v624 = vunpack.c.l.b16 %v139
    %v625 = vunpack.c.h.b16 %v139
    %v626 = vunpack.c.l.b16 %v140
    %v627 = vunpack.c.h.b16 %v140
    %v628 = vunpack.c.l.b16 %v141
    %v629 = vunpack.c.h.b16 %v141
    %v630 = vunpack.c.l.b16 %v142
    %v631 = vunpack.c.h.b16 %v142
    %v632 = vunpack.c.l.b16 %v143
    %v633 = vunpack.c.h.b16 %v143
    %v634 = vunpack.c.l.b16 %v144
    %v635 = vunpack.c.h.b16 %v144
    %v636 = vunpack.c.l.b16 %v145
    %v637 = vunpack.c.h.b16 %v145
    %v638 = vunpack.c.l.b16 %v146
    %v639 = vunpack.c.h.b16 %v146
    %v640 = vunpack.c.l.b16 %v147
    %v641 = vunpack.c.h.b16 %v147
    %v642 = vunpack.c.l.b16 %v148
    %v643 = vunpack.c.h.b16 %v148
    %v644 = vunpack.c.l.b16 %v149
    %v645 = vunpack.c.h.b16 %v149
    %v646 = vunpack.c.l.b16 %v150
    %v647 = vunpack.c.h.b16 %v150
    %v648 = vunpack.c.l.b16 %v151
    %v649 = vunpack.c.h.b16 %v151
    %v650 = vunpack.c.l.b16 %v152
    %v651 = vunpack.c.h.b16 %v152
    %v652 = vunpack.c.l.b16 %v153
    %v653 = vunpack.c.h.b16 %v153
    %v654 = vunpack.c.l.b16 %v154
    %v655 = vunpack.c.h.b16 %v154
    %v656 = vunpack.c.l.b16 %v155
    %v657 = vunpack.c.h.b16 %v155
    %v658 = vunpack.c.l.b16 %v156
    %v659 = vunpack.c.h.b16 %v156
    %v660 = vunpack.c.l.b16 %v157
    %v661 = vunpack.c.h.b16 %v157
    %v662 = vunpack.c.l.b16 %v158
    %v663 = vunpack.c.h.b16 %v158
    %v664 = vunpack.c.l.b16 %v159
    %v665 = vunpack.c.h.b16 %v159
    %v666 = vunpack.c.l.b16 %v160
    %v667 = vunpack.c.h.b16 %v160
    %v668 = vunpack.c.l.b16 %v161
    %v669 = vunpack.c.h.b16 %v161
    %v670 = vunpack.c.l.b16 %v162
    %v671 = vunpack.c.h.b16 %v162
    %v672 = vunpack.c.l.b16 %v163
    %v673 = vunpack.c.h.b16 %v163
    %v674 = vunpack.c.l.b16 %v164
    %v675 = vunpack.c.h.b16 %v164
    %v676 = vunpack.c.l.b16 %v165
    %v677 = vunpack.c.h.b16 %v165
    %v678 = vunpack.c.l.b16 %v166
    %v679 = vunpack.c.h.b16 %v166
    %v680 = vunpack.c.l.b16 %v167
    %v681 = vunpack.c.h.b16 %v167
    %v682 = vunpack.c.l.b16 %v168
    %v683 = vunpack.c.h.b16 %v168
    %v684 = vunpack.c.l.b16 %v169
    %v685 = vunpack.c.h.b16 %v169
    %v686 = vunpack.c.l.b16 %v170
    %v687 = vunpack.c.h.b16 %v170
    %v688 = vunpack.c.l.b16 %v171
    %v689 = vunpack.c.h.b16 %v171
    %v690 = vunpack.c.l.b16 %v172
    %v691 = vunpack.c.h.b16 %v172
    %v692 = vunpack.c.l.b16 %v173
    %v693 = vunpack.c.h.b16 %v173
    %v694 = vunpack.c.l.b16 %v174
    %v695 = vunpack.c.h.b16 %v174
    %v696 = vunpack.c.l.b16 %v175
    %v697 = vunpack.c.h.b16 %v175
    %v698 = vunpack.c.l.b16 %v176
    %v699 = vunpack.c.h.b16 %v176
    %v700 = vunpack.c.l.b16 %v177
    %v701 = vunpack.c.h.b16 %v177
    %v702 = vunpack.c.l.b16 %v178
    %v703 = vunpack.c.h.b16 %v178
    %v704 = vunpack.c.l.b16 %v179
    %v705 = vunpack.c.h.b16 %v179
    %v706 = vunpack.c.l.b16 %v180
    %v707 = vunpack.c.h.b16 %v180
    %v708 = vunpack.c.l.b16 %v181
    %v709 = vunpack.c.h.b16 %v181
    %v710 = vunpack.c.l.b16 %v182
    %v711 = vunpack.c.h.b16 %v182
    %v712 = vunpack.c.l.b16 %v183
    %v713 = vunpack.c.h.b16 %v183
    %v714 = vunpack.c.l.b16 %v184
    %v715 = vunpack.c.h.b16 %v184
    %v716 = vunpack.c.l.b16 %v185
    %v717 = vunpack.c.h.b16 %v185
    %v718 = vunpack.c.l.b16 %v186
    %v719 = vunpack.c.h.b16 %v186
    %v720 = vunpack.c.l.b16 %v187
    %v721 = vunpack.c.h.b16 %v187
    %v722 = vunpack.c.l.b16 %v188
    %v723 = vunpack.c.h.b16 %v188
    %v724 = vunpack.c.l.b16 %v189
    %v725 = vunpack.c.h.b16 %v189
    %v726 = vunpack.c.l.b16 %v190
    %v727 = vunpack.c.h.b16 %v190
    %v728 = vunpack.c.l.b16 %v191
    %v729 = vunpack.c.h.b16 %v191
    %v730 = vunpack.c.l.b16 %v192
    %v731 = vunpack.c.h.b16 %v192
    %v732 = vunpack.c.l.b16 %v193
    %v733 = vunpack.c.h.b16 %v193
    %v734 = vunpack.c.l.b16 %v194
    %v735 = vunpack.c.h.b16 %v194
    %v736 = vunpack.c.l.b16 %v195
    %v737 = vunpack.c.h.b16 %v195
    %v738 = vunpack.c.l.b16 %v196
    %v739 = vunpack.c.h.b16 %v196
    %v740 = vunpack.c.l.b16 %v197
    %v741 = vunpack.c.h.b16 %v197
    %v742 = vunpack.c.l.b16 %v198
    %v743 = vunpack.c.h.b16 %v198
    %v744 = vunpack.c.l.b16 %v199
    %v745 = vunpack.c.h.b16 %v199
    %v746 = vunpack.c.l.b16 %v200
    %v747 = vunpack.c.h.b16 %v200
    %v748 = vunpack.c.l.b16 %v201
    %v749 = vunpack.c.h.b16 %v201
    %v750 = vunpack.c.l.b16 %v202
    %v751 = vunpack.c.h.b16 %v202
    %v752 = vunpack.c.l.b16 %v203
    %v753 = vunpack.c.h.b16 %v203
    %v754 = vunpack.c.l.b16 %v204
    %v755 = vunpack.c.h.b16 %v204
    %v756 = vunpack.c.l.b16 %v205
    %v757 = vunpack.c.h.b16 %v205
    %v758 = vunpack.c.l.b16 %v206
    %v759 = vunpack.c.h.b16 %v206
    %v760 = vunpack.c.l.b16 %v207
    %v761 = vunpack.c.h.b16 %v207
    %v762 = vunpack.c.l.b16 %v208
    %v763 = vunpack.c.h.b16 %v208
    %v764 = vunpack.c.l.b16 %v209
    %v765 = vunpack.c.h.b16 %v209
    %v766 = vunpack.c.l.b16 %v210
    %v767 = vunpack.c.h.b16 %v210
    %v768 = vunpack.c.l.b16 %v211
    %v769 = vunpack.c.h.b16 %v211
    %v770 = vunpack.c.l.b16 %v212
    %v771 = vunpack.c.h.b16 %v212
    %v772 = vunpack.c.l.b16 %v213
    %v773 = vunpack.c.h.b16 %v213
    %v774 = vunpack.c.l.b16 %v214
    %v775 = vunpack.c.h.b16 %v214
    %v776 = vunpack.c.l.b16 %v215
    %v777 = vunpack.c.h.b16 %v215
    %v778 = vunpack.c.l.b16 %v216
    %v779 = vunpack.c.h.b16 %v216
    %v780 = vunpack.c.l.b16 %v217
    %v781 = vunpack.c.h.b16 %v217
    %v782 = vunpack.c.l.b16 %v218
    %v783 = vunpack.c.h.b16 %v218
    %v784 = vunpack.c.l.b16 %v219
    %v785 = vunpack.c.h.b16 %v219
    %v786 = vunpack.c.l.b16 %v220
    %v787 = vunpack.c.h.b16 %v220
    %v788 = vunpack.c.l.b16 %v221
    %v789 = vunpack.c.h.b16 %v221
    %v790 = vunpack.c.l.b16 %v222
    %v791 = vunpack.c.h.b16 %v222
    %v792 = vunpack.c.l.b16 %v223
    %v793 = vunpack.c.h.b16 %v223
    %v794 = vunpack.c.l.b16 %v224
    %v795 = vunpack.c.h.b16 %v224
    %v796 = vunpack.c.l.b16 %v225
    %v797 = vunpack.c.h.b16 %v225
    %v798 = vunpack.c.l.b16 %v226
    %v799 = vunpack.c.h.b16 %v226
    %v800 = vunpack.c.l.b16 %v227
    %v801 = vunpack.c.h.b16 %v227
    %v802 = vunpack.c.l.b16 %v228
    %v803 = vunpack.c.h.b16 %v228
    %v804 = vunpack.c.l.b16 %v229
    %v805 = vunpack.c.h.b16 %v229
    %v806 = vunpack.c.l.b16 %v230
    %v807 = vunpack.c.h.b16 %v230
    %v808 = vunpack.c.l.b16 %v231
    %v809 = vunpack.c.h.b16 %v231
    %v810 = vunpack.c.l.b16 %v232
    %v811 = vunpack.c.h.b16 %v232
    %v812 = vunpack.c.l.b16 %v233
    %v813 = vunpack.c.h.b16 %v233
    %v814 = vunpack.c.l.b16 %v234
    %v815 = vunpack.c.h.b16 %v234
    %v816 = vunpack.c.l.b16 %v235
    %v817 = vunpack.c.h.b16 %v235
    %v818 = vunpack.c.l.b16 %v236
    %v819 = vunpack.c.h.b16 %v236
    %v820 = vunpack.c.l.b16 %v237
    %v821 = vunpack.c.h.b16 %v237
    %v822 = vunpack.c.l.b16 %v238
    %v823 = vunpack.c.h.b16 %v238
    %v824 = vunpack.c.l.b16 %v239
    %v825 = vunpack.c.h.b16 %v239
    %v826 = vunpack.c.l.b16 %v240
    %v827 = vunpack.c.h.b16 %v240
    %v828 = vunpack.c.l.b16 %v241
    %v829 = vunpack.c.h.b16 %v241
    %v830 = vunpack.c.l.b16 %v242
    %v831 = vunpack.c.h.b16 %v242
    %v832 = vunpack.c.l.b16 %v243
    %v833 = vunpack.c.h.b16 %v243
    %v834 = vunpack.c.l.b16 %v244
    %v835 = vunpack.c.h.b16 %v244
    %v836 = vunpack.c.l.b16 %v245
    %v837 = vunpack.c.h.b16 %v245
    %v838 = vunpack.c.l.b16 %v246
    %v839 = vunpack.c.h.b16 %v246
    %v840 = vunpack.c.l.b16 %v247
    %v841 = vunpack.c.h.b16 %v247
    %v842 = vunpack.c.l.b16 %v248
    %v843 = vunpack.c.h.b16 %v248
    %v844 = vunpack.c.l.b16 %v249
    %v845 = vunpack.c.h.b16 %v249
    %v846 = vunpack.c.l.b16 %v250
    %v847 = vunpack.c.h.b16 %v250
    %v848 = vunpack.c.l.b16 %v251
    %v849 = vunpack.c.h.b16 %v251
    %v850 = vunpack.c.l.b16 %v252
    %v851 = vunpack.c.h.b16 %v252
    %v852 = vunpack.c.l.b16 %v253
    %v853 = vunpack.c.h.b16 %v253
    %v854 = vunpack.c.l.b16 %v254
    %v855 = vunpack.c.h.b16 %v254
    %v856 = vunpack.c.l.b16 %v255
    %v857 = vunpack.c.h.b16 %v255
    %v858 = vunpack.c.l.b16 %v256
    %v859 = vunpack.c.h.b16 %v256
    %v860 = vunpack.c.l.b16 %v257
    %v861 = vunpack.c.h.b16 %v257
    %v862 = vunpack.c.l.b16 %v258
    %v863 = vunpack.c.h.b16 %v258
    %v864 = vunpack.c.l.b16 %v259
    %v865 = vunpack.c.h.b16 %v259
    %v866 = vunpack.c.l.b16 %v260
    %v867 = vunpack.c.h.b16 %v260
    %v868 = vunpack.c.l.b16 %v261
    %v869 = vunpack.c.h.b16 %v261
    %v870 = vunpack.c.l.b16 %v262
    %v871 = vunpack.c.h.b16 %v262
    %v872 = vunpack.c.l.b16 %v263
    %v873 = vunpack.c.h.b16 %v263
    %v874 = vunpack.c.l.b16 %v264
    %v875 = vunpack.c.h.b16 %v264
    %v876 = vunpack.c.l.b16 %v265
    %v877 = vunpack.c.h.b16 %v265
    %v878 = vunpack.c.l.b16 %v266
    %v879 = vunpack.c.h.b16 %v266
    %v880 = vunpack.c.l.b16 %v267
    %v881 = vunpack.c.h.b16 %v267
    %v882 = vunpack.c.l.b16 %v268
    %v883 = vunpack.c.h.b16 %v268
    %v884 = vunpack.c.l.b16 %v269
    %v885 = vunpack.c.h.b16 %v269
    %v886 = vunpack.c.l.b16 %v270
    %v887 = vunpack.c.h.b16 %v270
    %v888 = vunpack.c.l.b16 %v271
    %v889 = vunpack.c.h.b16 %v271
    %v890 = vunpack.c.l.b16 %v272
    %v891 = vunpack.c.h.b16 %v272
    %v892 = vunpack.c.l.b16 %v273
    %v893 = vunpack.c.h.b16 %v273
    %v894 = vunpack.c.l.b16 %v274
    %v895 = vunpack.c.h.b16 %v274
    %v896 = vunpack.c.l.b16 %v275
    %v897 = vunpack.c.h.b16 %v275
    %v898 = vunpack.c.l.b16 %v276
    %v899 = vunpack.c.h.b16 %v276
    %v900 = vunpack.c.l.b16 %v277
    %v901 = vunpack.c.h.b16 %v277
    %v902 = vunpack.c.l.b16 %v278
    %v903 = vunpack.c.h.b16 %v278
    %v904 = vunpack.c.l.b16 %v279
    %v905 = vunpack.c.h.b16 %v279
    %v906 = vunpack.c.l.b16 %v280
    %v907 = vunpack.c.h.b16 %v280
    %v908 = vunpack.c.l.b16 %v281
    %v909 = vunpack.c.h.b16 %v281
    %v910 = vunpack.c.l.b16 %v282
    %v911 = vunpack.c.h.b16 %v282
    %v912 = vunpack.c.l.b16 %v283
    %v913 = vunpack.c.h.b16 %v283
    %v914 = vunpack.c.l.b16 %v284
    %v915 = vunpack.c.h.b16 %v284
    %v916 = vunpack.c.l.b16 %v285
    %v917 = vunpack.c.h.b16 %v285
    %v918 = vunpack.c.l.b16 %v286
    %v919 = vunpack.c.h.b16 %v286
    %v920 = vunpack.c.l.b16 %v287
    %v921 = vunpack.c.h.b16 %v287
    %v922 = vunpack.c.l.b16 %v288
    %v923 = vunpack.c.h.b16 %v288
    %v924 = vunpack.c.l.b16 %v289
    %v925 = vunpack.c.h.b16 %v289
    %v926 = vunpack.c.l.b16 %v290
    %v927 = vunpack.c.h.b16 %v290
    %v928 = vpack.c.b16 %v548, %v544
    %v929 = vpack.c.b16 %v549, %v545
    %v930 = vpack.c.b16 %v550, %v546
    %v931 = vpack.c.b16 %v551, %v547
    %v932 = vpack.c.b16 %v556, %v552
    %v933 = vpack.c.b16 %v557, %v553
    %v934 = vpack.c.b16 %v558, %v554
    %v935 = vpack.c.b16 %v559, %v555
    %v936 = vpack.c.b16 %v564, %v560
    %v937 = vpack.c.b16 %v565, %v561
    %v938 = vpack.c.b16 %v566, %v562
    %v939 = vpack.c.b16 %v567, %v563
    %v940 = vpack.c.b16 %v572, %v568
    %v941 = vpack.c.b16 %v573, %v569
    %v942 = vpack.c.b16 %v574, %v570
    %v943 = vpack.c.b16 %v575, %v571
    %v944 = vpack.c.b16 %v580, %v576
    %v945 = vpack.c.b16 %v581, %v577
    %v946 = vpack.c.b16 %v582, %v578
    %v947 = vpack.c.b16 %v583, %v579
    %v948 = vpack.c.b16 %v588, %v584
    %v949 = vpack.c.b16 %v589, %v585
    %v950 = vpack.c.b16 %v590, %v586
    %v951 = vpack.c.b16 %v591, %v587
    %v952 = vpack.c.b16 %v596, %v592
    %v953 = vpack.c.b16 %v597, %v593
    %v954 = vpack.c.b16 %v598, %v594
    %v955 = vpack.c.b16 %v599, %v595
    %v956 = vpack.c.b16 %v604, %v600
    %v957 = vpack.c.b16 %v605, %v601
    %v958 = vpack.c.b16 %v606, %v602
    %v959 = vpack.c.b16 %v607, %v603
    %v960 = vpack.c.b16 %v612, %v608
    %v961 = vpack.c.b16 %v613, %v609
    %v962 = vpack.c.b16 %v614, %v610
    %v963 = vpack.c.b16 %v615, %v611
    %v964 = vpack.c.b16 %v620, %v616
    %v965 = vpack.c.b16 %v621, %v617
    %v966 = vpack.c.b16 %v622, %v618
    %v967 = vpack.c.b16 %v623, %v619
    %v968 = vpack.c.b16 %v628, %v624
    %v969 = vpack.c.b16 %v629, %v625
    %v970 = vpack.c.b16 %v630, %v626
    %v971 = vpack.c.b16 %v631, %v627
    %v972 = vpack.c.b16 %v636, %v632
    %v973 = vpack.c.b16 %v637, %v633
    %v974 = vpack.c.b16 %v638, %v634
    %v975 = vpack.c.b16 %v639, %v635
    %v976 = vpack.c.b16 %v644, %v640
    %v977 = vpack.c.b16 %v645, %v641
    %v978 = vpack.c.b16 %v646, %v642
    %v979 = vpack.c.b16 %v647, %v643
    %v980 = vpack.c.b16 %v652, %v648
    %v981 = vpack.c.b16 %v653, %v649
    %v982 = vpack.c.b16 %v654, %v650
    %v983 = vpack.c.b16 %v655, %v651
    %v984 = vpack.c.b16 %v660, %v656
    %v985 = vpack.c.b16 %v661, %v657
    %v986 = vpack.c.b16 %v662, %v658
    %v987 = vpack.c.b16 %v663, %v659
    %v988 = vpack.c.b16 %v668, %v664
    %v989 = vpack.c.b16 %v669, %v665
    %v990 = vpack.c.b16 %v670, %v666
    %v991 = vpack.c.b16 %v671, %v667
    %v992 = vpack.c.b16 %v676, %v672
    %v993 = vpack.c.b16 %v677, %v673
    %v994 = vpack.c.b16 %v678, %v674
    %v995 = vpack.c.b16 %v679, %v675
    %v996 = vpack.c.b16 %v684, %v680
    %v997 = vpack.c.b16 %v685, %v681
    %v998 = vpack.c.b16 %v686, %v682
    %v999 = vpack.c.b16 %v687, %v683
    %v1000 = vpack.c.b16 %v692, %v688
    %v1001 = vpack.c.b16 %v693, %v689
    %v1002 = vpack.c.b16 %v694, %v690
    %v1003 = vpack.c.b16 %v695, %v691
    %v1004 = vpack.c.b16 %v700, %v696
    %v1005 = vpack.c.b16 %v701, %v697
    %v1006 = vpack.c.b16 %v702, %v698
    %v1007 = vpack.c.b16 %v703, %v699
    %v1008 = vpack.c.b16 %v708, %v704
    %v1009 = vpack.c.b16 %v709, %v705
    %v1010 = vpack.c.b16 %v710, %v706
    %v1011 = vpack.c.b16 %v711, %v707
    %v1012 = vpack.c.b16 %v716, %v712
    %v1013 = vpack.c.b16 %v717, %v713
    %v1014 = vpack.c.b16 %v718, %v714
    %v1015 = vpack.c.b16 %v719, %v715
    %v1016 = vpack.c.b16 %v724, %v720
    %v1017 = vpack.c.b16 %v725, %v721
    %v1018 = vpack.c.b16 %v726, %v722
    %v1019 = vpack.c.b16 %v727, %v723
    %v1020 = vpack.c.b16 %v732, %v728
    %v1021 = vpack.c.b16 %v733, %v729
    %v1022 = vpack.c.b16 %v734, %v730
    %v1023 = vpack.c.b16 %v735, %v731
    %v1024 = vpack.c.b16 %v740, %v736
    %v1025 = vpack.c.b16 %v741, %v737
    %v1026 = vpack.c.b16 %v742, %v738
    %v1027 = vpack.c.b16 %v743, %v739
    %v1028 = vpack.c.b16 %v748, %v744
    %v1029 = vpack.c.b16 %v749, %v745
    %v1030 = vpack.c.b16 %v750, %v746
    %v1031 = vpack.c.b16 %v751, %v747
    %v1032 = vpack.c.b16 %v756, %v752
    %v1033 = vpack.c.b16 %v757, %v753
    %v1034 = vpack.c.b16 %v758, %v754
    %v1035 = vpack.c.b16 %v759, %v755
    %v1036 = vpack.c.b16 %v764, %v760
    %v1037 = vpack.c.b16 %v765, %v761
    %v1038 = vpack.c.b16 %v766, %v762
    %v1039 = vpack.c.b16 %v767, %v763
    %v1040 = vpack.c.b16 %v772, %v768
    %v1041 = vpack.c.b16 %v773, %v769
    %v1042 = vpack.c.b16 %v774, %v770
    %v1043 = vpack.c.b16 %v775, %v771
    %v1044 = vpack.c.b16 %v780, %v776
    %v1045 = vpack.c.b16 %v781, %v777
    %v1046 = vpack.c.b16 %v782, %v778
    %v1047 = vpack.c.b16 %v783, %v779
    %v1048 = vpack.c.b16 %v788, %v784
    %v1049 = vpack.c.b16 %v789, %v785
    %v1050 = vpack.c.b16 %v790, %v786
    %v1051 = vpack.c.b16 %v791, %v787
    %v1052 = vpack.c.b16 %v796, %v792
    %v1053 = vpack.c.b16 %v797, %v793
    %v1054 = vpack.c.b16 %v798, %v794
    %v1055 = vpack.c.b16 %v799, %v795
    %v1056 = vpack.c.b16 %v804, %v800
    %v1057 = vpack.c.b16 %v805, %v801
    %v1058 = vpack.c.b16 %v806, %v802
    %v1059 = vpack.c.b16 %v807, %v803
    %v1060 = vpack.c.b16 %v812, %v808
    %v1061 = vpack.c.b16 %v813, %v809
    %v1062 = vpack.c.b16 %v814, %v810
    %v1063 = vpack.c.b16 %v815, %v811
    %v1064 = vpack.c.b16 %v820, %v816
    %v1065 = vpack.c.b16 %v821, %v817
    %v1066 = vpack.c.b16 %v822, %v818
    %v1067 = vpack.c.b16 %v823, %v819
    %v1068 = vpack.c.b16 %v828, %v824
    %v1069 = vpack.c.b16 %v829, %v825
    %v1070 = vpack.c.b16 %v830, %v826
    %v1071 = vpack.c.b16 %v831, %v827
    %v1072 = vpack.c.b16 %v836, %v832
    %v1073 = vpack.c.b16 %v837, %v833
    %v1074 = vpack.c.b16 %v838, %v834
    %v1075 = vpack.c.b16 %v839, %v835
    %v1076 = vpack.c.b16 %v844, %v840
    %v1077 = vpack.c.b16 %v845, %v841
    %v1078 = vpack.c.b16 %v846, %v842
    %v1079 = vpack.c.b16 %v847, %v843
    %v1080 = vpack.c.b16 %v852, %v848
    %v1081 = vpack.c.b16 %v853, %v849
    %v1082 = vpack.c.b16 %v854, %v850
    %v1083 = vpack.c.b16 %v855, %v851
    %v1084 = vpack.c.b16 %v860, %v856
    %v1085 = vpack.c.b16 %v861, %v857
    %v1086 = vpack.c.b16 %v862, %v858
    %v1087 = vpack.c.b16 %v863, %v859
    %v1088 = vpack.c.b16 %v868, %v864
    %v1089 = vpack.c.b16 %v869, %v865
    %v1090 = vpack.c.b16 %v870, %v866
    %v1091 = vpack.c.b16 %v871, %v867
    %v1092 = vpack.c.b16 %v876, %v872
    %v1093 = vpack.c.b16 %v877, %v873
    %v1094 = vpack.c.b16 %v878, %v874
    %v1095 = vpack.c.b16 %v879, %v875
    %v1096 = vpack.c.b16 %v884, %v880
    %v1097 = vpack.c.b16 %v885, %v881
    %v1098 = vpack.c.b16 %v886, %v882
    %v1099 = vpack.c.b16 %v887, %v883
    %v1100 = vpack.c.b16 %v892, %v888
    %v1101 = vpack.c.b16 %v893, %v889
    %v1102 = vpack.c.b16 %v894, %v890
    %v1103 = vpack.c.b16 %v895, %v891
    %v1104 = vpack.c.b16 %v900, %v896
    %v1105 = vpack.c.b16 %v901, %v897
    %v1106 = vpack.c.b16 %v902, %v898
    %v1107 = vpack.c.b16 %v903, %v899
    %v1108 = vpack.c.b16 %v908, %v904
    %v1109 = vpack.c.b16 %v909, %v905
    %v1110 = vpack.c.b16 %v910, %v906
    %v1111 = vpack.c.b16 %v911, %v907
    %v1112 = vpack.c.b16 %v916, %v912
    %v1113 = vpack.c.b16 %v917, %v913
    %v1114 = vpack.c.b16 %v918, %v914
    %v1115 = vpack.c.b16 %v919, %v915
    %v1116 = vpack.c.b16 %v924, %v920
    %v1117 = vpack.c.b16 %v925, %v921
    %v1118 = vpack.c.b16 %v926, %v922
    %v1119 = vpack.c.b16 %v927, %v923
    %1312 = vmatprep.subr.bf16.mxu0 %v957
    %1313 = vmatpush1.bf16.msra.mxu0 %v956
    %1314 = vmatprep.subr.bf16.mxu0 %v953
    %1315 = vmatpush1.bf16.msra.mxu0 %v952
    %1316 = vmatprep.subr.bf16.mxu0 %v949
    %1317 = vmatpush1.bf16.msra.mxu0 %v948
    %1318 = vmatprep.subr.bf16.mxu0 %v945
    %1319 = vmatpush1.bf16.msra.mxu0 %v944
    %1320 = vmatprep.subr.bf16.mxu0 %v941
    %1321 = vmatpush1.bf16.msra.mxu0 %v940
    %1322 = vmatprep.subr.bf16.mxu0 %v937
    %1323 = vmatpush1.bf16.msra.mxu0 %v936
    %1324 = vmatprep.subr.bf16.mxu0 %v933
    %1325 = vmatpush1.bf16.msra.mxu0 %v932
    %1326 = vmatprep.subr.bf16.mxu0 %v929
    %1327 = vmatpush1.bf16.msra.mxu0 %v928
    %1328 = vmatprep.subr.bf16.mxu0 %v989
    %1329 = vmatpush2.bf16.msra.mxu0 %v988
    %1330 = vmatprep.subr.bf16.mxu0 %v985
    %1331 = vmatpush2.bf16.msra.mxu0 %v984
    %1332 = vmatprep.subr.bf16.mxu0 %v981
    %1333 = vmatpush2.bf16.msra.mxu0 %v980
    %1334 = vmatprep.subr.bf16.mxu0 %v977
    %1335 = vmatpush2.bf16.msra.mxu0 %v976
    %1336 = vmatprep.subr.bf16.mxu0 %v973
    %1337 = vmatpush2.bf16.msra.mxu0 %v972
    %1338 = vmatprep.subr.bf16.mxu0 %v969
    %1339 = vmatpush2.bf16.msra.mxu0 %v968
    %1340 = vmatprep.subr.bf16.mxu0 %v965
    %1341 = vmatpush2.bf16.msra.mxu0 %v964
    %1342 = vmatprep.subr.bf16.mxu0 %v961
    %1343 = vmatpush2.bf16.msra.mxu0 %v960
    %1344 = vmatprep.mubr.bf16.mxu0 %v325
    %1345 = vmatmul.mubr.bf16.gmra.mxu0 %v324
    %v1346 = vpop.f32.mrf.mxu0
    %v1347 = vadd.f32 %v335, %v1346
    %v1348 = vpop.f32.mrf.mxu0
    %v1349 = vadd.f32 %v339, %v1348
    %v1350 = vpop.f32.mrf.mxu0
    %v1351 = vpop.f32.mrf.mxu0
    %1352 = vdwg.mxu0
    %1353 = vmatprep.subr.bf16.mxu0 %v1021
    %1354 = vmatpush1.bf16.msra.mxu0 %v1020
    %1355 = vmatprep.subr.bf16.mxu0 %v1017
    %1356 = vmatpush1.bf16.msra.mxu0 %v1016
    %1357 = vmatprep.subr.bf16.mxu0 %v1013
    %1358 = vmatpush1.bf16.msra.mxu0 %v1012
    %1359 = vmatprep.subr.bf16.mxu0 %v1009
    %1360 = vmatpush1.bf16.msra.mxu0 %v1008
    %1361 = vmatprep.subr.bf16.mxu0 %v1005
    %1362 = vmatpush1.bf16.msra.mxu0 %v1004
    %1363 = vmatprep.subr.bf16.mxu0 %v1001
    %1364 = vmatpush1.bf16.msra.mxu0 %v1000
    %1365 = vmatprep.subr.bf16.mxu0 %v997
    %1366 = vmatpush1.bf16.msra.mxu0 %v996
    %1367 = vmatprep.subr.bf16.mxu0 %v993
    %1368 = vmatpush1.bf16.msra.mxu0 %v992
    %1369 = vmatprep.subr.bf16.mxu0 %v1053
    %1370 = vmatpush2.bf16.msra.mxu0 %v1052
    %1371 = vmatprep.subr.bf16.mxu0 %v1049
    %1372 = vmatpush2.bf16.msra.mxu0 %v1048
    %1373 = vmatprep.subr.bf16.mxu0 %v1045
    %1374 = vmatpush2.bf16.msra.mxu0 %v1044
    %1375 = vmatprep.subr.bf16.mxu0 %v1041
    %1376 = vmatpush2.bf16.msra.mxu0 %v1040
    %1377 = vmatprep.subr.bf16.mxu0 %v1037
    %1378 = vmatpush2.bf16.msra.mxu0 %v1036
    %1379 = vmatprep.subr.bf16.mxu0 %v1033
    %1380 = vmatpush2.bf16.msra.mxu0 %v1032
    %1381 = vmatprep.subr.bf16.mxu0 %v1029
    %1382 = vmatpush2.bf16.msra.mxu0 %v1028
    %1383 = vmatprep.subr.bf16.mxu0 %v1025
    %1384 = vmatpush2.bf16.msra.mxu0 %v1024
    %1385 = vmatprep.mubr.bf16.mxu0 %v327
    %1386 = vmatmul.mubr.bf16.gmra.mxu0 %v326
    %v1387 = vpop.f32.mrf.mxu0
    %v1388 = vadd.f32 %v1347, %v1387
    %v1389 = vpop.f32.mrf.mxu0
    %v1390 = vadd.f32 %v1349, %v1389
    %v1391 = vpop.f32.mrf.mxu0
    %v1392 = vpop.f32.mrf.mxu0
    %1393 = vdwg.mxu0
    %1394 = vmatprep.subr.bf16.mxu0 %v1085
    %1395 = vmatpush1.bf16.msra.mxu0 %v1084
    %1396 = vmatprep.subr.bf16.mxu0 %v1081
    %1397 = vmatpush1.bf16.msra.mxu0 %v1080
    %1398 = vmatprep.subr.bf16.mxu0 %v1077
    %1399 = vmatpush1.bf16.msra.mxu0 %v1076
    %1400 = vmatprep.subr.bf16.mxu0 %v1073
    %1401 = vmatpush1.bf16.msra.mxu0 %v1072
    %1402 = vmatprep.subr.bf16.mxu0 %v1069
    %1403 = vmatpush1.bf16.msra.mxu0 %v1068
    %1404 = vmatprep.subr.bf16.mxu0 %v1065
    %1405 = vmatpush1.bf16.msra.mxu0 %v1064
    %1406 = vmatprep.subr.bf16.mxu0 %v1061
    %1407 = vmatpush1.bf16.msra.mxu0 %v1060
    %1408 = vmatprep.subr.bf16.mxu0 %v1057
    %1409 = vmatpush1.bf16.msra.mxu0 %v1056
    %1410 = vmatprep.subr.bf16.mxu0 %v1117
    %1411 = vmatpush2.bf16.msra.mxu0 %v1116
    %1412 = vmatprep.subr.bf16.mxu0 %v1113
    %1413 = vmatpush2.bf16.msra.mxu0 %v1112
    %1414 = vmatprep.subr.bf16.mxu0 %v1109
    %1415 = vmatpush2.bf16.msra.mxu0 %v1108
    %1416 = vmatprep.subr.bf16.mxu0 %v1105
    %1417 = vmatpush2.bf16.msra.mxu0 %v1104
    %1418 = vmatprep.subr.bf16.mxu0 %v1101
    %1419 = vmatpush2.bf16.msra.mxu0 %v1100
    %1420 = vmatprep.subr.bf16.mxu0 %v1097
    %1421 = vmatpush2.bf16.msra.mxu0 %v1096
    %1422 = vmatprep.subr.bf16.mxu0 %v1093
    %1423 = vmatpush2.bf16.msra.mxu0 %v1092
    %1424 = vmatprep.subr.bf16.mxu0 %v1089
    %1425 = vmatpush2.bf16.msra.mxu0 %v1088
    %1426 = vmatprep.mubr.bf16.mxu0 %v329
    %1427 = vmatmul.mubr.bf16.gmra.mxu0 %v328
    %v1428 = vpop.f32.mrf.mxu0
    %v1429 = vadd.f32 %v1388, %v1428
    %v1430 = vpop.f32.mrf.mxu0
    %v1431 = vadd.f32 %v1390, %v1430
    %v1432 = vpop.f32.mrf.mxu0
    %v1433 = vpop.f32.mrf.mxu0
    %1434 = vdwg.mxu0
    %1435 = vmatprep.subr.bf16.mxu0 %v959
    %1436 = vmatpush1.bf16.msra.mxu0 %v958
    %1437 = vmatprep.subr.bf16.mxu0 %v955
    %1438 = vmatpush1.bf16.msra.mxu0 %v954
    %1439 = vmatprep.subr.bf16.mxu0 %v951
    %1440 = vmatpush1.bf16.msra.mxu0 %v950
    %1441 = vmatprep.subr.bf16.mxu0 %v947
    %1442 = vmatpush1.bf16.msra.mxu0 %v946
    %1443 = vmatprep.subr.bf16.mxu0 %v943
    %1444 = vmatpush1.bf16.msra.mxu0 %v942
    %1445 = vmatprep.subr.bf16.mxu0 %v939
    %1446 = vmatpush1.bf16.msra.mxu0 %v938
    %1447 = vmatprep.subr.bf16.mxu0 %v935
    %1448 = vmatpush1.bf16.msra.mxu0 %v934
    %1449 = vmatprep.subr.bf16.mxu0 %v931
    %1450 = vmatpush1.bf16.msra.mxu0 %v930
    %1451 = vmatprep.subr.bf16.mxu0 %v991
    %1452 = vmatpush2.bf16.msra.mxu0 %v990
    %1453 = vmatprep.subr.bf16.mxu0 %v987
    %1454 = vmatpush2.bf16.msra.mxu0 %v986
    %1455 = vmatprep.subr.bf16.mxu0 %v983
    %1456 = vmatpush2.bf16.msra.mxu0 %v982
    %1457 = vmatprep.subr.bf16.mxu0 %v979
    %1458 = vmatpush2.bf16.msra.mxu0 %v978
    %1459 = vmatprep.subr.bf16.mxu0 %v975
    %1460 = vmatpush2.bf16.msra.mxu0 %v974
    %1461 = vmatprep.subr.bf16.mxu0 %v971
    %1462 = vmatpush2.bf16.msra.mxu0 %v970
    %1463 = vmatprep.subr.bf16.mxu0 %v967
    %1464 = vmatpush2.bf16.msra.mxu0 %v966
    %1465 = vmatprep.subr.bf16.mxu0 %v963
    %1466 = vmatpush2.bf16.msra.mxu0 %v962
    %1467 = vmatprep.mubr.bf16.mxu0 %v325
    %1468 = vmatmul.mubr.bf16.gmra.mxu0 %v324
    %v1469 = vpop.f32.mrf.mxu0
    %v1470 = vadd.f32 %v343, %v1469
    %v1471 = vpop.f32.mrf.mxu0
    %v1472 = vadd.f32 %v347, %v1471
    %v1473 = vpop.f32.mrf.mxu0
    %v1474 = vpop.f32.mrf.mxu0
    %1475 = vdwg.mxu0
    %1476 = vmatprep.subr.bf16.mxu0 %v1023
    %1477 = vmatpush1.bf16.msra.mxu0 %v1022
    %1478 = vmatprep.subr.bf16.mxu0 %v1019
    %1479 = vmatpush1.bf16.msra.mxu0 %v1018
    %1480 = vmatprep.subr.bf16.mxu0 %v1015
    %1481 = vmatpush1.bf16.msra.mxu0 %v1014
    %1482 = vmatprep.subr.bf16.mxu0 %v1011
    %1483 = vmatpush1.bf16.msra.mxu0 %v1010
    %1484 = vmatprep.subr.bf16.mxu0 %v1007
    %1485 = vmatpush1.bf16.msra.mxu0 %v1006
    %1486 = vmatprep.subr.bf16.mxu0 %v1003
    %1487 = vmatpush1.bf16.msra.mxu0 %v1002
    %1488 = vmatprep.subr.bf16.mxu0 %v999
    %1489 = vmatpush1.bf16.msra.mxu0 %v998
    %1490 = vmatprep.subr.bf16.mxu0 %v995
    %1491 = vmatpush1.bf16.msra.mxu0 %v994
    %1492 = vmatprep.subr.bf16.mxu0 %v1055
    %1493 = vmatpush2.bf16.msra.mxu0 %v1054
    %1494 = vmatprep.subr.bf16.mxu0 %v1051
    %1495 = vmatpush2.bf16.msra.mxu0 %v1050
    %1496 = vmatprep.subr.bf16.mxu0 %v1047
    %1497 = vmatpush2.bf16.msra.mxu0 %v1046
    %1498 = vmatprep.subr.bf16.mxu0 %v1043
    %1499 = vmatpush2.bf16.msra.mxu0 %v1042
    %1500 = vmatprep.subr.bf16.mxu0 %v1039
    %1501 = vmatpush2.bf16.msra.mxu0 %v1038
    %1502 = vmatprep.subr.bf16.mxu0 %v1035
    %1503 = vmatpush2.bf16.msra.mxu0 %v1034
    %1504 = vmatprep.subr.bf16.mxu0 %v1031
    %1505 = vmatpush2.bf16.msra.mxu0 %v1030
    %1506 = vmatprep.subr.bf16.mxu0 %v1027
    %1507 = vmatpush2.bf16.msra.mxu0 %v1026
    %1508 = vmatprep.mubr.bf16.mxu0 %v327
    %1509 = vmatmul.mubr.bf16.gmra.mxu0 %v326
    %v1510 = vpop.f32.mrf.mxu0
    %v1511 = vadd.f32 %v1470, %v1510
    %v1512 = vpop.f32.mrf.mxu0
    %v1513 = vadd.f32 %v1472, %v1512
    %v1514 = vpop.f32.mrf.mxu0
    %v1515 = vpop.f32.mrf.mxu0
    %1516 = vdwg.mxu0
    %1517 = vmatprep.subr.bf16.mxu0 %v1087
    %1518 = vmatpush1.bf16.msra.mxu0 %v1086
    %1519 = vmatprep.subr.bf16.mxu0 %v1083
    %1520 = vmatpush1.bf16.msra.mxu0 %v1082
    %1521 = vmatprep.subr.bf16.mxu0 %v1079
    %1522 = vmatpush1.bf16.msra.mxu0 %v1078
    %1523 = vmatprep.subr.bf16.mxu0 %v1075
    %1524 = vmatpush1.bf16.msra.mxu0 %v1074
    %1525 = vmatprep.subr.bf16.mxu0 %v1071
    %1526 = vmatpush1.bf16.msra.mxu0 %v1070
    %1527 = vmatprep.subr.bf16.mxu0 %v1067
    %1528 = vmatpush1.bf16.msra.mxu0 %v1066
    %1529 = vmatprep.subr.bf16.mxu0 %v1063
    %1530 = vmatpush1.bf16.msra.mxu0 %v1062
    %1531 = vmatprep.subr.bf16.mxu0 %v1059
    %1532 = vmatpush1.bf16.msra.mxu0 %v1058
    %1533 = vmatprep.subr.bf16.mxu0 %v1119
    %1534 = vmatpush2.bf16.msra.mxu0 %v1118
    %1535 = vmatprep.subr.bf16.mxu0 %v1115
    %1536 = vmatpush2.bf16.msra.mxu0 %v1114
    %1537 = vmatprep.subr.bf16.mxu0 %v1111
    %1538 = vmatpush2.bf16.msra.mxu0 %v1110
    %1539 = vmatprep.subr.bf16.mxu0 %v1107
    %1540 = vmatpush2.bf16.msra.mxu0 %v1106
    %1541 = vmatprep.subr.bf16.mxu0 %v1103
    %1542 = vmatpush2.bf16.msra.mxu0 %v1102
    %1543 = vmatprep.subr.bf16.mxu0 %v1099
    %1544 = vmatpush2.bf16.msra.mxu0 %v1098
    %1545 = vmatprep.subr.bf16.mxu0 %v1095
    %1546 = vmatpush2.bf16.msra.mxu0 %v1094
    %1547 = vmatprep.subr.bf16.mxu0 %v1091
    %1548 = vmatpush2.bf16.msra.mxu0 %v1090
    %1549 = vmatprep.mubr.bf16.mxu0 %v329
    %1550 = vmatmul.mubr.bf16.gmra.mxu0 %v328
    %v1551 = vpop.f32.mrf.mxu0
    %v1552 = vadd.f32 %v1511, %v1551
    %v1553 = vpop.f32.mrf.mxu0
    %v1554 = vadd.f32 %v1513, %v1553
    %v1555 = vpop.f32.mrf.mxu0
    %v1556 = vpop.f32.mrf.mxu0
    %1557 = vdwg.mxu0
    %v1558 = vmax.f32 %v1429, 0.0
    %v1559 = vmax.f32 %v1431, 0.0
    %v1560 = vmax.f32 %v1552, 0.0
    %v1561 = vmax.f32 %v1554, 0.0
    %v1562 = vld [vmem:[#allocation6] sm:$0xff]
    %v1563 = vld [vmem:[#allocation6 + $0x8] sm:$0xff]
    %v1564 = vld [vmem:[#allocation6 + $0x10] sm:$0xff]
    %v1565 = vld [vmem:[#allocation6 + $0x18] sm:$0xff]
    %v1566 = vld [vmem:[#allocation6 + $0x20] sm:$0xff]
    %v1567 = vld [vmem:[#allocation6 + $0x28] sm:$0xff]
    %v1568 = vld [vmem:[#allocation6 + $0x30] sm:$0xff]
    %v1569 = vld [vmem:[#allocation6 + $0x38] sm:$0xff]
    %v1570 = vld [vmem:[#allocation6 + $0x40] sm:$0xff]
    %v1571 = vld [vmem:[#allocation6 + $0x48] sm:$0xff]
    %v1572 = vld [vmem:[#allocation6 + $0x50] sm:$0xff]
    %v1573 = vld [vmem:[#allocation6 + $0x58] sm:$0xff]
    %v1574 = vld [vmem:[#allocation6 + $0x60] sm:$0xff]
    %v1575 = vld [vmem:[#allocation6 + $0x68] sm:$0xff]
    %v1576 = vld [vmem:[#allocation6 + $0x70] sm:$0xff]
    %v1577 = vld [vmem:[#allocation6 + $0x78] sm:$0xff]
    %v1578 = vld [vmem:[#allocation6 + $0x80] sm:$0xff]
    %v1579 = vld [vmem:[#allocation6 + $0x88] sm:$0xff]
    %v1580 = vld [vmem:[#allocation6 + $0x90] sm:$0xff]
    %v1581 = vld [vmem:[#allocation6 + $0x98] sm:$0xff]
    %v1582 = vld [vmem:[#allocation6 + $0xa0] sm:$0xff]
    %v1583 = vld [vmem:[#allocation6 + $0xa8] sm:$0xff]
    %v1584 = vld [vmem:[#allocation6 + $0xb0] sm:$0xff]
    %v1585 = vld [vmem:[#allocation6 + $0xb8] sm:$0xff]
    %v1586 = vld [vmem:[#allocation6 + $0xc0] sm:$0xff]
    %v1587 = vld [vmem:[#allocation6 + $0xc8] sm:$0xff]
    %v1588 = vld [vmem:[#allocation6 + $0xd0] sm:$0xff]
    %v1589 = vld [vmem:[#allocation6 + $0xd8] sm:$0xff]
    %v1590 = vld [vmem:[#allocation6 + $0xe0] sm:$0xff]
    %v1591 = vld [vmem:[#allocation6 + $0xe8] sm:$0xff]
    %v1592 = vld [vmem:[#allocation6 + $0xf0] sm:$0xff]
    %v1593 = vld [vmem:[#allocation6 + $0xf8] sm:$0xff]
    %v1594 = vld [vmem:[#allocation6 + $0x100] sm:$0xff]
    %v1595 = vld [vmem:[#allocation6 + $0x108] sm:$0xff]
    %v1596 = vld [vmem:[#allocation6 + $0x110] sm:$0xff]
    %v1597 = vld [vmem:[#allocation6 + $0x118] sm:$0xff]
    %v1598 = vld [vmem:[#allocation6 + $0x120] sm:$0xff]
    %v1599 = vld [vmem:[#allocation6 + $0x128] sm:$0xff]
    %v1600 = vld [vmem:[#allocation6 + $0x130] sm:$0xff]
    %v1601 = vld [vmem:[#allocation6 + $0x138] sm:$0xff]
    %v1602 = vld [vmem:[#allocation6 + $0x140] sm:$0xff]
    %v1603 = vld [vmem:[#allocation6 + $0x148] sm:$0xff]
    %v1604 = vld [vmem:[#allocation6 + $0x150] sm:$0xff]
    %v1605 = vld [vmem:[#allocation6 + $0x158] sm:$0xff]
    %v1606 = vld [vmem:[#allocation6 + $0x160] sm:$0xff]
    %v1607 = vld [vmem:[#allocation6 + $0x168] sm:$0xff]
    %v1608 = vld [vmem:[#allocation6 + $0x170] sm:$0xff]
    %v1609 = vld [vmem:[#allocation6 + $0x178] sm:$0xff]
    %v1610 = vld [vmem:[#allocation6 + $0x180] sm:$0xff]
    %v1611 = vld [vmem:[#allocation6 + $0x188] sm:$0xff]
    %v1612 = vld [vmem:[#allocation6 + $0x190] sm:$0xff]
    %v1613 = vld [vmem:[#allocation6 + $0x198] sm:$0xff]
    %v1614 = vld [vmem:[#allocation6 + $0x1a0] sm:$0xff]
    %v1615 = vld [vmem:[#allocation6 + $0x1a8] sm:$0xff]
    %v1616 = vld [vmem:[#allocation6 + $0x1b0] sm:$0xff]
    %v1617 = vld [vmem:[#allocation6 + $0x1b8] sm:$0xff]
    %v1618 = vld [vmem:[#allocation6 + $0x1c0] sm:$0xff]
    %v1619 = vld [vmem:[#allocation6 + $0x1c8] sm:$0xff]
    %v1620 = vld [vmem:[#allocation6 + $0x1d0] sm:$0xff]
    %v1621 = vld [vmem:[#allocation6 + $0x1d8] sm:$0xff]
    %v1622 = vld [vmem:[#allocation6 + $0x1e0] sm:$0xff]
    %v1623 = vld [vmem:[#allocation6 + $0x1e8] sm:$0xff]
    %v1624 = vld [vmem:[#allocation6 + $0x1f0] sm:$0xff]
    %v1625 = vld [vmem:[#allocation6 + $0x1f8] sm:$0xff]
    %v1626 = vpack.c.bf16 %v1558, %v1558
    %v1627 = vpack.c.bf16 %v1559, %v1559
    %v1628 = vpack.c.bf16 %v1560, %v1560
    %v1629 = vpack.c.bf16 %v1561, %v1561
    %v1630 = vld [vmem:[%s6 + $0x4] sm:$0x3]
    %v1632 = vlaneseq
    %v1633 = vshrl.u32 %v1632, 7
    %v1634 = vsub.s32 0, %v1633
    %v1635 = vrot.slane %v1630, %v1634
    %v1636 = vlaneseq
    %v1637 = vshrl.u32 %v1636, 7
    %v1638 = vsub.s32 1, %v1637
    %v1639 = vrot.slane %v1630, %v1638
    %v1706 = vunpack.c.l.b16 %v1562
    %v1707 = vunpack.c.h.b16 %v1562
    %v1708 = vunpack.c.l.b16 %v1563
    %v1709 = vunpack.c.h.b16 %v1563
    %v1710 = vunpack.c.l.b16 %v1564
    %v1711 = vunpack.c.h.b16 %v1564
    %v1712 = vunpack.c.l.b16 %v1565
    %v1713 = vunpack.c.h.b16 %v1565
    %v1714 = vunpack.c.l.b16 %v1566
    %v1715 = vunpack.c.h.b16 %v1566
    %v1716 = vunpack.c.l.b16 %v1567
    %v1717 = vunpack.c.h.b16 %v1567
    %v1718 = vunpack.c.l.b16 %v1568
    %v1719 = vunpack.c.h.b16 %v1568
    %v1720 = vunpack.c.l.b16 %v1569
    %v1721 = vunpack.c.h.b16 %v1569
    %v1722 = vunpack.c.l.b16 %v1570
    %v1723 = vunpack.c.h.b16 %v1570
    %v1724 = vunpack.c.l.b16 %v1571
    %v1725 = vunpack.c.h.b16 %v1571
    %v1726 = vunpack.c.l.b16 %v1572
    %v1727 = vunpack.c.h.b16 %v1572
    %v1728 = vunpack.c.l.b16 %v1573
    %v1729 = vunpack.c.h.b16 %v1573
    %v1730 = vunpack.c.l.b16 %v1574
    %v1731 = vunpack.c.h.b16 %v1574
    %v1732 = vunpack.c.l.b16 %v1575
    %v1733 = vunpack.c.h.b16 %v1575
    %v1734 = vunpack.c.l.b16 %v1576
    %v1735 = vunpack.c.h.b16 %v1576
    %v1736 = vunpack.c.l.b16 %v1577
    %v1737 = vunpack.c.h.b16 %v1577
    %v1738 = vunpack.c.l.b16 %v1578
    %v1739 = vunpack.c.h.b16 %v1578
    %v1740 = vunpack.c.l.b16 %v1579
    %v1741 = vunpack.c.h.b16 %v1579
    %v1742 = vunpack.c.l.b16 %v1580
    %v1743 = vunpack.c.h.b16 %v1580
    %v1744 = vunpack.c.l.b16 %v1581
    %v1745 = vunpack.c.h.b16 %v1581
    %v1746 = vunpack.c.l.b16 %v1582
    %v1747 = vunpack.c.h.b16 %v1582
    %v1748 = vunpack.c.l.b16 %v1583
    %v1749 = vunpack.c.h.b16 %v1583
    %v1750 = vunpack.c.l.b16 %v1584
    %v1751 = vunpack.c.h.b16 %v1584
    %v1752 = vunpack.c.l.b16 %v1585
    %v1753 = vunpack.c.h.b16 %v1585
    %v1754 = vunpack.c.l.b16 %v1586
    %v1755 = vunpack.c.h.b16 %v1586
    %v1756 = vunpack.c.l.b16 %v1587
    %v1757 = vunpack.c.h.b16 %v1587
    %v1758 = vunpack.c.l.b16 %v1588
    %v1759 = vunpack.c.h.b16 %v1588
    %v1760 = vunpack.c.l.b16 %v1589
    %v1761 = vunpack.c.h.b16 %v1589
    %v1762 = vunpack.c.l.b16 %v1590
    %v1763 = vunpack.c.h.b16 %v1590
    %v1764 = vunpack.c.l.b16 %v1591
    %v1765 = vunpack.c.h.b16 %v1591
    %v1766 = vunpack.c.l.b16 %v1592
    %v1767 = vunpack.c.h.b16 %v1592
    %v1768 = vunpack.c.l.b16 %v1593
    %v1769 = vunpack.c.h.b16 %v1593
    %v1770 = vunpack.c.l.b16 %v1594
    %v1771 = vunpack.c.h.b16 %v1594
    %v1772 = vunpack.c.l.b16 %v1595
    %v1773 = vunpack.c.h.b16 %v1595
    %v1774 = vunpack.c.l.b16 %v1596
    %v1775 = vunpack.c.h.b16 %v1596
    %v1776 = vunpack.c.l.b16 %v1597
    %v1777 = vunpack.c.h.b16 %v1597
    %v1778 = vunpack.c.l.b16 %v1598
    %v1779 = vunpack.c.h.b16 %v1598
    %v1780 = vunpack.c.l.b16 %v1599
    %v1781 = vunpack.c.h.b16 %v1599
    %v1782 = vunpack.c.l.b16 %v1600
    %v1783 = vunpack.c.h.b16 %v1600
    %v1784 = vunpack.c.l.b16 %v1601
    %v1785 = vunpack.c.h.b16 %v1601
    %v1786 = vunpack.c.l.b16 %v1602
    %v1787 = vunpack.c.h.b16 %v1602
    %v1788 = vunpack.c.l.b16 %v1603
    %v1789 = vunpack.c.h.b16 %v1603
    %v1790 = vunpack.c.l.b16 %v1604
    %v1791 = vunpack.c.h.b16 %v1604
    %v1792 = vunpack.c.l.b16 %v1605
    %v1793 = vunpack.c.h.b16 %v1605
    %v1794 = vunpack.c.l.b16 %v1606
    %v1795 = vunpack.c.h.b16 %v1606
    %v1796 = vunpack.c.l.b16 %v1607
    %v1797 = vunpack.c.h.b16 %v1607
    %v1798 = vunpack.c.l.b16 %v1608
    %v1799 = vunpack.c.h.b16 %v1608
    %v1800 = vunpack.c.l.b16 %v1609
    %v1801 = vunpack.c.h.b16 %v1609
    %v1802 = vunpack.c.l.b16 %v1610
    %v1803 = vunpack.c.h.b16 %v1610
    %v1804 = vunpack.c.l.b16 %v1611
    %v1805 = vunpack.c.h.b16 %v1611
    %v1806 = vunpack.c.l.b16 %v1612
    %v1807 = vunpack.c.h.b16 %v1612
    %v1808 = vunpack.c.l.b16 %v1613
    %v1809 = vunpack.c.h.b16 %v1613
    %v1810 = vunpack.c.l.b16 %v1614
    %v1811 = vunpack.c.h.b16 %v1614
    %v1812 = vunpack.c.l.b16 %v1615
    %v1813 = vunpack.c.h.b16 %v1615
    %v1814 = vunpack.c.l.b16 %v1616
    %v1815 = vunpack.c.h.b16 %v1616
    %v1816 = vunpack.c.l.b16 %v1617
    %v1817 = vunpack.c.h.b16 %v1617
    %v1818 = vunpack.c.l.b16 %v1618
    %v1819 = vunpack.c.h.b16 %v1618
    %v1820 = vunpack.c.l.b16 %v1619
    %v1821 = vunpack.c.h.b16 %v1619
    %v1822 = vunpack.c.l.b16 %v1620
    %v1823 = vunpack.c.h.b16 %v1620
    %v1824 = vunpack.c.l.b16 %v1621
    %v1825 = vunpack.c.h.b16 %v1621
    %v1826 = vunpack.c.l.b16 %v1622
    %v1827 = vunpack.c.h.b16 %v1622
    %v1828 = vunpack.c.l.b16 %v1623
    %v1829 = vunpack.c.h.b16 %v1623
    %v1830 = vunpack.c.l.b16 %v1624
    %v1831 = vunpack.c.h.b16 %v1624
    %v1832 = vunpack.c.l.b16 %v1625
    %v1833 = vunpack.c.h.b16 %v1625
    %v1834 = vpack.c.b16 %v1708, %v1706
    %v1835 = vpack.c.b16 %v1709, %v1707
    %v1836 = vpack.c.b16 %v1712, %v1710
    %v1837 = vpack.c.b16 %v1713, %v1711
    %v1838 = vpack.c.b16 %v1716, %v1714
    %v1839 = vpack.c.b16 %v1717, %v1715
    %v1840 = vpack.c.b16 %v1720, %v1718
    %v1841 = vpack.c.b16 %v1721, %v1719
    %v1842 = vpack.c.b16 %v1724, %v1722
    %v1843 = vpack.c.b16 %v1725, %v1723
    %v1844 = vpack.c.b16 %v1728, %v1726
    %v1845 = vpack.c.b16 %v1729, %v1727
    %v1846 = vpack.c.b16 %v1732, %v1730
    %v1847 = vpack.c.b16 %v1733, %v1731
    %v1848 = vpack.c.b16 %v1736, %v1734
    %v1849 = vpack.c.b16 %v1737, %v1735
    %v1850 = vpack.c.b16 %v1740, %v1738
    %v1851 = vpack.c.b16 %v1741, %v1739
    %v1852 = vpack.c.b16 %v1744, %v1742
    %v1853 = vpack.c.b16 %v1745, %v1743
    %v1854 = vpack.c.b16 %v1748, %v1746
    %v1855 = vpack.c.b16 %v1749, %v1747
    %v1856 = vpack.c.b16 %v1752, %v1750
    %v1857 = vpack.c.b16 %v1753, %v1751
    %v1858 = vpack.c.b16 %v1756, %v1754
    %v1859 = vpack.c.b16 %v1757, %v1755
    %v1860 = vpack.c.b16 %v1760, %v1758
    %v1861 = vpack.c.b16 %v1761, %v1759
    %v1862 = vpack.c.b16 %v1764, %v1762
    %v1863 = vpack.c.b16 %v1765, %v1763
    %v1864 = vpack.c.b16 %v1768, %v1766
    %v1865 = vpack.c.b16 %v1769, %v1767
    %v1866 = vpack.c.b16 %v1772, %v1770
    %v1867 = vpack.c.b16 %v1773, %v1771
    %v1868 = vpack.c.b16 %v1776, %v1774
    %v1869 = vpack.c.b16 %v1777, %v1775
    %v1870 = vpack.c.b16 %v1780, %v1778
    %v1871 = vpack.c.b16 %v1781, %v1779
    %v1872 = vpack.c.b16 %v1784, %v1782
    %v1873 = vpack.c.b16 %v1785, %v1783
    %v1874 = vpack.c.b16 %v1788, %v1786
    %v1875 = vpack.c.b16 %v1789, %v1787
    %v1876 = vpack.c.b16 %v1792, %v1790
    %v1877 = vpack.c.b16 %v1793, %v1791
    %v1878 = vpack.c.b16 %v1796, %v1794
    %v1879 = vpack.c.b16 %v1797, %v1795
    %v1880 = vpack.c.b16 %v1800, %v1798
    %v1881 = vpack.c.b16 %v1801, %v1799
    %v1882 = vpack.c.b16 %v1804, %v1802
    %v1883 = vpack.c.b16 %v1805, %v1803
    %v1884 = vpack.c.b16 %v1808, %v1806
    %v1885 = vpack.c.b16 %v1809, %v1807
    %v1886 = vpack.c.b16 %v1812, %v1810
    %v1887 = vpack.c.b16 %v1813, %v1811
    %v1888 = vpack.c.b16 %v1816, %v1814
    %v1889 = vpack.c.b16 %v1817, %v1815
    %v1890 = vpack.c.b16 %v1820, %v1818
    %v1891 = vpack.c.b16 %v1821, %v1819
    %v1892 = vpack.c.b16 %v1824, %v1822
    %v1893 = vpack.c.b16 %v1825, %v1823
    %v1894 = vpack.c.b16 %v1828, %v1826
    %v1895 = vpack.c.b16 %v1829, %v1827
    %v1896 = vpack.c.b16 %v1832, %v1830
    %v1897 = vpack.c.b16 %v1833, %v1831
    %1962 = vmatprep.subr.bf16.mxu0 %v1849
    %1963 = vmatpush1.bf16.msra.mxu0 %v1848
    %1964 = vmatprep.subr.bf16.mxu0 %v1847
    %1965 = vmatpush1.bf16.msra.mxu0 %v1846
    %1966 = vmatprep.subr.bf16.mxu0 %v1845
    %1967 = vmatpush1.bf16.msra.mxu0 %v1844
    %1968 = vmatprep.subr.bf16.mxu0 %v1843
    %1969 = vmatpush1.bf16.msra.mxu0 %v1842
    %1970 = vmatprep.subr.bf16.mxu0 %v1841
    %1971 = vmatpush1.bf16.msra.mxu0 %v1840
    %1972 = vmatprep.subr.bf16.mxu0 %v1839
    %1973 = vmatpush1.bf16.msra.mxu0 %v1838
    %1974 = vmatprep.subr.bf16.mxu0 %v1837
    %1975 = vmatpush1.bf16.msra.mxu0 %v1836
    %1976 = vmatprep.subr.bf16.mxu0 %v1835
    %1977 = vmatpush1.bf16.msra.mxu0 %v1834
    %1978 = vmatprep.subr.bf16.mxu0 %v1865
    %1979 = vmatpush2.bf16.msra.mxu0 %v1864
    %1980 = vmatprep.subr.bf16.mxu0 %v1863
    %1981 = vmatpush2.bf16.msra.mxu0 %v1862
    %1982 = vmatprep.subr.bf16.mxu0 %v1861
    %1983 = vmatpush2.bf16.msra.mxu0 %v1860
    %1984 = vmatprep.subr.bf16.mxu0 %v1859
    %1985 = vmatpush2.bf16.msra.mxu0 %v1858
    %1986 = vmatprep.subr.bf16.mxu0 %v1857
    %1987 = vmatpush2.bf16.msra.mxu0 %v1856
    %1988 = vmatprep.subr.bf16.mxu0 %v1855
    %1989 = vmatpush2.bf16.msra.mxu0 %v1854
    %1990 = vmatprep.subr.bf16.mxu0 %v1853
    %1991 = vmatpush2.bf16.msra.mxu0 %v1852
    %1992 = vmatprep.subr.bf16.mxu0 %v1851
    %1993 = vmatpush2.bf16.msra.mxu0 %v1850
    %1994 = vmatprep.mubr.bf16.mxu0 %v1627
    %1995 = vmatmul.mubr.bf16.gmra.mxu0 %v1626
    %v1996 = vpop.f32.mrf.mxu0
    %v1997 = vadd.f32 %v1635, %v1996
    %v1998 = vpop.f32.mrf.mxu0
    %v1999 = vadd.f32 %v1639, %v1998
    %v2000 = vpop.f32.mrf.mxu0
    %v2001 = vpop.f32.mrf.mxu0
    %2002 = vdwg.mxu0
    %2003 = vmatprep.subr.bf16.mxu0 %v1881
    %2004 = vmatpush1.bf16.msra.mxu0 %v1880
    %2005 = vmatprep.subr.bf16.mxu0 %v1879
    %2006 = vmatpush1.bf16.msra.mxu0 %v1878
    %2007 = vmatprep.subr.bf16.mxu0 %v1877
    %2008 = vmatpush1.bf16.msra.mxu0 %v1876
    %2009 = vmatprep.subr.bf16.mxu0 %v1875
    %2010 = vmatpush1.bf16.msra.mxu0 %v1874
    %2011 = vmatprep.subr.bf16.mxu0 %v1873
    %2012 = vmatpush1.bf16.msra.mxu0 %v1872
    %2013 = vmatprep.subr.bf16.mxu0 %v1871
    %2014 = vmatpush1.bf16.msra.mxu0 %v1870
    %2015 = vmatprep.subr.bf16.mxu0 %v1869
    %2016 = vmatpush1.bf16.msra.mxu0 %v1868
    %2017 = vmatprep.subr.bf16.mxu0 %v1867
    %2018 = vmatpush1.bf16.msra.mxu0 %v1866
    %2019 = vmatprep.subr.bf16.mxu0 %v1897
    %2020 = vmatpush2.bf16.msra.mxu0 %v1896
    %2021 = vmatprep.subr.bf16.mxu0 %v1895
    %2022 = vmatpush2.bf16.msra.mxu0 %v1894
    %2023 = vmatprep.subr.bf16.mxu0 %v1893
    %2024 = vmatpush2.bf16.msra.mxu0 %v1892
    %2025 = vmatprep.subr.bf16.mxu0 %v1891
    %2026 = vmatpush2.bf16.msra.mxu0 %v1890
    %2027 = vmatprep.subr.bf16.mxu0 %v1889
    %2028 = vmatpush2.bf16.msra.mxu0 %v1888
    %2029 = vmatprep.subr.bf16.mxu0 %v1887
    %2030 = vmatpush2.bf16.msra.mxu0 %v1886
    %2031 = vmatprep.subr.bf16.mxu0 %v1885
    %2032 = vmatpush2.bf16.msra.mxu0 %v1884
    %2033 = vmatprep.subr.bf16.mxu0 %v1883
    %2034 = vmatpush2.bf16.msra.mxu0 %v1882
    %2035 = vmatprep.mubr.bf16.mxu0 %v1629
    %2036 = vmatmul.mubr.bf16.gmra.mxu0 %v1628
    %v2037 = vpop.f32.mrf.mxu0
    %v2038 = vadd.f32 %v1997, %v2037
    %v2039 = vpop.f32.mrf.mxu0
    %v2040 = vadd.f32 %v1999, %v2039
    %v2041 = vpop.f32.mrf.mxu0
    %v2042 = vpop.f32.mrf.mxu0
    %2043 = vdwg.mxu0
    %v2044 = vmax.f32 %v2038, 0.0
    %v2045 = vmax.f32 %v2040, 0.0
    %v2046 = vld [vmem:[#allocation9] sm:$0xff]
    %v2047 = vld [vmem:[#allocation9 + $0x8] sm:$0xf]
    %v2048 = vld [vmem:[#allocation9 + $0x68] sm:$0xff]
    %v2049 = vld [vmem:[#allocation9 + $0x70] sm:$0xf]
    %v2050 = vld [vmem:[#allocation9 + $0xd0] sm:$0xff]
    %v2051 = vld [vmem:[#allocation9 + $0xd8] sm:$0xf]
    %v2052 = vld [vmem:[#allocation9 + $0x138] sm:$0xff]
    %v2053 = vld [vmem:[#allocation9 + $0x140] sm:$0xf]
    %v2054 = vld [vmem:[#allocation9 + $0x1a0] sm:$0xff]
    %v2055 = vld [vmem:[#allocation9 + $0x1a8] sm:$0xf]
    %v2056 = vld [vmem:[#allocation9 + $0x208] sm:$0xff]
    %v2057 = vld [vmem:[#allocation9 + $0x210] sm:$0xf]
    %v2058 = vld [vmem:[#allocation9 + $0x270] sm:$0xff]
    %v2059 = vld [vmem:[#allocation9 + $0x278] sm:$0xf]
    %v2060 = vld [vmem:[#allocation9 + $0x2d8] sm:$0xff]
    %v2061 = vld [vmem:[#allocation9 + $0x2e0] sm:$0xf]
    %v2062 = vld [vmem:[#allocation9 + $0x340] sm:$0xff]
    %v2063 = vld [vmem:[#allocation9 + $0x348] sm:$0xf]
    %v2064 = vld [vmem:[#allocation9 + $0x3a8] sm:$0xff]
    %v2065 = vld [vmem:[#allocation9 + $0x3b0] sm:$0xf]
    %v2066 = vld [vmem:[#allocation9 + $0x410] sm:$0xff]
    %v2067 = vld [vmem:[#allocation9 + $0x418] sm:$0xf]
    %v2068 = vld [vmem:[#allocation9 + $0x478] sm:$0xff]
    %v2069 = vld [vmem:[#allocation9 + $0x480] sm:$0xf]
    %v2070 = vld [vmem:[#allocation9 + $0x4e0] sm:$0xff]
    %v2071 = vld [vmem:[#allocation9 + $0x4e8] sm:$0xf]
    %v2072 = vld [vmem:[#allocation9 + $0x548] sm:$0xff]
    %v2073 = vld [vmem:[#allocation9 + $0x550] sm:$0xf]
    %v2074 = vld [vmem:[#allocation9 + $0x5b0] sm:$0xff]
    %v2075 = vld [vmem:[#allocation9 + $0x5b8] sm:$0xf]
    %v2076 = vld [vmem:[#allocation9 + $0x618] sm:$0xff]
    %v2077 = vld [vmem:[#allocation9 + $0x620] sm:$0xf]
    %v2078 = vpack.c.bf16 %v2044, %v2044
    %v2079 = vld [vmem:[%s6 + $0x6] sm:$0x7]
    %v2081 = vlaneseq
    %v2082 = vshrl.u32 %v2081, 7
    %v2083 = vsub.s32 0, %v2082
    %v2084 = vrot.slane %v2079, %v2083
    %v2085 = vlaneseq
    %v2086 = vshrl.u32 %v2085, 7
    %v2087 = vsub.s32 1, %v2086
    %v2088 = vrot.slane %v2079, %v2087
    %v2089 = vlaneseq
    %v2090 = vshrl.u32 %v2089, 7
    %v2091 = vsub.s32 2, %v2090
    %v2092 = vrot.slane %v2079, %v2091
    %v2128 = vunpack.c.l.b16 %v2046
    %v2129 = vunpack.c.h.b16 %v2046
    %v2130 = vunpack.c.l.b16 %v2047
    %v2131 = vunpack.c.l.b16 %v2048
    %v2132 = vunpack.c.h.b16 %v2048
    %v2133 = vunpack.c.l.b16 %v2049
    %v2134 = vunpack.c.l.b16 %v2050
    %v2135 = vunpack.c.h.b16 %v2050
    %v2136 = vunpack.c.l.b16 %v2051
    %v2137 = vunpack.c.l.b16 %v2052
    %v2138 = vunpack.c.h.b16 %v2052
    %v2139 = vunpack.c.l.b16 %v2053
    %v2140 = vunpack.c.l.b16 %v2054
    %v2141 = vunpack.c.h.b16 %v2054
    %v2142 = vunpack.c.l.b16 %v2055
    %v2143 = vunpack.c.l.b16 %v2056
    %v2144 = vunpack.c.h.b16 %v2056
    %v2145 = vunpack.c.l.b16 %v2057
    %v2146 = vunpack.c.l.b16 %v2058
    %v2147 = vunpack.c.h.b16 %v2058
    %v2148 = vunpack.c.l.b16 %v2059
    %v2149 = vunpack.c.l.b16 %v2060
    %v2150 = vunpack.c.h.b16 %v2060
    %v2151 = vunpack.c.l.b16 %v2061
    %v2152 = vunpack.c.l.b16 %v2062
    %v2153 = vunpack.c.h.b16 %v2062
    %v2154 = vunpack.c.l.b16 %v2063
    %v2155 = vunpack.c.l.b16 %v2064
    %v2156 = vunpack.c.h.b16 %v2064
    %v2157 = vunpack.c.l.b16 %v2065
    %v2158 = vunpack.c.l.b16 %v2066
    %v2159 = vunpack.c.h.b16 %v2066
    %v2160 = vunpack.c.l.b16 %v2067
    %v2161 = vunpack.c.l.b16 %v2068
    %v2162 = vunpack.c.h.b16 %v2068
    %v2163 = vunpack.c.l.b16 %v2069
    %v2164 = vunpack.c.l.b16 %v2070
    %v2165 = vunpack.c.h.b16 %v2070
    %v2166 = vunpack.c.l.b16 %v2071
    %v2167 = vunpack.c.l.b16 %v2072
    %v2168 = vunpack.c.h.b16 %v2072
    %v2169 = vunpack.c.l.b16 %v2073
    %v2170 = vunpack.c.l.b16 %v2074
    %v2171 = vunpack.c.h.b16 %v2074
    %v2172 = vunpack.c.l.b16 %v2075
    %v2173 = vunpack.c.l.b16 %v2076
    %v2174 = vunpack.c.h.b16 %v2076
    %v2175 = vunpack.c.l.b16 %v2077
    %v2176 = vpack.c.b16 %v2131, %v2128
    %v2177 = vpack.c.b16 %v2132, %v2129
    %v2178 = vpack.c.b16 %v2133, %v2130
    %v2179 = vpack.c.b16 %v2137, %v2134
    %v2180 = vpack.c.b16 %v2138, %v2135
    %v2181 = vpack.c.b16 %v2139, %v2136
    %v2182 = vpack.c.b16 %v2143, %v2140
    %v2183 = vpack.c.b16 %v2144, %v2141
    %v2184 = vpack.c.b16 %v2145, %v2142
    %v2185 = vpack.c.b16 %v2149, %v2146
    %v2186 = vpack.c.b16 %v2150, %v2147
    %v2187 = vpack.c.b16 %v2151, %v2148
    %v2188 = vpack.c.b16 %v2155, %v2152
    %v2189 = vpack.c.b16 %v2156, %v2153
    %v2190 = vpack.c.b16 %v2157, %v2154
    %v2191 = vpack.c.b16 %v2161, %v2158
    %v2192 = vpack.c.b16 %v2162, %v2159
    %v2193 = vpack.c.b16 %v2163, %v2160
    %v2194 = vpack.c.b16 %v2167, %v2164
    %v2195 = vpack.c.b16 %v2168, %v2165
    %v2196 = vpack.c.b16 %v2169, %v2166
    %v2197 = vpack.c.b16 %v2173, %v2170
    %v2198 = vpack.c.b16 %v2174, %v2171
    %v2199 = vpack.c.b16 %v2175, %v2172
    %2224 = vmatprep.subr.bf16.mxu0 %v2198
    %2225 = vmatpush1.bf16.msra.mxu0 %v2197
    %2226 = vmatprep.subr.bf16.mxu0 %v2195
    %2227 = vmatpush1.bf16.msra.mxu0 %v2194
    %2228 = vmatprep.subr.bf16.mxu0 %v2192
    %2229 = vmatpush1.bf16.msra.mxu0 %v2191
    %2230 = vmatprep.subr.bf16.mxu0 %v2189
    %2231 = vmatpush1.bf16.msra.mxu0 %v2188
    %2232 = vmatprep.subr.bf16.mxu0 %v2186
    %2233 = vmatpush1.bf16.msra.mxu0 %v2185
    %2234 = vmatprep.subr.bf16.mxu0 %v2183
    %2235 = vmatpush1.bf16.msra.mxu0 %v2182
    %2236 = vmatprep.subr.bf16.mxu0 %v2180
    %2237 = vmatpush1.bf16.msra.mxu0 %v2179
    %2238 = vmatprep.subr.bf16.mxu0 %v2177
    %2239 = vmatpush1.bf16.msra.mxu0 %v2176
    %2240 = vmatprep.subr.bf16.mxu0 0
    %2241 = vmatpush2.bf16.msra.mxu0 0
    %2242 = vmatprep.subr.bf16.mxu0 0
    %2243 = vmatpush2.bf16.msra.mxu0 0
    %2244 = vmatprep.subr.bf16.mxu0 0
    %2245 = vmatpush2.bf16.msra.mxu0 0
    %2246 = vmatprep.subr.bf16.mxu0 0
    %2247 = vmatpush2.bf16.msra.mxu0 0
    %2248 = vmatprep.subr.bf16.mxu0 0
    %2249 = vmatpush2.bf16.msra.mxu0 0
    %2250 = vmatprep.subr.bf16.mxu0 0
    %2251 = vmatpush2.bf16.msra.mxu0 0
    %2252 = vmatprep.subr.bf16.mxu0 0
    %2253 = vmatpush2.bf16.msra.mxu0 0
    %2254 = vmatprep.subr.bf16.mxu0 0
    %2255 = vmatpush2.bf16.msra.mxu0 0
    %2256 = vmatprep.mubr.bf16.mxu0 0
    %2257 = vmatmul.mubr.bf16.gmra.mxu0 %v2078
    %v2258 = vpop.f32.mrf.mxu0
    %v2259 = vadd.f32 %v2084, %v2258
    %v2260 = vpop.f32.mrf.mxu0
    %v2261 = vadd.f32 %v2088, %v2260
    %v2262 = vpop.f32.mrf.mxu0
    %v2263 = vpop.f32.mrf.mxu0
    %2264 = vdwg.mxu0
    %2265 = vmatprep.subr.bf16.mxu0 0
    %2266 = vmatpush1.bf16.msra.mxu0 %v2199
    %2267 = vmatprep.subr.bf16.mxu0 0
    %2268 = vmatpush1.bf16.msra.mxu0 %v2196
    %2269 = vmatprep.subr.bf16.mxu0 0
    %2270 = vmatpush1.bf16.msra.mxu0 %v2193
    %2271 = vmatprep.subr.bf16.mxu0 0
    %2272 = vmatpush1.bf16.msra.mxu0 %v2190
    %2273 = vmatprep.subr.bf16.mxu0 0
    %2274 = vmatpush1.bf16.msra.mxu0 %v2187
    %2275 = vmatprep.subr.bf16.mxu0 0
    %2276 = vmatpush1.bf16.msra.mxu0 %v2184
    %2277 = vmatprep.subr.bf16.mxu0 0
    %2278 = vmatpush1.bf16.msra.mxu0 %v2181
    %2279 = vmatprep.subr.bf16.mxu0 0
    %2280 = vmatpush1.bf16.msra.mxu0 %v2178
    %2281 = vmatprep.subr.bf16.mxu0 0
    %2282 = vmatpush2.bf16.msra.mxu0 0
    %2283 = vmatprep.subr.bf16.mxu0 0
    %2284 = vmatpush2.bf16.msra.mxu0 0
    %2285 = vmatprep.subr.bf16.mxu0 0
    %2286 = vmatpush2.bf16.msra.mxu0 0
    %2287 = vmatprep.subr.bf16.mxu0 0
    %2288 = vmatpush2.bf16.msra.mxu0 0
    %2289 = vmatprep.subr.bf16.mxu0 0
    %2290 = vmatpush2.bf16.msra.mxu0 0
    %2291 = vmatprep.subr.bf16.mxu0 0
    %2292 = vmatpush2.bf16.msra.mxu0 0
    %2293 = vmatprep.subr.bf16.mxu0 0
    %2294 = vmatpush2.bf16.msra.mxu0 0
    %2295 = vmatprep.subr.bf16.mxu0 0
    %2296 = vmatpush2.bf16.msra.mxu0 0
    %2297 = vmatprep.mubr.bf16.mxu0 0
    %2298 = vmatmul.mubr.bf16.gmra.mxu0 %v2078
    %v2299 = vpop.f32.mrf.mxu0
    %v2300 = vadd.f32 %v2092, %v2299
    %v2301 = vpop.f32.mrf.mxu0
    %v2302 = vpop.f32.mrf.mxu0
    %v2303 = vpop.f32.mrf.mxu0
    %2304 = vdwg.mxu0
    %v2305 = vmax.f32 %v2259, 0.0
    %v2306 = vmax.f32 %v2261, 0.0
    %v2307 = vld [vmem:[#allocation7] sm:$0xf]
    %v2308 = vld [vmem:[#allocation7 + $0x4] sm:$0xf]
    %v2309 = vld [vmem:[#allocation7 + $0x8] sm:$0xf]
    %v2310 = vld [vmem:[#allocation7 + $0xc] sm:$0xf]
    %v2311 = vld [vmem:[#allocation7 + $0x10] sm:$0xf]
    %v2312 = vld [vmem:[#allocation7 + $0x14] sm:$0xf]
    %v2313 = vld [vmem:[#allocation7 + $0x18] sm:$0xf]
    %v2314 = vld [vmem:[#allocation7 + $0x1c] sm:$0xf]
    %v2315 = vld [vmem:[#allocation7 + $0x20] sm:$0xf]
    %v2316 = vld [vmem:[#allocation7 + $0x24] sm:$0xf]
    %v2317 = vld [vmem:[#allocation7 + $0x28] sm:$0xf]
    %v2318 = vld [vmem:[#allocation7 + $0x2c] sm:$0xf]
    %v2319 = vld [vmem:[#allocation7 + $0x30] sm:$0xf]
    %v2320 = vld [vmem:[#allocation7 + $0x34] sm:$0xf]
    %v2321 = vld [vmem:[#allocation7 + $0x38] sm:$0xf]
    %v2322 = vld [vmem:[#allocation7 + $0x3c] sm:$0xf]
    %v2323 = vld [vmem:[#allocation7 + $0x40] sm:$0xf]
    %v2324 = vld [vmem:[#allocation7 + $0x44] sm:$0xf]
    %v2325 = vld [vmem:[#allocation7 + $0x48] sm:$0xf]
    %v2326 = vld [vmem:[#allocation7 + $0x4c] sm:$0xf]
    %v2327 = vld [vmem:[#allocation7 + $0x50] sm:$0xf]
    %v2328 = vld [vmem:[#allocation7 + $0x54] sm:$0xf]
    %v2329 = vld [vmem:[#allocation7 + $0x58] sm:$0xf]
    %v2330 = vld [vmem:[#allocation7 + $0x5c] sm:$0xf]
    %v2331 = vld [vmem:[#allocation7 + $0x60] sm:$0xf]
    %v2332 = vld [vmem:[#allocation7 + $0x64] sm:$0xf]
    %v2333 = vld [vmem:[#allocation7 + $0x68] sm:$0xf]
    %v2334 = vld [vmem:[#allocation7 + $0x6c] sm:$0xf]
    %v2335 = vld [vmem:[#allocation7 + $0x70] sm:$0xf]
    %v2336 = vld [vmem:[#allocation7 + $0x74] sm:$0xf]
    %v2337 = vld [vmem:[#allocation7 + $0x78] sm:$0xf]
    %v2338 = vld [vmem:[#allocation7 + $0x7c] sm:$0xf]
    %v2339 = vpack.c.bf16 %v2305, %v2305
    %v2340 = vpack.c.bf16 %v2306, %v2306
    %v2341 = vld [vmem:[%s6 + $0x9] sm:$0x1]
    %v2343 = vlaneseq
    %v2344 = vshrl.u32 %v2343, 7
    %v2345 = vsub.s32 0, %v2344
    %v2346 = vrot.slane %v2341, %v2345
    %v2380 = vunpack.c.l.b16 %v2307
    %v2381 = vunpack.c.l.b16 %v2308
    %v2382 = vunpack.c.l.b16 %v2309
    %v2383 = vunpack.c.l.b16 %v2310
    %v2384 = vunpack.c.l.b16 %v2311
    %v2385 = vunpack.c.l.b16 %v2312
    %v2386 = vunpack.c.l.b16 %v2313
    %v2387 = vunpack.c.l.b16 %v2314
    %v2388 = vunpack.c.l.b16 %v2315
    %v2389 = vunpack.c.l.b16 %v2316
    %v2390 = vunpack.c.l.b16 %v2317
    %v2391 = vunpack.c.l.b16 %v2318
    %v2392 = vunpack.c.l.b16 %v2319
    %v2393 = vunpack.c.l.b16 %v2320
    %v2394 = vunpack.c.l.b16 %v2321
    %v2395 = vunpack.c.l.b16 %v2322
    %v2396 = vunpack.c.l.b16 %v2323
    %v2397 = vunpack.c.l.b16 %v2324
    %v2398 = vunpack.c.l.b16 %v2325
    %v2399 = vunpack.c.l.b16 %v2326
    %v2400 = vunpack.c.l.b16 %v2327
    %v2401 = vunpack.c.l.b16 %v2328
    %v2402 = vunpack.c.l.b16 %v2329
    %v2403 = vunpack.c.l.b16 %v2330
    %v2404 = vunpack.c.l.b16 %v2331
    %v2405 = vunpack.c.l.b16 %v2332
    %v2406 = vunpack.c.l.b16 %v2333
    %v2407 = vunpack.c.l.b16 %v2334
    %v2408 = vunpack.c.l.b16 %v2335
    %v2409 = vunpack.c.l.b16 %v2336
    %v2410 = vunpack.c.l.b16 %v2337
    %v2411 = vunpack.c.l.b16 %v2338
    %v2412 = vpack.c.b16 %v2381, %v2380
    %v2413 = vpack.c.b16 %v2383, %v2382
    %v2414 = vpack.c.b16 %v2385, %v2384
    %v2415 = vpack.c.b16 %v2387, %v2386
    %v2416 = vpack.c.b16 %v2389, %v2388
    %v2417 = vpack.c.b16 %v2391, %v2390
    %v2418 = vpack.c.b16 %v2393, %v2392
    %v2419 = vpack.c.b16 %v2395, %v2394
    %v2420 = vpack.c.b16 %v2397, %v2396
    %v2421 = vpack.c.b16 %v2399, %v2398
    %v2422 = vpack.c.b16 %v2401, %v2400
    %v2423 = vpack.c.b16 %v2403, %v2402
    %v2424 = vpack.c.b16 %v2405, %v2404
    %v2425 = vpack.c.b16 %v2407, %v2406
    %v2426 = vpack.c.b16 %v2409, %v2408
    %v2427 = vpack.c.b16 %v2411, %v2410
    %2444 = vmatprep.subr.bf16.mxu0 0
    %2445 = vmatpush1.bf16.msra.mxu0 %v2419
    %2446 = vmatprep.subr.bf16.mxu0 0
    %2447 = vmatpush1.bf16.msra.mxu0 %v2418
    %2448 = vmatprep.subr.bf16.mxu0 0
    %2449 = vmatpush1.bf16.msra.mxu0 %v2417
    %2450 = vmatprep.subr.bf16.mxu0 0
    %2451 = vmatpush1.bf16.msra.mxu0 %v2416
    %2452 = vmatprep.subr.bf16.mxu0 0
    %2453 = vmatpush1.bf16.msra.mxu0 %v2415
    %2454 = vmatprep.subr.bf16.mxu0 0
    %2455 = vmatpush1.bf16.msra.mxu0 %v2414
    %2456 = vmatprep.subr.bf16.mxu0 0
    %2457 = vmatpush1.bf16.msra.mxu0 %v2413
    %2458 = vmatprep.subr.bf16.mxu0 0
    %2459 = vmatpush1.bf16.msra.mxu0 %v2412
    %2460 = vmatprep.subr.bf16.mxu0 0
    %2461 = vmatpush2.bf16.msra.mxu0 %v2427
    %2462 = vmatprep.subr.bf16.mxu0 0
    %2463 = vmatpush2.bf16.msra.mxu0 %v2426
    %2464 = vmatprep.subr.bf16.mxu0 0
    %2465 = vmatpush2.bf16.msra.mxu0 %v2425
    %2466 = vmatprep.subr.bf16.mxu0 0
    %2467 = vmatpush2.bf16.msra.mxu0 %v2424
    %2468 = vmatprep.subr.bf16.mxu0 0
    %2469 = vmatpush2.bf16.msra.mxu0 %v2423
    %2470 = vmatprep.subr.bf16.mxu0 0
    %2471 = vmatpush2.bf16.msra.mxu0 %v2422
    %2472 = vmatprep.subr.bf16.mxu0 0
    %2473 = vmatpush2.bf16.msra.mxu0 %v2421
    %2474 = vmatprep.subr.bf16.mxu0 0
    %2475 = vmatpush2.bf16.msra.mxu0 %v2420
    %2476 = vmatprep.mubr.bf16.mxu0 %v2340
    %2477 = vmatmul.mubr.bf16.gmra.mxu0 %v2339
    %v2478 = vpop.f32.mrf.mxu0
    %v2479 = vadd.f32 %v2346, %v2478
    %v2480 = vpop.f32.mrf.mxu0
    %v2481 = vpop.f32.mrf.mxu0
    %v2482 = vpop.f32.mrf.mxu0
    %2483 = vdwg.mxu0
    %v2484 = vmax.f32 %v2479, 0.0
    %v2486 = vrot.slane %v2045, 6
    %vm2488 = vcmask 1041408
    %v2489 = vsel %vm2488, %v2484, %v2486
    %v2490 = vld [vmem:[#allocation9 + $0xc] sm:$0xff]
    %v2491 = vld [vmem:[#allocation9 + $0x14] sm:$0xff]
    %v2492 = vld [vmem:[#allocation9 + $0x1c] sm:$0xff]
    %v2493 = vld [vmem:[#allocation9 + $0x24] sm:$0xff]
    %v2494 = vld [vmem:[#allocation9 + $0x2c] sm:$0xff]
    %v2495 = vld [vmem:[#allocation9 + $0x34] sm:$0xff]
    %v2496 = vld [vmem:[#allocation9 + $0x3c] sm:$0xff]
    %v2497 = vld [vmem:[#allocation9 + $0x44] sm:$0xff]
    %v2498 = vld [vmem:[#allocation9 + $0x4c] sm:$0xff]
    %v2499 = vld [vmem:[#allocation9 + $0x54] sm:$0xff]
    %v2500 = vld [vmem:[#allocation9 + $0x5c] sm:$0xf]
    %v2501 = vld [vmem:[#allocation9 + $0x74] sm:$0xff]
    %v2502 = vld [vmem:[#allocation9 + $0x7c] sm:$0xff]
    %v2503 = vld [vmem:[#allocation9 + $0x84] sm:$0xff]
    %v2504 = vld [vmem:[#allocation9 + $0x8c] sm:$0xff]
    %v2505 = vld [vmem:[#allocation9 + $0x94] sm:$0xff]
    %v2506 = vld [vmem:[#allocation9 + $0x9c] sm:$0xff]
    %v2507 = vld [vmem:[#allocation9 + $0xa4] sm:$0xff]
    %v2508 = vld [vmem:[#allocation9 + $0xac] sm:$0xff]
    %v2509 = vld [vmem:[#allocation9 + $0xb4] sm:$0xff]
    %v2510 = vld [vmem:[#allocation9 + $0xbc] sm:$0xff]
    %v2511 = vld [vmem:[#allocation9 + $0xc4] sm:$0xf]
    %v2512 = vld [vmem:[#allocation9 + $0xdc] sm:$0xff]
    %v2513 = vld [vmem:[#allocation9 + $0xe4] sm:$0xff]
    %v2514 = vld [vmem:[#allocation9 + $0xec] sm:$0xff]
    %v2515 = vld [vmem:[#allocation9 + $0xf4] sm:$0xff]
    %v2516 = vld [vmem:[#allocation9 + $0xfc] sm:$0xff]
    %v2517 = vld [vmem:[#allocation9 + $0x104] sm:$0xff]
    %v2518 = vld [vmem:[#allocation9 + $0x10c] sm:$0xff]
    %v2519 = vld [vmem:[#allocation9 + $0x114] sm:$0xff]
    %v2520 = vld [vmem:[#allocation9 + $0x11c] sm:$0xff]
    %v2521 = vld [vmem:[#allocation9 + $0x124] sm:$0xff]
    %v2522 = vld [vmem:[#allocation9 + $0x12c] sm:$0xf]
    %v2523 = vld [vmem:[#allocation9 + $0x144] sm:$0xff]
    %v2524 = vld [vmem:[#allocation9 + $0x14c] sm:$0xff]
    %v2525 = vld [vmem:[#allocation9 + $0x154] sm:$0xff]
    %v2526 = vld [vmem:[#allocation9 + $0x15c] sm:$0xff]
    %v2527 = vld [vmem:[#allocation9 + $0x164] sm:$0xff]
    %v2528 = vld [vmem:[#allocation9 + $0x16c] sm:$0xff]
    %v2529 = vld [vmem:[#allocation9 + $0x174] sm:$0xff]
    %v2530 = vld [vmem:[#allocation9 + $0x17c] sm:$0xff]
    %v2531 = vld [vmem:[#allocation9 + $0x184] sm:$0xff]
    %v2532 = vld [vmem:[#allocation9 + $0x18c] sm:$0xff]
    %v2533 = vld [vmem:[#allocation9 + $0x194] sm:$0xf]
    %v2534 = vld [vmem:[#allocation9 + $0x1ac] sm:$0xff]
    %v2535 = vld [vmem:[#allocation9 + $0x1b4] sm:$0xff]
    %v2536 = vld [vmem:[#allocation9 + $0x1bc] sm:$0xff]
    %v2537 = vld [vmem:[#allocation9 + $0x1c4] sm:$0xff]
    %v2538 = vld [vmem:[#allocation9 + $0x1cc] sm:$0xff]
    %v2539 = vld [vmem:[#allocation9 + $0x1d4] sm:$0xff]
    %v2540 = vld [vmem:[#allocation9 + $0x1dc] sm:$0xff]
    %v2541 = vld [vmem:[#allocation9 + $0x1e4] sm:$0xff]
    %v2542 = vld [vmem:[#allocation9 + $0x1ec] sm:$0xff]
    %v2543 = vld [vmem:[#allocation9 + $0x1f4] sm:$0xff]
    %v2544 = vld [vmem:[#allocation9 + $0x1fc] sm:$0xf]
    %v2545 = vld [vmem:[#allocation9 + $0x214] sm:$0xff]
    %v2546 = vld [vmem:[#allocation9 + $0x21c] sm:$0xff]
    %v2547 = vld [vmem:[#allocation9 + $0x224] sm:$0xff]
    %v2548 = vld [vmem:[#allocation9 + $0x22c] sm:$0xff]
    %v2549 = vld [vmem:[#allocation9 + $0x234] sm:$0xff]
    %v2550 = vld [vmem:[#allocation9 + $0x23c] sm:$0xff]
    %v2551 = vld [vmem:[#allocation9 + $0x244] sm:$0xff]
    %v2552 = vld [vmem:[#allocation9 + $0x24c] sm:$0xff]
    %v2553 = vld [vmem:[#allocation9 + $0x254] sm:$0xff]
    %v2554 = vld [vmem:[#allocation9 + $0x25c] sm:$0xff]
    %v2555 = vld [vmem:[#allocation9 + $0x264] sm:$0xf]
    %v2556 = vld [vmem:[#allocation9 + $0x27c] sm:$0xff]
    %v2557 = vld [vmem:[#allocation9 + $0x284] sm:$0xff]
    %v2558 = vld [vmem:[#allocation9 + $0x28c] sm:$0xff]
    %v2559 = vld [vmem:[#allocation9 + $0x294] sm:$0xff]
    %v2560 = vld [vmem:[#allocation9 + $0x29c] sm:$0xff]
    %v2561 = vld [vmem:[#allocation9 + $0x2a4] sm:$0xff]
    %v2562 = vld [vmem:[#allocation9 + $0x2ac] sm:$0xff]
    %v2563 = vld [vmem:[#allocation9 + $0x2b4] sm:$0xff]
    %v2564 = vld [vmem:[#allocation9 + $0x2bc] sm:$0xff]
    %v2565 = vld [vmem:[#allocation9 + $0x2c4] sm:$0xff]
    %v2566 = vld [vmem:[#allocation9 + $0x2cc] sm:$0xf]
    %v2567 = vld [vmem:[#allocation9 + $0x2e4] sm:$0xff]
    %v2568 = vld [vmem:[#allocation9 + $0x2ec] sm:$0xff]
    %v2569 = vld [vmem:[#allocation9 + $0x2f4] sm:$0xff]
    %v2570 = vld [vmem:[#allocation9 + $0x2fc] sm:$0xff]
    %v2571 = vld [vmem:[#allocation9 + $0x304] sm:$0xff]
    %v2572 = vld [vmem:[#allocation9 + $0x30c] sm:$0xff]
    %v2573 = vld [vmem:[#allocation9 + $0x314] sm:$0xff]
    %v2574 = vld [vmem:[#allocation9 + $0x31c] sm:$0xff]
    %v2575 = vld [vmem:[#allocation9 + $0x324] sm:$0xff]
    %v2576 = vld [vmem:[#allocation9 + $0x32c] sm:$0xff]
    %v2577 = vld [vmem:[#allocation9 + $0x334] sm:$0xf]
    %v2578 = vld [vmem:[#allocation9 + $0x34c] sm:$0xff]
    %v2579 = vld [vmem:[#allocation9 + $0x354] sm:$0xff]
    %v2580 = vld [vmem:[#allocation9 + $0x35c] sm:$0xff]
    %v2581 = vld [vmem:[#allocation9 + $0x364] sm:$0xff]
    %v2582 = vld [vmem:[#allocation9 + $0x36c] sm:$0xff]
    %v2583 = vld [vmem:[#allocation9 + $0x374] sm:$0xff]
    %v2584 = vld [vmem:[#allocation9 + $0x37c] sm:$0xff]
    %v2585 = vld [vmem:[#allocation9 + $0x384] sm:$0xff]
    %v2586 = vld [vmem:[#allocation9 + $0x38c] sm:$0xff]
    %v2587 = vld [vmem:[#allocation9 + $0x394] sm:$0xff]
    %v2588 = vld [vmem:[#allocation9 + $0x39c] sm:$0xf]
    %v2589 = vld [vmem:[#allocation9 + $0x3b4] sm:$0xff]
    %v2590 = vld [vmem:[#allocation9 + $0x3bc] sm:$0xff]
    %v2591 = vld [vmem:[#allocation9 + $0x3c4] sm:$0xff]
    %v2592 = vld [vmem:[#allocation9 + $0x3cc] sm:$0xff]
    %v2593 = vld [vmem:[#allocation9 + $0x3d4] sm:$0xff]
    %v2594 = vld [vmem:[#allocation9 + $0x3dc] sm:$0xff]
    %v2595 = vld [vmem:[#allocation9 + $0x3e4] sm:$0xff]
    %v2596 = vld [vmem:[#allocation9 + $0x3ec] sm:$0xff]
    %v2597 = vld [vmem:[#allocation9 + $0x3f4] sm:$0xff]
    %v2598 = vld [vmem:[#allocation9 + $0x3fc] sm:$0xff]
    %v2599 = vld [vmem:[#allocation9 + $0x404] sm:$0xf]
    %v2600 = vld [vmem:[#allocation9 + $0x41c] sm:$0xff]
    %v2601 = vld [vmem:[#allocation9 + $0x424] sm:$0xff]
    %v2602 = vld [vmem:[#allocation9 + $0x42c] sm:$0xff]
    %v2603 = vld [vmem:[#allocation9 + $0x434] sm:$0xff]
    %v2604 = vld [vmem:[#allocation9 + $0x43c] sm:$0xff]
    %v2605 = vld [vmem:[#allocation9 + $0x444] sm:$0xff]
    %v2606 = vld [vmem:[#allocation9 + $0x44c] sm:$0xff]
    %v2607 = vld [vmem:[#allocation9 + $0x454] sm:$0xff]
    %v2608 = vld [vmem:[#allocation9 + $0x45c] sm:$0xff]
    %v2609 = vld [vmem:[#allocation9 + $0x464] sm:$0xff]
    %v2610 = vld [vmem:[#allocation9 + $0x46c] sm:$0xf]
    %v2611 = vld [vmem:[#allocation9 + $0x484] sm:$0xff]
    %v2612 = vld [vmem:[#allocation9 + $0x48c] sm:$0xff]
    %v2613 = vld [vmem:[#allocation9 + $0x494] sm:$0xff]
    %v2614 = vld [vmem:[#allocation9 + $0x49c] sm:$0xff]
    %v2615 = vld [vmem:[#allocation9 + $0x4a4] sm:$0xff]
    %v2616 = vld [vmem:[#allocation9 + $0x4ac] sm:$0xff]
    %v2617 = vld [vmem:[#allocation9 + $0x4b4] sm:$0xff]
    %v2618 = vld [vmem:[#allocation9 + $0x4bc] sm:$0xff]
    %v2619 = vld [vmem:[#allocation9 + $0x4c4] sm:$0xff]
    %v2620 = vld [vmem:[#allocation9 + $0x4cc] sm:$0xff]
    %v2621 = vld [vmem:[#allocation9 + $0x4d4] sm:$0xf]
    %v2622 = vld [vmem:[#allocation9 + $0x4ec] sm:$0xff]
    %v2623 = vld [vmem:[#allocation9 + $0x4f4] sm:$0xff]
    %v2624 = vld [vmem:[#allocation9 + $0x4fc] sm:$0xff]
    %v2625 = vld [vmem:[#allocation9 + $0x504] sm:$0xff]
    %v2626 = vld [vmem:[#allocation9 + $0x50c] sm:$0xff]
    %v2627 = vld [vmem:[#allocation9 + $0x514] sm:$0xff]
    %v2628 = vld [vmem:[#allocation9 + $0x51c] sm:$0xff]
    %v2629 = vld [vmem:[#allocation9 + $0x524] sm:$0xff]
    %v2630 = vld [vmem:[#allocation9 + $0x52c] sm:$0xff]
    %v2631 = vld [vmem:[#allocation9 + $0x534] sm:$0xff]
    %v2632 = vld [vmem:[#allocation9 + $0x53c] sm:$0xf]
    %v2633 = vld [vmem:[#allocation9 + $0x554] sm:$0xff]
    %v2634 = vld [vmem:[#allocation9 + $0x55c] sm:$0xff]
    %v2635 = vld [vmem:[#allocation9 + $0x564] sm:$0xff]
    %v2636 = vld [vmem:[#allocation9 + $0x56c] sm:$0xff]
    %v2637 = vld [vmem:[#allocation9 + $0x574] sm:$0xff]
    %v2638 = vld [vmem:[#allocation9 + $0x57c] sm:$0xff]
    %v2639 = vld [vmem:[#allocation9 + $0x584] sm:$0xff]
    %v2640 = vld [vmem:[#allocation9 + $0x58c] sm:$0xff]
    %v2641 = vld [vmem:[#allocation9 + $0x594] sm:$0xff]
    %v2642 = vld [vmem:[#allocation9 + $0x59c] sm:$0xff]
    %v2643 = vld [vmem:[#allocation9 + $0x5a4] sm:$0xf]
    %v2644 = vld [vmem:[#allocation9 + $0x5bc] sm:$0xff]
    %v2645 = vld [vmem:[#allocation9 + $0x5c4] sm:$0xff]
    %v2646 = vld [vmem:[#allocation9 + $0x5cc] sm:$0xff]
    %v2647 = vld [vmem:[#allocation9 + $0x5d4] sm:$0xff]
    %v2648 = vld [vmem:[#allocation9 + $0x5dc] sm:$0xff]
    %v2649 = vld [vmem:[#allocation9 + $0x5e4] sm:$0xff]
    %v2650 = vld [vmem:[#allocation9 + $0x5ec] sm:$0xff]
    %v2651 = vld [vmem:[#allocation9 + $0x5f4] sm:$0xff]
    %v2652 = vld [vmem:[#allocation9 + $0x5fc] sm:$0xff]
    %v2653 = vld [vmem:[#allocation9 + $0x604] sm:$0xff]
    %v2654 = vld [vmem:[#allocation9 + $0x60c] sm:$0xf]
    %v2655 = vld [vmem:[#allocation9 + $0x624] sm:$0xff]
    %v2656 = vld [vmem:[#allocation9 + $0x62c] sm:$0xff]
    %v2657 = vld [vmem:[#allocation9 + $0x634] sm:$0xff]
    %v2658 = vld [vmem:[#allocation9 + $0x63c] sm:$0xff]
    %v2659 = vld [vmem:[#allocation9 + $0x644] sm:$0xff]
    %v2660 = vld [vmem:[#allocation9 + $0x64c] sm:$0xff]
    %v2661 = vld [vmem:[#allocation9 + $0x654] sm:$0xff]
    %v2662 = vld [vmem:[#allocation9 + $0x65c] sm:$0xff]
    %v2663 = vld [vmem:[#allocation9 + $0x664] sm:$0xff]
    %v2664 = vld [vmem:[#allocation9 + $0x66c] sm:$0xff]
    %v2665 = vld [vmem:[#allocation9 + $0x674] sm:$0xf]
    %v2666 = vpack.c.bf16 %v2489, %v2489
    %v2667 = vld [vmem:[%s6 + $0xa] sm:$0xff]
    %v2668 = vld [vmem:[%s6 + $0x12] sm:$0xff]
    %v2669 = vld [vmem:[%s6 + $0x1a] sm:$0x1f]
    %v2673 = vlaneseq
    %v2674 = vshrl.u32 %v2673, 7
    %v2675 = vsub.s32 0, %v2674
    %v2676 = vrot.slane %v2667, %v2675
    %v2677 = vlaneseq
    %v2678 = vshrl.u32 %v2677, 7
    %v2679 = vsub.s32 1, %v2678
    %v2680 = vrot.slane %v2667, %v2679
    %v2681 = vlaneseq
    %v2682 = vshrl.u32 %v2681, 7
    %v2683 = vsub.s32 2, %v2682
    %v2684 = vrot.slane %v2667, %v2683
    %v2685 = vlaneseq
    %v2686 = vshrl.u32 %v2685, 7
    %v2687 = vsub.s32 3, %v2686
    %v2688 = vrot.slane %v2667, %v2687
    %v2689 = vlaneseq
    %v2690 = vshrl.u32 %v2689, 7
    %v2691 = vsub.s32 4, %v2690
    %v2692 = vrot.slane %v2667, %v2691
    %v2693 = vlaneseq
    %v2694 = vshrl.u32 %v2693, 7
    %v2695 = vsub.s32 5, %v2694
    %v2696 = vrot.slane %v2667, %v2695
    %v2697 = vlaneseq
    %v2698 = vshrl.u32 %v2697, 7
    %v2699 = vsub.s32 6, %v2698
    %v2700 = vrot.slane %v2667, %v2699
    %v2701 = vlaneseq
    %v2702 = vshrl.u32 %v2701, 7
    %v2703 = vsub.s32 7, %v2702
    %v2704 = vrot.slane %v2667, %v2703
    %v2705 = vlaneseq
    %v2706 = vshrl.u32 %v2705, 7
    %v2707 = vsub.s32 0, %v2706
    %v2708 = vrot.slane %v2668, %v2707
    %v2709 = vlaneseq
    %v2710 = vshrl.u32 %v2709, 7
    %v2711 = vsub.s32 1, %v2710
    %v2712 = vrot.slane %v2668, %v2711
    %v2713 = vlaneseq
    %v2714 = vshrl.u32 %v2713, 7
    %v2715 = vsub.s32 2, %v2714
    %v2716 = vrot.slane %v2668, %v2715
    %v2717 = vlaneseq
    %v2718 = vshrl.u32 %v2717, 7
    %v2719 = vsub.s32 3, %v2718
    %v2720 = vrot.slane %v2668, %v2719
    %v2721 = vlaneseq
    %v2722 = vshrl.u32 %v2721, 7
    %v2723 = vsub.s32 4, %v2722
    %v2724 = vrot.slane %v2668, %v2723
    %v2725 = vlaneseq
    %v2726 = vshrl.u32 %v2725, 7
    %v2727 = vsub.s32 5, %v2726
    %v2728 = vrot.slane %v2668, %v2727
    %v2729 = vlaneseq
    %v2730 = vshrl.u32 %v2729, 7
    %v2731 = vsub.s32 6, %v2730
    %v2732 = vrot.slane %v2668, %v2731
    %v2733 = vlaneseq
    %v2734 = vshrl.u32 %v2733, 7
    %v2735 = vsub.s32 7, %v2734
    %v2736 = vrot.slane %v2668, %v2735
    %v2737 = vlaneseq
    %v2738 = vshrl.u32 %v2737, 7
    %v2739 = vsub.s32 0, %v2738
    %v2740 = vrot.slane %v2669, %v2739
    %v2741 = vlaneseq
    %v2742 = vshrl.u32 %v2741, 7
    %v2743 = vsub.s32 1, %v2742
    %v2744 = vrot.slane %v2669, %v2743
    %v2745 = vlaneseq
    %v2746 = vshrl.u32 %v2745, 7
    %v2747 = vsub.s32 2, %v2746
    %v2748 = vrot.slane %v2669, %v2747
    %v2749 = vlaneseq
    %v2750 = vshrl.u32 %v2749, 7
    %v2751 = vsub.s32 3, %v2750
    %v2752 = vrot.slane %v2669, %v2751
    %v2753 = vlaneseq
    %v2754 = vshrl.u32 %v2753, 7
    %v2755 = vsub.s32 4, %v2754
    %v2756 = vrot.slane %v2669, %v2755
    %v2954 = vunpack.c.l.b16 %v2490
    %v2955 = vunpack.c.h.b16 %v2490
    %v2956 = vunpack.c.l.b16 %v2491
    %v2957 = vunpack.c.h.b16 %v2491
    %v2958 = vunpack.c.l.b16 %v2492
    %v2959 = vunpack.c.h.b16 %v2492
    %v2960 = vunpack.c.l.b16 %v2493
    %v2961 = vunpack.c.h.b16 %v2493
    %v2962 = vunpack.c.l.b16 %v2494
    %v2963 = vunpack.c.h.b16 %v2494
    %v2964 = vunpack.c.l.b16 %v2495
    %v2965 = vunpack.c.h.b16 %v2495
    %v2966 = vunpack.c.l.b16 %v2496
    %v2967 = vunpack.c.h.b16 %v2496
    %v2968 = vunpack.c.l.b16 %v2497
    %v2969 = vunpack.c.h.b16 %v2497
    %v2970 = vunpack.c.l.b16 %v2498
    %v2971 = vunpack.c.h.b16 %v2498
    %v2972 = vunpack.c.l.b16 %v2499
    %v2973 = vunpack.c.h.b16 %v2499
    %v2974 = vunpack.c.l.b16 %v2500
    %v2975 = vunpack.c.l.b16 %v2501
    %v2976 = vunpack.c.h.b16 %v2501
    %v2977 = vunpack.c.l.b16 %v2502
    %v2978 = vunpack.c.h.b16 %v2502
    %v2979 = vunpack.c.l.b16 %v2503
    %v2980 = vunpack.c.h.b16 %v2503
    %v2981 = vunpack.c.l.b16 %v2504
    %v2982 = vunpack.c.h.b16 %v2504
    %v2983 = vunpack.c.l.b16 %v2505
    %v2984 = vunpack.c.h.b16 %v2505
    %v2985 = vunpack.c.l.b16 %v2506
    %v2986 = vunpack.c.h.b16 %v2506
    %v2987 = vunpack.c.l.b16 %v2507
    %v2988 = vunpack.c.h.b16 %v2507
    %v2989 = vunpack.c.l.b16 %v2508
    %v2990 = vunpack.c.h.b16 %v2508
    %v2991 = vunpack.c.l.b16 %v2509
    %v2992 = vunpack.c.h.b16 %v2509
    %v2993 = vunpack.c.l.b16 %v2510
    %v2994 = vunpack.c.h.b16 %v2510
    %v2995 = vunpack.c.l.b16 %v2511
    %v2996 = vunpack.c.l.b16 %v2512
    %v2997 = vunpack.c.h.b16 %v2512
    %v2998 = vunpack.c.l.b16 %v2513
    %v2999 = vunpack.c.h.b16 %v2513
    %v3000 = vunpack.c.l.b16 %v2514
    %v3001 = vunpack.c.h.b16 %v2514
    %v3002 = vunpack.c.l.b16 %v2515
    %v3003 = vunpack.c.h.b16 %v2515
    %v3004 = vunpack.c.l.b16 %v2516
    %v3005 = vunpack.c.h.b16 %v2516
    %v3006 = vunpack.c.l.b16 %v2517
    %v3007 = vunpack.c.h.b16 %v2517
    %v3008 = vunpack.c.l.b16 %v2518
    %v3009 = vunpack.c.h.b16 %v2518
    %v3010 = vunpack.c.l.b16 %v2519
    %v3011 = vunpack.c.h.b16 %v2519
    %v3012 = vunpack.c.l.b16 %v2520
    %v3013 = vunpack.c.h.b16 %v2520
    %v3014 = vunpack.c.l.b16 %v2521
    %v3015 = vunpack.c.h.b16 %v2521
    %v3016 = vunpack.c.l.b16 %v2522
    %v3017 = vunpack.c.l.b16 %v2523
    %v3018 = vunpack.c.h.b16 %v2523
    %v3019 = vunpack.c.l.b16 %v2524
    %v3020 = vunpack.c.h.b16 %v2524
    %v3021 = vunpack.c.l.b16 %v2525
    %v3022 = vunpack.c.h.b16 %v2525
    %v3023 = vunpack.c.l.b16 %v2526
    %v3024 = vunpack.c.h.b16 %v2526
    %v3025 = vunpack.c.l.b16 %v2527
    %v3026 = vunpack.c.h.b16 %v2527
    %v3027 = vunpack.c.l.b16 %v2528
    %v3028 = vunpack.c.h.b16 %v2528
    %v3029 = vunpack.c.l.b16 %v2529
    %v3030 = vunpack.c.h.b16 %v2529
    %v3031 = vunpack.c.l.b16 %v2530
    %v3032 = vunpack.c.h.b16 %v2530
    %v3033 = vunpack.c.l.b16 %v2531
    %v3034 = vunpack.c.h.b16 %v2531
    %v3035 = vunpack.c.l.b16 %v2532
    %v3036 = vunpack.c.h.b16 %v2532
    %v3037 = vunpack.c.l.b16 %v2533
    %v3038 = vunpack.c.l.b16 %v2534
    %v3039 = vunpack.c.h.b16 %v2534
    %v3040 = vunpack.c.l.b16 %v2535
    %v3041 = vunpack.c.h.b16 %v2535
    %v3042 = vunpack.c.l.b16 %v2536
    %v3043 = vunpack.c.h.b16 %v2536
    %v3044 = vunpack.c.l.b16 %v2537
    %v3045 = vunpack.c.h.b16 %v2537
    %v3046 = vunpack.c.l.b16 %v2538
    %v3047 = vunpack.c.h.b16 %v2538
    %v3048 = vunpack.c.l.b16 %v2539
    %v3049 = vunpack.c.h.b16 %v2539
    %v3050 = vunpack.c.l.b16 %v2540
    %v3051 = vunpack.c.h.b16 %v2540
    %v3052 = vunpack.c.l.b16 %v2541
    %v3053 = vunpack.c.h.b16 %v2541
    %v3054 = vunpack.c.l.b16 %v2542
    %v3055 = vunpack.c.h.b16 %v2542
    %v3056 = vunpack.c.l.b16 %v2543
    %v3057 = vunpack.c.h.b16 %v2543
    %v3058 = vunpack.c.l.b16 %v2544
    %v3059 = vunpack.c.l.b16 %v2545
    %v3060 = vunpack.c.h.b16 %v2545
    %v3061 = vunpack.c.l.b16 %v2546
    %v3062 = vunpack.c.h.b16 %v2546
    %v3063 = vunpack.c.l.b16 %v2547
    %v3064 = vunpack.c.h.b16 %v2547
    %v3065 = vunpack.c.l.b16 %v2548
    %v3066 = vunpack.c.h.b16 %v2548
    %v3067 = vunpack.c.l.b16 %v2549
    %v3068 = vunpack.c.h.b16 %v2549
    %v3069 = vunpack.c.l.b16 %v2550
    %v3070 = vunpack.c.h.b16 %v2550
    %v3071 = vunpack.c.l.b16 %v2551
    %v3072 = vunpack.c.h.b16 %v2551
    %v3073 = vunpack.c.l.b16 %v2552
    %v3074 = vunpack.c.h.b16 %v2552
    %v3075 = vunpack.c.l.b16 %v2553
    %v3076 = vunpack.c.h.b16 %v2553
    %v3077 = vunpack.c.l.b16 %v2554
    %v3078 = vunpack.c.h.b16 %v2554
    %v3079 = vunpack.c.l.b16 %v2555
    %v3080 = vunpack.c.l.b16 %v2556
    %v3081 = vunpack.c.h.b16 %v2556
    %v3082 = vunpack.c.l.b16 %v2557
    %v3083 = vunpack.c.h.b16 %v2557
    %v3084 = vunpack.c.l.b16 %v2558
    %v3085 = vunpack.c.h.b16 %v2558
    %v3086 = vunpack.c.l.b16 %v2559
    %v3087 = vunpack.c.h.b16 %v2559
    %v3088 = vunpack.c.l.b16 %v2560
    %v3089 = vunpack.c.h.b16 %v2560
    %v3090 = vunpack.c.l.b16 %v2561
    %v3091 = vunpack.c.h.b16 %v2561
    %v3092 = vunpack.c.l.b16 %v2562
    %v3093 = vunpack.c.h.b16 %v2562
    %v3094 = vunpack.c.l.b16 %v2563
    %v3095 = vunpack.c.h.b16 %v2563
    %v3096 = vunpack.c.l.b16 %v2564
    %v3097 = vunpack.c.h.b16 %v2564
    %v3098 = vunpack.c.l.b16 %v2565
    %v3099 = vunpack.c.h.b16 %v2565
    %v3100 = vunpack.c.l.b16 %v2566
    %v3101 = vunpack.c.l.b16 %v2567
    %v3102 = vunpack.c.h.b16 %v2567
    %v3103 = vunpack.c.l.b16 %v2568
    %v3104 = vunpack.c.h.b16 %v2568
    %v3105 = vunpack.c.l.b16 %v2569
    %v3106 = vunpack.c.h.b16 %v2569
    %v3107 = vunpack.c.l.b16 %v2570
    %v3108 = vunpack.c.h.b16 %v2570
    %v3109 = vunpack.c.l.b16 %v2571
    %v3110 = vunpack.c.h.b16 %v2571
    %v3111 = vunpack.c.l.b16 %v2572
    %v3112 = vunpack.c.h.b16 %v2572
    %v3113 = vunpack.c.l.b16 %v2573
    %v3114 = vunpack.c.h.b16 %v2573
    %v3115 = vunpack.c.l.b16 %v2574
    %v3116 = vunpack.c.h.b16 %v2574
    %v3117 = vunpack.c.l.b16 %v2575
    %v3118 = vunpack.c.h.b16 %v2575
    %v3119 = vunpack.c.l.b16 %v2576
    %v3120 = vunpack.c.h.b16 %v2576
    %v3121 = vunpack.c.l.b16 %v2577
    %v3122 = vunpack.c.l.b16 %v2578
    %v3123 = vunpack.c.h.b16 %v2578
    %v3124 = vunpack.c.l.b16 %v2579
    %v3125 = vunpack.c.h.b16 %v2579
    %v3126 = vunpack.c.l.b16 %v2580
    %v3127 = vunpack.c.h.b16 %v2580
    %v3128 = vunpack.c.l.b16 %v2581
    %v3129 = vunpack.c.h.b16 %v2581
    %v3130 = vunpack.c.l.b16 %v2582
    %v3131 = vunpack.c.h.b16 %v2582
    %v3132 = vunpack.c.l.b16 %v2583
    %v3133 = vunpack.c.h.b16 %v2583
    %v3134 = vunpack.c.l.b16 %v2584
    %v3135 = vunpack.c.h.b16 %v2584
    %v3136 = vunpack.c.l.b16 %v2585
    %v3137 = vunpack.c.h.b16 %v2585
    %v3138 = vunpack.c.l.b16 %v2586
    %v3139 = vunpack.c.h.b16 %v2586
    %v3140 = vunpack.c.l.b16 %v2587
    %v3141 = vunpack.c.h.b16 %v2587
    %v3142 = vunpack.c.l.b16 %v2588
    %v3143 = vunpack.c.l.b16 %v2589
    %v3144 = vunpack.c.h.b16 %v2589
    %v3145 = vunpack.c.l.b16 %v2590
    %v3146 = vunpack.c.h.b16 %v2590
    %v3147 = vunpack.c.l.b16 %v2591
    %v3148 = vunpack.c.h.b16 %v2591
    %v3149 = vunpack.c.l.b16 %v2592
    %v3150 = vunpack.c.h.b16 %v2592
    %v3151 = vunpack.c.l.b16 %v2593
    %v3152 = vunpack.c.h.b16 %v2593
    %v3153 = vunpack.c.l.b16 %v2594
    %v3154 = vunpack.c.h.b16 %v2594
    %v3155 = vunpack.c.l.b16 %v2595
    %v3156 = vunpack.c.h.b16 %v2595
    %v3157 = vunpack.c.l.b16 %v2596
    %v3158 = vunpack.c.h.b16 %v2596
    %v3159 = vunpack.c.l.b16 %v2597
    %v3160 = vunpack.c.h.b16 %v2597
    %v3161 = vunpack.c.l.b16 %v2598
    %v3162 = vunpack.c.h.b16 %v2598
    %v3163 = vunpack.c.l.b16 %v2599
    %v3164 = vunpack.c.l.b16 %v2600
    %v3165 = vunpack.c.h.b16 %v2600
    %v3166 = vunpack.c.l.b16 %v2601
    %v3167 = vunpack.c.h.b16 %v2601
    %v3168 = vunpack.c.l.b16 %v2602
    %v3169 = vunpack.c.h.b16 %v2602
    %v3170 = vunpack.c.l.b16 %v2603
    %v3171 = vunpack.c.h.b16 %v2603
    %v3172 = vunpack.c.l.b16 %v2604
    %v3173 = vunpack.c.h.b16 %v2604
    %v3174 = vunpack.c.l.b16 %v2605
    %v3175 = vunpack.c.h.b16 %v2605
    %v3176 = vunpack.c.l.b16 %v2606
    %v3177 = vunpack.c.h.b16 %v2606
    %v3178 = vunpack.c.l.b16 %v2607
    %v3179 = vunpack.c.h.b16 %v2607
    %v3180 = vunpack.c.l.b16 %v2608
    %v3181 = vunpack.c.h.b16 %v2608
    %v3182 = vunpack.c.l.b16 %v2609
    %v3183 = vunpack.c.h.b16 %v2609
    %v3184 = vunpack.c.l.b16 %v2610
    %v3185 = vunpack.c.l.b16 %v2611
    %v3186 = vunpack.c.h.b16 %v2611
    %v3187 = vunpack.c.l.b16 %v2612
    %v3188 = vunpack.c.h.b16 %v2612
    %v3189 = vunpack.c.l.b16 %v2613
    %v3190 = vunpack.c.h.b16 %v2613
    %v3191 = vunpack.c.l.b16 %v2614
    %v3192 = vunpack.c.h.b16 %v2614
    %v3193 = vunpack.c.l.b16 %v2615
    %v3194 = vunpack.c.h.b16 %v2615
    %v3195 = vunpack.c.l.b16 %v2616
    %v3196 = vunpack.c.h.b16 %v2616
    %v3197 = vunpack.c.l.b16 %v2617
    %v3198 = vunpack.c.h.b16 %v2617
    %v3199 = vunpack.c.l.b16 %v2618
    %v3200 = vunpack.c.h.b16 %v2618
    %v3201 = vunpack.c.l.b16 %v2619
    %v3202 = vunpack.c.h.b16 %v2619
    %v3203 = vunpack.c.l.b16 %v2620
    %v3204 = vunpack.c.h.b16 %v2620
    %v3205 = vunpack.c.l.b16 %v2621
    %v3206 = vunpack.c.l.b16 %v2622
    %v3207 = vunpack.c.h.b16 %v2622
    %v3208 = vunpack.c.l.b16 %v2623
    %v3209 = vunpack.c.h.b16 %v2623
    %v3210 = vunpack.c.l.b16 %v2624
    %v3211 = vunpack.c.h.b16 %v2624
    %v3212 = vunpack.c.l.b16 %v2625
    %v3213 = vunpack.c.h.b16 %v2625
    %v3214 = vunpack.c.l.b16 %v2626
    %v3215 = vunpack.c.h.b16 %v2626
    %v3216 = vunpack.c.l.b16 %v2627
    %v3217 = vunpack.c.h.b16 %v2627
    %v3218 = vunpack.c.l.b16 %v2628
    %v3219 = vunpack.c.h.b16 %v2628
    %v3220 = vunpack.c.l.b16 %v2629
    %v3221 = vunpack.c.h.b16 %v2629
    %v3222 = vunpack.c.l.b16 %v2630
    %v3223 = vunpack.c.h.b16 %v2630
    %v3224 = vunpack.c.l.b16 %v2631
    %v3225 = vunpack.c.h.b16 %v2631
    %v3226 = vunpack.c.l.b16 %v2632
    %v3227 = vunpack.c.l.b16 %v2633
    %v3228 = vunpack.c.h.b16 %v2633
    %v3229 = vunpack.c.l.b16 %v2634
    %v3230 = vunpack.c.h.b16 %v2634
    %v3231 = vunpack.c.l.b16 %v2635
    %v3232 = vunpack.c.h.b16 %v2635
    %v3233 = vunpack.c.l.b16 %v2636
    %v3234 = vunpack.c.h.b16 %v2636
    %v3235 = vunpack.c.l.b16 %v2637
    %v3236 = vunpack.c.h.b16 %v2637
    %v3237 = vunpack.c.l.b16 %v2638
    %v3238 = vunpack.c.h.b16 %v2638
    %v3239 = vunpack.c.l.b16 %v2639
    %v3240 = vunpack.c.h.b16 %v2639
    %v3241 = vunpack.c.l.b16 %v2640
    %v3242 = vunpack.c.h.b16 %v2640
    %v3243 = vunpack.c.l.b16 %v2641
    %v3244 = vunpack.c.h.b16 %v2641
    %v3245 = vunpack.c.l.b16 %v2642
    %v3246 = vunpack.c.h.b16 %v2642
    %v3247 = vunpack.c.l.b16 %v2643
    %v3248 = vunpack.c.l.b16 %v2644
    %v3249 = vunpack.c.h.b16 %v2644
    %v3250 = vunpack.c.l.b16 %v2645
    %v3251 = vunpack.c.h.b16 %v2645
    %v3252 = vunpack.c.l.b16 %v2646
    %v3253 = vunpack.c.h.b16 %v2646
    %v3254 = vunpack.c.l.b16 %v2647
    %v3255 = vunpack.c.h.b16 %v2647
    %v3256 = vunpack.c.l.b16 %v2648
    %v3257 = vunpack.c.h.b16 %v2648
    %v3258 = vunpack.c.l.b16 %v2649
    %v3259 = vunpack.c.h.b16 %v2649
    %v3260 = vunpack.c.l.b16 %v2650
    %v3261 = vunpack.c.h.b16 %v2650
    %v3262 = vunpack.c.l.b16 %v2651
    %v3263 = vunpack.c.h.b16 %v2651
    %v3264 = vunpack.c.l.b16 %v2652
    %v3265 = vunpack.c.h.b16 %v2652
    %v3266 = vunpack.c.l.b16 %v2653
    %v3267 = vunpack.c.h.b16 %v2653
    %v3268 = vunpack.c.l.b16 %v2654
    %v3269 = vunpack.c.l.b16 %v2655
    %v3270 = vunpack.c.h.b16 %v2655
    %v3271 = vunpack.c.l.b16 %v2656
    %v3272 = vunpack.c.h.b16 %v2656
    %v3273 = vunpack.c.l.b16 %v2657
    %v3274 = vunpack.c.h.b16 %v2657
    %v3275 = vunpack.c.l.b16 %v2658
    %v3276 = vunpack.c.h.b16 %v2658
    %v3277 = vunpack.c.l.b16 %v2659
    %v3278 = vunpack.c.h.b16 %v2659
    %v3279 = vunpack.c.l.b16 %v2660
    %v3280 = vunpack.c.h.b16 %v2660
    %v3281 = vunpack.c.l.b16 %v2661
    %v3282 = vunpack.c.h.b16 %v2661
    %v3283 = vunpack.c.l.b16 %v2662
    %v3284 = vunpack.c.h.b16 %v2662
    %v3285 = vunpack.c.l.b16 %v2663
    %v3286 = vunpack.c.h.b16 %v2663
    %v3287 = vunpack.c.l.b16 %v2664
    %v3288 = vunpack.c.h.b16 %v2664
    %v3289 = vunpack.c.l.b16 %v2665
    %v3290 = vpack.c.b16 %v2975, %v2954
    %v3291 = vpack.c.b16 %v2976, %v2955
    %v3292 = vpack.c.b16 %v2977, %v2956
    %v3293 = vpack.c.b16 %v2978, %v2957
    %v3294 = vpack.c.b16 %v2979, %v2958
    %v3295 = vpack.c.b16 %v2980, %v2959
    %v3296 = vpack.c.b16 %v2981, %v2960
    %v3297 = vpack.c.b16 %v2982, %v2961
    %v3298 = vpack.c.b16 %v2983, %v2962
    %v3299 = vpack.c.b16 %v2984, %v2963
    %v3300 = vpack.c.b16 %v2985, %v2964
    %v3301 = vpack.c.b16 %v2986, %v2965
    %v3302 = vpack.c.b16 %v2987, %v2966
    %v3303 = vpack.c.b16 %v2988, %v2967
    %v3304 = vpack.c.b16 %v2989, %v2968
    %v3305 = vpack.c.b16 %v2990, %v2969
    %v3306 = vpack.c.b16 %v2991, %v2970
    %v3307 = vpack.c.b16 %v2992, %v2971
    %v3308 = vpack.c.b16 %v2993, %v2972
    %v3309 = vpack.c.b16 %v2994, %v2973
    %v3310 = vpack.c.b16 %v2995, %v2974
    %v3311 = vpack.c.b16 %v3017, %v2996
    %v3312 = vpack.c.b16 %v3018, %v2997
    %v3313 = vpack.c.b16 %v3019, %v2998
    %v3314 = vpack.c.b16 %v3020, %v2999
    %v3315 = vpack.c.b16 %v3021, %v3000
    %v3316 = vpack.c.b16 %v3022, %v3001
    %v3317 = vpack.c.b16 %v3023, %v3002
    %v3318 = vpack.c.b16 %v3024, %v3003
    %v3319 = vpack.c.b16 %v3025, %v3004
    %v3320 = vpack.c.b16 %v3026, %v3005
    %v3321 = vpack.c.b16 %v3027, %v3006
    %v3322 = vpack.c.b16 %v3028, %v3007
    %v3323 = vpack.c.b16 %v3029, %v3008
    %v3324 = vpack.c.b16 %v3030, %v3009
    %v3325 = vpack.c.b16 %v3031, %v3010
    %v3326 = vpack.c.b16 %v3032, %v3011
    %v3327 = vpack.c.b16 %v3033, %v3012
    %v3328 = vpack.c.b16 %v3034, %v3013
    %v3329 = vpack.c.b16 %v3035, %v3014
    %v3330 = vpack.c.b16 %v3036, %v3015
    %v3331 = vpack.c.b16 %v3037, %v3016
    %v3332 = vpack.c.b16 %v3059, %v3038
    %v3333 = vpack.c.b16 %v3060, %v3039
    %v3334 = vpack.c.b16 %v3061, %v3040
    %v3335 = vpack.c.b16 %v3062, %v3041
    %v3336 = vpack.c.b16 %v3063, %v3042
    %v3337 = vpack.c.b16 %v3064, %v3043
    %v3338 = vpack.c.b16 %v3065, %v3044
    %v3339 = vpack.c.b16 %v3066, %v3045
    %v3340 = vpack.c.b16 %v3067, %v3046
    %v3341 = vpack.c.b16 %v3068, %v3047
    %v3342 = vpack.c.b16 %v3069, %v3048
    %v3343 = vpack.c.b16 %v3070, %v3049
    %v3344 = vpack.c.b16 %v3071, %v3050
    %v3345 = vpack.c.b16 %v3072, %v3051
    %v3346 = vpack.c.b16 %v3073, %v3052
    %v3347 = vpack.c.b16 %v3074, %v3053
    %v3348 = vpack.c.b16 %v3075, %v3054
    %v3349 = vpack.c.b16 %v3076, %v3055
    %v3350 = vpack.c.b16 %v3077, %v3056
    %v3351 = vpack.c.b16 %v3078, %v3057
    %v3352 = vpack.c.b16 %v3079, %v3058
    %v3353 = vpack.c.b16 %v3101, %v3080
    %v3354 = vpack.c.b16 %v3102, %v3081
    %v3355 = vpack.c.b16 %v3103, %v3082
    %v3356 = vpack.c.b16 %v3104, %v3083
    %v3357 = vpack.c.b16 %v3105, %v3084
    %v3358 = vpack.c.b16 %v3106, %v3085
    %v3359 = vpack.c.b16 %v3107, %v3086
    %v3360 = vpack.c.b16 %v3108, %v3087
    %v3361 = vpack.c.b16 %v3109, %v3088
    %v3362 = vpack.c.b16 %v3110, %v3089
    %v3363 = vpack.c.b16 %v3111, %v3090
    %v3364 = vpack.c.b16 %v3112, %v3091
    %v3365 = vpack.c.b16 %v3113, %v3092
    %v3366 = vpack.c.b16 %v3114, %v3093
    %v3367 = vpack.c.b16 %v3115, %v3094
    %v3368 = vpack.c.b16 %v3116, %v3095
    %v3369 = vpack.c.b16 %v3117, %v3096
    %v3370 = vpack.c.b16 %v3118, %v3097
    %v3371 = vpack.c.b16 %v3119, %v3098
    %v3372 = vpack.c.b16 %v3120, %v3099
    %v3373 = vpack.c.b16 %v3121, %v3100
    %v3374 = vpack.c.b16 %v3143, %v3122
    %v3375 = vpack.c.b16 %v3144, %v3123
    %v3376 = vpack.c.b16 %v3145, %v3124
    %v3377 = vpack.c.b16 %v3146, %v3125
    %v3378 = vpack.c.b16 %v3147, %v3126
    %v3379 = vpack.c.b16 %v3148, %v3127
    %v3380 = vpack.c.b16 %v3149, %v3128
    %v3381 = vpack.c.b16 %v3150, %v3129
    %v3382 = vpack.c.b16 %v3151, %v3130
    %v3383 = vpack.c.b16 %v3152, %v3131
    %v3384 = vpack.c.b16 %v3153, %v3132
    %v3385 = vpack.c.b16 %v3154, %v3133
    %v3386 = vpack.c.b16 %v3155, %v3134
    %v3387 = vpack.c.b16 %v3156, %v3135
    %v3388 = vpack.c.b16 %v3157, %v3136
    %v3389 = vpack.c.b16 %v3158, %v3137
    %v3390 = vpack.c.b16 %v3159, %v3138
    %v3391 = vpack.c.b16 %v3160, %v3139
    %v3392 = vpack.c.b16 %v3161, %v3140
    %v3393 = vpack.c.b16 %v3162, %v3141
    %v3394 = vpack.c.b16 %v3163, %v3142
    %v3395 = vpack.c.b16 %v3185, %v3164
    %v3396 = vpack.c.b16 %v3186, %v3165
    %v3397 = vpack.c.b16 %v3187, %v3166
    %v3398 = vpack.c.b16 %v3188, %v3167
    %v3399 = vpack.c.b16 %v3189, %v3168
    %v3400 = vpack.c.b16 %v3190, %v3169
    %v3401 = vpack.c.b16 %v3191, %v3170
    %v3402 = vpack.c.b16 %v3192, %v3171
    %v3403 = vpack.c.b16 %v3193, %v3172
    %v3404 = vpack.c.b16 %v3194, %v3173
    %v3405 = vpack.c.b16 %v3195, %v3174
    %v3406 = vpack.c.b16 %v3196, %v3175
    %v3407 = vpack.c.b16 %v3197, %v3176
    %v3408 = vpack.c.b16 %v3198, %v3177
    %v3409 = vpack.c.b16 %v3199, %v3178
    %v3410 = vpack.c.b16 %v3200, %v3179
    %v3411 = vpack.c.b16 %v3201, %v3180
    %v3412 = vpack.c.b16 %v3202, %v3181
    %v3413 = vpack.c.b16 %v3203, %v3182
    %v3414 = vpack.c.b16 %v3204, %v3183
    %v3415 = vpack.c.b16 %v3205, %v3184
    %v3416 = vpack.c.b16 %v3227, %v3206
    %v3417 = vpack.c.b16 %v3228, %v3207
    %v3418 = vpack.c.b16 %v3229, %v3208
    %v3419 = vpack.c.b16 %v3230, %v3209
    %v3420 = vpack.c.b16 %v3231, %v3210
    %v3421 = vpack.c.b16 %v3232, %v3211
    %v3422 = vpack.c.b16 %v3233, %v3212
    %v3423 = vpack.c.b16 %v3234, %v3213
    %v3424 = vpack.c.b16 %v3235, %v3214
    %v3425 = vpack.c.b16 %v3236, %v3215
    %v3426 = vpack.c.b16 %v3237, %v3216
    %v3427 = vpack.c.b16 %v3238, %v3217
    %v3428 = vpack.c.b16 %v3239, %v3218
    %v3429 = vpack.c.b16 %v3240, %v3219
    %v3430 = vpack.c.b16 %v3241, %v3220
    %v3431 = vpack.c.b16 %v3242, %v3221
    %v3432 = vpack.c.b16 %v3243, %v3222
    %v3433 = vpack.c.b16 %v3244, %v3223
    %v3434 = vpack.c.b16 %v3245, %v3224
    %v3435 = vpack.c.b16 %v3246, %v3225
    %v3436 = vpack.c.b16 %v3247, %v3226
    %v3437 = vpack.c.b16 %v3269, %v3248
    %v3438 = vpack.c.b16 %v3270, %v3249
    %v3439 = vpack.c.b16 %v3271, %v3250
    %v3440 = vpack.c.b16 %v3272, %v3251
    %v3441 = vpack.c.b16 %v3273, %v3252
    %v3442 = vpack.c.b16 %v3274, %v3253
    %v3443 = vpack.c.b16 %v3275, %v3254
    %v3444 = vpack.c.b16 %v3276, %v3255
    %v3445 = vpack.c.b16 %v3277, %v3256
    %v3446 = vpack.c.b16 %v3278, %v3257
    %v3447 = vpack.c.b16 %v3279, %v3258
    %v3448 = vpack.c.b16 %v3280, %v3259
    %v3449 = vpack.c.b16 %v3281, %v3260
    %v3450 = vpack.c.b16 %v3282, %v3261
    %v3451 = vpack.c.b16 %v3283, %v3262
    %v3452 = vpack.c.b16 %v3284, %v3263
    %v3453 = vpack.c.b16 %v3285, %v3264
    %v3454 = vpack.c.b16 %v3286, %v3265
    %v3455 = vpack.c.b16 %v3287, %v3266
    %v3456 = vpack.c.b16 %v3288, %v3267
    %v3457 = vpack.c.b16 %v3289, %v3268
    %3626 = vmatprep.subr.bf16.mxu0 %v3438
    %3627 = vmatpush1.bf16.msra.mxu0 %v3437
    %3628 = vmatprep.subr.bf16.mxu0 %v3417
    %3629 = vmatpush1.bf16.msra.mxu0 %v3416
    %3630 = vmatprep.subr.bf16.mxu0 %v3396
    %3631 = vmatpush1.bf16.msra.mxu0 %v3395
    %3632 = vmatprep.subr.bf16.mxu0 %v3375
    %3633 = vmatpush1.bf16.msra.mxu0 %v3374
    %3634 = vmatprep.subr.bf16.mxu0 %v3354
    %3635 = vmatpush1.bf16.msra.mxu0 %v3353
    %3636 = vmatprep.subr.bf16.mxu0 %v3333
    %3637 = vmatpush1.bf16.msra.mxu0 %v3332
    %3638 = vmatprep.subr.bf16.mxu0 %v3312
    %3639 = vmatpush1.bf16.msra.mxu0 %v3311
    %3640 = vmatprep.subr.bf16.mxu0 %v3291
    %3641 = vmatpush1.bf16.msra.mxu0 %v3290
    %3642 = vmatprep.subr.bf16.mxu0 0
    %3643 = vmatpush2.bf16.msra.mxu0 0
    %3644 = vmatprep.subr.bf16.mxu0 0
    %3645 = vmatpush2.bf16.msra.mxu0 0
    %3646 = vmatprep.subr.bf16.mxu0 0
    %3647 = vmatpush2.bf16.msra.mxu0 0
    %3648 = vmatprep.subr.bf16.mxu0 0
    %3649 = vmatpush2.bf16.msra.mxu0 0
    %3650 = vmatprep.subr.bf16.mxu0 0
    %3651 = vmatpush2.bf16.msra.mxu0 0
    %3652 = vmatprep.subr.bf16.mxu0 0
    %3653 = vmatpush2.bf16.msra.mxu0 0
    %3654 = vmatprep.subr.bf16.mxu0 0
    %3655 = vmatpush2.bf16.msra.mxu0 0
    %3656 = vmatprep.subr.bf16.mxu0 0
    %3657 = vmatpush2.bf16.msra.mxu0 0
    %3658 = vmatprep.mubr.bf16.mxu0 0
    %3659 = vmatmul.mubr.bf16.gmra.mxu0 %v2666
    %v3660 = vpop.f32.mrf.mxu0
    %v3661 = vadd.f32 %v2676, %v3660
    %v3662 = vpop.f32.mrf.mxu0
    %v3663 = vadd.f32 %v2680, %v3662
    %v3664 = vpop.f32.mrf.mxu0
    %v3665 = vpop.f32.mrf.mxu0
    %3666 = vdwg.mxu0
    %3667 = vmatprep.subr.bf16.mxu0 %v3440
    %3668 = vmatpush1.bf16.msra.mxu0 %v3439
    %3669 = vmatprep.subr.bf16.mxu0 %v3419
    %3670 = vmatpush1.bf16.msra.mxu0 %v3418
    %3671 = vmatprep.subr.bf16.mxu0 %v3398
    %3672 = vmatpush1.bf16.msra.mxu0 %v3397
    %3673 = vmatprep.subr.bf16.mxu0 %v3377
    %3674 = vmatpush1.bf16.msra.mxu0 %v3376
    %3675 = vmatprep.subr.bf16.mxu0 %v3356
    %3676 = vmatpush1.bf16.msra.mxu0 %v3355
    %3677 = vmatprep.subr.bf16.mxu0 %v3335
    %3678 = vmatpush1.bf16.msra.mxu0 %v3334
    %3679 = vmatprep.subr.bf16.mxu0 %v3314
    %3680 = vmatpush1.bf16.msra.mxu0 %v3313
    %3681 = vmatprep.subr.bf16.mxu0 %v3293
    %3682 = vmatpush1.bf16.msra.mxu0 %v3292
    %3683 = vmatprep.subr.bf16.mxu0 0
    %3684 = vmatpush2.bf16.msra.mxu0 0
    %3685 = vmatprep.subr.bf16.mxu0 0
    %3686 = vmatpush2.bf16.msra.mxu0 0
    %3687 = vmatprep.subr.bf16.mxu0 0
    %3688 = vmatpush2.bf16.msra.mxu0 0
    %3689 = vmatprep.subr.bf16.mxu0 0
    %3690 = vmatpush2.bf16.msra.mxu0 0
    %3691 = vmatprep.subr.bf16.mxu0 0
    %3692 = vmatpush2.bf16.msra.mxu0 0
    %3693 = vmatprep.subr.bf16.mxu0 0
    %3694 = vmatpush2.bf16.msra.mxu0 0
    %3695 = vmatprep.subr.bf16.mxu0 0
    %3696 = vmatpush2.bf16.msra.mxu0 0
    %3697 = vmatprep.subr.bf16.mxu0 0
    %3698 = vmatpush2.bf16.msra.mxu0 0
    %3699 = vmatprep.mubr.bf16.mxu0 0
    %3700 = vmatmul.mubr.bf16.gmra.mxu0 %v2666
    %v3701 = vpop.f32.mrf.mxu0
    %v3702 = vadd.f32 %v2684, %v3701
    %v3703 = vpop.f32.mrf.mxu0
    %v3704 = vadd.f32 %v2688, %v3703
    %v3705 = vpop.f32.mrf.mxu0
    %v3706 = vpop.f32.mrf.mxu0
    %3707 = vdwg.mxu0
    %3708 = vmatprep.subr.bf16.mxu0 %v3442
    %3709 = vmatpush1.bf16.msra.mxu0 %v3441
    %3710 = vmatprep.subr.bf16.mxu0 %v3421
    %3711 = vmatpush1.bf16.msra.mxu0 %v3420
    %3712 = vmatprep.subr.bf16.mxu0 %v3400
    %3713 = vmatpush1.bf16.msra.mxu0 %v3399
    %3714 = vmatprep.subr.bf16.mxu0 %v3379
    %3715 = vmatpush1.bf16.msra.mxu0 %v3378
    %3716 = vmatprep.subr.bf16.mxu0 %v3358
    %3717 = vmatpush1.bf16.msra.mxu0 %v3357
    %3718 = vmatprep.subr.bf16.mxu0 %v3337
    %3719 = vmatpush1.bf16.msra.mxu0 %v3336
    %3720 = vmatprep.subr.bf16.mxu0 %v3316
    %3721 = vmatpush1.bf16.msra.mxu0 %v3315
    %3722 = vmatprep.subr.bf16.mxu0 %v3295
    %3723 = vmatpush1.bf16.msra.mxu0 %v3294
    %3724 = vmatprep.subr.bf16.mxu0 0
    %3725 = vmatpush2.bf16.msra.mxu0 0
    %3726 = vmatprep.subr.bf16.mxu0 0
    %3727 = vmatpush2.bf16.msra.mxu0 0
    %3728 = vmatprep.subr.bf16.mxu0 0
    %3729 = vmatpush2.bf16.msra.mxu0 0
    %3730 = vmatprep.subr.bf16.mxu0 0
    %3731 = vmatpush2.bf16.msra.mxu0 0
    %3732 = vmatprep.subr.bf16.mxu0 0
    %3733 = vmatpush2.bf16.msra.mxu0 0
    %3734 = vmatprep.subr.bf16.mxu0 0
    %3735 = vmatpush2.bf16.msra.mxu0 0
    %3736 = vmatprep.subr.bf16.mxu0 0
    %3737 = vmatpush2.bf16.msra.mxu0 0
    %3738 = vmatprep.subr.bf16.mxu0 0
    %3739 = vmatpush2.bf16.msra.mxu0 0
    %3740 = vmatprep.mubr.bf16.mxu0 0
    %3741 = vmatmul.mubr.bf16.gmra.mxu0 %v2666
    %v3742 = vpop.f32.mrf.mxu0
    %v3743 = vadd.f32 %v2692, %v3742
    %v3744 = vpop.f32.mrf.mxu0
    %v3745 = vadd.f32 %v2696, %v3744
    %v3746 = vpop.f32.mrf.mxu0
    %v3747 = vpop.f32.mrf.mxu0
    %3748 = vdwg.mxu0
    %3749 = vmatprep.subr.bf16.mxu0 %v3444
    %3750 = vmatpush1.bf16.msra.mxu0 %v3443
    %3751 = vmatprep.subr.bf16.mxu0 %v3423
    %3752 = vmatpush1.bf16.msra.mxu0 %v3422
    %3753 = vmatprep.subr.bf16.mxu0 %v3402
    %3754 = vmatpush1.bf16.msra.mxu0 %v3401
    %3755 = vmatprep.subr.bf16.mxu0 %v3381
    %3756 = vmatpush1.bf16.msra.mxu0 %v3380
    %3757 = vmatprep.subr.bf16.mxu0 %v3360
    %3758 = vmatpush1.bf16.msra.mxu0 %v3359
    %3759 = vmatprep.subr.bf16.mxu0 %v3339
    %3760 = vmatpush1.bf16.msra.mxu0 %v3338
    %3761 = vmatprep.subr.bf16.mxu0 %v3318
    %3762 = vmatpush1.bf16.msra.mxu0 %v3317
    %3763 = vmatprep.subr.bf16.mxu0 %v3297
    %3764 = vmatpush1.bf16.msra.mxu0 %v3296
    %3765 = vmatprep.subr.bf16.mxu0 0
    %3766 = vmatpush2.bf16.msra.mxu0 0
    %3767 = vmatprep.subr.bf16.mxu0 0
    %3768 = vmatpush2.bf16.msra.mxu0 0
    %3769 = vmatprep.subr.bf16.mxu0 0
    %3770 = vmatpush2.bf16.msra.mxu0 0
    %3771 = vmatprep.subr.bf16.mxu0 0
    %3772 = vmatpush2.bf16.msra.mxu0 0
    %3773 = vmatprep.subr.bf16.mxu0 0
    %3774 = vmatpush2.bf16.msra.mxu0 0
    %3775 = vmatprep.subr.bf16.mxu0 0
    %3776 = vmatpush2.bf16.msra.mxu0 0
    %3777 = vmatprep.subr.bf16.mxu0 0
    %3778 = vmatpush2.bf16.msra.mxu0 0
    %3779 = vmatprep.subr.bf16.mxu0 0
    %3780 = vmatpush2.bf16.msra.mxu0 0
    %3781 = vmatprep.mubr.bf16.mxu0 0
    %3782 = vmatmul.mubr.bf16.gmra.mxu0 %v2666
    %v3783 = vpop.f32.mrf.mxu0
    %v3784 = vadd.f32 %v2700, %v3783
    %v3785 = vpop.f32.mrf.mxu0
    %v3786 = vadd.f32 %v2704, %v3785
    %v3787 = vpop.f32.mrf.mxu0
    %v3788 = vpop.f32.mrf.mxu0
    %3789 = vdwg.mxu0
    %3790 = vmatprep.subr.bf16.mxu0 %v3446
    %3791 = vmatpush1.bf16.msra.mxu0 %v3445
    %3792 = vmatprep.subr.bf16.mxu0 %v3425
    %3793 = vmatpush1.bf16.msra.mxu0 %v3424
    %3794 = vmatprep.subr.bf16.mxu0 %v3404
    %3795 = vmatpush1.bf16.msra.mxu0 %v3403
    %3796 = vmatprep.subr.bf16.mxu0 %v3383
    %3797 = vmatpush1.bf16.msra.mxu0 %v3382
    %3798 = vmatprep.subr.bf16.mxu0 %v3362
    %3799 = vmatpush1.bf16.msra.mxu0 %v3361
    %3800 = vmatprep.subr.bf16.mxu0 %v3341
    %3801 = vmatpush1.bf16.msra.mxu0 %v3340
    %3802 = vmatprep.subr.bf16.mxu0 %v3320
    %3803 = vmatpush1.bf16.msra.mxu0 %v3319
    %3804 = vmatprep.subr.bf16.mxu0 %v3299
    %3805 = vmatpush1.bf16.msra.mxu0 %v3298
    %3806 = vmatprep.subr.bf16.mxu0 0
    %3807 = vmatpush2.bf16.msra.mxu0 0
    %3808 = vmatprep.subr.bf16.mxu0 0
    %3809 = vmatpush2.bf16.msra.mxu0 0
    %3810 = vmatprep.subr.bf16.mxu0 0
    %3811 = vmatpush2.bf16.msra.mxu0 0
    %3812 = vmatprep.subr.bf16.mxu0 0
    %3813 = vmatpush2.bf16.msra.mxu0 0
    %3814 = vmatprep.subr.bf16.mxu0 0
    %3815 = vmatpush2.bf16.msra.mxu0 0
    %3816 = vmatprep.subr.bf16.mxu0 0
    %3817 = vmatpush2.bf16.msra.mxu0 0
    %3818 = vmatprep.subr.bf16.mxu0 0
    %3819 = vmatpush2.bf16.msra.mxu0 0
    %3820 = vmatprep.subr.bf16.mxu0 0
    %3821 = vmatpush2.bf16.msra.mxu0 0
    %3822 = vmatprep.mubr.bf16.mxu0 0
    %3823 = vmatmul.mubr.bf16.gmra.mxu0 %v2666
    %v3824 = vpop.f32.mrf.mxu0
    %v3825 = vadd.f32 %v2708, %v3824
    %v3826 = vpop.f32.mrf.mxu0
    %v3827 = vadd.f32 %v2712, %v3826
    %v3828 = vpop.f32.mrf.mxu0
    %v3829 = vpop.f32.mrf.mxu0
    %3830 = vdwg.mxu0
    %3831 = vmatprep.subr.bf16.mxu0 %v3448
    %3832 = vmatpush1.bf16.msra.mxu0 %v3447
    %3833 = vmatprep.subr.bf16.mxu0 %v3427
    %3834 = vmatpush1.bf16.msra.mxu0 %v3426
    %3835 = vmatprep.subr.bf16.mxu0 %v3406
    %3836 = vmatpush1.bf16.msra.mxu0 %v3405
    %3837 = vmatprep.subr.bf16.mxu0 %v3385
    %3838 = vmatpush1.bf16.msra.mxu0 %v3384
    %3839 = vmatprep.subr.bf16.mxu0 %v3364
    %3840 = vmatpush1.bf16.msra.mxu0 %v3363
    %3841 = vmatprep.subr.bf16.mxu0 %v3343
    %3842 = vmatpush1.bf16.msra.mxu0 %v3342
    %3843 = vmatprep.subr.bf16.mxu0 %v3322
    %3844 = vmatpush1.bf16.msra.mxu0 %v3321
    %3845 = vmatprep.subr.bf16.mxu0 %v3301
    %3846 = vmatpush1.bf16.msra.mxu0 %v3300
    %3847 = vmatprep.subr.bf16.mxu0 0
    %3848 = vmatpush2.bf16.msra.mxu0 0
    %3849 = vmatprep.subr.bf16.mxu0 0
    %3850 = vmatpush2.bf16.msra.mxu0 0
    %3851 = vmatprep.subr.bf16.mxu0 0
    %3852 = vmatpush2.bf16.msra.mxu0 0
    %3853 = vmatprep.subr.bf16.mxu0 0
    %3854 = vmatpush2.bf16.msra.mxu0 0
    %3855 = vmatprep.subr.bf16.mxu0 0
    %3856 = vmatpush2.bf16.msra.mxu0 0
    %3857 = vmatprep.subr.bf16.mxu0 0
    %3858 = vmatpush2.bf16.msra.mxu0 0
    %3859 = vmatprep.subr.bf16.mxu0 0
    %3860 = vmatpush2.bf16.msra.mxu0 0
    %3861 = vmatprep.subr.bf16.mxu0 0
    %3862 = vmatpush2.bf16.msra.mxu0 0
    %3863 = vmatprep.mubr.bf16.mxu0 0
    %3864 = vmatmul.mubr.bf16.gmra.mxu0 %v2666
    %v3865 = vpop.f32.mrf.mxu0
    %v3866 = vadd.f32 %v2716, %v3865
    %v3867 = vpop.f32.mrf.mxu0
    %v3868 = vadd.f32 %v2720, %v3867
    %v3869 = vpop.f32.mrf.mxu0
    %v3870 = vpop.f32.mrf.mxu0
    %3871 = vdwg.mxu0
    %3872 = vmatprep.subr.bf16.mxu0 %v3450
    %3873 = vmatpush1.bf16.msra.mxu0 %v3449
    %3874 = vmatprep.subr.bf16.mxu0 %v3429
    %3875 = vmatpush1.bf16.msra.mxu0 %v3428
    %3876 = vmatprep.subr.bf16.mxu0 %v3408
    %3877 = vmatpush1.bf16.msra.mxu0 %v3407
    %3878 = vmatprep.subr.bf16.mxu0 %v3387
    %3879 = vmatpush1.bf16.msra.mxu0 %v3386
    %3880 = vmatprep.subr.bf16.mxu0 %v3366
    %3881 = vmatpush1.bf16.msra.mxu0 %v3365
    %3882 = vmatprep.subr.bf16.mxu0 %v3345
    %3883 = vmatpush1.bf16.msra.mxu0 %v3344
    %3884 = vmatprep.subr.bf16.mxu0 %v3324
    %3885 = vmatpush1.bf16.msra.mxu0 %v3323
    %3886 = vmatprep.subr.bf16.mxu0 %v3303
    %3887 = vmatpush1.bf16.msra.mxu0 %v3302
    %3888 = vmatprep.subr.bf16.mxu0 0
    %3889 = vmatpush2.bf16.msra.mxu0 0
    %3890 = vmatprep.subr.bf16.mxu0 0
    %3891 = vmatpush2.bf16.msra.mxu0 0
    %3892 = vmatprep.subr.bf16.mxu0 0
    %3893 = vmatpush2.bf16.msra.mxu0 0
    %3894 = vmatprep.subr.bf16.mxu0 0
    %3895 = vmatpush2.bf16.msra.mxu0 0
    %3896 = vmatprep.subr.bf16.mxu0 0
    %3897 = vmatpush2.bf16.msra.mxu0 0
    %3898 = vmatprep.subr.bf16.mxu0 0
    %3899 = vmatpush2.bf16.msra.mxu0 0
    %3900 = vmatprep.subr.bf16.mxu0 0
    %3901 = vmatpush2.bf16.msra.mxu0 0
    %3902 = vmatprep.subr.bf16.mxu0 0
    %3903 = vmatpush2.bf16.msra.mxu0 0
    %3904 = vmatprep.mubr.bf16.mxu0 0
    %3905 = vmatmul.mubr.bf16.gmra.mxu0 %v2666
    %v3906 = vpop.f32.mrf.mxu0
    %v3907 = vadd.f32 %v2724, %v3906
    %v3908 = vpop.f32.mrf.mxu0
    %v3909 = vadd.f32 %v2728, %v3908
    %v3910 = vpop.f32.mrf.mxu0
    %v3911 = vpop.f32.mrf.mxu0
    %3912 = vdwg.mxu0
    %3913 = vmatprep.subr.bf16.mxu0 %v3452
    %3914 = vmatpush1.bf16.msra.mxu0 %v3451
    %3915 = vmatprep.subr.bf16.mxu0 %v3431
    %3916 = vmatpush1.bf16.msra.mxu0 %v3430
    %3917 = vmatprep.subr.bf16.mxu0 %v3410
    %3918 = vmatpush1.bf16.msra.mxu0 %v3409
    %3919 = vmatprep.subr.bf16.mxu0 %v3389
    %3920 = vmatpush1.bf16.msra.mxu0 %v3388
    %3921 = vmatprep.subr.bf16.mxu0 %v3368
    %3922 = vmatpush1.bf16.msra.mxu0 %v3367
    %3923 = vmatprep.subr.bf16.mxu0 %v3347
    %3924 = vmatpush1.bf16.msra.mxu0 %v3346
    %3925 = vmatprep.subr.bf16.mxu0 %v3326
    %3926 = vmatpush1.bf16.msra.mxu0 %v3325
    %3927 = vmatprep.subr.bf16.mxu0 %v3305
    %3928 = vmatpush1.bf16.msra.mxu0 %v3304
    %3929 = vmatprep.subr.bf16.mxu0 0
    %3930 = vmatpush2.bf16.msra.mxu0 0
    %3931 = vmatprep.subr.bf16.mxu0 0
    %3932 = vmatpush2.bf16.msra.mxu0 0
    %3933 = vmatprep.subr.bf16.mxu0 0
    %3934 = vmatpush2.bf16.msra.mxu0 0
    %3935 = vmatprep.subr.bf16.mxu0 0
    %3936 = vmatpush2.bf16.msra.mxu0 0
    %3937 = vmatprep.subr.bf16.mxu0 0
    %3938 = vmatpush2.bf16.msra.mxu0 0
    %3939 = vmatprep.subr.bf16.mxu0 0
    %3940 = vmatpush2.bf16.msra.mxu0 0
    %3941 = vmatprep.subr.bf16.mxu0 0
    %3942 = vmatpush2.bf16.msra.mxu0 0
    %3943 = vmatprep.subr.bf16.mxu0 0
    %3944 = vmatpush2.bf16.msra.mxu0 0
    %3945 = vmatprep.mubr.bf16.mxu0 0
    %3946 = vmatmul.mubr.bf16.gmra.mxu0 %v2666
    %v3947 = vpop.f32.mrf.mxu0
    %v3948 = vadd.f32 %v2732, %v3947
    %v3949 = vpop.f32.mrf.mxu0
    %v3950 = vadd.f32 %v2736, %v3949
    %v3951 = vpop.f32.mrf.mxu0
    %v3952 = vpop.f32.mrf.mxu0
    %3953 = vdwg.mxu0
    %3954 = vmatprep.subr.bf16.mxu0 %v3454
    %3955 = vmatpush1.bf16.msra.mxu0 %v3453
    %3956 = vmatprep.subr.bf16.mxu0 %v3433
    %3957 = vmatpush1.bf16.msra.mxu0 %v3432
    %3958 = vmatprep.subr.bf16.mxu0 %v3412
    %3959 = vmatpush1.bf16.msra.mxu0 %v3411
    %3960 = vmatprep.subr.bf16.mxu0 %v3391
    %3961 = vmatpush1.bf16.msra.mxu0 %v3390
    %3962 = vmatprep.subr.bf16.mxu0 %v3370
    %3963 = vmatpush1.bf16.msra.mxu0 %v3369
    %3964 = vmatprep.subr.bf16.mxu0 %v3349
    %3965 = vmatpush1.bf16.msra.mxu0 %v3348
    %3966 = vmatprep.subr.bf16.mxu0 %v3328
    %3967 = vmatpush1.bf16.msra.mxu0 %v3327
    %3968 = vmatprep.subr.bf16.mxu0 %v3307
    %3969 = vmatpush1.bf16.msra.mxu0 %v3306
    %3970 = vmatprep.subr.bf16.mxu0 0
    %3971 = vmatpush2.bf16.msra.mxu0 0
    %3972 = vmatprep.subr.bf16.mxu0 0
    %3973 = vmatpush2.bf16.msra.mxu0 0
    %3974 = vmatprep.subr.bf16.mxu0 0
    %3975 = vmatpush2.bf16.msra.mxu0 0
    %3976 = vmatprep.subr.bf16.mxu0 0
    %3977 = vmatpush2.bf16.msra.mxu0 0
    %3978 = vmatprep.subr.bf16.mxu0 0
    %3979 = vmatpush2.bf16.msra.mxu0 0
    %3980 = vmatprep.subr.bf16.mxu0 0
    %3981 = vmatpush2.bf16.msra.mxu0 0
    %3982 = vmatprep.subr.bf16.mxu0 0
    %3983 = vmatpush2.bf16.msra.mxu0 0
    %3984 = vmatprep.subr.bf16.mxu0 0
    %3985 = vmatpush2.bf16.msra.mxu0 0
    %3986 = vmatprep.mubr.bf16.mxu0 0
    %3987 = vmatmul.mubr.bf16.gmra.mxu0 %v2666
    %v3988 = vpop.f32.mrf.mxu0
    %v3989 = vadd.f32 %v2740, %v3988
    %v3990 = vpop.f32.mrf.mxu0
    %v3991 = vadd.f32 %v2744, %v3990
    %v3992 = vpop.f32.mrf.mxu0
    %v3993 = vpop.f32.mrf.mxu0
    %3994 = vdwg.mxu0
    %3995 = vmatprep.subr.bf16.mxu0 %v3456
    %3996 = vmatpush1.bf16.msra.mxu0 %v3455
    %3997 = vmatprep.subr.bf16.mxu0 %v3435
    %3998 = vmatpush1.bf16.msra.mxu0 %v3434
    %3999 = vmatprep.subr.bf16.mxu0 %v3414
    %4000 = vmatpush1.bf16.msra.mxu0 %v3413
    %4001 = vmatprep.subr.bf16.mxu0 %v3393
    %4002 = vmatpush1.bf16.msra.mxu0 %v3392
    %4003 = vmatprep.subr.bf16.mxu0 %v3372
    %4004 = vmatpush1.bf16.msra.mxu0 %v3371
    %4005 = vmatprep.subr.bf16.mxu0 %v3351
    %4006 = vmatpush1.bf16.msra.mxu0 %v3350
    %4007 = vmatprep.subr.bf16.mxu0 %v3330
    %4008 = vmatpush1.bf16.msra.mxu0 %v3329
    %4009 = vmatprep.subr.bf16.mxu0 %v3309
    %4010 = vmatpush1.bf16.msra.mxu0 %v3308
    %4011 = vmatprep.subr.bf16.mxu0 0
    %4012 = vmatpush2.bf16.msra.mxu0 0
    %4013 = vmatprep.subr.bf16.mxu0 0
    %4014 = vmatpush2.bf16.msra.mxu0 0
    %4015 = vmatprep.subr.bf16.mxu0 0
    %4016 = vmatpush2.bf16.msra.mxu0 0
    %4017 = vmatprep.subr.bf16.mxu0 0
    %4018 = vmatpush2.bf16.msra.mxu0 0
    %4019 = vmatprep.subr.bf16.mxu0 0
    %4020 = vmatpush2.bf16.msra.mxu0 0
    %4021 = vmatprep.subr.bf16.mxu0 0
    %4022 = vmatpush2.bf16.msra.mxu0 0
    %4023 = vmatprep.subr.bf16.mxu0 0
    %4024 = vmatpush2.bf16.msra.mxu0 0
    %4025 = vmatprep.subr.bf16.mxu0 0
    %4026 = vmatpush2.bf16.msra.mxu0 0
    %4027 = vmatprep.mubr.bf16.mxu0 0
    %4028 = vmatmul.mubr.bf16.gmra.mxu0 %v2666
    %v4029 = vpop.f32.mrf.mxu0
    %v4030 = vadd.f32 %v2748, %v4029
    %v4031 = vpop.f32.mrf.mxu0
    %v4032 = vadd.f32 %v2752, %v4031
    %v4033 = vpop.f32.mrf.mxu0
    %v4034 = vpop.f32.mrf.mxu0
    %4035 = vdwg.mxu0
    %4036 = vmatprep.subr.bf16.mxu0 0
    %4037 = vmatpush1.bf16.msra.mxu0 %v3457
    %4038 = vmatprep.subr.bf16.mxu0 0
    %4039 = vmatpush1.bf16.msra.mxu0 %v3436
    %4040 = vmatprep.subr.bf16.mxu0 0
    %4041 = vmatpush1.bf16.msra.mxu0 %v3415
    %4042 = vmatprep.subr.bf16.mxu0 0
    %4043 = vmatpush1.bf16.msra.mxu0 %v3394
    %4044 = vmatprep.subr.bf16.mxu0 0
    %4045 = vmatpush1.bf16.msra.mxu0 %v3373
    %4046 = vmatprep.subr.bf16.mxu0 0
    %4047 = vmatpush1.bf16.msra.mxu0 %v3352
    %4048 = vmatprep.subr.bf16.mxu0 0
    %4049 = vmatpush1.bf16.msra.mxu0 %v3331
    %4050 = vmatprep.subr.bf16.mxu0 0
    %4051 = vmatpush1.bf16.msra.mxu0 %v3310
    %4052 = vmatprep.subr.bf16.mxu0 0
    %4053 = vmatpush2.bf16.msra.mxu0 0
    %4054 = vmatprep.subr.bf16.mxu0 0
    %4055 = vmatpush2.bf16.msra.mxu0 0
    %4056 = vmatprep.subr.bf16.mxu0 0
    %4057 = vmatpush2.bf16.msra.mxu0 0
    %4058 = vmatprep.subr.bf16.mxu0 0
    %4059 = vmatpush2.bf16.msra.mxu0 0
    %4060 = vmatprep.subr.bf16.mxu0 0
    %4061 = vmatpush2.bf16.msra.mxu0 0
    %4062 = vmatprep.subr.bf16.mxu0 0
    %4063 = vmatpush2.bf16.msra.mxu0 0
    %4064 = vmatprep.subr.bf16.mxu0 0
    %4065 = vmatpush2.bf16.msra.mxu0 0
    %4066 = vmatprep.subr.bf16.mxu0 0
    %4067 = vmatpush2.bf16.msra.mxu0 0
    %4068 = vmatprep.mubr.bf16.mxu0 0
    %4069 = vmatmul.mubr.bf16.gmra.mxu0 %v2666
    %v4070 = vpop.f32.mrf.mxu0
    %v4071 = vadd.f32 %v2756, %v4070
    %v4072 = vpop.f32.mrf.mxu0
    %v4073 = vpop.f32.mrf.mxu0
    %v4074 = vpop.f32.mrf.mxu0
    %4075 = vdwg.mxu0
    %v4096 = vcombine.low %v3661, %v3663
    %v4097 = vcombine.low %v3702, %v3704
    %v4099 = vunpack.c.l.s4 1983009808
    %v4100 = vunpack.c.0.s8 %v4099
    %v4101 = vlaneseq
    %v4102 = vshrl.u32 %v4101, 7
    %v4103 = vsub.s32 %v4100, %v4102
    %v4104 = vrot.slane %v4096, %v4103
    %v4106 = vunpack.c.l.s4 1983009808
    %v4107 = vunpack.c.0.s8 %v4106
    %v4108 = vlaneseq
    %v4109 = vshrl.u32 %v4108, 7
    %v4110 = vsub.s32 %v4107, %v4109
    %v4111 = vrot.slane %v4097, %v4110
    %v4112 = vcombine.low %v4104, %v4111
    %v4113 = vcombine.low %v3743, %v3745
    %v4114 = vcombine.low %v3784, %v3786
    %v4116 = vunpack.c.l.s4 1983009808
    %v4117 = vunpack.c.0.s8 %v4116
    %v4118 = vlaneseq
    %v4119 = vshrl.u32 %v4118, 7
    %v4120 = vsub.s32 %v4117, %v4119
    %v4121 = vrot.slane %v4113, %v4120
    %v4123 = vunpack.c.l.s4 1983009808
    %v4124 = vunpack.c.0.s8 %v4123
    %v4125 = vlaneseq
    %v4126 = vshrl.u32 %v4125, 7
    %v4127 = vsub.s32 %v4124, %v4126
    %v4128 = vrot.slane %v4114, %v4127
    %v4129 = vcombine.low %v4121, %v4128
    %v4130 = vcombine.low %v3825, %v3827
    %v4131 = vcombine.low %v3866, %v3868
    %v4133 = vunpack.c.l.s4 1983009808
    %v4134 = vunpack.c.0.s8 %v4133
    %v4135 = vlaneseq
    %v4136 = vshrl.u32 %v4135, 7
    %v4137 = vsub.s32 %v4134, %v4136
    %v4138 = vrot.slane %v4130, %v4137
    %v4140 = vunpack.c.l.s4 1983009808
    %v4141 = vunpack.c.0.s8 %v4140
    %v4142 = vlaneseq
    %v4143 = vshrl.u32 %v4142, 7
    %v4144 = vsub.s32 %v4141, %v4143
    %v4145 = vrot.slane %v4131, %v4144
    %v4146 = vcombine.low %v4138, %v4145
    %v4147 = vcombine.low %v3907, %v3909
    %v4148 = vcombine.low %v3948, %v3950
    %v4150 = vunpack.c.l.s4 1983009808
    %v4151 = vunpack.c.0.s8 %v4150
    %v4152 = vlaneseq
    %v4153 = vshrl.u32 %v4152, 7
    %v4154 = vsub.s32 %v4151, %v4153
    %v4155 = vrot.slane %v4147, %v4154
    %v4157 = vunpack.c.l.s4 1983009808
    %v4158 = vunpack.c.0.s8 %v4157
    %v4159 = vlaneseq
    %v4160 = vshrl.u32 %v4159, 7
    %v4161 = vsub.s32 %v4158, %v4160
    %v4162 = vrot.slane %v4148, %v4161
    %v4163 = vcombine.low %v4155, %v4162
    %v4164 = vcombine.low %v3989, %v3991
    %v4165 = vcombine.low %v4030, %v4032
    %v4167 = vunpack.c.l.s4 1983009808
    %v4168 = vunpack.c.0.s8 %v4167
    %v4169 = vlaneseq
    %v4170 = vshrl.u32 %v4169, 7
    %v4171 = vsub.s32 %v4168, %v4170
    %v4172 = vrot.slane %v4164, %v4171
    %v4174 = vunpack.c.l.s4 1983009808
    %v4175 = vunpack.c.0.s8 %v4174
    %v4176 = vlaneseq
    %v4177 = vshrl.u32 %v4176, 7
    %v4178 = vsub.s32 %v4175, %v4177
    %v4179 = vrot.slane %v4165, %v4178
    %v4180 = vcombine.low %v4172, %v4179
    %4186 = vst [vmem:[%s7] sm:$0xff] %v4112
    %4187 = vst [vmem:[%s7 + $0x8] sm:$0xff] %v4129
    %4188 = vst [vmem:[%s7 + $0x10] sm:$0xff] %v4146
    %4189 = vst [vmem:[%s7 + $0x18] sm:$0xff] %v4163
    %4190 = vst [vmem:[%s7 + $0x20] sm:$0xff] %v4180
    %v4193 = vunpack.c.l.s4 1983009808
    %v4194 = vunpack.c.0.s8 %v4193
    %v4195 = vlaneseq
    %v4196 = vshrl.u32 %v4195, 7
    %v4197 = vsub.s32 %v4194, %v4196
    %v4198 = vrot.slane %v4071, %v4197
    %v4199 = vcombine.high %v4198, %v4198
    %4201 = vst [vmem:[%s7 + $0x28] sm:$0x3] %v4199
    %v4202 = vld [vmem:[#allocation2] sm:$0xff]
    %v4203 = vld [vmem:[#allocation2 + $0x8] sm:$0xff]
    %v4204 = vld [vmem:[#allocation2 + $0x10] sm:$0xff]
    %v4205 = vld [vmem:[#allocation2 + $0x18] sm:$0xff]
    %v4206 = vld [vmem:[#allocation2 + $0x20] sm:$0xff]
    %v4207 = vld [vmem:[#allocation2 + $0x28] sm:$0xff]
    %v4208 = vld [vmem:[#allocation2 + $0x30] sm:$0xff]
    %v4209 = vld [vmem:[#allocation2 + $0x38] sm:$0xff]
    %v4210 = vld [vmem:[#allocation2 + $0x40] sm:$0xff]
    %v4211 = vld [vmem:[#allocation2 + $0x48] sm:$0xff]
    %v4212 = vld [vmem:[#allocation2 + $0x50] sm:$0xff]
    %v4213 = vld [vmem:[#allocation2 + $0x58] sm:$0xff]
    %v4214 = vld [vmem:[#allocation2 + $0x60] sm:$0xff]
    %v4215 = vld [vmem:[#allocation2 + $0x68] sm:$0xff]
    %v4216 = vld [vmem:[#allocation2 + $0x70] sm:$0xff]
    %v4217 = vld [vmem:[#allocation2 + $0x78] sm:$0xff]
    %v4218 = vld [vmem:[#allocation2 + $0x80] sm:$0xff]
    %v4219 = vld [vmem:[#allocation2 + $0x88] sm:$0xff]
    %v4220 = vld [vmem:[#allocation2 + $0x90] sm:$0xff]
    %v4221 = vld [vmem:[#allocation2 + $0x98] sm:$0xff]
    %v4222 = vld [vmem:[#allocation2 + $0xa0] sm:$0xff]
    %v4223 = vld [vmem:[#allocation2 + $0xa8] sm:$0xff]
    %v4224 = vld [vmem:[#allocation2 + $0xb0] sm:$0xff]
    %v4225 = vld [vmem:[#allocation2 + $0xb8] sm:$0xff]
    %v4226 = vld [vmem:[#allocation2 + $0xc0] sm:$0xff]
    %v4227 = vld [vmem:[#allocation2 + $0xc8] sm:$0xff]
    %v4228 = vld [vmem:[#allocation2 + $0xd0] sm:$0xff]
    %v4229 = vld [vmem:[#allocation2 + $0xd8] sm:$0xff]
    %v4230 = vld [vmem:[#allocation2 + $0xe0] sm:$0xff]
    %v4231 = vld [vmem:[#allocation2 + $0xe8] sm:$0xff]
    %v4232 = vld [vmem:[#allocation2 + $0xf0] sm:$0xff]
    %v4233 = vld [vmem:[#allocation2 + $0xf8] sm:$0xff]
    %v4234 = vld [vmem:[#allocation2 + $0x100] sm:$0xff]
    %v4235 = vld [vmem:[#allocation2 + $0x108] sm:$0xff]
    %v4236 = vld [vmem:[#allocation2 + $0x110] sm:$0xff]
    %v4237 = vld [vmem:[#allocation2 + $0x118] sm:$0xff]
    %v4238 = vld [vmem:[#allocation2 + $0x120] sm:$0xff]
    %v4239 = vld [vmem:[#allocation2 + $0x128] sm:$0xff]
    %v4240 = vld [vmem:[#allocation2 + $0x130] sm:$0xff]
    %v4241 = vld [vmem:[#allocation2 + $0x138] sm:$0xff]
    %v4242 = vld [vmem:[#allocation2 + $0x140] sm:$0xff]
    %v4243 = vld [vmem:[#allocation2 + $0x148] sm:$0xff]
    %v4244 = vld [vmem:[#allocation2 + $0x150] sm:$0xff]
    %v4245 = vld [vmem:[#allocation2 + $0x158] sm:$0xff]
    %v4246 = vld [vmem:[#allocation2 + $0x160] sm:$0xff]
    %v4247 = vld [vmem:[#allocation2 + $0x168] sm:$0xff]
    %v4248 = vld [vmem:[#allocation2 + $0x170] sm:$0xff]
    %v4249 = vld [vmem:[#allocation2 + $0x178] sm:$0xff]
    %v4250 = vld [vmem:[#allocation2 + $0x180] sm:$0xff]
    %v4251 = vld [vmem:[#allocation2 + $0x188] sm:$0xff]
    %v4252 = vld [vmem:[#allocation2 + $0x190] sm:$0xff]
    %v4253 = vld [vmem:[#allocation2 + $0x198] sm:$0xff]
    %v4254 = vld [vmem:[#allocation2 + $0x1a0] sm:$0xff]
    %v4255 = vld [vmem:[#allocation2 + $0x1a8] sm:$0xff]
    %v4256 = vld [vmem:[#allocation2 + $0x1b0] sm:$0xff]
    %v4257 = vld [vmem:[#allocation2 + $0x1b8] sm:$0xff]
    %v4258 = vld [vmem:[#allocation2 + $0x1c0] sm:$0xff]
    %v4259 = vld [vmem:[#allocation2 + $0x1c8] sm:$0xff]
    %v4260 = vld [vmem:[#allocation2 + $0x1d0] sm:$0xff]
    %v4261 = vld [vmem:[#allocation2 + $0x1d8] sm:$0xff]
    %v4262 = vld [vmem:[#allocation2 + $0x1e0] sm:$0xff]
    %v4263 = vld [vmem:[#allocation2 + $0x1e8] sm:$0xff]
    %v4264 = vld [vmem:[#allocation2 + $0x1f0] sm:$0xff]
    %v4265 = vld [vmem:[#allocation2 + $0x1f8] sm:$0xff]
    %v4266 = vld [vmem:[#allocation2 + $0x200] sm:$0xff]
    %v4267 = vld [vmem:[#allocation2 + $0x208] sm:$0xff]
    %v4268 = vld [vmem:[#allocation2 + $0x210] sm:$0xff]
    %v4269 = vld [vmem:[#allocation2 + $0x218] sm:$0xff]
    %v4270 = vld [vmem:[#allocation2 + $0x220] sm:$0xff]
    %v4271 = vld [vmem:[#allocation2 + $0x228] sm:$0xff]
    %v4272 = vld [vmem:[#allocation2 + $0x230] sm:$0xff]
    %v4273 = vld [vmem:[#allocation2 + $0x238] sm:$0xff]
    %v4274 = vld [vmem:[#allocation2 + $0x240] sm:$0xff]
    %v4275 = vld [vmem:[#allocation2 + $0x248] sm:$0xff]
    %v4276 = vld [vmem:[#allocation2 + $0x250] sm:$0xff]
    %v4277 = vld [vmem:[#allocation2 + $0x258] sm:$0xff]
    %v4278 = vld [vmem:[#allocation2 + $0x260] sm:$0xff]
    %v4279 = vld [vmem:[#allocation2 + $0x268] sm:$0xff]
    %v4280 = vld [vmem:[#allocation2 + $0x270] sm:$0xff]
    %v4281 = vld [vmem:[#allocation2 + $0x278] sm:$0xff]
    %v4282 = vld [vmem:[#allocation2 + $0x280] sm:$0xff]
    %v4285 = vunpack.c.l.s4 1966171168
    %v4286 = vunpack.c.0.s8 %v4285
    %v4287 = vlaneseq
    %v4288 = vshrl.u32 %v4287, 7
    %v4289 = vsub.s32 %v4286, %v4288
    %v4290 = vrot.slane %v2300, %v4289
    %v4291 = vcombine.high %v4290, %v4290
    %v4293 = vunpack.c.l.s4 1966171168
    %v4294 = vunpack.c.0.s8 %v4293
    %v4295 = vlaneseq
    %v4296 = vshrl.u32 %v4295, 7
    %v4297 = vsub.s32 %v4294, %v4296
    %v4298 = vrot.slane %v4290, %v4297
    %v4300 = vunpack.c.l.s4 1966171168
    %v4301 = vunpack.c.0.s8 %v4300
    %v4302 = vlaneseq
    %v4303 = vshrl.u32 %v4302, 7
    %v4304 = vsub.s32 %v4301, %v4303
    %v4305 = vrot.slane %v4291, %v4304
    %v4306 = vlaneseq
    %v4307 = vshrl.u32 %v4306, 7
    %v4308 = vsub.s32 0, %v4307
    %v4309 = vrot.slane %v4298, %v4308
    %v4310 = vlaneseq
    %v4311 = vshrl.u32 %v4310, 7
    %v4312 = vsub.s32 0, %v4311
    %v4313 = vrot.slane %v4305, %v4312
    %v4316 = vadd.f32 %v4202, %v4309
    %v4317 = vadd.f32 %v4203, %v4309
    %v4318 = vadd.f32 %v4204, %v4309
    %v4319 = vadd.f32 %v4205, %v4309
    %v4320 = vadd.f32 %v4206, %v4309
    %v4321 = vadd.f32 %v4207, %v4309
    %v4322 = vadd.f32 %v4208, %v4309
    %v4323 = vadd.f32 %v4209, %v4309
    %v4324 = vadd.f32 %v4210, %v4309
    %v4325 = vadd.f32 %v4211, %v4309
    %v4326 = vadd.f32 %v4212, %v4309
    %v4327 = vadd.f32 %v4213, %v4309
    %v4328 = vadd.f32 %v4214, %v4309
    %v4329 = vadd.f32 %v4215, %v4309
    %v4330 = vadd.f32 %v4216, %v4309
    %v4331 = vadd.f32 %v4217, %v4309
    %v4332 = vadd.f32 %v4218, %v4309
    %v4333 = vadd.f32 %v4219, %v4309
    %v4334 = vadd.f32 %v4220, %v4309
    %v4335 = vadd.f32 %v4221, %v4309
    %v4336 = vadd.f32 %v4222, %v4309
    %v4337 = vadd.f32 %v4223, %v4309
    %v4338 = vadd.f32 %v4224, %v4309
    %v4339 = vadd.f32 %v4225, %v4309
    %v4340 = vadd.f32 %v4226, %v4309
    %v4341 = vadd.f32 %v4227, %v4309
    %v4342 = vadd.f32 %v4228, %v4309
    %v4343 = vadd.f32 %v4229, %v4309
    %v4344 = vadd.f32 %v4230, %v4309
    %v4345 = vadd.f32 %v4231, %v4309
    %v4346 = vadd.f32 %v4232, %v4309
    %v4347 = vadd.f32 %v4233, %v4309
    %v4348 = vadd.f32 %v4234, %v4309
    %v4349 = vadd.f32 %v4235, %v4309
    %v4350 = vadd.f32 %v4236, %v4309
    %v4351 = vadd.f32 %v4237, %v4309
    %v4352 = vadd.f32 %v4238, %v4309
    %v4353 = vadd.f32 %v4239, %v4309
    %v4354 = vadd.f32 %v4240, %v4309
    %v4355 = vadd.f32 %v4241, %v4309
    %v4356 = vadd.f32 %v4242, %v4309
    %v4357 = vadd.f32 %v4243, %v4309
    %v4358 = vadd.f32 %v4244, %v4309
    %v4359 = vadd.f32 %v4245, %v4309
    %v4360 = vadd.f32 %v4246, %v4309
    %v4361 = vadd.f32 %v4247, %v4309
    %v4362 = vadd.f32 %v4248, %v4309
    %v4363 = vadd.f32 %v4249, %v4309
    %v4364 = vadd.f32 %v4250, %v4309
    %v4365 = vadd.f32 %v4251, %v4309
    %v4366 = vadd.f32 %v4252, %v4309
    %v4367 = vadd.f32 %v4253, %v4309
    %v4368 = vadd.f32 %v4254, %v4309
    %v4369 = vadd.f32 %v4255, %v4309
    %v4370 = vadd.f32 %v4256, %v4309
    %v4371 = vadd.f32 %v4257, %v4309
    %v4372 = vadd.f32 %v4258, %v4309
    %v4373 = vadd.f32 %v4259, %v4309
    %v4374 = vadd.f32 %v4260, %v4309
    %v4375 = vadd.f32 %v4261, %v4309
    %v4376 = vadd.f32 %v4262, %v4309
    %v4377 = vadd.f32 %v4263, %v4309
    %v4378 = vadd.f32 %v4264, %v4309
    %v4379 = vadd.f32 %v4265, %v4309
    %v4380 = vadd.f32 %v4266, %v4309
    %v4381 = vadd.f32 %v4267, %v4309
    %v4382 = vadd.f32 %v4268, %v4309
    %v4383 = vadd.f32 %v4269, %v4309
    %v4384 = vadd.f32 %v4270, %v4309
    %v4385 = vadd.f32 %v4271, %v4309
    %v4386 = vadd.f32 %v4272, %v4309
    %v4387 = vadd.f32 %v4273, %v4309
    %v4388 = vadd.f32 %v4274, %v4309
    %v4389 = vadd.f32 %v4275, %v4309
    %v4390 = vadd.f32 %v4276, %v4309
    %v4391 = vadd.f32 %v4277, %v4309
    %v4392 = vadd.f32 %v4278, %v4309
    %v4393 = vadd.f32 %v4279, %v4309
    %v4394 = vadd.f32 %v4280, %v4309
    %v4395 = vadd.f32 %v4281, %v4309
    %v4396 = vadd.f32 %v4282, %v4309
    %v4397 = vadd.f32 %v4202, %v4313
    %v4398 = vadd.f32 %v4203, %v4313
    %v4399 = vadd.f32 %v4204, %v4313
    %v4400 = vadd.f32 %v4205, %v4313
    %v4401 = vadd.f32 %v4206, %v4313
    %v4402 = vadd.f32 %v4207, %v4313
    %v4403 = vadd.f32 %v4208, %v4313
    %v4404 = vadd.f32 %v4209, %v4313
    %v4405 = vadd.f32 %v4210, %v4313
    %v4406 = vadd.f32 %v4211, %v4313
    %v4407 = vadd.f32 %v4212, %v4313
    %v4408 = vadd.f32 %v4213, %v4313
    %v4409 = vadd.f32 %v4214, %v4313
    %v4410 = vadd.f32 %v4215, %v4313
    %v4411 = vadd.f32 %v4216, %v4313
    %v4412 = vadd.f32 %v4217, %v4313
    %v4413 = vadd.f32 %v4218, %v4313
    %v4414 = vadd.f32 %v4219, %v4313
    %v4415 = vadd.f32 %v4220, %v4313
    %v4416 = vadd.f32 %v4221, %v4313
    %v4417 = vadd.f32 %v4222, %v4313
    %v4418 = vadd.f32 %v4223, %v4313
    %v4419 = vadd.f32 %v4224, %v4313
    %v4420 = vadd.f32 %v4225, %v4313
    %v4421 = vadd.f32 %v4226, %v4313
    %v4422 = vadd.f32 %v4227, %v4313
    %v4423 = vadd.f32 %v4228, %v4313
    %v4424 = vadd.f32 %v4229, %v4313
    %v4425 = vadd.f32 %v4230, %v4313
    %v4426 = vadd.f32 %v4231, %v4313
    %v4427 = vadd.f32 %v4232, %v4313
    %v4428 = vadd.f32 %v4233, %v4313
    %v4429 = vadd.f32 %v4234, %v4313
    %v4430 = vadd.f32 %v4235, %v4313
    %v4431 = vadd.f32 %v4236, %v4313
    %v4432 = vadd.f32 %v4237, %v4313
    %v4433 = vadd.f32 %v4238, %v4313
    %v4434 = vadd.f32 %v4239, %v4313
    %v4435 = vadd.f32 %v4240, %v4313
    %v4436 = vadd.f32 %v4241, %v4313
    %v4437 = vadd.f32 %v4242, %v4313
    %v4438 = vadd.f32 %v4243, %v4313
    %v4439 = vadd.f32 %v4244, %v4313
    %v4440 = vadd.f32 %v4245, %v4313
    %v4441 = vadd.f32 %v4246, %v4313
    %v4442 = vadd.f32 %v4247, %v4313
    %v4443 = vadd.f32 %v4248, %v4313
    %v4444 = vadd.f32 %v4249, %v4313
    %v4445 = vadd.f32 %v4250, %v4313
    %v4446 = vadd.f32 %v4251, %v4313
    %v4447 = vadd.f32 %v4252, %v4313
    %v4448 = vadd.f32 %v4253, %v4313
    %v4449 = vadd.f32 %v4254, %v4313
    %v4450 = vadd.f32 %v4255, %v4313
    %v4451 = vadd.f32 %v4256, %v4313
    %v4452 = vadd.f32 %v4257, %v4313
    %v4453 = vadd.f32 %v4258, %v4313
    %v4454 = vadd.f32 %v4259, %v4313
    %v4455 = vadd.f32 %v4260, %v4313
    %v4456 = vadd.f32 %v4261, %v4313
    %v4457 = vadd.f32 %v4262, %v4313
    %v4458 = vadd.f32 %v4263, %v4313
    %v4459 = vadd.f32 %v4264, %v4313
    %v4460 = vadd.f32 %v4265, %v4313
    %v4461 = vadd.f32 %v4266, %v4313
    %v4462 = vadd.f32 %v4267, %v4313
    %v4463 = vadd.f32 %v4268, %v4313
    %v4464 = vadd.f32 %v4269, %v4313
    %v4465 = vadd.f32 %v4270, %v4313
    %v4466 = vadd.f32 %v4271, %v4313
    %v4467 = vadd.f32 %v4272, %v4313
    %v4468 = vadd.f32 %v4273, %v4313
    %v4469 = vadd.f32 %v4274, %v4313
    %v4470 = vadd.f32 %v4275, %v4313
    %v4471 = vadd.f32 %v4276, %v4313
    %v4472 = vadd.f32 %v4277, %v4313
    %v4473 = vadd.f32 %v4278, %v4313
    %v4474 = vadd.f32 %v4279, %v4313
    %v4475 = vadd.f32 %v4280, %v4313
    %v4476 = vadd.f32 %v4281, %v4313
    %v4477 = vadd.f32 %v4282, %v4313
    %v4478 = vmax.f32 %v4316, 0.0
    %v4479 = vmax.f32 %v4317, 0.0
    %v4480 = vmax.f32 %v4318, 0.0
    %v4481 = vmax.f32 %v4319, 0.0
    %v4482 = vmax.f32 %v4320, 0.0
    %v4483 = vmax.f32 %v4321, 0.0
    %v4484 = vmax.f32 %v4322, 0.0
    %v4485 = vmax.f32 %v4323, 0.0
    %v4486 = vmax.f32 %v4324, 0.0
    %v4487 = vmax.f32 %v4325, 0.0
    %v4488 = vmax.f32 %v4326, 0.0
    %v4489 = vmax.f32 %v4327, 0.0
    %v4490 = vmax.f32 %v4328, 0.0
    %v4491 = vmax.f32 %v4329, 0.0
    %v4492 = vmax.f32 %v4330, 0.0
    %v4493 = vmax.f32 %v4331, 0.0
    %v4494 = vmax.f32 %v4332, 0.0
    %v4495 = vmax.f32 %v4333, 0.0
    %v4496 = vmax.f32 %v4334, 0.0
    %v4497 = vmax.f32 %v4335, 0.0
    %v4498 = vmax.f32 %v4336, 0.0
    %v4499 = vmax.f32 %v4337, 0.0
    %v4500 = vmax.f32 %v4338, 0.0
    %v4501 = vmax.f32 %v4339, 0.0
    %v4502 = vmax.f32 %v4340, 0.0
    %v4503 = vmax.f32 %v4341, 0.0
    %v4504 = vmax.f32 %v4342, 0.0
    %v4505 = vmax.f32 %v4343, 0.0
    %v4506 = vmax.f32 %v4344, 0.0
    %v4507 = vmax.f32 %v4345, 0.0
    %v4508 = vmax.f32 %v4346, 0.0
    %v4509 = vmax.f32 %v4347, 0.0
    %v4510 = vmax.f32 %v4348, 0.0
    %v4511 = vmax.f32 %v4349, 0.0
    %v4512 = vmax.f32 %v4350, 0.0
    %v4513 = vmax.f32 %v4351, 0.0
    %v4514 = vmax.f32 %v4352, 0.0
    %v4515 = vmax.f32 %v4353, 0.0
    %v4516 = vmax.f32 %v4354, 0.0
    %v4517 = vmax.f32 %v4355, 0.0
    %v4518 = vmax.f32 %v4356, 0.0
    %v4519 = vmax.f32 %v4357, 0.0
    %v4520 = vmax.f32 %v4358, 0.0
    %v4521 = vmax.f32 %v4359, 0.0
    %v4522 = vmax.f32 %v4360, 0.0
    %v4523 = vmax.f32 %v4361, 0.0
    %v4524 = vmax.f32 %v4362, 0.0
    %v4525 = vmax.f32 %v4363, 0.0
    %v4526 = vmax.f32 %v4364, 0.0
    %v4527 = vmax.f32 %v4365, 0.0
    %v4528 = vmax.f32 %v4366, 0.0
    %v4529 = vmax.f32 %v4367, 0.0
    %v4530 = vmax.f32 %v4368, 0.0
    %v4531 = vmax.f32 %v4369, 0.0
    %v4532 = vmax.f32 %v4370, 0.0
    %v4533 = vmax.f32 %v4371, 0.0
    %v4534 = vmax.f32 %v4372, 0.0
    %v4535 = vmax.f32 %v4373, 0.0
    %v4536 = vmax.f32 %v4374, 0.0
    %v4537 = vmax.f32 %v4375, 0.0
    %v4538 = vmax.f32 %v4376, 0.0
    %v4539 = vmax.f32 %v4377, 0.0
    %v4540 = vmax.f32 %v4378, 0.0
    %v4541 = vmax.f32 %v4379, 0.0
    %v4542 = vmax.f32 %v4380, 0.0
    %v4543 = vmax.f32 %v4381, 0.0
    %v4544 = vmax.f32 %v4382, 0.0
    %v4545 = vmax.f32 %v4383, 0.0
    %v4546 = vmax.f32 %v4384, 0.0
    %v4547 = vmax.f32 %v4385, 0.0
    %v4548 = vmax.f32 %v4386, 0.0
    %v4549 = vmax.f32 %v4387, 0.0
    %v4550 = vmax.f32 %v4388, 0.0
    %v4551 = vmax.f32 %v4389, 0.0
    %v4552 = vmax.f32 %v4390, 0.0
    %v4553 = vmax.f32 %v4391, 0.0
    %v4554 = vmax.f32 %v4392, 0.0
    %v4555 = vmax.f32 %v4393, 0.0
    %v4556 = vmax.f32 %v4394, 0.0
    %v4557 = vmax.f32 %v4395, 0.0
    %v4558 = vmax.f32 %v4396, 0.0
    %v4559 = vmax.f32 %v4397, 0.0
    %v4560 = vmax.f32 %v4398, 0.0
    %v4561 = vmax.f32 %v4399, 0.0
    %v4562 = vmax.f32 %v4400, 0.0
    %v4563 = vmax.f32 %v4401, 0.0
    %v4564 = vmax.f32 %v4402, 0.0
    %v4565 = vmax.f32 %v4403, 0.0
    %v4566 = vmax.f32 %v4404, 0.0
    %v4567 = vmax.f32 %v4405, 0.0
    %v4568 = vmax.f32 %v4406, 0.0
    %v4569 = vmax.f32 %v4407, 0.0
    %v4570 = vmax.f32 %v4408, 0.0
    %v4571 = vmax.f32 %v4409, 0.0
    %v4572 = vmax.f32 %v4410, 0.0
    %v4573 = vmax.f32 %v4411, 0.0
    %v4574 = vmax.f32 %v4412, 0.0
    %v4575 = vmax.f32 %v4413, 0.0
    %v4576 = vmax.f32 %v4414, 0.0
    %v4577 = vmax.f32 %v4415, 0.0
    %v4578 = vmax.f32 %v4416, 0.0
    %v4579 = vmax.f32 %v4417, 0.0
    %v4580 = vmax.f32 %v4418, 0.0
    %v4581 = vmax.f32 %v4419, 0.0
    %v4582 = vmax.f32 %v4420, 0.0
    %v4583 = vmax.f32 %v4421, 0.0
    %v4584 = vmax.f32 %v4422, 0.0
    %v4585 = vmax.f32 %v4423, 0.0
    %v4586 = vmax.f32 %v4424, 0.0
    %v4587 = vmax.f32 %v4425, 0.0
    %v4588 = vmax.f32 %v4426, 0.0
    %v4589 = vmax.f32 %v4427, 0.0
    %v4590 = vmax.f32 %v4428, 0.0
    %v4591 = vmax.f32 %v4429, 0.0
    %v4592 = vmax.f32 %v4430, 0.0
    %v4593 = vmax.f32 %v4431, 0.0
    %v4594 = vmax.f32 %v4432, 0.0
    %v4595 = vmax.f32 %v4433, 0.0
    %v4596 = vmax.f32 %v4434, 0.0
    %v4597 = vmax.f32 %v4435, 0.0
    %v4598 = vmax.f32 %v4436, 0.0
    %v4599 = vmax.f32 %v4437, 0.0
    %v4600 = vmax.f32 %v4438, 0.0
    %v4601 = vmax.f32 %v4439, 0.0
    %v4602 = vmax.f32 %v4440, 0.0
    %v4603 = vmax.f32 %v4441, 0.0
    %v4604 = vmax.f32 %v4442, 0.0
    %v4605 = vmax.f32 %v4443, 0.0
    %v4606 = vmax.f32 %v4444, 0.0
    %v4607 = vmax.f32 %v4445, 0.0
    %v4608 = vmax.f32 %v4446, 0.0
    %v4609 = vmax.f32 %v4447, 0.0
    %v4610 = vmax.f32 %v4448, 0.0
    %v4611 = vmax.f32 %v4449, 0.0
    %v4612 = vmax.f32 %v4450, 0.0
    %v4613 = vmax.f32 %v4451, 0.0
    %v4614 = vmax.f32 %v4452, 0.0
    %v4615 = vmax.f32 %v4453, 0.0
    %v4616 = vmax.f32 %v4454, 0.0
    %v4617 = vmax.f32 %v4455, 0.0
    %v4618 = vmax.f32 %v4456, 0.0
    %v4619 = vmax.f32 %v4457, 0.0
    %v4620 = vmax.f32 %v4458, 0.0
    %v4621 = vmax.f32 %v4459, 0.0
    %v4622 = vmax.f32 %v4460, 0.0
    %v4623 = vmax.f32 %v4461, 0.0
    %v4624 = vmax.f32 %v4462, 0.0
    %v4625 = vmax.f32 %v4463, 0.0
    %v4626 = vmax.f32 %v4464, 0.0
    %v4627 = vmax.f32 %v4465, 0.0
    %v4628 = vmax.f32 %v4466, 0.0
    %v4629 = vmax.f32 %v4467, 0.0
    %v4630 = vmax.f32 %v4468, 0.0
    %v4631 = vmax.f32 %v4469, 0.0
    %v4632 = vmax.f32 %v4470, 0.0
    %v4633 = vmax.f32 %v4471, 0.0
    %v4634 = vmax.f32 %v4472, 0.0
    %v4635 = vmax.f32 %v4473, 0.0
    %v4636 = vmax.f32 %v4474, 0.0
    %v4637 = vmax.f32 %v4475, 0.0
    %v4638 = vmax.f32 %v4476, 0.0
    %v4639 = vmax.f32 %v4477, 0.0
    %v4640 = vld [vmem:[#allocation9 + $0x60] sm:$0xf]
    %v4641 = vld [vmem:[#allocation9 + $0xc8] sm:$0xf]
    %v4642 = vld [vmem:[#allocation9 + $0x130] sm:$0xf]
    %v4643 = vld [vmem:[#allocation9 + $0x198] sm:$0xf]
    %v4644 = vld [vmem:[#allocation9 + $0x200] sm:$0xf]
    %v4645 = vld [vmem:[#allocation9 + $0x268] sm:$0xf]
    %v4646 = vld [vmem:[#allocation9 + $0x2d0] sm:$0xf]
    %v4647 = vld [vmem:[#allocation9 + $0x338] sm:$0xf]
    %v4648 = vld [vmem:[#allocation9 + $0x3a0] sm:$0xf]
    %v4649 = vld [vmem:[#allocation9 + $0x408] sm:$0xf]
    %v4650 = vld [vmem:[#allocation9 + $0x470] sm:$0xf]
    %v4651 = vld [vmem:[#allocation9 + $0x4d8] sm:$0xf]
    %v4652 = vld [vmem:[#allocation9 + $0x540] sm:$0xf]
    %v4653 = vld [vmem:[#allocation9 + $0x5a8] sm:$0xf]
    %v4654 = vld [vmem:[#allocation9 + $0x610] sm:$0xf]
    %v4655 = vld [vmem:[#allocation9 + $0x678] sm:$0xf]
    %v4656 = vpack.c.bf16 %v4479, %v4478
    %v4657 = vpack.c.bf16 %v4481, %v4480
    %v4658 = vpack.c.bf16 %v4483, %v4482
    %v4659 = vpack.c.bf16 %v4485, %v4484
    %v4660 = vpack.c.bf16 %v4487, %v4486
    %v4661 = vpack.c.bf16 %v4489, %v4488
    %v4662 = vpack.c.bf16 %v4491, %v4490
    %v4663 = vpack.c.bf16 %v4493, %v4492
    %v4664 = vpack.c.bf16 %v4495, %v4494
    %v4665 = vpack.c.bf16 %v4497, %v4496
    %v4666 = vpack.c.bf16 %v4499, %v4498
    %v4667 = vpack.c.bf16 %v4501, %v4500
    %v4668 = vpack.c.bf16 %v4503, %v4502
    %v4669 = vpack.c.bf16 %v4505, %v4504
    %v4670 = vpack.c.bf16 %v4507, %v4506
    %v4671 = vpack.c.bf16 %v4509, %v4508
    %v4672 = vpack.c.bf16 %v4511, %v4510
    %v4673 = vpack.c.bf16 %v4513, %v4512
    %v4674 = vpack.c.bf16 %v4515, %v4514
    %v4675 = vpack.c.bf16 %v4517, %v4516
    %v4676 = vpack.c.bf16 %v4519, %v4518
    %v4677 = vpack.c.bf16 %v4521, %v4520
    %v4678 = vpack.c.bf16 %v4523, %v4522
    %v4679 = vpack.c.bf16 %v4525, %v4524
    %v4680 = vpack.c.bf16 %v4527, %v4526
    %v4681 = vpack.c.bf16 %v4529, %v4528
    %v4682 = vpack.c.bf16 %v4531, %v4530
    %v4683 = vpack.c.bf16 %v4533, %v4532
    %v4684 = vpack.c.bf16 %v4535, %v4534
    %v4685 = vpack.c.bf16 %v4537, %v4536
    %v4686 = vpack.c.bf16 %v4539, %v4538
    %v4687 = vpack.c.bf16 %v4541, %v4540
    %v4688 = vpack.c.bf16 %v4543, %v4542
    %v4689 = vpack.c.bf16 %v4545, %v4544
    %v4690 = vpack.c.bf16 %v4547, %v4546
    %v4691 = vpack.c.bf16 %v4549, %v4548
    %v4692 = vpack.c.bf16 %v4551, %v4550
    %v4693 = vpack.c.bf16 %v4553, %v4552
    %v4694 = vpack.c.bf16 %v4555, %v4554
    %v4695 = vpack.c.bf16 %v4557, %v4556
    %v4696 = vpack.c.bf16 %v4559, %v4558
    %v4697 = vpack.c.bf16 %v4561, %v4560
    %v4698 = vpack.c.bf16 %v4563, %v4562
    %v4699 = vpack.c.bf16 %v4565, %v4564
    %v4700 = vpack.c.bf16 %v4567, %v4566
    %v4701 = vpack.c.bf16 %v4569, %v4568
    %v4702 = vpack.c.bf16 %v4571, %v4570
    %v4703 = vpack.c.bf16 %v4573, %v4572
    %v4704 = vpack.c.bf16 %v4575, %v4574
    %v4705 = vpack.c.bf16 %v4577, %v4576
    %v4706 = vpack.c.bf16 %v4579, %v4578
    %v4707 = vpack.c.bf16 %v4581, %v4580
    %v4708 = vpack.c.bf16 %v4583, %v4582
    %v4709 = vpack.c.bf16 %v4585, %v4584
    %v4710 = vpack.c.bf16 %v4587, %v4586
    %v4711 = vpack.c.bf16 %v4589, %v4588
    %v4712 = vpack.c.bf16 %v4591, %v4590
    %v4713 = vpack.c.bf16 %v4593, %v4592
    %v4714 = vpack.c.bf16 %v4595, %v4594
    %v4715 = vpack.c.bf16 %v4597, %v4596
    %v4716 = vpack.c.bf16 %v4599, %v4598
    %v4717 = vpack.c.bf16 %v4601, %v4600
    %v4718 = vpack.c.bf16 %v4603, %v4602
    %v4719 = vpack.c.bf16 %v4605, %v4604
    %v4720 = vpack.c.bf16 %v4607, %v4606
    %v4721 = vpack.c.bf16 %v4609, %v4608
    %v4722 = vpack.c.bf16 %v4611, %v4610
    %v4723 = vpack.c.bf16 %v4613, %v4612
    %v4724 = vpack.c.bf16 %v4615, %v4614
    %v4725 = vpack.c.bf16 %v4617, %v4616
    %v4726 = vpack.c.bf16 %v4619, %v4618
    %v4727 = vpack.c.bf16 %v4621, %v4620
    %v4728 = vpack.c.bf16 %v4623, %v4622
    %v4729 = vpack.c.bf16 %v4625, %v4624
    %v4730 = vpack.c.bf16 %v4627, %v4626
    %v4731 = vpack.c.bf16 %v4629, %v4628
    %v4732 = vpack.c.bf16 %v4631, %v4630
    %v4733 = vpack.c.bf16 %v4633, %v4632
    %v4734 = vpack.c.bf16 %v4635, %v4634
    %v4735 = vpack.c.bf16 %v4637, %v4636
    %v4736 = vpack.c.bf16 %v4639, %v4638
    %v4737 = vld [vmem:[%s6 + $0x1f] sm:$0x1]
    %v4739 = vlaneseq
    %v4740 = vshrl.u32 %v4739, 7
    %v4741 = vsub.s32 0, %v4740
    %v4742 = vrot.slane %v4737, %v4741
    %v4760 = vunpack.c.l.b16 %v4640
    %v4761 = vunpack.c.l.b16 %v4641
    %v4762 = vunpack.c.l.b16 %v4642
    %v4763 = vunpack.c.l.b16 %v4643
    %v4764 = vunpack.c.l.b16 %v4644
    %v4765 = vunpack.c.l.b16 %v4645
    %v4766 = vunpack.c.l.b16 %v4646
    %v4767 = vunpack.c.l.b16 %v4647
    %v4768 = vunpack.c.l.b16 %v4648
    %v4769 = vunpack.c.l.b16 %v4649
    %v4770 = vunpack.c.l.b16 %v4650
    %v4771 = vunpack.c.l.b16 %v4651
    %v4772 = vunpack.c.l.b16 %v4652
    %v4773 = vunpack.c.l.b16 %v4653
    %v4774 = vunpack.c.l.b16 %v4654
    %v4775 = vunpack.c.l.b16 %v4655
    %v4776 = vpack.c.b16 %v4761, %v4760
    %v4777 = vpack.c.b16 %v4763, %v4762
    %v4778 = vpack.c.b16 %v4765, %v4764
    %v4779 = vpack.c.b16 %v4767, %v4766
    %v4780 = vpack.c.b16 %v4769, %v4768
    %v4781 = vpack.c.b16 %v4771, %v4770
    %v4782 = vpack.c.b16 %v4773, %v4772
    %v4783 = vpack.c.b16 %v4775, %v4774
    %4792 = vmatprep.subr.bf16.mxu0 0
    %4793 = vmatpush1.bf16.msra.mxu0 %v4783
    %4794 = vmatprep.subr.bf16.mxu0 0
    %4795 = vmatpush1.bf16.msra.mxu0 %v4782
    %4796 = vmatprep.subr.bf16.mxu0 0
    %4797 = vmatpush1.bf16.msra.mxu0 %v4781
    %4798 = vmatprep.subr.bf16.mxu0 0
    %4799 = vmatpush1.bf16.msra.mxu0 %v4780
    %4800 = vmatprep.subr.bf16.mxu0 0
    %4801 = vmatpush1.bf16.msra.mxu0 %v4779
    %4802 = vmatprep.subr.bf16.mxu0 0
    %4803 = vmatpush1.bf16.msra.mxu0 %v4778
    %4804 = vmatprep.subr.bf16.mxu0 0
    %4805 = vmatpush1.bf16.msra.mxu0 %v4777
    %4806 = vmatprep.subr.bf16.mxu0 0
    %4807 = vmatpush1.bf16.msra.mxu0 %v4776
    %4808 = vmatprep.subr.bf16.mxu0 0
    %4809 = vmatpush2.bf16.msra.mxu0 0
    %4810 = vmatprep.subr.bf16.mxu0 0
    %4811 = vmatpush2.bf16.msra.mxu0 0
    %4812 = vmatprep.subr.bf16.mxu0 0
    %4813 = vmatpush2.bf16.msra.mxu0 0
    %4814 = vmatprep.subr.bf16.mxu0 0
    %4815 = vmatpush2.bf16.msra.mxu0 0
    %4816 = vmatprep.subr.bf16.mxu0 0
    %4817 = vmatpush2.bf16.msra.mxu0 0
    %4818 = vmatprep.subr.bf16.mxu0 0
    %4819 = vmatpush2.bf16.msra.mxu0 0
    %4820 = vmatprep.subr.bf16.mxu0 0
    %4821 = vmatpush2.bf16.msra.mxu0 0
    %4822 = vmatprep.subr.bf16.mxu0 0
    %4823 = vmatpush2.bf16.msra.mxu0 0
    %4824 = vmatprep.mubr.bf16.mxu0 0
    %4825 = vmatmul.mubr.bf16.gmra.mxu0 %v4656
    %v4826 = vpop.f32.mrf.mxu0
    %v4827 = vadd.f32 %v4742, %v4826
    %v4828 = vpop.f32.mrf.mxu0
    %v4829 = vpop.f32.mrf.mxu0
    %v4830 = vadd.f32 %v4742, %v4829
    %v4831 = vpop.f32.mrf.mxu0
    %4832 = vmatprep.mubr.bf16.mxu0 0
    %4833 = vmatmul.mubr.bf16.gmra.mxu0 %v4657
    %v4834 = vpop.f32.mrf.mxu0
    %v4835 = vadd.f32 %v4742, %v4834
    %v4836 = vpop.f32.mrf.mxu0
    %v4837 = vpop.f32.mrf.mxu0
    %v4838 = vadd.f32 %v4742, %v4837
    %v4839 = vpop.f32.mrf.mxu0
    %4840 = vmatprep.mubr.bf16.mxu0 0
    %4841 = vmatmul.mubr.bf16.gmra.mxu0 %v4658
    %v4842 = vpop.f32.mrf.mxu0
    %v4843 = vadd.f32 %v4742, %v4842
    %v4844 = vpop.f32.mrf.mxu0
    %v4845 = vpop.f32.mrf.mxu0
    %v4846 = vadd.f32 %v4742, %v4845
    %v4847 = vpop.f32.mrf.mxu0
    %4848 = vmatprep.mubr.bf16.mxu0 0
    %4849 = vmatmul.mubr.bf16.gmra.mxu0 %v4659
    %v4850 = vpop.f32.mrf.mxu0
    %v4851 = vadd.f32 %v4742, %v4850
    %v4852 = vpop.f32.mrf.mxu0
    %v4853 = vpop.f32.mrf.mxu0
    %v4854 = vadd.f32 %v4742, %v4853
    %v4855 = vpop.f32.mrf.mxu0
    %4856 = vmatprep.mubr.bf16.mxu0 0
    %4857 = vmatmul.mubr.bf16.gmra.mxu0 %v4660
    %v4858 = vpop.f32.mrf.mxu0
    %v4859 = vadd.f32 %v4742, %v4858
    %v4860 = vpop.f32.mrf.mxu0
    %v4861 = vpop.f32.mrf.mxu0
    %v4862 = vadd.f32 %v4742, %v4861
    %v4863 = vpop.f32.mrf.mxu0
    %4864 = vmatprep.mubr.bf16.mxu0 0
    %4865 = vmatmul.mubr.bf16.gmra.mxu0 %v4661
    %v4866 = vpop.f32.mrf.mxu0
    %v4867 = vadd.f32 %v4742, %v4866
    %v4868 = vpop.f32.mrf.mxu0
    %v4869 = vpop.f32.mrf.mxu0
    %v4870 = vadd.f32 %v4742, %v4869
    %v4871 = vpop.f32.mrf.mxu0
    %4872 = vmatprep.mubr.bf16.mxu0 0
    %4873 = vmatmul.mubr.bf16.gmra.mxu0 %v4662
    %v4874 = vpop.f32.mrf.mxu0
    %v4875 = vadd.f32 %v4742, %v4874
    %v4876 = vpop.f32.mrf.mxu0
    %v4877 = vpop.f32.mrf.mxu0
    %v4878 = vadd.f32 %v4742, %v4877
    %v4879 = vpop.f32.mrf.mxu0
    %4880 = vmatprep.mubr.bf16.mxu0 0
    %4881 = vmatmul.mubr.bf16.gmra.mxu0 %v4663
    %v4882 = vpop.f32.mrf.mxu0
    %v4883 = vadd.f32 %v4742, %v4882
    %v4884 = vpop.f32.mrf.mxu0
    %v4885 = vpop.f32.mrf.mxu0
    %v4886 = vadd.f32 %v4742, %v4885
    %v4887 = vpop.f32.mrf.mxu0
    %4888 = vmatprep.mubr.bf16.mxu0 0
    %4889 = vmatmul.mubr.bf16.gmra.mxu0 %v4664
    %v4890 = vpop.f32.mrf.mxu0
    %v4891 = vadd.f32 %v4742, %v4890
    %v4892 = vpop.f32.mrf.mxu0
    %v4893 = vpop.f32.mrf.mxu0
    %v4894 = vadd.f32 %v4742, %v4893
    %v4895 = vpop.f32.mrf.mxu0
    %4896 = vmatprep.mubr.bf16.mxu0 0
    %4897 = vmatmul.mubr.bf16.gmra.mxu0 %v4665
    %v4898 = vpop.f32.mrf.mxu0
    %v4899 = vadd.f32 %v4742, %v4898
    %v4900 = vpop.f32.mrf.mxu0
    %v4901 = vpop.f32.mrf.mxu0
    %v4902 = vadd.f32 %v4742, %v4901
    %v4903 = vpop.f32.mrf.mxu0
    %4904 = vmatprep.mubr.bf16.mxu0 0
    %4905 = vmatmul.mubr.bf16.gmra.mxu0 %v4666
    %v4906 = vpop.f32.mrf.mxu0
    %v4907 = vadd.f32 %v4742, %v4906
    %v4908 = vpop.f32.mrf.mxu0
    %v4909 = vpop.f32.mrf.mxu0
    %v4910 = vadd.f32 %v4742, %v4909
    %v4911 = vpop.f32.mrf.mxu0
    %4912 = vmatprep.mubr.bf16.mxu0 0
    %4913 = vmatmul.mubr.bf16.gmra.mxu0 %v4667
    %v4914 = vpop.f32.mrf.mxu0
    %v4915 = vadd.f32 %v4742, %v4914
    %v4916 = vpop.f32.mrf.mxu0
    %v4917 = vpop.f32.mrf.mxu0
    %v4918 = vadd.f32 %v4742, %v4917
    %v4919 = vpop.f32.mrf.mxu0
    %4920 = vmatprep.mubr.bf16.mxu0 0
    %4921 = vmatmul.mubr.bf16.gmra.mxu0 %v4668
    %v4922 = vpop.f32.mrf.mxu0
    %v4923 = vadd.f32 %v4742, %v4922
    %v4924 = vpop.f32.mrf.mxu0
    %v4925 = vpop.f32.mrf.mxu0
    %v4926 = vadd.f32 %v4742, %v4925
    %v4927 = vpop.f32.mrf.mxu0
    %4928 = vmatprep.mubr.bf16.mxu0 0
    %4929 = vmatmul.mubr.bf16.gmra.mxu0 %v4669
    %v4930 = vpop.f32.mrf.mxu0
    %v4931 = vadd.f32 %v4742, %v4930
    %v4932 = vpop.f32.mrf.mxu0
    %v4933 = vpop.f32.mrf.mxu0
    %v4934 = vadd.f32 %v4742, %v4933
    %v4935 = vpop.f32.mrf.mxu0
    %4936 = vmatprep.mubr.bf16.mxu0 0
    %4937 = vmatmul.mubr.bf16.gmra.mxu0 %v4670
    %v4938 = vpop.f32.mrf.mxu0
    %v4939 = vadd.f32 %v4742, %v4938
    %v4940 = vpop.f32.mrf.mxu0
    %v4941 = vpop.f32.mrf.mxu0
    %v4942 = vadd.f32 %v4742, %v4941
    %v4943 = vpop.f32.mrf.mxu0
    %4944 = vmatprep.mubr.bf16.mxu0 0
    %4945 = vmatmul.mubr.bf16.gmra.mxu0 %v4671
    %v4946 = vpop.f32.mrf.mxu0
    %v4947 = vadd.f32 %v4742, %v4946
    %v4948 = vpop.f32.mrf.mxu0
    %v4949 = vpop.f32.mrf.mxu0
    %v4950 = vadd.f32 %v4742, %v4949
    %v4951 = vpop.f32.mrf.mxu0
    %4952 = vmatprep.mubr.bf16.mxu0 0
    %4953 = vmatmul.mubr.bf16.gmra.mxu0 %v4672
    %v4954 = vpop.f32.mrf.mxu0
    %v4955 = vadd.f32 %v4742, %v4954
    %v4956 = vpop.f32.mrf.mxu0
    %v4957 = vpop.f32.mrf.mxu0
    %v4958 = vadd.f32 %v4742, %v4957
    %v4959 = vpop.f32.mrf.mxu0
    %4960 = vmatprep.mubr.bf16.mxu0 0
    %4961 = vmatmul.mubr.bf16.gmra.mxu0 %v4673
    %v4962 = vpop.f32.mrf.mxu0
    %v4963 = vadd.f32 %v4742, %v4962
    %v4964 = vpop.f32.mrf.mxu0
    %v4965 = vpop.f32.mrf.mxu0
    %v4966 = vadd.f32 %v4742, %v4965
    %v4967 = vpop.f32.mrf.mxu0
    %4968 = vmatprep.mubr.bf16.mxu0 0
    %4969 = vmatmul.mubr.bf16.gmra.mxu0 %v4674
    %v4970 = vpop.f32.mrf.mxu0
    %v4971 = vadd.f32 %v4742, %v4970
    %v4972 = vpop.f32.mrf.mxu0
    %v4973 = vpop.f32.mrf.mxu0
    %v4974 = vadd.f32 %v4742, %v4973
    %v4975 = vpop.f32.mrf.mxu0
    %4976 = vmatprep.mubr.bf16.mxu0 0
    %4977 = vmatmul.mubr.bf16.gmra.mxu0 %v4675
    %v4978 = vpop.f32.mrf.mxu0
    %v4979 = vadd.f32 %v4742, %v4978
    %v4980 = vpop.f32.mrf.mxu0
    %v4981 = vpop.f32.mrf.mxu0
    %v4982 = vadd.f32 %v4742, %v4981
    %v4983 = vpop.f32.mrf.mxu0
    %4984 = vmatprep.mubr.bf16.mxu0 0
    %4985 = vmatmul.mubr.bf16.gmra.mxu0 %v4676
    %v4986 = vpop.f32.mrf.mxu0
    %v4987 = vadd.f32 %v4742, %v4986
    %v4988 = vpop.f32.mrf.mxu0
    %v4989 = vpop.f32.mrf.mxu0
    %v4990 = vadd.f32 %v4742, %v4989
    %v4991 = vpop.f32.mrf.mxu0
    %4992 = vmatprep.mubr.bf16.mxu0 0
    %4993 = vmatmul.mubr.bf16.gmra.mxu0 %v4677
    %v4994 = vpop.f32.mrf.mxu0
    %v4995 = vadd.f32 %v4742, %v4994
    %v4996 = vpop.f32.mrf.mxu0
    %v4997 = vpop.f32.mrf.mxu0
    %v4998 = vadd.f32 %v4742, %v4997
    %v4999 = vpop.f32.mrf.mxu0
    %5000 = vmatprep.mubr.bf16.mxu0 0
    %5001 = vmatmul.mubr.bf16.gmra.mxu0 %v4678
    %v5002 = vpop.f32.mrf.mxu0
    %v5003 = vadd.f32 %v4742, %v5002
    %v5004 = vpop.f32.mrf.mxu0
    %v5005 = vpop.f32.mrf.mxu0
    %v5006 = vadd.f32 %v4742, %v5005
    %v5007 = vpop.f32.mrf.mxu0
    %5008 = vmatprep.mubr.bf16.mxu0 0
    %5009 = vmatmul.mubr.bf16.gmra.mxu0 %v4679
    %v5010 = vpop.f32.mrf.mxu0
    %v5011 = vadd.f32 %v4742, %v5010
    %v5012 = vpop.f32.mrf.mxu0
    %v5013 = vpop.f32.mrf.mxu0
    %v5014 = vadd.f32 %v4742, %v5013
    %v5015 = vpop.f32.mrf.mxu0
    %5016 = vmatprep.mubr.bf16.mxu0 0
    %5017 = vmatmul.mubr.bf16.gmra.mxu0 %v4680
    %v5018 = vpop.f32.mrf.mxu0
    %v5019 = vadd.f32 %v4742, %v5018
    %v5020 = vpop.f32.mrf.mxu0
    %v5021 = vpop.f32.mrf.mxu0
    %v5022 = vadd.f32 %v4742, %v5021
    %v5023 = vpop.f32.mrf.mxu0
    %5024 = vmatprep.mubr.bf16.mxu0 0
    %5025 = vmatmul.mubr.bf16.gmra.mxu0 %v4681
    %v5026 = vpop.f32.mrf.mxu0
    %v5027 = vadd.f32 %v4742, %v5026
    %v5028 = vpop.f32.mrf.mxu0
    %v5029 = vpop.f32.mrf.mxu0
    %v5030 = vadd.f32 %v4742, %v5029
    %v5031 = vpop.f32.mrf.mxu0
    %5032 = vmatprep.mubr.bf16.mxu0 0
    %5033 = vmatmul.mubr.bf16.gmra.mxu0 %v4682
    %v5034 = vpop.f32.mrf.mxu0
    %v5035 = vadd.f32 %v4742, %v5034
    %v5036 = vpop.f32.mrf.mxu0
    %v5037 = vpop.f32.mrf.mxu0
    %v5038 = vadd.f32 %v4742, %v5037
    %v5039 = vpop.f32.mrf.mxu0
    %5040 = vmatprep.mubr.bf16.mxu0 0
    %5041 = vmatmul.mubr.bf16.gmra.mxu0 %v4683
    %v5042 = vpop.f32.mrf.mxu0
    %v5043 = vadd.f32 %v4742, %v5042
    %v5044 = vpop.f32.mrf.mxu0
    %v5045 = vpop.f32.mrf.mxu0
    %v5046 = vadd.f32 %v4742, %v5045
    %v5047 = vpop.f32.mrf.mxu0
    %5048 = vmatprep.mubr.bf16.mxu0 0
    %5049 = vmatmul.mubr.bf16.gmra.mxu0 %v4684
    %v5050 = vpop.f32.mrf.mxu0
    %v5051 = vadd.f32 %v4742, %v5050
    %v5052 = vpop.f32.mrf.mxu0
    %v5053 = vpop.f32.mrf.mxu0
    %v5054 = vadd.f32 %v4742, %v5053
    %v5055 = vpop.f32.mrf.mxu0
    %5056 = vmatprep.mubr.bf16.mxu0 0
    %5057 = vmatmul.mubr.bf16.gmra.mxu0 %v4685
    %v5058 = vpop.f32.mrf.mxu0
    %v5059 = vadd.f32 %v4742, %v5058
    %v5060 = vpop.f32.mrf.mxu0
    %v5061 = vpop.f32.mrf.mxu0
    %v5062 = vadd.f32 %v4742, %v5061
    %v5063 = vpop.f32.mrf.mxu0
    %5064 = vmatprep.mubr.bf16.mxu0 0
    %5065 = vmatmul.mubr.bf16.gmra.mxu0 %v4686
    %v5066 = vpop.f32.mrf.mxu0
    %v5067 = vadd.f32 %v4742, %v5066
    %v5068 = vpop.f32.mrf.mxu0
    %v5069 = vpop.f32.mrf.mxu0
    %v5070 = vadd.f32 %v4742, %v5069
    %v5071 = vpop.f32.mrf.mxu0
    %5072 = vmatprep.mubr.bf16.mxu0 0
    %5073 = vmatmul.mubr.bf16.gmra.mxu0 %v4687
    %v5074 = vpop.f32.mrf.mxu0
    %v5075 = vadd.f32 %v4742, %v5074
    %v5076 = vpop.f32.mrf.mxu0
    %v5077 = vpop.f32.mrf.mxu0
    %v5078 = vadd.f32 %v4742, %v5077
    %v5079 = vpop.f32.mrf.mxu0
    %5080 = vmatprep.mubr.bf16.mxu0 0
    %5081 = vmatmul.mubr.bf16.gmra.mxu0 %v4688
    %v5082 = vpop.f32.mrf.mxu0
    %v5083 = vadd.f32 %v4742, %v5082
    %v5084 = vpop.f32.mrf.mxu0
    %v5085 = vpop.f32.mrf.mxu0
    %v5086 = vadd.f32 %v4742, %v5085
    %v5087 = vpop.f32.mrf.mxu0
    %5088 = vmatprep.mubr.bf16.mxu0 0
    %5089 = vmatmul.mubr.bf16.gmra.mxu0 %v4689
    %v5090 = vpop.f32.mrf.mxu0
    %v5091 = vadd.f32 %v4742, %v5090
    %v5092 = vpop.f32.mrf.mxu0
    %v5093 = vpop.f32.mrf.mxu0
    %v5094 = vadd.f32 %v4742, %v5093
    %v5095 = vpop.f32.mrf.mxu0
    %5096 = vmatprep.mubr.bf16.mxu0 0
    %5097 = vmatmul.mubr.bf16.gmra.mxu0 %v4690
    %v5098 = vpop.f32.mrf.mxu0
    %v5099 = vadd.f32 %v4742, %v5098
    %v5100 = vpop.f32.mrf.mxu0
    %v5101 = vpop.f32.mrf.mxu0
    %v5102 = vadd.f32 %v4742, %v5101
    %v5103 = vpop.f32.mrf.mxu0
    %5104 = vmatprep.mubr.bf16.mxu0 0
    %5105 = vmatmul.mubr.bf16.gmra.mxu0 %v4691
    %v5106 = vpop.f32.mrf.mxu0
    %v5107 = vadd.f32 %v4742, %v5106
    %v5108 = vpop.f32.mrf.mxu0
    %v5109 = vpop.f32.mrf.mxu0
    %v5110 = vadd.f32 %v4742, %v5109
    %v5111 = vpop.f32.mrf.mxu0
    %5112 = vmatprep.mubr.bf16.mxu0 0
    %5113 = vmatmul.mubr.bf16.gmra.mxu0 %v4692
    %v5114 = vpop.f32.mrf.mxu0
    %v5115 = vadd.f32 %v4742, %v5114
    %v5116 = vpop.f32.mrf.mxu0
    %v5117 = vpop.f32.mrf.mxu0
    %v5118 = vadd.f32 %v4742, %v5117
    %v5119 = vpop.f32.mrf.mxu0
    %5120 = vmatprep.mubr.bf16.mxu0 0
    %5121 = vmatmul.mubr.bf16.gmra.mxu0 %v4693
    %v5122 = vpop.f32.mrf.mxu0
    %v5123 = vadd.f32 %v4742, %v5122
    %v5124 = vpop.f32.mrf.mxu0
    %v5125 = vpop.f32.mrf.mxu0
    %v5126 = vadd.f32 %v4742, %v5125
    %v5127 = vpop.f32.mrf.mxu0
    %5128 = vmatprep.mubr.bf16.mxu0 0
    %5129 = vmatmul.mubr.bf16.gmra.mxu0 %v4694
    %v5130 = vpop.f32.mrf.mxu0
    %v5131 = vadd.f32 %v4742, %v5130
    %v5132 = vpop.f32.mrf.mxu0
    %v5133 = vpop.f32.mrf.mxu0
    %v5134 = vadd.f32 %v4742, %v5133
    %v5135 = vpop.f32.mrf.mxu0
    %5136 = vmatprep.mubr.bf16.mxu0 0
    %5137 = vmatmul.mubr.bf16.gmra.mxu0 %v4695
    %v5138 = vpop.f32.mrf.mxu0
    %v5139 = vadd.f32 %v4742, %v5138
    %v5140 = vpop.f32.mrf.mxu0
    %v5141 = vpop.f32.mrf.mxu0
    %v5142 = vadd.f32 %v4742, %v5141
    %v5143 = vpop.f32.mrf.mxu0
    %5144 = vmatprep.mubr.bf16.mxu0 0
    %5145 = vmatmul.mubr.bf16.gmra.mxu0 %v4696
    %v5146 = vpop.f32.mrf.mxu0
    %v5147 = vadd.f32 %v4742, %v5146
    %v5148 = vpop.f32.mrf.mxu0
    %v5149 = vpop.f32.mrf.mxu0
    %v5150 = vadd.f32 %v4742, %v5149
    %v5151 = vpop.f32.mrf.mxu0
    %5152 = vmatprep.mubr.bf16.mxu0 0
    %5153 = vmatmul.mubr.bf16.gmra.mxu0 %v4697
    %v5154 = vpop.f32.mrf.mxu0
    %v5155 = vadd.f32 %v4742, %v5154
    %v5156 = vpop.f32.mrf.mxu0
    %v5157 = vpop.f32.mrf.mxu0
    %v5158 = vadd.f32 %v4742, %v5157
    %v5159 = vpop.f32.mrf.mxu0
    %5160 = vmatprep.mubr.bf16.mxu0 0
    %5161 = vmatmul.mubr.bf16.gmra.mxu0 %v4698
    %v5162 = vpop.f32.mrf.mxu0
    %v5163 = vadd.f32 %v4742, %v5162
    %v5164 = vpop.f32.mrf.mxu0
    %v5165 = vpop.f32.mrf.mxu0
    %v5166 = vadd.f32 %v4742, %v5165
    %v5167 = vpop.f32.mrf.mxu0
    %5168 = vmatprep.mubr.bf16.mxu0 0
    %5169 = vmatmul.mubr.bf16.gmra.mxu0 %v4699
    %v5170 = vpop.f32.mrf.mxu0
    %v5171 = vadd.f32 %v4742, %v5170
    %v5172 = vpop.f32.mrf.mxu0
    %v5173 = vpop.f32.mrf.mxu0
    %v5174 = vadd.f32 %v4742, %v5173
    %v5175 = vpop.f32.mrf.mxu0
    %5176 = vmatprep.mubr.bf16.mxu0 0
    %5177 = vmatmul.mubr.bf16.gmra.mxu0 %v4700
    %v5178 = vpop.f32.mrf.mxu0
    %v5179 = vadd.f32 %v4742, %v5178
    %v5180 = vpop.f32.mrf.mxu0
    %v5181 = vpop.f32.mrf.mxu0
    %v5182 = vadd.f32 %v4742, %v5181
    %v5183 = vpop.f32.mrf.mxu0
    %5184 = vmatprep.mubr.bf16.mxu0 0
    %5185 = vmatmul.mubr.bf16.gmra.mxu0 %v4701
    %v5186 = vpop.f32.mrf.mxu0
    %v5187 = vadd.f32 %v4742, %v5186
    %v5188 = vpop.f32.mrf.mxu0
    %v5189 = vpop.f32.mrf.mxu0
    %v5190 = vadd.f32 %v4742, %v5189
    %v5191 = vpop.f32.mrf.mxu0
    %5192 = vmatprep.mubr.bf16.mxu0 0
    %5193 = vmatmul.mubr.bf16.gmra.mxu0 %v4702
    %v5194 = vpop.f32.mrf.mxu0
    %v5195 = vadd.f32 %v4742, %v5194
    %v5196 = vpop.f32.mrf.mxu0
    %v5197 = vpop.f32.mrf.mxu0
    %v5198 = vadd.f32 %v4742, %v5197
    %v5199 = vpop.f32.mrf.mxu0
    %5200 = vmatprep.mubr.bf16.mxu0 0
    %5201 = vmatmul.mubr.bf16.gmra.mxu0 %v4703
    %v5202 = vpop.f32.mrf.mxu0
    %v5203 = vadd.f32 %v4742, %v5202
    %v5204 = vpop.f32.mrf.mxu0
    %v5205 = vpop.f32.mrf.mxu0
    %v5206 = vadd.f32 %v4742, %v5205
    %v5207 = vpop.f32.mrf.mxu0
    %5208 = vmatprep.mubr.bf16.mxu0 0
    %5209 = vmatmul.mubr.bf16.gmra.mxu0 %v4704
    %v5210 = vpop.f32.mrf.mxu0
    %v5211 = vadd.f32 %v4742, %v5210
    %v5212 = vpop.f32.mrf.mxu0
    %v5213 = vpop.f32.mrf.mxu0
    %v5214 = vadd.f32 %v4742, %v5213
    %v5215 = vpop.f32.mrf.mxu0
    %5216 = vmatprep.mubr.bf16.mxu0 0
    %5217 = vmatmul.mubr.bf16.gmra.mxu0 %v4705
    %v5218 = vpop.f32.mrf.mxu0
    %v5219 = vadd.f32 %v4742, %v5218
    %v5220 = vpop.f32.mrf.mxu0
    %v5221 = vpop.f32.mrf.mxu0
    %v5222 = vadd.f32 %v4742, %v5221
    %v5223 = vpop.f32.mrf.mxu0
    %5224 = vmatprep.mubr.bf16.mxu0 0
    %5225 = vmatmul.mubr.bf16.gmra.mxu0 %v4706
    %v5226 = vpop.f32.mrf.mxu0
    %v5227 = vadd.f32 %v4742, %v5226
    %v5228 = vpop.f32.mrf.mxu0
    %v5229 = vpop.f32.mrf.mxu0
    %v5230 = vadd.f32 %v4742, %v5229
    %v5231 = vpop.f32.mrf.mxu0
    %5232 = vmatprep.mubr.bf16.mxu0 0
    %5233 = vmatmul.mubr.bf16.gmra.mxu0 %v4707
    %v5234 = vpop.f32.mrf.mxu0
    %v5235 = vadd.f32 %v4742, %v5234
    %v5236 = vpop.f32.mrf.mxu0
    %v5237 = vpop.f32.mrf.mxu0
    %v5238 = vadd.f32 %v4742, %v5237
    %v5239 = vpop.f32.mrf.mxu0
    %5240 = vmatprep.mubr.bf16.mxu0 0
    %5241 = vmatmul.mubr.bf16.gmra.mxu0 %v4708
    %v5242 = vpop.f32.mrf.mxu0
    %v5243 = vadd.f32 %v4742, %v5242
    %v5244 = vpop.f32.mrf.mxu0
    %v5245 = vpop.f32.mrf.mxu0
    %v5246 = vadd.f32 %v4742, %v5245
    %v5247 = vpop.f32.mrf.mxu0
    %5248 = vmatprep.mubr.bf16.mxu0 0
    %5249 = vmatmul.mubr.bf16.gmra.mxu0 %v4709
    %v5250 = vpop.f32.mrf.mxu0
    %v5251 = vadd.f32 %v4742, %v5250
    %v5252 = vpop.f32.mrf.mxu0
    %v5253 = vpop.f32.mrf.mxu0
    %v5254 = vadd.f32 %v4742, %v5253
    %v5255 = vpop.f32.mrf.mxu0
    %5256 = vmatprep.mubr.bf16.mxu0 0
    %5257 = vmatmul.mubr.bf16.gmra.mxu0 %v4710
    %v5258 = vpop.f32.mrf.mxu0
    %v5259 = vadd.f32 %v4742, %v5258
    %v5260 = vpop.f32.mrf.mxu0
    %v5261 = vpop.f32.mrf.mxu0
    %v5262 = vadd.f32 %v4742, %v5261
    %v5263 = vpop.f32.mrf.mxu0
    %5264 = vmatprep.mubr.bf16.mxu0 0
    %5265 = vmatmul.mubr.bf16.gmra.mxu0 %v4711
    %v5266 = vpop.f32.mrf.mxu0
    %v5267 = vadd.f32 %v4742, %v5266
    %v5268 = vpop.f32.mrf.mxu0
    %v5269 = vpop.f32.mrf.mxu0
    %v5270 = vadd.f32 %v4742, %v5269
    %v5271 = vpop.f32.mrf.mxu0
    %5272 = vmatprep.mubr.bf16.mxu0 0
    %5273 = vmatmul.mubr.bf16.gmra.mxu0 %v4712
    %v5274 = vpop.f32.mrf.mxu0
    %v5275 = vadd.f32 %v4742, %v5274
    %v5276 = vpop.f32.mrf.mxu0
    %v5277 = vpop.f32.mrf.mxu0
    %v5278 = vadd.f32 %v4742, %v5277
    %v5279 = vpop.f32.mrf.mxu0
    %5280 = vmatprep.mubr.bf16.mxu0 0
    %5281 = vmatmul.mubr.bf16.gmra.mxu0 %v4713
    %v5282 = vpop.f32.mrf.mxu0
    %v5283 = vadd.f32 %v4742, %v5282
    %v5284 = vpop.f32.mrf.mxu0
    %v5285 = vpop.f32.mrf.mxu0
    %v5286 = vadd.f32 %v4742, %v5285
    %v5287 = vpop.f32.mrf.mxu0
    %5288 = vmatprep.mubr.bf16.mxu0 0
    %5289 = vmatmul.mubr.bf16.gmra.mxu0 %v4714
    %v5290 = vpop.f32.mrf.mxu0
    %v5291 = vadd.f32 %v4742, %v5290
    %v5292 = vpop.f32.mrf.mxu0
    %v5293 = vpop.f32.mrf.mxu0
    %v5294 = vadd.f32 %v4742, %v5293
    %v5295 = vpop.f32.mrf.mxu0
    %5296 = vmatprep.mubr.bf16.mxu0 0
    %5297 = vmatmul.mubr.bf16.gmra.mxu0 %v4715
    %v5298 = vpop.f32.mrf.mxu0
    %v5299 = vadd.f32 %v4742, %v5298
    %v5300 = vpop.f32.mrf.mxu0
    %v5301 = vpop.f32.mrf.mxu0
    %v5302 = vadd.f32 %v4742, %v5301
    %v5303 = vpop.f32.mrf.mxu0
    %5304 = vmatprep.mubr.bf16.mxu0 0
    %5305 = vmatmul.mubr.bf16.gmra.mxu0 %v4716
    %v5306 = vpop.f32.mrf.mxu0
    %v5307 = vadd.f32 %v4742, %v5306
    %v5308 = vpop.f32.mrf.mxu0
    %v5309 = vpop.f32.mrf.mxu0
    %v5310 = vadd.f32 %v4742, %v5309
    %v5311 = vpop.f32.mrf.mxu0
    %5312 = vmatprep.mubr.bf16.mxu0 0
    %5313 = vmatmul.mubr.bf16.gmra.mxu0 %v4717
    %v5314 = vpop.f32.mrf.mxu0
    %v5315 = vadd.f32 %v4742, %v5314
    %v5316 = vpop.f32.mrf.mxu0
    %v5317 = vpop.f32.mrf.mxu0
    %v5318 = vadd.f32 %v4742, %v5317
    %v5319 = vpop.f32.mrf.mxu0
    %5320 = vmatprep.mubr.bf16.mxu0 0
    %5321 = vmatmul.mubr.bf16.gmra.mxu0 %v4718
    %v5322 = vpop.f32.mrf.mxu0
    %v5323 = vadd.f32 %v4742, %v5322
    %v5324 = vpop.f32.mrf.mxu0
    %v5325 = vpop.f32.mrf.mxu0
    %v5326 = vadd.f32 %v4742, %v5325
    %v5327 = vpop.f32.mrf.mxu0
    %5328 = vmatprep.mubr.bf16.mxu0 0
    %5329 = vmatmul.mubr.bf16.gmra.mxu0 %v4719
    %v5330 = vpop.f32.mrf.mxu0
    %v5331 = vadd.f32 %v4742, %v5330
    %v5332 = vpop.f32.mrf.mxu0
    %v5333 = vpop.f32.mrf.mxu0
    %v5334 = vadd.f32 %v4742, %v5333
    %v5335 = vpop.f32.mrf.mxu0
    %5336 = vmatprep.mubr.bf16.mxu0 0
    %5337 = vmatmul.mubr.bf16.gmra.mxu0 %v4720
    %v5338 = vpop.f32.mrf.mxu0
    %v5339 = vadd.f32 %v4742, %v5338
    %v5340 = vpop.f32.mrf.mxu0
    %v5341 = vpop.f32.mrf.mxu0
    %v5342 = vadd.f32 %v4742, %v5341
    %v5343 = vpop.f32.mrf.mxu0
    %5344 = vmatprep.mubr.bf16.mxu0 0
    %5345 = vmatmul.mubr.bf16.gmra.mxu0 %v4721
    %v5346 = vpop.f32.mrf.mxu0
    %v5347 = vadd.f32 %v4742, %v5346
    %v5348 = vpop.f32.mrf.mxu0
    %v5349 = vpop.f32.mrf.mxu0
    %v5350 = vadd.f32 %v4742, %v5349
    %v5351 = vpop.f32.mrf.mxu0
    %5352 = vmatprep.mubr.bf16.mxu0 0
    %5353 = vmatmul.mubr.bf16.gmra.mxu0 %v4722
    %v5354 = vpop.f32.mrf.mxu0
    %v5355 = vadd.f32 %v4742, %v5354
    %v5356 = vpop.f32.mrf.mxu0
    %v5357 = vpop.f32.mrf.mxu0
    %v5358 = vadd.f32 %v4742, %v5357
    %v5359 = vpop.f32.mrf.mxu0
    %5360 = vmatprep.mubr.bf16.mxu0 0
    %5361 = vmatmul.mubr.bf16.gmra.mxu0 %v4723
    %v5362 = vpop.f32.mrf.mxu0
    %v5363 = vadd.f32 %v4742, %v5362
    %v5364 = vpop.f32.mrf.mxu0
    %v5365 = vpop.f32.mrf.mxu0
    %v5366 = vadd.f32 %v4742, %v5365
    %v5367 = vpop.f32.mrf.mxu0
    %5368 = vmatprep.mubr.bf16.mxu0 0
    %5369 = vmatmul.mubr.bf16.gmra.mxu0 %v4724
    %v5370 = vpop.f32.mrf.mxu0
    %v5371 = vadd.f32 %v4742, %v5370
    %v5372 = vpop.f32.mrf.mxu0
    %v5373 = vpop.f32.mrf.mxu0
    %v5374 = vadd.f32 %v4742, %v5373
    %v5375 = vpop.f32.mrf.mxu0
    %5376 = vmatprep.mubr.bf16.mxu0 0
    %5377 = vmatmul.mubr.bf16.gmra.mxu0 %v4725
    %v5378 = vpop.f32.mrf.mxu0
    %v5379 = vadd.f32 %v4742, %v5378
    %v5380 = vpop.f32.mrf.mxu0
    %v5381 = vpop.f32.mrf.mxu0
    %v5382 = vadd.f32 %v4742, %v5381
    %v5383 = vpop.f32.mrf.mxu0
    %5384 = vmatprep.mubr.bf16.mxu0 0
    %5385 = vmatmul.mubr.bf16.gmra.mxu0 %v4726
    %v5386 = vpop.f32.mrf.mxu0
    %v5387 = vadd.f32 %v4742, %v5386
    %v5388 = vpop.f32.mrf.mxu0
    %v5389 = vpop.f32.mrf.mxu0
    %v5390 = vadd.f32 %v4742, %v5389
    %v5391 = vpop.f32.mrf.mxu0
    %5392 = vmatprep.mubr.bf16.mxu0 0
    %5393 = vmatmul.mubr.bf16.gmra.mxu0 %v4727
    %v5394 = vpop.f32.mrf.mxu0
    %v5395 = vadd.f32 %v4742, %v5394
    %v5396 = vpop.f32.mrf.mxu0
    %v5397 = vpop.f32.mrf.mxu0
    %v5398 = vadd.f32 %v4742, %v5397
    %v5399 = vpop.f32.mrf.mxu0
    %5400 = vmatprep.mubr.bf16.mxu0 0
    %5401 = vmatmul.mubr.bf16.gmra.mxu0 %v4728
    %v5402 = vpop.f32.mrf.mxu0
    %v5403 = vadd.f32 %v4742, %v5402
    %v5404 = vpop.f32.mrf.mxu0
    %v5405 = vpop.f32.mrf.mxu0
    %v5406 = vadd.f32 %v4742, %v5405
    %v5407 = vpop.f32.mrf.mxu0
    %5408 = vmatprep.mubr.bf16.mxu0 0
    %5409 = vmatmul.mubr.bf16.gmra.mxu0 %v4729
    %v5410 = vpop.f32.mrf.mxu0
    %v5411 = vadd.f32 %v4742, %v5410
    %v5412 = vpop.f32.mrf.mxu0
    %v5413 = vpop.f32.mrf.mxu0
    %v5414 = vadd.f32 %v4742, %v5413
    %v5415 = vpop.f32.mrf.mxu0
    %5416 = vmatprep.mubr.bf16.mxu0 0
    %5417 = vmatmul.mubr.bf16.gmra.mxu0 %v4730
    %v5418 = vpop.f32.mrf.mxu0
    %v5419 = vadd.f32 %v4742, %v5418
    %v5420 = vpop.f32.mrf.mxu0
    %v5421 = vpop.f32.mrf.mxu0
    %v5422 = vadd.f32 %v4742, %v5421
    %v5423 = vpop.f32.mrf.mxu0
    %5424 = vmatprep.mubr.bf16.mxu0 0
    %5425 = vmatmul.mubr.bf16.gmra.mxu0 %v4731
    %v5426 = vpop.f32.mrf.mxu0
    %v5427 = vadd.f32 %v4742, %v5426
    %v5428 = vpop.f32.mrf.mxu0
    %v5429 = vpop.f32.mrf.mxu0
    %v5430 = vadd.f32 %v4742, %v5429
    %v5431 = vpop.f32.mrf.mxu0
    %5432 = vmatprep.mubr.bf16.mxu0 0
    %5433 = vmatmul.mubr.bf16.gmra.mxu0 %v4732
    %v5434 = vpop.f32.mrf.mxu0
    %v5435 = vadd.f32 %v4742, %v5434
    %v5436 = vpop.f32.mrf.mxu0
    %v5437 = vpop.f32.mrf.mxu0
    %v5438 = vadd.f32 %v4742, %v5437
    %v5439 = vpop.f32.mrf.mxu0
    %5440 = vmatprep.mubr.bf16.mxu0 0
    %5441 = vmatmul.mubr.bf16.gmra.mxu0 %v4733
    %v5442 = vpop.f32.mrf.mxu0
    %v5443 = vadd.f32 %v4742, %v5442
    %v5444 = vpop.f32.mrf.mxu0
    %v5445 = vpop.f32.mrf.mxu0
    %v5446 = vadd.f32 %v4742, %v5445
    %v5447 = vpop.f32.mrf.mxu0
    %5448 = vmatprep.mubr.bf16.mxu0 0
    %5449 = vmatmul.mubr.bf16.gmra.mxu0 %v4734
    %v5450 = vpop.f32.mrf.mxu0
    %v5451 = vadd.f32 %v4742, %v5450
    %v5452 = vpop.f32.mrf.mxu0
    %v5453 = vpop.f32.mrf.mxu0
    %v5454 = vadd.f32 %v4742, %v5453
    %v5455 = vpop.f32.mrf.mxu0
    %5456 = vmatprep.mubr.bf16.mxu0 0
    %5457 = vmatmul.mubr.bf16.gmra.mxu0 %v4735
    %v5458 = vpop.f32.mrf.mxu0
    %v5459 = vadd.f32 %v4742, %v5458
    %v5460 = vpop.f32.mrf.mxu0
    %v5461 = vpop.f32.mrf.mxu0
    %v5462 = vadd.f32 %v4742, %v5461
    %v5463 = vpop.f32.mrf.mxu0
    %5464 = vmatprep.mubr.bf16.mxu0 0
    %5465 = vmatmul.mubr.bf16.gmra.mxu0 %v4736
    %v5466 = vpop.f32.mrf.mxu0
    %v5467 = vadd.f32 %v4742, %v5466
    %v5468 = vpop.f32.mrf.mxu0
    %v5469 = vpop.f32.mrf.mxu0
    %v5470 = vadd.f32 %v4742, %v5469
    %v5471 = vpop.f32.mrf.mxu0
    %5472 = vdwg.mxu0
    %v5473 = vmax.f32 %v4827, 0.0
    %v5474 = vmax.f32 %v4830, 0.0
    %v5475 = vmax.f32 %v4835, 0.0
    %v5476 = vmax.f32 %v4838, 0.0
    %v5477 = vmax.f32 %v4843, 0.0
    %v5478 = vmax.f32 %v4846, 0.0
    %v5479 = vmax.f32 %v4851, 0.0
    %v5480 = vmax.f32 %v4854, 0.0
    %v5481 = vmax.f32 %v4859, 0.0
    %v5482 = vmax.f32 %v4862, 0.0
    %v5483 = vmax.f32 %v4867, 0.0
    %v5484 = vmax.f32 %v4870, 0.0
    %v5485 = vmax.f32 %v4875, 0.0
    %v5486 = vmax.f32 %v4878, 0.0
    %v5487 = vmax.f32 %v4883, 0.0
    %v5488 = vmax.f32 %v4886, 0.0
    %v5489 = vmax.f32 %v4891, 0.0
    %v5490 = vmax.f32 %v4894, 0.0
    %v5491 = vmax.f32 %v4899, 0.0
    %v5492 = vmax.f32 %v4902, 0.0
    %v5493 = vmax.f32 %v4907, 0.0
    %v5494 = vmax.f32 %v4910, 0.0
    %v5495 = vmax.f32 %v4915, 0.0
    %v5496 = vmax.f32 %v4918, 0.0
    %v5497 = vmax.f32 %v4923, 0.0
    %v5498 = vmax.f32 %v4926, 0.0
    %v5499 = vmax.f32 %v4931, 0.0
    %v5500 = vmax.f32 %v4934, 0.0
    %v5501 = vmax.f32 %v4939, 0.0
    %v5502 = vmax.f32 %v4942, 0.0
    %v5503 = vmax.f32 %v4947, 0.0
    %v5504 = vmax.f32 %v4950, 0.0
    %v5505 = vmax.f32 %v4955, 0.0
    %v5506 = vmax.f32 %v4958, 0.0
    %v5507 = vmax.f32 %v4963, 0.0
    %v5508 = vmax.f32 %v4966, 0.0
    %v5509 = vmax.f32 %v4971, 0.0
    %v5510 = vmax.f32 %v4974, 0.0
    %v5511 = vmax.f32 %v4979, 0.0
    %v5512 = vmax.f32 %v4982, 0.0
    %v5513 = vmax.f32 %v4987, 0.0
    %v5514 = vmax.f32 %v4990, 0.0
    %v5515 = vmax.f32 %v4995, 0.0
    %v5516 = vmax.f32 %v4998, 0.0
    %v5517 = vmax.f32 %v5003, 0.0
    %v5518 = vmax.f32 %v5006, 0.0
    %v5519 = vmax.f32 %v5011, 0.0
    %v5520 = vmax.f32 %v5014, 0.0
    %v5521 = vmax.f32 %v5019, 0.0
    %v5522 = vmax.f32 %v5022, 0.0
    %v5523 = vmax.f32 %v5027, 0.0
    %v5524 = vmax.f32 %v5030, 0.0
    %v5525 = vmax.f32 %v5035, 0.0
    %v5526 = vmax.f32 %v5038, 0.0
    %v5527 = vmax.f32 %v5043, 0.0
    %v5528 = vmax.f32 %v5046, 0.0
    %v5529 = vmax.f32 %v5051, 0.0
    %v5530 = vmax.f32 %v5054, 0.0
    %v5531 = vmax.f32 %v5059, 0.0
    %v5532 = vmax.f32 %v5062, 0.0
    %v5533 = vmax.f32 %v5067, 0.0
    %v5534 = vmax.f32 %v5070, 0.0
    %v5535 = vmax.f32 %v5075, 0.0
    %v5536 = vmax.f32 %v5078, 0.0
    %v5537 = vmax.f32 %v5083, 0.0
    %v5538 = vmax.f32 %v5086, 0.0
    %v5539 = vmax.f32 %v5091, 0.0
    %v5540 = vmax.f32 %v5094, 0.0
    %v5541 = vmax.f32 %v5099, 0.0
    %v5542 = vmax.f32 %v5102, 0.0
    %v5543 = vmax.f32 %v5107, 0.0
    %v5544 = vmax.f32 %v5110, 0.0
    %v5545 = vmax.f32 %v5115, 0.0
    %v5546 = vmax.f32 %v5118, 0.0
    %v5547 = vmax.f32 %v5123, 0.0
    %v5548 = vmax.f32 %v5126, 0.0
    %v5549 = vmax.f32 %v5131, 0.0
    %v5550 = vmax.f32 %v5134, 0.0
    %v5551 = vmax.f32 %v5139, 0.0
    %v5552 = vmax.f32 %v5142, 0.0
    %v5553 = vmax.f32 %v5147, 0.0
    %v5554 = vmax.f32 %v5150, 0.0
    %v5555 = vmax.f32 %v5155, 0.0
    %v5556 = vmax.f32 %v5158, 0.0
    %v5557 = vmax.f32 %v5163, 0.0
    %v5558 = vmax.f32 %v5166, 0.0
    %v5559 = vmax.f32 %v5171, 0.0
    %v5560 = vmax.f32 %v5174, 0.0
    %v5561 = vmax.f32 %v5179, 0.0
    %v5562 = vmax.f32 %v5182, 0.0
    %v5563 = vmax.f32 %v5187, 0.0
    %v5564 = vmax.f32 %v5190, 0.0
    %v5565 = vmax.f32 %v5195, 0.0
    %v5566 = vmax.f32 %v5198, 0.0
    %v5567 = vmax.f32 %v5203, 0.0
    %v5568 = vmax.f32 %v5206, 0.0
    %v5569 = vmax.f32 %v5211, 0.0
    %v5570 = vmax.f32 %v5214, 0.0
    %v5571 = vmax.f32 %v5219, 0.0
    %v5572 = vmax.f32 %v5222, 0.0
    %v5573 = vmax.f32 %v5227, 0.0
    %v5574 = vmax.f32 %v5230, 0.0
    %v5575 = vmax.f32 %v5235, 0.0
    %v5576 = vmax.f32 %v5238, 0.0
    %v5577 = vmax.f32 %v5243, 0.0
    %v5578 = vmax.f32 %v5246, 0.0
    %v5579 = vmax.f32 %v5251, 0.0
    %v5580 = vmax.f32 %v5254, 0.0
    %v5581 = vmax.f32 %v5259, 0.0
    %v5582 = vmax.f32 %v5262, 0.0
    %v5583 = vmax.f32 %v5267, 0.0
    %v5584 = vmax.f32 %v5270, 0.0
    %v5585 = vmax.f32 %v5275, 0.0
    %v5586 = vmax.f32 %v5278, 0.0
    %v5587 = vmax.f32 %v5283, 0.0
    %v5588 = vmax.f32 %v5286, 0.0
    %v5589 = vmax.f32 %v5291, 0.0
    %v5590 = vmax.f32 %v5294, 0.0
    %v5591 = vmax.f32 %v5299, 0.0
    %v5592 = vmax.f32 %v5302, 0.0
    %v5593 = vmax.f32 %v5307, 0.0
    %v5594 = vmax.f32 %v5310, 0.0
    %v5595 = vmax.f32 %v5315, 0.0
    %v5596 = vmax.f32 %v5318, 0.0
    %v5597 = vmax.f32 %v5323, 0.0
    %v5598 = vmax.f32 %v5326, 0.0
    %v5599 = vmax.f32 %v5331, 0.0
    %v5600 = vmax.f32 %v5334, 0.0
    %v5601 = vmax.f32 %v5339, 0.0
    %v5602 = vmax.f32 %v5342, 0.0
    %v5603 = vmax.f32 %v5347, 0.0
    %v5604 = vmax.f32 %v5350, 0.0
    %v5605 = vmax.f32 %v5355, 0.0
    %v5606 = vmax.f32 %v5358, 0.0
    %v5607 = vmax.f32 %v5363, 0.0
    %v5608 = vmax.f32 %v5366, 0.0
    %v5609 = vmax.f32 %v5371, 0.0
    %v5610 = vmax.f32 %v5374, 0.0
    %v5611 = vmax.f32 %v5379, 0.0
    %v5612 = vmax.f32 %v5382, 0.0
    %v5613 = vmax.f32 %v5387, 0.0
    %v5614 = vmax.f32 %v5390, 0.0
    %v5615 = vmax.f32 %v5395, 0.0
    %v5616 = vmax.f32 %v5398, 0.0
    %v5617 = vmax.f32 %v5403, 0.0
    %v5618 = vmax.f32 %v5406, 0.0
    %v5619 = vmax.f32 %v5411, 0.0
    %v5620 = vmax.f32 %v5414, 0.0
    %v5621 = vmax.f32 %v5419, 0.0
    %v5622 = vmax.f32 %v5422, 0.0
    %v5623 = vmax.f32 %v5427, 0.0
    %v5624 = vmax.f32 %v5430, 0.0
    %v5625 = vmax.f32 %v5435, 0.0
    %v5626 = vmax.f32 %v5438, 0.0
    %v5627 = vmax.f32 %v5443, 0.0
    %v5628 = vmax.f32 %v5446, 0.0
    %v5629 = vmax.f32 %v5451, 0.0
    %v5630 = vmax.f32 %v5454, 0.0
    %v5631 = vmax.f32 %v5459, 0.0
    %v5632 = vmax.f32 %v5462, 0.0
    %v5633 = vmax.f32 %v5467, 0.0
    %v5634 = vmax.f32 %v5470, 0.0
    %v5635 = vld [vmem:[#allocation9 + $0x64] sm:$0xf]
    %v5636 = vld [vmem:[#allocation9 + $0xcc] sm:$0xf]
    %v5637 = vld [vmem:[#allocation9 + $0x134] sm:$0xf]
    %v5638 = vld [vmem:[#allocation9 + $0x19c] sm:$0xf]
    %v5639 = vld [vmem:[#allocation9 + $0x204] sm:$0xf]
    %v5640 = vld [vmem:[#allocation9 + $0x26c] sm:$0xf]
    %v5641 = vld [vmem:[#allocation9 + $0x2d4] sm:$0xf]
    %v5642 = vld [vmem:[#allocation9 + $0x33c] sm:$0xf]
    %v5643 = vld [vmem:[#allocation9 + $0x3a4] sm:$0xf]
    %v5644 = vld [vmem:[#allocation9 + $0x40c] sm:$0xf]
    %v5645 = vld [vmem:[#allocation9 + $0x474] sm:$0xf]
    %v5646 = vld [vmem:[#allocation9 + $0x4dc] sm:$0xf]
    %v5647 = vld [vmem:[#allocation9 + $0x544] sm:$0xf]
    %v5648 = vld [vmem:[#allocation9 + $0x5ac] sm:$0xf]
    %v5649 = vld [vmem:[#allocation9 + $0x614] sm:$0xf]
    %v5650 = vld [vmem:[#allocation9 + $0x67c] sm:$0xf]
    %v5651 = vpack.c.bf16 %v5474, %v5473
    %v5652 = vpack.c.bf16 %v5476, %v5475
    %v5653 = vpack.c.bf16 %v5478, %v5477
    %v5654 = vpack.c.bf16 %v5480, %v5479
    %v5655 = vpack.c.bf16 %v5482, %v5481
    %v5656 = vpack.c.bf16 %v5484, %v5483
    %v5657 = vpack.c.bf16 %v5486, %v5485
    %v5658 = vpack.c.bf16 %v5488, %v5487
    %v5659 = vpack.c.bf16 %v5490, %v5489
    %v5660 = vpack.c.bf16 %v5492, %v5491
    %v5661 = vpack.c.bf16 %v5494, %v5493
    %v5662 = vpack.c.bf16 %v5496, %v5495
    %v5663 = vpack.c.bf16 %v5498, %v5497
    %v5664 = vpack.c.bf16 %v5500, %v5499
    %v5665 = vpack.c.bf16 %v5502, %v5501
    %v5666 = vpack.c.bf16 %v5504, %v5503
    %v5667 = vpack.c.bf16 %v5506, %v5505
    %v5668 = vpack.c.bf16 %v5508, %v5507
    %v5669 = vpack.c.bf16 %v5510, %v5509
    %v5670 = vpack.c.bf16 %v5512, %v5511
    %v5671 = vpack.c.bf16 %v5514, %v5513
    %v5672 = vpack.c.bf16 %v5516, %v5515
    %v5673 = vpack.c.bf16 %v5518, %v5517
    %v5674 = vpack.c.bf16 %v5520, %v5519
    %v5675 = vpack.c.bf16 %v5522, %v5521
    %v5676 = vpack.c.bf16 %v5524, %v5523
    %v5677 = vpack.c.bf16 %v5526, %v5525
    %v5678 = vpack.c.bf16 %v5528, %v5527
    %v5679 = vpack.c.bf16 %v5530, %v5529
    %v5680 = vpack.c.bf16 %v5532, %v5531
    %v5681 = vpack.c.bf16 %v5534, %v5533
    %v5682 = vpack.c.bf16 %v5536, %v5535
    %v5683 = vpack.c.bf16 %v5538, %v5537
    %v5684 = vpack.c.bf16 %v5540, %v5539
    %v5685 = vpack.c.bf16 %v5542, %v5541
    %v5686 = vpack.c.bf16 %v5544, %v5543
    %v5687 = vpack.c.bf16 %v5546, %v5545
    %v5688 = vpack.c.bf16 %v5548, %v5547
    %v5689 = vpack.c.bf16 %v5550, %v5549
    %v5690 = vpack.c.bf16 %v5552, %v5551
    %v5691 = vpack.c.bf16 %v5554, %v5553
    %v5692 = vpack.c.bf16 %v5556, %v5555
    %v5693 = vpack.c.bf16 %v5558, %v5557
    %v5694 = vpack.c.bf16 %v5560, %v5559
    %v5695 = vpack.c.bf16 %v5562, %v5561
    %v5696 = vpack.c.bf16 %v5564, %v5563
    %v5697 = vpack.c.bf16 %v5566, %v5565
    %v5698 = vpack.c.bf16 %v5568, %v5567
    %v5699 = vpack.c.bf16 %v5570, %v5569
    %v5700 = vpack.c.bf16 %v5572, %v5571
    %v5701 = vpack.c.bf16 %v5574, %v5573
    %v5702 = vpack.c.bf16 %v5576, %v5575
    %v5703 = vpack.c.bf16 %v5578, %v5577
    %v5704 = vpack.c.bf16 %v5580, %v5579
    %v5705 = vpack.c.bf16 %v5582, %v5581
    %v5706 = vpack.c.bf16 %v5584, %v5583
    %v5707 = vpack.c.bf16 %v5586, %v5585
    %v5708 = vpack.c.bf16 %v5588, %v5587
    %v5709 = vpack.c.bf16 %v5590, %v5589
    %v5710 = vpack.c.bf16 %v5592, %v5591
    %v5711 = vpack.c.bf16 %v5594, %v5593
    %v5712 = vpack.c.bf16 %v5596, %v5595
    %v5713 = vpack.c.bf16 %v5598, %v5597
    %v5714 = vpack.c.bf16 %v5600, %v5599
    %v5715 = vpack.c.bf16 %v5602, %v5601
    %v5716 = vpack.c.bf16 %v5604, %v5603
    %v5717 = vpack.c.bf16 %v5606, %v5605
    %v5718 = vpack.c.bf16 %v5608, %v5607
    %v5719 = vpack.c.bf16 %v5610, %v5609
    %v5720 = vpack.c.bf16 %v5612, %v5611
    %v5721 = vpack.c.bf16 %v5614, %v5613
    %v5722 = vpack.c.bf16 %v5616, %v5615
    %v5723 = vpack.c.bf16 %v5618, %v5617
    %v5724 = vpack.c.bf16 %v5620, %v5619
    %v5725 = vpack.c.bf16 %v5622, %v5621
    %v5726 = vpack.c.bf16 %v5624, %v5623
    %v5727 = vpack.c.bf16 %v5626, %v5625
    %v5728 = vpack.c.bf16 %v5628, %v5627
    %v5729 = vpack.c.bf16 %v5630, %v5629
    %v5730 = vpack.c.bf16 %v5632, %v5631
    %v5731 = vpack.c.bf16 %v5634, %v5633
    %v5732 = vld [vmem:[%s6 + $0x20] sm:$0x1]
    %v5734 = vlaneseq
    %v5735 = vshrl.u32 %v5734, 7
    %v5736 = vsub.s32 0, %v5735
    %v5737 = vrot.slane %v5732, %v5736
    %v5755 = vunpack.c.l.b16 %v5635
    %v5756 = vunpack.c.l.b16 %v5636
    %v5757 = vunpack.c.l.b16 %v5637
    %v5758 = vunpack.c.l.b16 %v5638
    %v5759 = vunpack.c.l.b16 %v5639
    %v5760 = vunpack.c.l.b16 %v5640
    %v5761 = vunpack.c.l.b16 %v5641
    %v5762 = vunpack.c.l.b16 %v5642
    %v5763 = vunpack.c.l.b16 %v5643
    %v5764 = vunpack.c.l.b16 %v5644
    %v5765 = vunpack.c.l.b16 %v5645
    %v5766 = vunpack.c.l.b16 %v5646
    %v5767 = vunpack.c.l.b16 %v5647
    %v5768 = vunpack.c.l.b16 %v5648
    %v5769 = vunpack.c.l.b16 %v5649
    %v5770 = vunpack.c.l.b16 %v5650
    %v5771 = vpack.c.b16 %v5756, %v5755
    %v5772 = vpack.c.b16 %v5758, %v5757
    %v5773 = vpack.c.b16 %v5760, %v5759
    %v5774 = vpack.c.b16 %v5762, %v5761
    %v5775 = vpack.c.b16 %v5764, %v5763
    %v5776 = vpack.c.b16 %v5766, %v5765
    %v5777 = vpack.c.b16 %v5768, %v5767
    %v5778 = vpack.c.b16 %v5770, %v5769
    %5787 = vmatprep.subr.bf16.mxu0 0
    %5788 = vmatpush1.bf16.msra.mxu0 %v5778
    %5789 = vmatprep.subr.bf16.mxu0 0
    %5790 = vmatpush1.bf16.msra.mxu0 %v5777
    %5791 = vmatprep.subr.bf16.mxu0 0
    %5792 = vmatpush1.bf16.msra.mxu0 %v5776
    %5793 = vmatprep.subr.bf16.mxu0 0
    %5794 = vmatpush1.bf16.msra.mxu0 %v5775
    %5795 = vmatprep.subr.bf16.mxu0 0
    %5796 = vmatpush1.bf16.msra.mxu0 %v5774
    %5797 = vmatprep.subr.bf16.mxu0 0
    %5798 = vmatpush1.bf16.msra.mxu0 %v5773
    %5799 = vmatprep.subr.bf16.mxu0 0
    %5800 = vmatpush1.bf16.msra.mxu0 %v5772
    %5801 = vmatprep.subr.bf16.mxu0 0
    %5802 = vmatpush1.bf16.msra.mxu0 %v5771
    %5803 = vmatprep.subr.bf16.mxu0 0
    %5804 = vmatpush2.bf16.msra.mxu0 0
    %5805 = vmatprep.subr.bf16.mxu0 0
    %5806 = vmatpush2.bf16.msra.mxu0 0
    %5807 = vmatprep.subr.bf16.mxu0 0
    %5808 = vmatpush2.bf16.msra.mxu0 0
    %5809 = vmatprep.subr.bf16.mxu0 0
    %5810 = vmatpush2.bf16.msra.mxu0 0
    %5811 = vmatprep.subr.bf16.mxu0 0
    %5812 = vmatpush2.bf16.msra.mxu0 0
    %5813 = vmatprep.subr.bf16.mxu0 0
    %5814 = vmatpush2.bf16.msra.mxu0 0
    %5815 = vmatprep.subr.bf16.mxu0 0
    %5816 = vmatpush2.bf16.msra.mxu0 0
    %5817 = vmatprep.subr.bf16.mxu0 0
    %5818 = vmatpush2.bf16.msra.mxu0 0
    %5819 = vmatprep.mubr.bf16.mxu0 0
    %5820 = vmatmul.mubr.bf16.gmra.mxu0 %v5651
    %v5821 = vpop.f32.mrf.mxu0
    %v5822 = vadd.f32 %v5737, %v5821
    %v5823 = vpop.f32.mrf.mxu0
    %v5824 = vpop.f32.mrf.mxu0
    %v5825 = vadd.f32 %v5737, %v5824
    %v5826 = vpop.f32.mrf.mxu0
    %5827 = vmatprep.mubr.bf16.mxu0 0
    %5828 = vmatmul.mubr.bf16.gmra.mxu0 %v5652
    %v5829 = vpop.f32.mrf.mxu0
    %v5830 = vadd.f32 %v5737, %v5829
    %v5831 = vpop.f32.mrf.mxu0
    %v5832 = vpop.f32.mrf.mxu0
    %v5833 = vadd.f32 %v5737, %v5832
    %v5834 = vpop.f32.mrf.mxu0
    %5835 = vmatprep.mubr.bf16.mxu0 0
    %5836 = vmatmul.mubr.bf16.gmra.mxu0 %v5653
    %v5837 = vpop.f32.mrf.mxu0
    %v5838 = vadd.f32 %v5737, %v5837
    %v5839 = vpop.f32.mrf.mxu0
    %v5840 = vpop.f32.mrf.mxu0
    %v5841 = vadd.f32 %v5737, %v5840
    %v5842 = vpop.f32.mrf.mxu0
    %5843 = vmatprep.mubr.bf16.mxu0 0
    %5844 = vmatmul.mubr.bf16.gmra.mxu0 %v5654
    %v5845 = vpop.f32.mrf.mxu0
    %v5846 = vadd.f32 %v5737, %v5845
    %v5847 = vpop.f32.mrf.mxu0
    %v5848 = vpop.f32.mrf.mxu0
    %v5849 = vadd.f32 %v5737, %v5848
    %v5850 = vpop.f32.mrf.mxu0
    %5851 = vmatprep.mubr.bf16.mxu0 0
    %5852 = vmatmul.mubr.bf16.gmra.mxu0 %v5655
    %v5853 = vpop.f32.mrf.mxu0
    %v5854 = vadd.f32 %v5737, %v5853
    %v5855 = vpop.f32.mrf.mxu0
    %v5856 = vpop.f32.mrf.mxu0
    %v5857 = vadd.f32 %v5737, %v5856
    %v5858 = vpop.f32.mrf.mxu0
    %5859 = vmatprep.mubr.bf16.mxu0 0
    %5860 = vmatmul.mubr.bf16.gmra.mxu0 %v5656
    %v5861 = vpop.f32.mrf.mxu0
    %v5862 = vadd.f32 %v5737, %v5861
    %v5863 = vpop.f32.mrf.mxu0
    %v5864 = vpop.f32.mrf.mxu0
    %v5865 = vadd.f32 %v5737, %v5864
    %v5866 = vpop.f32.mrf.mxu0
    %5867 = vmatprep.mubr.bf16.mxu0 0
    %5868 = vmatmul.mubr.bf16.gmra.mxu0 %v5657
    %v5869 = vpop.f32.mrf.mxu0
    %v5870 = vadd.f32 %v5737, %v5869
    %v5871 = vpop.f32.mrf.mxu0
    %v5872 = vpop.f32.mrf.mxu0
    %v5873 = vadd.f32 %v5737, %v5872
    %v5874 = vpop.f32.mrf.mxu0
    %5875 = vmatprep.mubr.bf16.mxu0 0
    %5876 = vmatmul.mubr.bf16.gmra.mxu0 %v5658
    %v5877 = vpop.f32.mrf.mxu0
    %v5878 = vadd.f32 %v5737, %v5877
    %v5879 = vpop.f32.mrf.mxu0
    %v5880 = vpop.f32.mrf.mxu0
    %v5881 = vadd.f32 %v5737, %v5880
    %v5882 = vpop.f32.mrf.mxu0
    %5883 = vmatprep.mubr.bf16.mxu0 0
    %5884 = vmatmul.mubr.bf16.gmra.mxu0 %v5659
    %v5885 = vpop.f32.mrf.mxu0
    %v5886 = vadd.f32 %v5737, %v5885
    %v5887 = vpop.f32.mrf.mxu0
    %v5888 = vpop.f32.mrf.mxu0
    %v5889 = vadd.f32 %v5737, %v5888
    %v5890 = vpop.f32.mrf.mxu0
    %5891 = vmatprep.mubr.bf16.mxu0 0
    %5892 = vmatmul.mubr.bf16.gmra.mxu0 %v5660
    %v5893 = vpop.f32.mrf.mxu0
    %v5894 = vadd.f32 %v5737, %v5893
    %v5895 = vpop.f32.mrf.mxu0
    %v5896 = vpop.f32.mrf.mxu0
    %v5897 = vadd.f32 %v5737, %v5896
    %v5898 = vpop.f32.mrf.mxu0
    %5899 = vmatprep.mubr.bf16.mxu0 0
    %5900 = vmatmul.mubr.bf16.gmra.mxu0 %v5661
    %v5901 = vpop.f32.mrf.mxu0
    %v5902 = vadd.f32 %v5737, %v5901
    %v5903 = vpop.f32.mrf.mxu0
    %v5904 = vpop.f32.mrf.mxu0
    %v5905 = vadd.f32 %v5737, %v5904
    %v5906 = vpop.f32.mrf.mxu0
    %5907 = vmatprep.mubr.bf16.mxu0 0
    %5908 = vmatmul.mubr.bf16.gmra.mxu0 %v5662
    %v5909 = vpop.f32.mrf.mxu0
    %v5910 = vadd.f32 %v5737, %v5909
    %v5911 = vpop.f32.mrf.mxu0
    %v5912 = vpop.f32.mrf.mxu0
    %v5913 = vadd.f32 %v5737, %v5912
    %v5914 = vpop.f32.mrf.mxu0
    %5915 = vmatprep.mubr.bf16.mxu0 0
    %5916 = vmatmul.mubr.bf16.gmra.mxu0 %v5663
    %v5917 = vpop.f32.mrf.mxu0
    %v5918 = vadd.f32 %v5737, %v5917
    %v5919 = vpop.f32.mrf.mxu0
    %v5920 = vpop.f32.mrf.mxu0
    %v5921 = vadd.f32 %v5737, %v5920
    %v5922 = vpop.f32.mrf.mxu0
    %5923 = vmatprep.mubr.bf16.mxu0 0
    %5924 = vmatmul.mubr.bf16.gmra.mxu0 %v5664
    %v5925 = vpop.f32.mrf.mxu0
    %v5926 = vadd.f32 %v5737, %v5925
    %v5927 = vpop.f32.mrf.mxu0
    %v5928 = vpop.f32.mrf.mxu0
    %v5929 = vadd.f32 %v5737, %v5928
    %v5930 = vpop.f32.mrf.mxu0
    %5931 = vmatprep.mubr.bf16.mxu0 0
    %5932 = vmatmul.mubr.bf16.gmra.mxu0 %v5665
    %v5933 = vpop.f32.mrf.mxu0
    %v5934 = vadd.f32 %v5737, %v5933
    %v5935 = vpop.f32.mrf.mxu0
    %v5936 = vpop.f32.mrf.mxu0
    %v5937 = vadd.f32 %v5737, %v5936
    %v5938 = vpop.f32.mrf.mxu0
    %5939 = vmatprep.mubr.bf16.mxu0 0
    %5940 = vmatmul.mubr.bf16.gmra.mxu0 %v5666
    %v5941 = vpop.f32.mrf.mxu0
    %v5942 = vadd.f32 %v5737, %v5941
    %v5943 = vpop.f32.mrf.mxu0
    %v5944 = vpop.f32.mrf.mxu0
    %v5945 = vadd.f32 %v5737, %v5944
    %v5946 = vpop.f32.mrf.mxu0
    %5947 = vmatprep.mubr.bf16.mxu0 0
    %5948 = vmatmul.mubr.bf16.gmra.mxu0 %v5667
    %v5949 = vpop.f32.mrf.mxu0
    %v5950 = vadd.f32 %v5737, %v5949
    %v5951 = vpop.f32.mrf.mxu0
    %v5952 = vpop.f32.mrf.mxu0
    %v5953 = vadd.f32 %v5737, %v5952
    %v5954 = vpop.f32.mrf.mxu0
    %5955 = vmatprep.mubr.bf16.mxu0 0
    %5956 = vmatmul.mubr.bf16.gmra.mxu0 %v5668
    %v5957 = vpop.f32.mrf.mxu0
    %v5958 = vadd.f32 %v5737, %v5957
    %v5959 = vpop.f32.mrf.mxu0
    %v5960 = vpop.f32.mrf.mxu0
    %v5961 = vadd.f32 %v5737, %v5960
    %v5962 = vpop.f32.mrf.mxu0
    %5963 = vmatprep.mubr.bf16.mxu0 0
    %5964 = vmatmul.mubr.bf16.gmra.mxu0 %v5669
    %v5965 = vpop.f32.mrf.mxu0
    %v5966 = vadd.f32 %v5737, %v5965
    %v5967 = vpop.f32.mrf.mxu0
    %v5968 = vpop.f32.mrf.mxu0
    %v5969 = vadd.f32 %v5737, %v5968
    %v5970 = vpop.f32.mrf.mxu0
    %5971 = vmatprep.mubr.bf16.mxu0 0
    %5972 = vmatmul.mubr.bf16.gmra.mxu0 %v5670
    %v5973 = vpop.f32.mrf.mxu0
    %v5974 = vadd.f32 %v5737, %v5973
    %v5975 = vpop.f32.mrf.mxu0
    %v5976 = vpop.f32.mrf.mxu0
    %v5977 = vadd.f32 %v5737, %v5976
    %v5978 = vpop.f32.mrf.mxu0
    %5979 = vmatprep.mubr.bf16.mxu0 0
    %5980 = vmatmul.mubr.bf16.gmra.mxu0 %v5671
    %v5981 = vpop.f32.mrf.mxu0
    %v5982 = vadd.f32 %v5737, %v5981
    %v5983 = vpop.f32.mrf.mxu0
    %v5984 = vpop.f32.mrf.mxu0
    %v5985 = vadd.f32 %v5737, %v5984
    %v5986 = vpop.f32.mrf.mxu0
    %5987 = vmatprep.mubr.bf16.mxu0 0
    %5988 = vmatmul.mubr.bf16.gmra.mxu0 %v5672
    %v5989 = vpop.f32.mrf.mxu0
    %v5990 = vadd.f32 %v5737, %v5989
    %v5991 = vpop.f32.mrf.mxu0
    %v5992 = vpop.f32.mrf.mxu0
    %v5993 = vadd.f32 %v5737, %v5992
    %v5994 = vpop.f32.mrf.mxu0
    %5995 = vmatprep.mubr.bf16.mxu0 0
    %5996 = vmatmul.mubr.bf16.gmra.mxu0 %v5673
    %v5997 = vpop.f32.mrf.mxu0
    %v5998 = vadd.f32 %v5737, %v5997
    %v5999 = vpop.f32.mrf.mxu0
    %v6000 = vpop.f32.mrf.mxu0
    %v6001 = vadd.f32 %v5737, %v6000
    %v6002 = vpop.f32.mrf.mxu0
    %6003 = vmatprep.mubr.bf16.mxu0 0
    %6004 = vmatmul.mubr.bf16.gmra.mxu0 %v5674
    %v6005 = vpop.f32.mrf.mxu0
    %v6006 = vadd.f32 %v5737, %v6005
    %v6007 = vpop.f32.mrf.mxu0
    %v6008 = vpop.f32.mrf.mxu0
    %v6009 = vadd.f32 %v5737, %v6008
    %v6010 = vpop.f32.mrf.mxu0
    %6011 = vmatprep.mubr.bf16.mxu0 0
    %6012 = vmatmul.mubr.bf16.gmra.mxu0 %v5675
    %v6013 = vpop.f32.mrf.mxu0
    %v6014 = vadd.f32 %v5737, %v6013
    %v6015 = vpop.f32.mrf.mxu0
    %v6016 = vpop.f32.mrf.mxu0
    %v6017 = vadd.f32 %v5737, %v6016
    %v6018 = vpop.f32.mrf.mxu0
    %6019 = vmatprep.mubr.bf16.mxu0 0
    %6020 = vmatmul.mubr.bf16.gmra.mxu0 %v5676
    %v6021 = vpop.f32.mrf.mxu0
    %v6022 = vadd.f32 %v5737, %v6021
    %v6023 = vpop.f32.mrf.mxu0
    %v6024 = vpop.f32.mrf.mxu0
    %v6025 = vadd.f32 %v5737, %v6024
    %v6026 = vpop.f32.mrf.mxu0
    %6027 = vmatprep.mubr.bf16.mxu0 0
    %6028 = vmatmul.mubr.bf16.gmra.mxu0 %v5677
    %v6029 = vpop.f32.mrf.mxu0
    %v6030 = vadd.f32 %v5737, %v6029
    %v6031 = vpop.f32.mrf.mxu0
    %v6032 = vpop.f32.mrf.mxu0
    %v6033 = vadd.f32 %v5737, %v6032
    %v6034 = vpop.f32.mrf.mxu0
    %6035 = vmatprep.mubr.bf16.mxu0 0
    %6036 = vmatmul.mubr.bf16.gmra.mxu0 %v5678
    %v6037 = vpop.f32.mrf.mxu0
    %v6038 = vadd.f32 %v5737, %v6037
    %v6039 = vpop.f32.mrf.mxu0
    %v6040 = vpop.f32.mrf.mxu0
    %v6041 = vadd.f32 %v5737, %v6040
    %v6042 = vpop.f32.mrf.mxu0
    %6043 = vmatprep.mubr.bf16.mxu0 0
    %6044 = vmatmul.mubr.bf16.gmra.mxu0 %v5679
    %v6045 = vpop.f32.mrf.mxu0
    %v6046 = vadd.f32 %v5737, %v6045
    %v6047 = vpop.f32.mrf.mxu0
    %v6048 = vpop.f32.mrf.mxu0
    %v6049 = vadd.f32 %v5737, %v6048
    %v6050 = vpop.f32.mrf.mxu0
    %6051 = vmatprep.mubr.bf16.mxu0 0
    %6052 = vmatmul.mubr.bf16.gmra.mxu0 %v5680
    %v6053 = vpop.f32.mrf.mxu0
    %v6054 = vadd.f32 %v5737, %v6053
    %v6055 = vpop.f32.mrf.mxu0
    %v6056 = vpop.f32.mrf.mxu0
    %v6057 = vadd.f32 %v5737, %v6056
    %v6058 = vpop.f32.mrf.mxu0
    %6059 = vmatprep.mubr.bf16.mxu0 0
    %6060 = vmatmul.mubr.bf16.gmra.mxu0 %v5681
    %v6061 = vpop.f32.mrf.mxu0
    %v6062 = vadd.f32 %v5737, %v6061
    %v6063 = vpop.f32.mrf.mxu0
    %v6064 = vpop.f32.mrf.mxu0
    %v6065 = vadd.f32 %v5737, %v6064
    %v6066 = vpop.f32.mrf.mxu0
    %6067 = vmatprep.mubr.bf16.mxu0 0
    %6068 = vmatmul.mubr.bf16.gmra.mxu0 %v5682
    %v6069 = vpop.f32.mrf.mxu0
    %v6070 = vadd.f32 %v5737, %v6069
    %v6071 = vpop.f32.mrf.mxu0
    %v6072 = vpop.f32.mrf.mxu0
    %v6073 = vadd.f32 %v5737, %v6072
    %v6074 = vpop.f32.mrf.mxu0
    %6075 = vmatprep.mubr.bf16.mxu0 0
    %6076 = vmatmul.mubr.bf16.gmra.mxu0 %v5683
    %v6077 = vpop.f32.mrf.mxu0
    %v6078 = vadd.f32 %v5737, %v6077
    %v6079 = vpop.f32.mrf.mxu0
    %v6080 = vpop.f32.mrf.mxu0
    %v6081 = vadd.f32 %v5737, %v6080
    %v6082 = vpop.f32.mrf.mxu0
    %6083 = vmatprep.mubr.bf16.mxu0 0
    %6084 = vmatmul.mubr.bf16.gmra.mxu0 %v5684
    %v6085 = vpop.f32.mrf.mxu0
    %v6086 = vadd.f32 %v5737, %v6085
    %v6087 = vpop.f32.mrf.mxu0
    %v6088 = vpop.f32.mrf.mxu0
    %v6089 = vadd.f32 %v5737, %v6088
    %v6090 = vpop.f32.mrf.mxu0
    %6091 = vmatprep.mubr.bf16.mxu0 0
    %6092 = vmatmul.mubr.bf16.gmra.mxu0 %v5685
    %v6093 = vpop.f32.mrf.mxu0
    %v6094 = vadd.f32 %v5737, %v6093
    %v6095 = vpop.f32.mrf.mxu0
    %v6096 = vpop.f32.mrf.mxu0
    %v6097 = vadd.f32 %v5737, %v6096
    %v6098 = vpop.f32.mrf.mxu0
    %6099 = vmatprep.mubr.bf16.mxu0 0
    %6100 = vmatmul.mubr.bf16.gmra.mxu0 %v5686
    %v6101 = vpop.f32.mrf.mxu0
    %v6102 = vadd.f32 %v5737, %v6101
    %v6103 = vpop.f32.mrf.mxu0
    %v6104 = vpop.f32.mrf.mxu0
    %v6105 = vadd.f32 %v5737, %v6104
    %v6106 = vpop.f32.mrf.mxu0
    %6107 = vmatprep.mubr.bf16.mxu0 0
    %6108 = vmatmul.mubr.bf16.gmra.mxu0 %v5687
    %v6109 = vpop.f32.mrf.mxu0
    %v6110 = vadd.f32 %v5737, %v6109
    %v6111 = vpop.f32.mrf.mxu0
    %v6112 = vpop.f32.mrf.mxu0
    %v6113 = vadd.f32 %v5737, %v6112
    %v6114 = vpop.f32.mrf.mxu0
    %6115 = vmatprep.mubr.bf16.mxu0 0
    %6116 = vmatmul.mubr.bf16.gmra.mxu0 %v5688
    %v6117 = vpop.f32.mrf.mxu0
    %v6118 = vadd.f32 %v5737, %v6117
    %v6119 = vpop.f32.mrf.mxu0
    %v6120 = vpop.f32.mrf.mxu0
    %v6121 = vadd.f32 %v5737, %v6120
    %v6122 = vpop.f32.mrf.mxu0
    %6123 = vmatprep.mubr.bf16.mxu0 0
    %6124 = vmatmul.mubr.bf16.gmra.mxu0 %v5689
    %v6125 = vpop.f32.mrf.mxu0
    %v6126 = vadd.f32 %v5737, %v6125
    %v6127 = vpop.f32.mrf.mxu0
    %v6128 = vpop.f32.mrf.mxu0
    %v6129 = vadd.f32 %v5737, %v6128
    %v6130 = vpop.f32.mrf.mxu0
    %6131 = vmatprep.mubr.bf16.mxu0 0
    %6132 = vmatmul.mubr.bf16.gmra.mxu0 %v5690
    %v6133 = vpop.f32.mrf.mxu0
    %v6134 = vadd.f32 %v5737, %v6133
    %v6135 = vpop.f32.mrf.mxu0
    %v6136 = vpop.f32.mrf.mxu0
    %v6137 = vadd.f32 %v5737, %v6136
    %v6138 = vpop.f32.mrf.mxu0
    %6139 = vmatprep.mubr.bf16.mxu0 0
    %6140 = vmatmul.mubr.bf16.gmra.mxu0 %v5691
    %v6141 = vpop.f32.mrf.mxu0
    %v6142 = vadd.f32 %v5737, %v6141
    %v6143 = vpop.f32.mrf.mxu0
    %v6144 = vpop.f32.mrf.mxu0
    %v6145 = vadd.f32 %v5737, %v6144
    %v6146 = vpop.f32.mrf.mxu0
    %6147 = vmatprep.mubr.bf16.mxu0 0
    %6148 = vmatmul.mubr.bf16.gmra.mxu0 %v5692
    %v6149 = vpop.f32.mrf.mxu0
    %v6150 = vadd.f32 %v5737, %v6149
    %v6151 = vpop.f32.mrf.mxu0
    %v6152 = vpop.f32.mrf.mxu0
    %v6153 = vadd.f32 %v5737, %v6152
    %v6154 = vpop.f32.mrf.mxu0
    %6155 = vmatprep.mubr.bf16.mxu0 0
    %6156 = vmatmul.mubr.bf16.gmra.mxu0 %v5693
    %v6157 = vpop.f32.mrf.mxu0
    %v6158 = vadd.f32 %v5737, %v6157
    %v6159 = vpop.f32.mrf.mxu0
    %v6160 = vpop.f32.mrf.mxu0
    %v6161 = vadd.f32 %v5737, %v6160
    %v6162 = vpop.f32.mrf.mxu0
    %6163 = vmatprep.mubr.bf16.mxu0 0
    %6164 = vmatmul.mubr.bf16.gmra.mxu0 %v5694
    %v6165 = vpop.f32.mrf.mxu0
    %v6166 = vadd.f32 %v5737, %v6165
    %v6167 = vpop.f32.mrf.mxu0
    %v6168 = vpop.f32.mrf.mxu0
    %v6169 = vadd.f32 %v5737, %v6168
    %v6170 = vpop.f32.mrf.mxu0
    %6171 = vmatprep.mubr.bf16.mxu0 0
    %6172 = vmatmul.mubr.bf16.gmra.mxu0 %v5695
    %v6173 = vpop.f32.mrf.mxu0
    %v6174 = vadd.f32 %v5737, %v6173
    %v6175 = vpop.f32.mrf.mxu0
    %v6176 = vpop.f32.mrf.mxu0
    %v6177 = vadd.f32 %v5737, %v6176
    %v6178 = vpop.f32.mrf.mxu0
    %6179 = vmatprep.mubr.bf16.mxu0 0
    %6180 = vmatmul.mubr.bf16.gmra.mxu0 %v5696
    %v6181 = vpop.f32.mrf.mxu0
    %v6182 = vadd.f32 %v5737, %v6181
    %v6183 = vpop.f32.mrf.mxu0
    %v6184 = vpop.f32.mrf.mxu0
    %v6185 = vadd.f32 %v5737, %v6184
    %v6186 = vpop.f32.mrf.mxu0
    %6187 = vmatprep.mubr.bf16.mxu0 0
    %6188 = vmatmul.mubr.bf16.gmra.mxu0 %v5697
    %v6189 = vpop.f32.mrf.mxu0
    %v6190 = vadd.f32 %v5737, %v6189
    %v6191 = vpop.f32.mrf.mxu0
    %v6192 = vpop.f32.mrf.mxu0
    %v6193 = vadd.f32 %v5737, %v6192
    %v6194 = vpop.f32.mrf.mxu0
    %6195 = vmatprep.mubr.bf16.mxu0 0
    %6196 = vmatmul.mubr.bf16.gmra.mxu0 %v5698
    %v6197 = vpop.f32.mrf.mxu0
    %v6198 = vadd.f32 %v5737, %v6197
    %v6199 = vpop.f32.mrf.mxu0
    %v6200 = vpop.f32.mrf.mxu0
    %v6201 = vadd.f32 %v5737, %v6200
    %v6202 = vpop.f32.mrf.mxu0
    %6203 = vmatprep.mubr.bf16.mxu0 0
    %6204 = vmatmul.mubr.bf16.gmra.mxu0 %v5699
    %v6205 = vpop.f32.mrf.mxu0
    %v6206 = vadd.f32 %v5737, %v6205
    %v6207 = vpop.f32.mrf.mxu0
    %v6208 = vpop.f32.mrf.mxu0
    %v6209 = vadd.f32 %v5737, %v6208
    %v6210 = vpop.f32.mrf.mxu0
    %6211 = vmatprep.mubr.bf16.mxu0 0
    %6212 = vmatmul.mubr.bf16.gmra.mxu0 %v5700
    %v6213 = vpop.f32.mrf.mxu0
    %v6214 = vadd.f32 %v5737, %v6213
    %v6215 = vpop.f32.mrf.mxu0
    %v6216 = vpop.f32.mrf.mxu0
    %v6217 = vadd.f32 %v5737, %v6216
    %v6218 = vpop.f32.mrf.mxu0
    %6219 = vmatprep.mubr.bf16.mxu0 0
    %6220 = vmatmul.mubr.bf16.gmra.mxu0 %v5701
    %v6221 = vpop.f32.mrf.mxu0
    %v6222 = vadd.f32 %v5737, %v6221
    %v6223 = vpop.f32.mrf.mxu0
    %v6224 = vpop.f32.mrf.mxu0
    %v6225 = vadd.f32 %v5737, %v6224
    %v6226 = vpop.f32.mrf.mxu0
    %6227 = vmatprep.mubr.bf16.mxu0 0
    %6228 = vmatmul.mubr.bf16.gmra.mxu0 %v5702
    %v6229 = vpop.f32.mrf.mxu0
    %v6230 = vadd.f32 %v5737, %v6229
    %v6231 = vpop.f32.mrf.mxu0
    %v6232 = vpop.f32.mrf.mxu0
    %v6233 = vadd.f32 %v5737, %v6232
    %v6234 = vpop.f32.mrf.mxu0
    %6235 = vmatprep.mubr.bf16.mxu0 0
    %6236 = vmatmul.mubr.bf16.gmra.mxu0 %v5703
    %v6237 = vpop.f32.mrf.mxu0
    %v6238 = vadd.f32 %v5737, %v6237
    %v6239 = vpop.f32.mrf.mxu0
    %v6240 = vpop.f32.mrf.mxu0
    %v6241 = vadd.f32 %v5737, %v6240
    %v6242 = vpop.f32.mrf.mxu0
    %6243 = vmatprep.mubr.bf16.mxu0 0
    %6244 = vmatmul.mubr.bf16.gmra.mxu0 %v5704
    %v6245 = vpop.f32.mrf.mxu0
    %v6246 = vadd.f32 %v5737, %v6245
    %v6247 = vpop.f32.mrf.mxu0
    %v6248 = vpop.f32.mrf.mxu0
    %v6249 = vadd.f32 %v5737, %v6248
    %v6250 = vpop.f32.mrf.mxu0
    %6251 = vmatprep.mubr.bf16.mxu0 0
    %6252 = vmatmul.mubr.bf16.gmra.mxu0 %v5705
    %v6253 = vpop.f32.mrf.mxu0
    %v6254 = vadd.f32 %v5737, %v6253
    %v6255 = vpop.f32.mrf.mxu0
    %v6256 = vpop.f32.mrf.mxu0
    %v6257 = vadd.f32 %v5737, %v6256
    %v6258 = vpop.f32.mrf.mxu0
    %6259 = vmatprep.mubr.bf16.mxu0 0
    %6260 = vmatmul.mubr.bf16.gmra.mxu0 %v5706
    %v6261 = vpop.f32.mrf.mxu0
    %v6262 = vadd.f32 %v5737, %v6261
    %v6263 = vpop.f32.mrf.mxu0
    %v6264 = vpop.f32.mrf.mxu0
    %v6265 = vadd.f32 %v5737, %v6264
    %v6266 = vpop.f32.mrf.mxu0
    %6267 = vmatprep.mubr.bf16.mxu0 0
    %6268 = vmatmul.mubr.bf16.gmra.mxu0 %v5707
    %v6269 = vpop.f32.mrf.mxu0
    %v6270 = vadd.f32 %v5737, %v6269
    %v6271 = vpop.f32.mrf.mxu0
    %v6272 = vpop.f32.mrf.mxu0
    %v6273 = vadd.f32 %v5737, %v6272
    %v6274 = vpop.f32.mrf.mxu0
    %6275 = vmatprep.mubr.bf16.mxu0 0
    %6276 = vmatmul.mubr.bf16.gmra.mxu0 %v5708
    %v6277 = vpop.f32.mrf.mxu0
    %v6278 = vadd.f32 %v5737, %v6277
    %v6279 = vpop.f32.mrf.mxu0
    %v6280 = vpop.f32.mrf.mxu0
    %v6281 = vadd.f32 %v5737, %v6280
    %v6282 = vpop.f32.mrf.mxu0
    %6283 = vmatprep.mubr.bf16.mxu0 0
    %6284 = vmatmul.mubr.bf16.gmra.mxu0 %v5709
    %v6285 = vpop.f32.mrf.mxu0
    %v6286 = vadd.f32 %v5737, %v6285
    %v6287 = vpop.f32.mrf.mxu0
    %v6288 = vpop.f32.mrf.mxu0
    %v6289 = vadd.f32 %v5737, %v6288
    %v6290 = vpop.f32.mrf.mxu0
    %6291 = vmatprep.mubr.bf16.mxu0 0
    %6292 = vmatmul.mubr.bf16.gmra.mxu0 %v5710
    %v6293 = vpop.f32.mrf.mxu0
    %v6294 = vadd.f32 %v5737, %v6293
    %v6295 = vpop.f32.mrf.mxu0
    %v6296 = vpop.f32.mrf.mxu0
    %v6297 = vadd.f32 %v5737, %v6296
    %v6298 = vpop.f32.mrf.mxu0
    %6299 = vmatprep.mubr.bf16.mxu0 0
    %6300 = vmatmul.mubr.bf16.gmra.mxu0 %v5711
    %v6301 = vpop.f32.mrf.mxu0
    %v6302 = vadd.f32 %v5737, %v6301
    %v6303 = vpop.f32.mrf.mxu0
    %v6304 = vpop.f32.mrf.mxu0
    %v6305 = vadd.f32 %v5737, %v6304
    %v6306 = vpop.f32.mrf.mxu0
    %6307 = vmatprep.mubr.bf16.mxu0 0
    %6308 = vmatmul.mubr.bf16.gmra.mxu0 %v5712
    %v6309 = vpop.f32.mrf.mxu0
    %v6310 = vadd.f32 %v5737, %v6309
    %v6311 = vpop.f32.mrf.mxu0
    %v6312 = vpop.f32.mrf.mxu0
    %v6313 = vadd.f32 %v5737, %v6312
    %v6314 = vpop.f32.mrf.mxu0
    %6315 = vmatprep.mubr.bf16.mxu0 0
    %6316 = vmatmul.mubr.bf16.gmra.mxu0 %v5713
    %v6317 = vpop.f32.mrf.mxu0
    %v6318 = vadd.f32 %v5737, %v6317
    %v6319 = vpop.f32.mrf.mxu0
    %v6320 = vpop.f32.mrf.mxu0
    %v6321 = vadd.f32 %v5737, %v6320
    %v6322 = vpop.f32.mrf.mxu0
    %6323 = vmatprep.mubr.bf16.mxu0 0
    %6324 = vmatmul.mubr.bf16.gmra.mxu0 %v5714
    %v6325 = vpop.f32.mrf.mxu0
    %v6326 = vadd.f32 %v5737, %v6325
    %v6327 = vpop.f32.mrf.mxu0
    %v6328 = vpop.f32.mrf.mxu0
    %v6329 = vadd.f32 %v5737, %v6328
    %v6330 = vpop.f32.mrf.mxu0
    %6331 = vmatprep.mubr.bf16.mxu0 0
    %6332 = vmatmul.mubr.bf16.gmra.mxu0 %v5715
    %v6333 = vpop.f32.mrf.mxu0
    %v6334 = vadd.f32 %v5737, %v6333
    %v6335 = vpop.f32.mrf.mxu0
    %v6336 = vpop.f32.mrf.mxu0
    %v6337 = vadd.f32 %v5737, %v6336
    %v6338 = vpop.f32.mrf.mxu0
    %6339 = vmatprep.mubr.bf16.mxu0 0
    %6340 = vmatmul.mubr.bf16.gmra.mxu0 %v5716
    %v6341 = vpop.f32.mrf.mxu0
    %v6342 = vadd.f32 %v5737, %v6341
    %v6343 = vpop.f32.mrf.mxu0
    %v6344 = vpop.f32.mrf.mxu0
    %v6345 = vadd.f32 %v5737, %v6344
    %v6346 = vpop.f32.mrf.mxu0
    %6347 = vmatprep.mubr.bf16.mxu0 0
    %6348 = vmatmul.mubr.bf16.gmra.mxu0 %v5717
    %v6349 = vpop.f32.mrf.mxu0
    %v6350 = vadd.f32 %v5737, %v6349
    %v6351 = vpop.f32.mrf.mxu0
    %v6352 = vpop.f32.mrf.mxu0
    %v6353 = vadd.f32 %v5737, %v6352
    %v6354 = vpop.f32.mrf.mxu0
    %6355 = vmatprep.mubr.bf16.mxu0 0
    %6356 = vmatmul.mubr.bf16.gmra.mxu0 %v5718
    %v6357 = vpop.f32.mrf.mxu0
    %v6358 = vadd.f32 %v5737, %v6357
    %v6359 = vpop.f32.mrf.mxu0
    %v6360 = vpop.f32.mrf.mxu0
    %v6361 = vadd.f32 %v5737, %v6360
    %v6362 = vpop.f32.mrf.mxu0
    %6363 = vmatprep.mubr.bf16.mxu0 0
    %6364 = vmatmul.mubr.bf16.gmra.mxu0 %v5719
    %v6365 = vpop.f32.mrf.mxu0
    %v6366 = vadd.f32 %v5737, %v6365
    %v6367 = vpop.f32.mrf.mxu0
    %v6368 = vpop.f32.mrf.mxu0
    %v6369 = vadd.f32 %v5737, %v6368
    %v6370 = vpop.f32.mrf.mxu0
    %6371 = vmatprep.mubr.bf16.mxu0 0
    %6372 = vmatmul.mubr.bf16.gmra.mxu0 %v5720
    %v6373 = vpop.f32.mrf.mxu0
    %v6374 = vadd.f32 %v5737, %v6373
    %v6375 = vpop.f32.mrf.mxu0
    %v6376 = vpop.f32.mrf.mxu0
    %v6377 = vadd.f32 %v5737, %v6376
    %v6378 = vpop.f32.mrf.mxu0
    %6379 = vmatprep.mubr.bf16.mxu0 0
    %6380 = vmatmul.mubr.bf16.gmra.mxu0 %v5721
    %v6381 = vpop.f32.mrf.mxu0
    %v6382 = vadd.f32 %v5737, %v6381
    %v6383 = vpop.f32.mrf.mxu0
    %v6384 = vpop.f32.mrf.mxu0
    %v6385 = vadd.f32 %v5737, %v6384
    %v6386 = vpop.f32.mrf.mxu0
    %6387 = vmatprep.mubr.bf16.mxu0 0
    %6388 = vmatmul.mubr.bf16.gmra.mxu0 %v5722
    %v6389 = vpop.f32.mrf.mxu0
    %v6390 = vadd.f32 %v5737, %v6389
    %v6391 = vpop.f32.mrf.mxu0
    %v6392 = vpop.f32.mrf.mxu0
    %v6393 = vadd.f32 %v5737, %v6392
    %v6394 = vpop.f32.mrf.mxu0
    %6395 = vmatprep.mubr.bf16.mxu0 0
    %6396 = vmatmul.mubr.bf16.gmra.mxu0 %v5723
    %v6397 = vpop.f32.mrf.mxu0
    %v6398 = vadd.f32 %v5737, %v6397
    %v6399 = vpop.f32.mrf.mxu0
    %v6400 = vpop.f32.mrf.mxu0
    %v6401 = vadd.f32 %v5737, %v6400
    %v6402 = vpop.f32.mrf.mxu0
    %6403 = vmatprep.mubr.bf16.mxu0 0
    %6404 = vmatmul.mubr.bf16.gmra.mxu0 %v5724
    %v6405 = vpop.f32.mrf.mxu0
    %v6406 = vadd.f32 %v5737, %v6405
    %v6407 = vpop.f32.mrf.mxu0
    %v6408 = vpop.f32.mrf.mxu0
    %v6409 = vadd.f32 %v5737, %v6408
    %v6410 = vpop.f32.mrf.mxu0
    %6411 = vmatprep.mubr.bf16.mxu0 0
    %6412 = vmatmul.mubr.bf16.gmra.mxu0 %v5725
    %v6413 = vpop.f32.mrf.mxu0
    %v6414 = vadd.f32 %v5737, %v6413
    %v6415 = vpop.f32.mrf.mxu0
    %v6416 = vpop.f32.mrf.mxu0
    %v6417 = vadd.f32 %v5737, %v6416
    %v6418 = vpop.f32.mrf.mxu0
    %6419 = vmatprep.mubr.bf16.mxu0 0
    %6420 = vmatmul.mubr.bf16.gmra.mxu0 %v5726
    %v6421 = vpop.f32.mrf.mxu0
    %v6422 = vadd.f32 %v5737, %v6421
    %v6423 = vpop.f32.mrf.mxu0
    %v6424 = vpop.f32.mrf.mxu0
    %v6425 = vadd.f32 %v5737, %v6424
    %v6426 = vpop.f32.mrf.mxu0
    %6427 = vmatprep.mubr.bf16.mxu0 0
    %6428 = vmatmul.mubr.bf16.gmra.mxu0 %v5727
    %v6429 = vpop.f32.mrf.mxu0
    %v6430 = vadd.f32 %v5737, %v6429
    %v6431 = vpop.f32.mrf.mxu0
    %v6432 = vpop.f32.mrf.mxu0
    %v6433 = vadd.f32 %v5737, %v6432
    %v6434 = vpop.f32.mrf.mxu0
    %6435 = vmatprep.mubr.bf16.mxu0 0
    %6436 = vmatmul.mubr.bf16.gmra.mxu0 %v5728
    %v6437 = vpop.f32.mrf.mxu0
    %v6438 = vadd.f32 %v5737, %v6437
    %v6439 = vpop.f32.mrf.mxu0
    %v6440 = vpop.f32.mrf.mxu0
    %v6441 = vadd.f32 %v5737, %v6440
    %v6442 = vpop.f32.mrf.mxu0
    %6443 = vmatprep.mubr.bf16.mxu0 0
    %6444 = vmatmul.mubr.bf16.gmra.mxu0 %v5729
    %v6445 = vpop.f32.mrf.mxu0
    %v6446 = vadd.f32 %v5737, %v6445
    %v6447 = vpop.f32.mrf.mxu0
    %v6448 = vpop.f32.mrf.mxu0
    %v6449 = vadd.f32 %v5737, %v6448
    %v6450 = vpop.f32.mrf.mxu0
    %6451 = vmatprep.mubr.bf16.mxu0 0
    %6452 = vmatmul.mubr.bf16.gmra.mxu0 %v5730
    %v6453 = vpop.f32.mrf.mxu0
    %v6454 = vadd.f32 %v5737, %v6453
    %v6455 = vpop.f32.mrf.mxu0
    %v6456 = vpop.f32.mrf.mxu0
    %v6457 = vadd.f32 %v5737, %v6456
    %v6458 = vpop.f32.mrf.mxu0
    %6459 = vmatprep.mubr.bf16.mxu0 0
    %6460 = vmatmul.mubr.bf16.gmra.mxu0 %v5731
    %v6461 = vpop.f32.mrf.mxu0
    %v6462 = vadd.f32 %v5737, %v6461
    %v6463 = vpop.f32.mrf.mxu0
    %v6464 = vpop.f32.mrf.mxu0
    %v6465 = vadd.f32 %v5737, %v6464
    %v6466 = vpop.f32.mrf.mxu0
    %6467 = vdwg.mxu0
    %v6468 = vmul.f32 %v5822, 0.01
    %v6469 = vmul.f32 %v5825, 0.01
    %v6470 = vmul.f32 %v5830, 0.01
    %v6471 = vmul.f32 %v5833, 0.01
    %v6472 = vmul.f32 %v5838, 0.01
    %v6473 = vmul.f32 %v5841, 0.01
    %v6474 = vmul.f32 %v5846, 0.01
    %v6475 = vmul.f32 %v5849, 0.01
    %v6476 = vmul.f32 %v5854, 0.01
    %v6477 = vmul.f32 %v5857, 0.01
    %v6478 = vmul.f32 %v5862, 0.01
    %v6479 = vmul.f32 %v5865, 0.01
    %v6480 = vmul.f32 %v5870, 0.01
    %v6481 = vmul.f32 %v5873, 0.01
    %v6482 = vmul.f32 %v5878, 0.01
    %v6483 = vmul.f32 %v5881, 0.01
    %v6484 = vmul.f32 %v5886, 0.01
    %v6485 = vmul.f32 %v5889, 0.01
    %v6486 = vmul.f32 %v5894, 0.01
    %v6487 = vmul.f32 %v5897, 0.01
    %v6488 = vmul.f32 %v5902, 0.01
    %v6489 = vmul.f32 %v5905, 0.01
    %v6490 = vmul.f32 %v5910, 0.01
    %v6491 = vmul.f32 %v5913, 0.01
    %v6492 = vmul.f32 %v5918, 0.01
    %v6493 = vmul.f32 %v5921, 0.01
    %v6494 = vmul.f32 %v5926, 0.01
    %v6495 = vmul.f32 %v5929, 0.01
    %v6496 = vmul.f32 %v5934, 0.01
    %v6497 = vmul.f32 %v5937, 0.01
    %v6498 = vmul.f32 %v5942, 0.01
    %v6499 = vmul.f32 %v5945, 0.01
    %v6500 = vmul.f32 %v5950, 0.01
    %v6501 = vmul.f32 %v5953, 0.01
    %v6502 = vmul.f32 %v5958, 0.01
    %v6503 = vmul.f32 %v5961, 0.01
    %v6504 = vmul.f32 %v5966, 0.01
    %v6505 = vmul.f32 %v5969, 0.01
    %v6506 = vmul.f32 %v5974, 0.01
    %v6507 = vmul.f32 %v5977, 0.01
    %v6508 = vmul.f32 %v5982, 0.01
    %v6509 = vmul.f32 %v5985, 0.01
    %v6510 = vmul.f32 %v5990, 0.01
    %v6511 = vmul.f32 %v5993, 0.01
    %v6512 = vmul.f32 %v5998, 0.01
    %v6513 = vmul.f32 %v6001, 0.01
    %v6514 = vmul.f32 %v6006, 0.01
    %v6515 = vmul.f32 %v6009, 0.01
    %v6516 = vmul.f32 %v6014, 0.01
    %v6517 = vmul.f32 %v6017, 0.01
    %v6518 = vmul.f32 %v6022, 0.01
    %v6519 = vmul.f32 %v6025, 0.01
    %v6520 = vmul.f32 %v6030, 0.01
    %v6521 = vmul.f32 %v6033, 0.01
    %v6522 = vmul.f32 %v6038, 0.01
    %v6523 = vmul.f32 %v6041, 0.01
    %v6524 = vmul.f32 %v6046, 0.01
    %v6525 = vmul.f32 %v6049, 0.01
    %v6526 = vmul.f32 %v6054, 0.01
    %v6527 = vmul.f32 %v6057, 0.01
    %v6528 = vmul.f32 %v6062, 0.01
    %v6529 = vmul.f32 %v6065, 0.01
    %v6530 = vmul.f32 %v6070, 0.01
    %v6531 = vmul.f32 %v6073, 0.01
    %v6532 = vmul.f32 %v6078, 0.01
    %v6533 = vmul.f32 %v6081, 0.01
    %v6534 = vmul.f32 %v6086, 0.01
    %v6535 = vmul.f32 %v6089, 0.01
    %v6536 = vmul.f32 %v6094, 0.01
    %v6537 = vmul.f32 %v6097, 0.01
    %v6538 = vmul.f32 %v6102, 0.01
    %v6539 = vmul.f32 %v6105, 0.01
    %v6540 = vmul.f32 %v6110, 0.01
    %v6541 = vmul.f32 %v6113, 0.01
    %v6542 = vmul.f32 %v6118, 0.01
    %v6543 = vmul.f32 %v6121, 0.01
    %v6544 = vmul.f32 %v6126, 0.01
    %v6545 = vmul.f32 %v6129, 0.01
    %v6546 = vmul.f32 %v6134, 0.01
    %v6547 = vmul.f32 %v6137, 0.01
    %v6548 = vmul.f32 %v6142, 0.01
    %v6549 = vmul.f32 %v6145, 0.01
    %v6550 = vmul.f32 %v6150, 0.01
    %v6551 = vmul.f32 %v6153, 0.01
    %v6552 = vmul.f32 %v6158, 0.01
    %v6553 = vmul.f32 %v6161, 0.01
    %v6554 = vmul.f32 %v6166, 0.01
    %v6555 = vmul.f32 %v6169, 0.01
    %v6556 = vmul.f32 %v6174, 0.01
    %v6557 = vmul.f32 %v6177, 0.01
    %v6558 = vmul.f32 %v6182, 0.01
    %v6559 = vmul.f32 %v6185, 0.01
    %v6560 = vmul.f32 %v6190, 0.01
    %v6561 = vmul.f32 %v6193, 0.01
    %v6562 = vmul.f32 %v6198, 0.01
    %v6563 = vmul.f32 %v6201, 0.01
    %v6564 = vmul.f32 %v6206, 0.01
    %v6565 = vmul.f32 %v6209, 0.01
    %v6566 = vmul.f32 %v6214, 0.01
    %v6567 = vmul.f32 %v6217, 0.01
    %v6568 = vmul.f32 %v6222, 0.01
    %v6569 = vmul.f32 %v6225, 0.01
    %v6570 = vmul.f32 %v6230, 0.01
    %v6571 = vmul.f32 %v6233, 0.01
    %v6572 = vmul.f32 %v6238, 0.01
    %v6573 = vmul.f32 %v6241, 0.01
    %v6574 = vmul.f32 %v6246, 0.01
    %v6575 = vmul.f32 %v6249, 0.01
    %v6576 = vmul.f32 %v6254, 0.01
    %v6577 = vmul.f32 %v6257, 0.01
    %v6578 = vmul.f32 %v6262, 0.01
    %v6579 = vmul.f32 %v6265, 0.01
    %v6580 = vmul.f32 %v6270, 0.01
    %v6581 = vmul.f32 %v6273, 0.01
    %v6582 = vmul.f32 %v6278, 0.01
    %v6583 = vmul.f32 %v6281, 0.01
    %v6584 = vmul.f32 %v6286, 0.01
    %v6585 = vmul.f32 %v6289, 0.01
    %v6586 = vmul.f32 %v6294, 0.01
    %v6587 = vmul.f32 %v6297, 0.01
    %v6588 = vmul.f32 %v6302, 0.01
    %v6589 = vmul.f32 %v6305, 0.01
    %v6590 = vmul.f32 %v6310, 0.01
    %v6591 = vmul.f32 %v6313, 0.01
    %v6592 = vmul.f32 %v6318, 0.01
    %v6593 = vmul.f32 %v6321, 0.01
    %v6594 = vmul.f32 %v6326, 0.01
    %v6595 = vmul.f32 %v6329, 0.01
    %v6596 = vmul.f32 %v6334, 0.01
    %v6597 = vmul.f32 %v6337, 0.01
    %v6598 = vmul.f32 %v6342, 0.01
    %v6599 = vmul.f32 %v6345, 0.01
    %v6600 = vmul.f32 %v6350, 0.01
    %v6601 = vmul.f32 %v6353, 0.01
    %v6602 = vmul.f32 %v6358, 0.01
    %v6603 = vmul.f32 %v6361, 0.01
    %v6604 = vmul.f32 %v6366, 0.01
    %v6605 = vmul.f32 %v6369, 0.01
    %v6606 = vmul.f32 %v6374, 0.01
    %v6607 = vmul.f32 %v6377, 0.01
    %v6608 = vmul.f32 %v6382, 0.01
    %v6609 = vmul.f32 %v6385, 0.01
    %v6610 = vmul.f32 %v6390, 0.01
    %v6611 = vmul.f32 %v6393, 0.01
    %v6612 = vmul.f32 %v6398, 0.01
    %v6613 = vmul.f32 %v6401, 0.01
    %v6614 = vmul.f32 %v6406, 0.01
    %v6615 = vmul.f32 %v6409, 0.01
    %v6616 = vmul.f32 %v6414, 0.01
    %v6617 = vmul.f32 %v6417, 0.01
    %v6618 = vmul.f32 %v6422, 0.01
    %v6619 = vmul.f32 %v6425, 0.01
    %v6620 = vmul.f32 %v6430, 0.01
    %v6621 = vmul.f32 %v6433, 0.01
    %v6622 = vmul.f32 %v6438, 0.01
    %v6623 = vmul.f32 %v6441, 0.01
    %v6624 = vmul.f32 %v6446, 0.01
    %v6625 = vmul.f32 %v6449, 0.01
    %v6626 = vmul.f32 %v6454, 0.01
    %v6627 = vmul.f32 %v6457, 0.01
    %v6628 = vmul.f32 %v6462, 0.01
    %v6629 = vmul.f32 %v6465, 0.01
    %v6630 = vlaneseq
    %v6631 = vshrl.u32 %v6630, 7
    %v6632 = vadd.s32 %v6631, 8
    %v6633 = vadd.s32 %v6631, 16
    %v6634 = vadd.s32 %v6631, 24
    %v6635 = vadd.s32 %v6631, 32
    %v6636 = vadd.s32 %v6631, 40
    %v6637 = vadd.s32 %v6631, 48
    %v6638 = vadd.s32 %v6631, 56
    %v6639 = vadd.s32 %v6631, 64
    %v6640 = vadd.s32 %v6631, 72
    %v6641 = vadd.s32 %v6631, 80
    %v6642 = vadd.s32 %v6631, 88
    %v6643 = vadd.s32 %v6631, 96
    %v6644 = vadd.s32 %v6631, 104
    %v6645 = vadd.s32 %v6631, 112
    %v6646 = vadd.s32 %v6631, 120
    %v6647 = vadd.s32 %v6631, 128
    %v6648 = vadd.s32 %v6631, 136
    %v6649 = vadd.s32 %v6631, 144
    %v6650 = vadd.s32 %v6631, 152
    %v6651 = vadd.s32 %v6631, 160
    %v6652 = vadd.s32 %v6631, 168
    %v6653 = vadd.s32 %v6631, 176
    %v6654 = vadd.s32 %v6631, 184
    %v6655 = vadd.s32 %v6631, 192
    %v6656 = vadd.s32 %v6631, 200
    %v6657 = vadd.s32 %v6631, 208
    %v6658 = vadd.s32 %v6631, 216
    %v6659 = vadd.s32 %v6631, 224
    %v6660 = vadd.s32 %v6631, 232
    %v6661 = vadd.s32 %v6631, 240
    %v6662 = vadd.s32 %v6631, 248
    %v6663 = vadd.s32 %v6631, 256
    %v6664 = vadd.s32 %v6631, 264
    %v6665 = vadd.s32 %v6631, 272
    %v6666 = vadd.s32 %v6631, 280
    %v6667 = vadd.s32 %v6631, 288
    %v6668 = vadd.s32 %v6631, 296
    %v6669 = vadd.s32 %v6631, 304
    %v6670 = vadd.s32 %v6631, 312
    %v6671 = vadd.s32 %v6631, 320
    %v6672 = vadd.s32 %v6631, 328
    %v6673 = vadd.s32 %v6631, 336
    %v6674 = vadd.s32 %v6631, 344
    %v6675 = vadd.s32 %v6631, 352
    %v6676 = vadd.s32 %v6631, 360
    %v6677 = vadd.s32 %v6631, 368
    %v6678 = vadd.s32 %v6631, 376
    %v6679 = vadd.s32 %v6631, 384
    %v6680 = vadd.s32 %v6631, 392
    %v6681 = vadd.s32 %v6631, 400
    %v6682 = vadd.s32 %v6631, 408
    %v6683 = vadd.s32 %v6631, 416
    %v6684 = vadd.s32 %v6631, 424
    %v6685 = vadd.s32 %v6631, 432
    %v6686 = vadd.s32 %v6631, 440
    %v6687 = vadd.s32 %v6631, 448
    %v6688 = vadd.s32 %v6631, 456
    %v6689 = vadd.s32 %v6631, 464
    %v6690 = vadd.s32 %v6631, 472
    %v6691 = vadd.s32 %v6631, 480
    %v6692 = vadd.s32 %v6631, 488
    %v6693 = vadd.s32 %v6631, 496
    %v6694 = vadd.s32 %v6631, 504
    %v6695 = vadd.s32 %v6631, 512
    %v6696 = vadd.s32 %v6631, 520
    %v6697 = vadd.s32 %v6631, 528
    %v6698 = vadd.s32 %v6631, 536
    %v6699 = vadd.s32 %v6631, 544
    %v6700 = vadd.s32 %v6631, 552
    %v6701 = vadd.s32 %v6631, 560
    %v6702 = vadd.s32 %v6631, 568
    %v6703 = vadd.s32 %v6631, 576
    %v6704 = vadd.s32 %v6631, 584
    %v6705 = vadd.s32 %v6631, 592
    %v6706 = vadd.s32 %v6631, 600
    %v6707 = vadd.s32 %v6631, 608
    %v6708 = vadd.s32 %v6631, 616
    %v6709 = vadd.s32 %v6631, 624
    %v6710 = vadd.s32 %v6631, 632
    %v6711 = vadd.s32 %v6631, 640
    %vm6712 = vcmp.lt.s32.totalorder %v6631, 642
    %vm6713 = vcmp.lt.s32.totalorder %v6632, 642
    %vm6714 = vcmp.lt.s32.totalorder %v6633, 642
    %vm6715 = vcmp.lt.s32.totalorder %v6634, 642
    %vm6716 = vcmp.lt.s32.totalorder %v6635, 642
    %vm6717 = vcmp.lt.s32.totalorder %v6636, 642
    %vm6718 = vcmp.lt.s32.totalorder %v6637, 642
    %vm6719 = vcmp.lt.s32.totalorder %v6638, 642
    %vm6720 = vcmp.lt.s32.totalorder %v6639, 642
    %vm6721 = vcmp.lt.s32.totalorder %v6640, 642
    %vm6722 = vcmp.lt.s32.totalorder %v6641, 642
    %vm6723 = vcmp.lt.s32.totalorder %v6642, 642
    %vm6724 = vcmp.lt.s32.totalorder %v6643, 642
    %vm6725 = vcmp.lt.s32.totalorder %v6644, 642
    %vm6726 = vcmp.lt.s32.totalorder %v6645, 642
    %vm6727 = vcmp.lt.s32.totalorder %v6646, 642
    %vm6728 = vcmp.lt.s32.totalorder %v6647, 642
    %vm6729 = vcmp.lt.s32.totalorder %v6648, 642
    %vm6730 = vcmp.lt.s32.totalorder %v6649, 642
    %vm6731 = vcmp.lt.s32.totalorder %v6650, 642
    %vm6732 = vcmp.lt.s32.totalorder %v6651, 642
    %vm6733 = vcmp.lt.s32.totalorder %v6652, 642
    %vm6734 = vcmp.lt.s32.totalorder %v6653, 642
    %vm6735 = vcmp.lt.s32.totalorder %v6654, 642
    %vm6736 = vcmp.lt.s32.totalorder %v6655, 642
    %vm6737 = vcmp.lt.s32.totalorder %v6656, 642
    %vm6738 = vcmp.lt.s32.totalorder %v6657, 642
    %vm6739 = vcmp.lt.s32.totalorder %v6658, 642
    %vm6740 = vcmp.lt.s32.totalorder %v6659, 642
    %vm6741 = vcmp.lt.s32.totalorder %v6660, 642
    %vm6742 = vcmp.lt.s32.totalorder %v6661, 642
    %vm6743 = vcmp.lt.s32.totalorder %v6662, 642
    %vm6744 = vcmp.lt.s32.totalorder %v6663, 642
    %vm6745 = vcmp.lt.s32.totalorder %v6664, 642
    %vm6746 = vcmp.lt.s32.totalorder %v6665, 642
    %vm6747 = vcmp.lt.s32.totalorder %v6666, 642
    %vm6748 = vcmp.lt.s32.totalorder %v6667, 642
    %vm6749 = vcmp.lt.s32.totalorder %v6668, 642
    %vm6750 = vcmp.lt.s32.totalorder %v6669, 642
    %vm6751 = vcmp.lt.s32.totalorder %v6670, 642
    %vm6752 = vcmp.lt.s32.totalorder %v6671, 642
    %vm6753 = vcmp.lt.s32.totalorder %v6672, 642
    %vm6754 = vcmp.lt.s32.totalorder %v6673, 642
    %vm6755 = vcmp.lt.s32.totalorder %v6674, 642
    %vm6756 = vcmp.lt.s32.totalorder %v6675, 642
    %vm6757 = vcmp.lt.s32.totalorder %v6676, 642
    %vm6758 = vcmp.lt.s32.totalorder %v6677, 642
    %vm6759 = vcmp.lt.s32.totalorder %v6678, 642
    %vm6760 = vcmp.lt.s32.totalorder %v6679, 642
    %vm6761 = vcmp.lt.s32.totalorder %v6680, 642
    %vm6762 = vcmp.lt.s32.totalorder %v6681, 642
    %vm6763 = vcmp.lt.s32.totalorder %v6682, 642
    %vm6764 = vcmp.lt.s32.totalorder %v6683, 642
    %vm6765 = vcmp.lt.s32.totalorder %v6684, 642
    %vm6766 = vcmp.lt.s32.totalorder %v6685, 642
    %vm6767 = vcmp.lt.s32.totalorder %v6686, 642
    %vm6768 = vcmp.lt.s32.totalorder %v6687, 642
    %vm6769 = vcmp.lt.s32.totalorder %v6688, 642
    %vm6770 = vcmp.lt.s32.totalorder %v6689, 642
    %vm6771 = vcmp.lt.s32.totalorder %v6690, 642
    %vm6772 = vcmp.lt.s32.totalorder %v6691, 642
    %vm6773 = vcmp.lt.s32.totalorder %v6692, 642
    %vm6774 = vcmp.lt.s32.totalorder %v6693, 642
    %vm6775 = vcmp.lt.s32.totalorder %v6694, 642
    %vm6776 = vcmp.lt.s32.totalorder %v6695, 642
    %vm6777 = vcmp.lt.s32.totalorder %v6696, 642
    %vm6778 = vcmp.lt.s32.totalorder %v6697, 642
    %vm6779 = vcmp.lt.s32.totalorder %v6698, 642
    %vm6780 = vcmp.lt.s32.totalorder %v6699, 642
    %vm6781 = vcmp.lt.s32.totalorder %v6700, 642
    %vm6782 = vcmp.lt.s32.totalorder %v6701, 642
    %vm6783 = vcmp.lt.s32.totalorder %v6702, 642
    %vm6784 = vcmp.lt.s32.totalorder %v6703, 642
    %vm6785 = vcmp.lt.s32.totalorder %v6704, 642
    %vm6786 = vcmp.lt.s32.totalorder %v6705, 642
    %vm6787 = vcmp.lt.s32.totalorder %v6706, 642
    %vm6788 = vcmp.lt.s32.totalorder %v6707, 642
    %vm6789 = vcmp.lt.s32.totalorder %v6708, 642
    %vm6790 = vcmp.lt.s32.totalorder %v6709, 642
    %vm6791 = vcmp.lt.s32.totalorder %v6710, 642
    %vm6792 = vcmp.lt.s32.totalorder %v6711, 642
    %v6793 = vsel %vm6712, 1, 0
    %v6794 = vsel %vm6713, 1, 0
    %v6795 = vsel %vm6714, 1, 0
    %v6796 = vsel %vm6715, 1, 0
    %v6797 = vsel %vm6716, 1, 0
    %v6798 = vsel %vm6717, 1, 0
    %v6799 = vsel %vm6718, 1, 0
    %v6800 = vsel %vm6719, 1, 0
    %v6801 = vsel %vm6720, 1, 0
    %v6802 = vsel %vm6721, 1, 0
    %v6803 = vsel %vm6722, 1, 0
    %v6804 = vsel %vm6723, 1, 0
    %v6805 = vsel %vm6724, 1, 0
    %v6806 = vsel %vm6725, 1, 0
    %v6807 = vsel %vm6726, 1, 0
    %v6808 = vsel %vm6727, 1, 0
    %v6809 = vsel %vm6728, 1, 0
    %v6810 = vsel %vm6729, 1, 0
    %v6811 = vsel %vm6730, 1, 0
    %v6812 = vsel %vm6731, 1, 0
    %v6813 = vsel %vm6732, 1, 0
    %v6814 = vsel %vm6733, 1, 0
    %v6815 = vsel %vm6734, 1, 0
    %v6816 = vsel %vm6735, 1, 0
    %v6817 = vsel %vm6736, 1, 0
    %v6818 = vsel %vm6737, 1, 0
    %v6819 = vsel %vm6738, 1, 0
    %v6820 = vsel %vm6739, 1, 0
    %v6821 = vsel %vm6740, 1, 0
    %v6822 = vsel %vm6741, 1, 0
    %v6823 = vsel %vm6742, 1, 0
    %v6824 = vsel %vm6743, 1, 0
    %v6825 = vsel %vm6744, 1, 0
    %v6826 = vsel %vm6745, 1, 0
    %v6827 = vsel %vm6746, 1, 0
    %v6828 = vsel %vm6747, 1, 0
    %v6829 = vsel %vm6748, 1, 0
    %v6830 = vsel %vm6749, 1, 0
    %v6831 = vsel %vm6750, 1, 0
    %v6832 = vsel %vm6751, 1, 0
    %v6833 = vsel %vm6752, 1, 0
    %v6834 = vsel %vm6753, 1, 0
    %v6835 = vsel %vm6754, 1, 0
    %v6836 = vsel %vm6755, 1, 0
    %v6837 = vsel %vm6756, 1, 0
    %v6838 = vsel %vm6757, 1, 0
    %v6839 = vsel %vm6758, 1, 0
    %v6840 = vsel %vm6759, 1, 0
    %v6841 = vsel %vm6760, 1, 0
    %v6842 = vsel %vm6761, 1, 0
    %v6843 = vsel %vm6762, 1, 0
    %v6844 = vsel %vm6763, 1, 0
    %v6845 = vsel %vm6764, 1, 0
    %v6846 = vsel %vm6765, 1, 0
    %v6847 = vsel %vm6766, 1, 0
    %v6848 = vsel %vm6767, 1, 0
    %v6849 = vsel %vm6768, 1, 0
    %v6850 = vsel %vm6769, 1, 0
    %v6851 = vsel %vm6770, 1, 0
    %v6852 = vsel %vm6771, 1, 0
    %v6853 = vsel %vm6772, 1, 0
    %v6854 = vsel %vm6773, 1, 0
    %v6855 = vsel %vm6774, 1, 0
    %v6856 = vsel %vm6775, 1, 0
    %v6857 = vsel %vm6776, 1, 0
    %v6858 = vsel %vm6777, 1, 0
    %v6859 = vsel %vm6778, 1, 0
    %v6860 = vsel %vm6779, 1, 0
    %v6861 = vsel %vm6780, 1, 0
    %v6862 = vsel %vm6781, 1, 0
    %v6863 = vsel %vm6782, 1, 0
    %v6864 = vsel %vm6783, 1, 0
    %v6865 = vsel %vm6784, 1, 0
    %v6866 = vsel %vm6785, 1, 0
    %v6867 = vsel %vm6786, 1, 0
    %v6868 = vsel %vm6787, 1, 0
    %v6869 = vsel %vm6788, 1, 0
    %v6870 = vsel %vm6789, 1, 0
    %v6871 = vsel %vm6790, 1, 0
    %v6872 = vsel %vm6791, 1, 0
    %v6873 = vsel %vm6792, 1, 0
    %v6874 = vcvt.s32.f32 %v6793
    %v6875 = vcvt.s32.f32 %v6794
    %v6876 = vcvt.s32.f32 %v6795
    %v6877 = vcvt.s32.f32 %v6796
    %v6878 = vcvt.s32.f32 %v6797
    %v6879 = vcvt.s32.f32 %v6798
    %v6880 = vcvt.s32.f32 %v6799
    %v6881 = vcvt.s32.f32 %v6800
    %v6882 = vcvt.s32.f32 %v6801
    %v6883 = vcvt.s32.f32 %v6802
    %v6884 = vcvt.s32.f32 %v6803
    %v6885 = vcvt.s32.f32 %v6804
    %v6886 = vcvt.s32.f32 %v6805
    %v6887 = vcvt.s32.f32 %v6806
    %v6888 = vcvt.s32.f32 %v6807
    %v6889 = vcvt.s32.f32 %v6808
    %v6890 = vcvt.s32.f32 %v6809
    %v6891 = vcvt.s32.f32 %v6810
    %v6892 = vcvt.s32.f32 %v6811
    %v6893 = vcvt.s32.f32 %v6812
    %v6894 = vcvt.s32.f32 %v6813
    %v6895 = vcvt.s32.f32 %v6814
    %v6896 = vcvt.s32.f32 %v6815
    %v6897 = vcvt.s32.f32 %v6816
    %v6898 = vcvt.s32.f32 %v6817
    %v6899 = vcvt.s32.f32 %v6818
    %v6900 = vcvt.s32.f32 %v6819
    %v6901 = vcvt.s32.f32 %v6820
    %v6902 = vcvt.s32.f32 %v6821
    %v6903 = vcvt.s32.f32 %v6822
    %v6904 = vcvt.s32.f32 %v6823
    %v6905 = vcvt.s32.f32 %v6824
    %v6906 = vcvt.s32.f32 %v6825
    %v6907 = vcvt.s32.f32 %v6826
    %v6908 = vcvt.s32.f32 %v6827
    %v6909 = vcvt.s32.f32 %v6828
    %v6910 = vcvt.s32.f32 %v6829
    %v6911 = vcvt.s32.f32 %v6830
    %v6912 = vcvt.s32.f32 %v6831
    %v6913 = vcvt.s32.f32 %v6832
    %v6914 = vcvt.s32.f32 %v6833
    %v6915 = vcvt.s32.f32 %v6834
    %v6916 = vcvt.s32.f32 %v6835
    %v6917 = vcvt.s32.f32 %v6836
    %v6918 = vcvt.s32.f32 %v6837
    %v6919 = vcvt.s32.f32 %v6838
    %v6920 = vcvt.s32.f32 %v6839
    %v6921 = vcvt.s32.f32 %v6840
    %v6922 = vcvt.s32.f32 %v6841
    %v6923 = vcvt.s32.f32 %v6842
    %v6924 = vcvt.s32.f32 %v6843
    %v6925 = vcvt.s32.f32 %v6844
    %v6926 = vcvt.s32.f32 %v6845
    %v6927 = vcvt.s32.f32 %v6846
    %v6928 = vcvt.s32.f32 %v6847
    %v6929 = vcvt.s32.f32 %v6848
    %v6930 = vcvt.s32.f32 %v6849
    %v6931 = vcvt.s32.f32 %v6850
    %v6932 = vcvt.s32.f32 %v6851
    %v6933 = vcvt.s32.f32 %v6852
    %v6934 = vcvt.s32.f32 %v6853
    %v6935 = vcvt.s32.f32 %v6854
    %v6936 = vcvt.s32.f32 %v6855
    %v6937 = vcvt.s32.f32 %v6856
    %v6938 = vcvt.s32.f32 %v6857
    %v6939 = vcvt.s32.f32 %v6858
    %v6940 = vcvt.s32.f32 %v6859
    %v6941 = vcvt.s32.f32 %v6860
    %v6942 = vcvt.s32.f32 %v6861
    %v6943 = vcvt.s32.f32 %v6862
    %v6944 = vcvt.s32.f32 %v6863
    %v6945 = vcvt.s32.f32 %v6864
    %v6946 = vcvt.s32.f32 %v6865
    %v6947 = vcvt.s32.f32 %v6866
    %v6948 = vcvt.s32.f32 %v6867
    %v6949 = vcvt.s32.f32 %v6868
    %v6950 = vcvt.s32.f32 %v6869
    %v6951 = vcvt.s32.f32 %v6870
    %v6952 = vcvt.s32.f32 %v6871
    %v6953 = vcvt.s32.f32 %v6872
    %v6954 = vcvt.s32.f32 %v6873
    %v6955 = vmul.f32 %v6468, %v6874
    %v6956 = vmul.f32 %v6469, %v6875
    %v6957 = vmul.f32 %v6470, %v6876
    %v6958 = vmul.f32 %v6471, %v6877
    %v6959 = vmul.f32 %v6472, %v6878
    %v6960 = vmul.f32 %v6473, %v6879
    %v6961 = vmul.f32 %v6474, %v6880
    %v6962 = vmul.f32 %v6475, %v6881
    %v6963 = vmul.f32 %v6476, %v6882
    %v6964 = vmul.f32 %v6477, %v6883
    %v6965 = vmul.f32 %v6478, %v6884
    %v6966 = vmul.f32 %v6479, %v6885
    %v6967 = vmul.f32 %v6480, %v6886
    %v6968 = vmul.f32 %v6481, %v6887
    %v6969 = vmul.f32 %v6482, %v6888
    %v6970 = vmul.f32 %v6483, %v6889
    %v6971 = vmul.f32 %v6484, %v6890
    %v6972 = vmul.f32 %v6485, %v6891
    %v6973 = vmul.f32 %v6486, %v6892
    %v6974 = vmul.f32 %v6487, %v6893
    %v6975 = vmul.f32 %v6488, %v6894
    %v6976 = vmul.f32 %v6489, %v6895
    %v6977 = vmul.f32 %v6490, %v6896
    %v6978 = vmul.f32 %v6491, %v6897
    %v6979 = vmul.f32 %v6492, %v6898
    %v6980 = vmul.f32 %v6493, %v6899
    %v6981 = vmul.f32 %v6494, %v6900
    %v6982 = vmul.f32 %v6495, %v6901
    %v6983 = vmul.f32 %v6496, %v6902
    %v6984 = vmul.f32 %v6497, %v6903
    %v6985 = vmul.f32 %v6498, %v6904
    %v6986 = vmul.f32 %v6499, %v6905
    %v6987 = vmul.f32 %v6500, %v6906
    %v6988 = vmul.f32 %v6501, %v6907
    %v6989 = vmul.f32 %v6502, %v6908
    %v6990 = vmul.f32 %v6503, %v6909
    %v6991 = vmul.f32 %v6504, %v6910
    %v6992 = vmul.f32 %v6505, %v6911
    %v6993 = vmul.f32 %v6506, %v6912
    %v6994 = vmul.f32 %v6507, %v6913
    %v6995 = vmul.f32 %v6508, %v6914
    %v6996 = vmul.f32 %v6509, %v6915
    %v6997 = vmul.f32 %v6510, %v6916
    %v6998 = vmul.f32 %v6511, %v6917
    %v6999 = vmul.f32 %v6512, %v6918
    %v7000 = vmul.f32 %v6513, %v6919
    %v7001 = vmul.f32 %v6514, %v6920
    %v7002 = vmul.f32 %v6515, %v6921
    %v7003 = vmul.f32 %v6516, %v6922
    %v7004 = vmul.f32 %v6517, %v6923
    %v7005 = vmul.f32 %v6518, %v6924
    %v7006 = vmul.f32 %v6519, %v6925
    %v7007 = vmul.f32 %v6520, %v6926
    %v7008 = vmul.f32 %v6521, %v6927
    %v7009 = vmul.f32 %v6522, %v6928
    %v7010 = vmul.f32 %v6523, %v6929
    %v7011 = vmul.f32 %v6524, %v6930
    %v7012 = vmul.f32 %v6525, %v6931
    %v7013 = vmul.f32 %v6526, %v6932
    %v7014 = vmul.f32 %v6527, %v6933
    %v7015 = vmul.f32 %v6528, %v6934
    %v7016 = vmul.f32 %v6529, %v6935
    %v7017 = vmul.f32 %v6530, %v6936
    %v7018 = vmul.f32 %v6531, %v6937
    %v7019 = vmul.f32 %v6532, %v6938
    %v7020 = vmul.f32 %v6533, %v6939
    %v7021 = vmul.f32 %v6534, %v6940
    %v7022 = vmul.f32 %v6535, %v6941
    %v7023 = vmul.f32 %v6536, %v6942
    %v7024 = vmul.f32 %v6537, %v6943
    %v7025 = vmul.f32 %v6538, %v6944
    %v7026 = vmul.f32 %v6539, %v6945
    %v7027 = vmul.f32 %v6540, %v6946
    %v7028 = vmul.f32 %v6541, %v6947
    %v7029 = vmul.f32 %v6542, %v6948
    %v7030 = vmul.f32 %v6543, %v6949
    %v7031 = vmul.f32 %v6544, %v6950
    %v7032 = vmul.f32 %v6545, %v6951
    %v7033 = vmul.f32 %v6546, %v6952
    %v7034 = vmul.f32 %v6547, %v6953
    %v7035 = vmul.f32 %v6548, %v6954
    %v7036 = vmul.f32 %v6549, %v6874
    %v7037 = vmul.f32 %v6550, %v6875
    %v7038 = vmul.f32 %v6551, %v6876
    %v7039 = vmul.f32 %v6552, %v6877
    %v7040 = vmul.f32 %v6553, %v6878
    %v7041 = vmul.f32 %v6554, %v6879
    %v7042 = vmul.f32 %v6555, %v6880
    %v7043 = vmul.f32 %v6556, %v6881
    %v7044 = vmul.f32 %v6557, %v6882
    %v7045 = vmul.f32 %v6558, %v6883
    %v7046 = vmul.f32 %v6559, %v6884
    %v7047 = vmul.f32 %v6560, %v6885
    %v7048 = vmul.f32 %v6561, %v6886
    %v7049 = vmul.f32 %v6562, %v6887
    %v7050 = vmul.f32 %v6563, %v6888
    %v7051 = vmul.f32 %v6564, %v6889
    %v7052 = vmul.f32 %v6565, %v6890
    %v7053 = vmul.f32 %v6566, %v6891
    %v7054 = vmul.f32 %v6567, %v6892
    %v7055 = vmul.f32 %v6568, %v6893
    %v7056 = vmul.f32 %v6569, %v6894
    %v7057 = vmul.f32 %v6570, %v6895
    %v7058 = vmul.f32 %v6571, %v6896
    %v7059 = vmul.f32 %v6572, %v6897
    %v7060 = vmul.f32 %v6573, %v6898
    %v7061 = vmul.f32 %v6574, %v6899
    %v7062 = vmul.f32 %v6575, %v6900
    %v7063 = vmul.f32 %v6576, %v6901
    %v7064 = vmul.f32 %v6577, %v6902
    %v7065 = vmul.f32 %v6578, %v6903
    %v7066 = vmul.f32 %v6579, %v6904
    %v7067 = vmul.f32 %v6580, %v6905
    %v7068 = vmul.f32 %v6581, %v6906
    %v7069 = vmul.f32 %v6582, %v6907
    %v7070 = vmul.f32 %v6583, %v6908
    %v7071 = vmul.f32 %v6584, %v6909
    %v7072 = vmul.f32 %v6585, %v6910
    %v7073 = vmul.f32 %v6586, %v6911
    %v7074 = vmul.f32 %v6587, %v6912
    %v7075 = vmul.f32 %v6588, %v6913
    %v7076 = vmul.f32 %v6589, %v6914
    %v7077 = vmul.f32 %v6590, %v6915
    %v7078 = vmul.f32 %v6591, %v6916
    %v7079 = vmul.f32 %v6592, %v6917
    %v7080 = vmul.f32 %v6593, %v6918
    %v7081 = vmul.f32 %v6594, %v6919
    %v7082 = vmul.f32 %v6595, %v6920
    %v7083 = vmul.f32 %v6596, %v6921
    %v7084 = vmul.f32 %v6597, %v6922
    %v7085 = vmul.f32 %v6598, %v6923
    %v7086 = vmul.f32 %v6599, %v6924
    %v7087 = vmul.f32 %v6600, %v6925
    %v7088 = vmul.f32 %v6601, %v6926
    %v7089 = vmul.f32 %v6602, %v6927
    %v7090 = vmul.f32 %v6603, %v6928
    %v7091 = vmul.f32 %v6604, %v6929
    %v7092 = vmul.f32 %v6605, %v6930
    %v7093 = vmul.f32 %v6606, %v6931
    %v7094 = vmul.f32 %v6607, %v6932
    %v7095 = vmul.f32 %v6608, %v6933
    %v7096 = vmul.f32 %v6609, %v6934
    %v7097 = vmul.f32 %v6610, %v6935
    %v7098 = vmul.f32 %v6611, %v6936
    %v7099 = vmul.f32 %v6612, %v6937
    %v7100 = vmul.f32 %v6613, %v6938
    %v7101 = vmul.f32 %v6614, %v6939
    %v7102 = vmul.f32 %v6615, %v6940
    %v7103 = vmul.f32 %v6616, %v6941
    %v7104 = vmul.f32 %v6617, %v6942
    %v7105 = vmul.f32 %v6618, %v6943
    %v7106 = vmul.f32 %v6619, %v6944
    %v7107 = vmul.f32 %v6620, %v6945
    %v7108 = vmul.f32 %v6621, %v6946
    %v7109 = vmul.f32 %v6622, %v6947
    %v7110 = vmul.f32 %v6623, %v6948
    %v7111 = vmul.f32 %v6624, %v6949
    %v7112 = vmul.f32 %v6625, %v6950
    %v7113 = vmul.f32 %v6626, %v6951
    %v7114 = vmul.f32 %v6627, %v6952
    %v7115 = vmul.f32 %v6628, %v6953
    %v7116 = vmul.f32 %v6629, %v6954
    %v7117 = vadd.f32 %v6955, %v6956
    %v7118 = vadd.f32 %v7117, %v6957
    %v7119 = vadd.f32 %v7118, %v6958
    %v7120 = vadd.f32 %v7119, %v6959
    %v7121 = vadd.f32 %v7120, %v6960
    %v7122 = vadd.f32 %v7121, %v6961
    %v7123 = vadd.f32 %v7122, %v6962
    %v7124 = vadd.f32 %v7123, %v6963
    %v7125 = vadd.f32 %v7124, %v6964
    %v7126 = vadd.f32 %v7125, %v6965
    %v7127 = vadd.f32 %v7126, %v6966
    %v7128 = vadd.f32 %v7127, %v6967
    %v7129 = vadd.f32 %v7128, %v6968
    %v7130 = vadd.f32 %v7129, %v6969
    %v7131 = vadd.f32 %v7130, %v6970
    %v7132 = vadd.f32 %v7131, %v6971
    %v7133 = vadd.f32 %v7132, %v6972
    %v7134 = vadd.f32 %v7133, %v6973
    %v7135 = vadd.f32 %v7134, %v6974
    %v7136 = vadd.f32 %v7135, %v6975
    %v7137 = vadd.f32 %v7136, %v6976
    %v7138 = vadd.f32 %v7137, %v6977
    %v7139 = vadd.f32 %v7138, %v6978
    %v7140 = vadd.f32 %v7139, %v6979
    %v7141 = vadd.f32 %v7140, %v6980
    %v7142 = vadd.f32 %v7141, %v6981
    %v7143 = vadd.f32 %v7142, %v6982
    %v7144 = vadd.f32 %v7143, %v6983
    %v7145 = vadd.f32 %v7144, %v6984
    %v7146 = vadd.f32 %v7145, %v6985
    %v7147 = vadd.f32 %v7146, %v6986
    %v7148 = vadd.f32 %v7147, %v6987
    %v7149 = vadd.f32 %v7148, %v6988
    %v7150 = vadd.f32 %v7149, %v6989
    %v7151 = vadd.f32 %v7150, %v6990
    %v7152 = vadd.f32 %v7151, %v6991
    %v7153 = vadd.f32 %v7152, %v6992
    %v7154 = vadd.f32 %v7153, %v6993
    %v7155 = vadd.f32 %v7154, %v6994
    %v7156 = vadd.f32 %v7155, %v6995
    %v7157 = vadd.f32 %v7156, %v6996
    %v7158 = vadd.f32 %v7157, %v6997
    %v7159 = vadd.f32 %v7158, %v6998
    %v7160 = vadd.f32 %v7159, %v6999
    %v7161 = vadd.f32 %v7160, %v7000
    %v7162 = vadd.f32 %v7161, %v7001
    %v7163 = vadd.f32 %v7162, %v7002
    %v7164 = vadd.f32 %v7163, %v7003
    %v7165 = vadd.f32 %v7164, %v7004
    %v7166 = vadd.f32 %v7165, %v7005
    %v7167 = vadd.f32 %v7166, %v7006
    %v7168 = vadd.f32 %v7167, %v7007
    %v7169 = vadd.f32 %v7168, %v7008
    %v7170 = vadd.f32 %v7169, %v7009
    %v7171 = vadd.f32 %v7170, %v7010
    %v7172 = vadd.f32 %v7171, %v7011
    %v7173 = vadd.f32 %v7172, %v7012
    %v7174 = vadd.f32 %v7173, %v7013
    %v7175 = vadd.f32 %v7174, %v7014
    %v7176 = vadd.f32 %v7175, %v7015
    %v7177 = vadd.f32 %v7176, %v7016
    %v7178 = vadd.f32 %v7177, %v7017
    %v7179 = vadd.f32 %v7178, %v7018
    %v7180 = vadd.f32 %v7179, %v7019
    %v7181 = vadd.f32 %v7180, %v7020
    %v7182 = vadd.f32 %v7181, %v7021
    %v7183 = vadd.f32 %v7182, %v7022
    %v7184 = vadd.f32 %v7183, %v7023
    %v7185 = vadd.f32 %v7184, %v7024
    %v7186 = vadd.f32 %v7185, %v7025
    %v7187 = vadd.f32 %v7186, %v7026
    %v7188 = vadd.f32 %v7187, %v7027
    %v7189 = vadd.f32 %v7188, %v7028
    %v7190 = vadd.f32 %v7189, %v7029
    %v7191 = vadd.f32 %v7190, %v7030
    %v7192 = vadd.f32 %v7191, %v7031
    %v7193 = vadd.f32 %v7192, %v7032
    %v7194 = vadd.f32 %v7193, %v7033
    %v7195 = vadd.f32 %v7194, %v7034
    %v7196 = vadd.f32 %v7195, %v7035
    %v7197 = vrot.slane %v7196, 4
    %v7198 = vadd.f32 %v7196, %v7197
    %v7199 = vrot.slane %v7198, 2
    %v7200 = vadd.f32 %v7198, %v7199
    %v7201 = vrot.slane %v7200, 1
    %v7202 = vadd.f32 %v7200, %v7201
    %v7203 = vadd.f32 %v7036, %v7037
    %v7204 = vadd.f32 %v7203, %v7038
    %v7205 = vadd.f32 %v7204, %v7039
    %v7206 = vadd.f32 %v7205, %v7040
    %v7207 = vadd.f32 %v7206, %v7041
    %v7208 = vadd.f32 %v7207, %v7042
    %v7209 = vadd.f32 %v7208, %v7043
    %v7210 = vadd.f32 %v7209, %v7044
    %v7211 = vadd.f32 %v7210, %v7045
    %v7212 = vadd.f32 %v7211, %v7046
    %v7213 = vadd.f32 %v7212, %v7047
    %v7214 = vadd.f32 %v7213, %v7048
    %v7215 = vadd.f32 %v7214, %v7049
    %v7216 = vadd.f32 %v7215, %v7050
    %v7217 = vadd.f32 %v7216, %v7051
    %v7218 = vadd.f32 %v7217, %v7052
    %v7219 = vadd.f32 %v7218, %v7053
    %v7220 = vadd.f32 %v7219, %v7054
    %v7221 = vadd.f32 %v7220, %v7055
    %v7222 = vadd.f32 %v7221, %v7056
    %v7223 = vadd.f32 %v7222, %v7057
    %v7224 = vadd.f32 %v7223, %v7058
    %v7225 = vadd.f32 %v7224, %v7059
    %v7226 = vadd.f32 %v7225, %v7060
    %v7227 = vadd.f32 %v7226, %v7061
    %v7228 = vadd.f32 %v7227, %v7062
    %v7229 = vadd.f32 %v7228, %v7063
    %v7230 = vadd.f32 %v7229, %v7064
    %v7231 = vadd.f32 %v7230, %v7065
    %v7232 = vadd.f32 %v7231, %v7066
    %v7233 = vadd.f32 %v7232, %v7067
    %v7234 = vadd.f32 %v7233, %v7068
    %v7235 = vadd.f32 %v7234, %v7069
    %v7236 = vadd.f32 %v7235, %v7070
    %v7237 = vadd.f32 %v7236, %v7071
    %v7238 = vadd.f32 %v7237, %v7072
    %v7239 = vadd.f32 %v7238, %v7073
    %v7240 = vadd.f32 %v7239, %v7074
    %v7241 = vadd.f32 %v7240, %v7075
    %v7242 = vadd.f32 %v7241, %v7076
    %v7243 = vadd.f32 %v7242, %v7077
    %v7244 = vadd.f32 %v7243, %v7078
    %v7245 = vadd.f32 %v7244, %v7079
    %v7246 = vadd.f32 %v7245, %v7080
    %v7247 = vadd.f32 %v7246, %v7081
    %v7248 = vadd.f32 %v7247, %v7082
    %v7249 = vadd.f32 %v7248, %v7083
    %v7250 = vadd.f32 %v7249, %v7084
    %v7251 = vadd.f32 %v7250, %v7085
    %v7252 = vadd.f32 %v7251, %v7086
    %v7253 = vadd.f32 %v7252, %v7087
    %v7254 = vadd.f32 %v7253, %v7088
    %v7255 = vadd.f32 %v7254, %v7089
    %v7256 = vadd.f32 %v7255, %v7090
    %v7257 = vadd.f32 %v7256, %v7091
    %v7258 = vadd.f32 %v7257, %v7092
    %v7259 = vadd.f32 %v7258, %v7093
    %v7260 = vadd.f32 %v7259, %v7094
    %v7261 = vadd.f32 %v7260, %v7095
    %v7262 = vadd.f32 %v7261, %v7096
    %v7263 = vadd.f32 %v7262, %v7097
    %v7264 = vadd.f32 %v7263, %v7098
    %v7265 = vadd.f32 %v7264, %v7099
    %v7266 = vadd.f32 %v7265, %v7100
    %v7267 = vadd.f32 %v7266, %v7101
    %v7268 = vadd.f32 %v7267, %v7102
    %v7269 = vadd.f32 %v7268, %v7103
    %v7270 = vadd.f32 %v7269, %v7104
    %v7271 = vadd.f32 %v7270, %v7105
    %v7272 = vadd.f32 %v7271, %v7106
    %v7273 = vadd.f32 %v7272, %v7107
    %v7274 = vadd.f32 %v7273, %v7108
    %v7275 = vadd.f32 %v7274, %v7109
    %v7276 = vadd.f32 %v7275, %v7110
    %v7277 = vadd.f32 %v7276, %v7111
    %v7278 = vadd.f32 %v7277, %v7112
    %v7279 = vadd.f32 %v7278, %v7113
    %v7280 = vadd.f32 %v7279, %v7114
    %v7281 = vadd.f32 %v7280, %v7115
    %v7282 = vadd.f32 %v7281, %v7116
    %v7283 = vrot.slane %v7282, 4
    %v7284 = vadd.f32 %v7282, %v7283
    %v7285 = vrot.slane %v7284, 2
    %v7286 = vadd.f32 %v7284, %v7285
    %v7287 = vrot.slane %v7286, 1
    %v7288 = vadd.f32 %v7286, %v7287
    %v7289 = vmul.f32 %v7202, 0.0015576323
    %v7290 = vmul.f32 %v7288, 0.0015576323
    %v7291 = vsub.f32 %v6468, %v7289
    %v7292 = vsub.f32 %v6469, %v7289
    %v7293 = vsub.f32 %v6470, %v7289
    %v7294 = vsub.f32 %v6471, %v7289
    %v7295 = vsub.f32 %v6472, %v7289
    %v7296 = vsub.f32 %v6473, %v7289
    %v7297 = vsub.f32 %v6474, %v7289
    %v7298 = vsub.f32 %v6475, %v7289
    %v7299 = vsub.f32 %v6476, %v7289
    %v7300 = vsub.f32 %v6477, %v7289
    %v7301 = vsub.f32 %v6478, %v7289
    %v7302 = vsub.f32 %v6479, %v7289
    %v7303 = vsub.f32 %v6480, %v7289
    %v7304 = vsub.f32 %v6481, %v7289
    %v7305 = vsub.f32 %v6482, %v7289
    %v7306 = vsub.f32 %v6483, %v7289
    %v7307 = vsub.f32 %v6484, %v7289
    %v7308 = vsub.f32 %v6485, %v7289
    %v7309 = vsub.f32 %v6486, %v7289
    %v7310 = vsub.f32 %v6487, %v7289
    %v7311 = vsub.f32 %v6488, %v7289
    %v7312 = vsub.f32 %v6489, %v7289
    %v7313 = vsub.f32 %v6490, %v7289
    %v7314 = vsub.f32 %v6491, %v7289
    %v7315 = vsub.f32 %v6492, %v7289
    %v7316 = vsub.f32 %v6493, %v7289
    %v7317 = vsub.f32 %v6494, %v7289
    %v7318 = vsub.f32 %v6495, %v7289
    %v7319 = vsub.f32 %v6496, %v7289
    %v7320 = vsub.f32 %v6497, %v7289
    %v7321 = vsub.f32 %v6498, %v7289
    %v7322 = vsub.f32 %v6499, %v7289
    %v7323 = vsub.f32 %v6500, %v7289
    %v7324 = vsub.f32 %v6501, %v7289
    %v7325 = vsub.f32 %v6502, %v7289
    %v7326 = vsub.f32 %v6503, %v7289
    %v7327 = vsub.f32 %v6504, %v7289
    %v7328 = vsub.f32 %v6505, %v7289
    %v7329 = vsub.f32 %v6506, %v7289
    %v7330 = vsub.f32 %v6507, %v7289
    %v7331 = vsub.f32 %v6508, %v7289
    %v7332 = vsub.f32 %v6509, %v7289
    %v7333 = vsub.f32 %v6510, %v7289
    %v7334 = vsub.f32 %v6511, %v7289
    %v7335 = vsub.f32 %v6512, %v7289
    %v7336 = vsub.f32 %v6513, %v7289
    %v7337 = vsub.f32 %v6514, %v7289
    %v7338 = vsub.f32 %v6515, %v7289
    %v7339 = vsub.f32 %v6516, %v7289
    %v7340 = vsub.f32 %v6517, %v7289
    %v7341 = vsub.f32 %v6518, %v7289
    %v7342 = vsub.f32 %v6519, %v7289
    %v7343 = vsub.f32 %v6520, %v7289
    %v7344 = vsub.f32 %v6521, %v7289
    %v7345 = vsub.f32 %v6522, %v7289
    %v7346 = vsub.f32 %v6523, %v7289
    %v7347 = vsub.f32 %v6524, %v7289
    %v7348 = vsub.f32 %v6525, %v7289
    %v7349 = vsub.f32 %v6526, %v7289
    %v7350 = vsub.f32 %v6527, %v7289
    %v7351 = vsub.f32 %v6528, %v7289
    %v7352 = vsub.f32 %v6529, %v7289
    %v7353 = vsub.f32 %v6530, %v7289
    %v7354 = vsub.f32 %v6531, %v7289
    %v7355 = vsub.f32 %v6532, %v7289
    %v7356 = vsub.f32 %v6533, %v7289
    %v7357 = vsub.f32 %v6534, %v7289
    %v7358 = vsub.f32 %v6535, %v7289
    %v7359 = vsub.f32 %v6536, %v7289
    %v7360 = vsub.f32 %v6537, %v7289
    %v7361 = vsub.f32 %v6538, %v7289
    %v7362 = vsub.f32 %v6539, %v7289
    %v7363 = vsub.f32 %v6540, %v7289
    %v7364 = vsub.f32 %v6541, %v7289
    %v7365 = vsub.f32 %v6542, %v7289
    %v7366 = vsub.f32 %v6543, %v7289
    %v7367 = vsub.f32 %v6544, %v7289
    %v7368 = vsub.f32 %v6545, %v7289
    %v7369 = vsub.f32 %v6546, %v7289
    %v7370 = vsub.f32 %v6547, %v7289
    %v7371 = vsub.f32 %v6548, %v7289
    %v7372 = vsub.f32 %v6549, %v7290
    %v7373 = vsub.f32 %v6550, %v7290
    %v7374 = vsub.f32 %v6551, %v7290
    %v7375 = vsub.f32 %v6552, %v7290
    %v7376 = vsub.f32 %v6553, %v7290
    %v7377 = vsub.f32 %v6554, %v7290
    %v7378 = vsub.f32 %v6555, %v7290
    %v7379 = vsub.f32 %v6556, %v7290
    %v7380 = vsub.f32 %v6557, %v7290
    %v7381 = vsub.f32 %v6558, %v7290
    %v7382 = vsub.f32 %v6559, %v7290
    %v7383 = vsub.f32 %v6560, %v7290
    %v7384 = vsub.f32 %v6561, %v7290
    %v7385 = vsub.f32 %v6562, %v7290
    %v7386 = vsub.f32 %v6563, %v7290
    %v7387 = vsub.f32 %v6564, %v7290
    %v7388 = vsub.f32 %v6565, %v7290
    %v7389 = vsub.f32 %v6566, %v7290
    %v7390 = vsub.f32 %v6567, %v7290
    %v7391 = vsub.f32 %v6568, %v7290
    %v7392 = vsub.f32 %v6569, %v7290
    %v7393 = vsub.f32 %v6570, %v7290
    %v7394 = vsub.f32 %v6571, %v7290
    %v7395 = vsub.f32 %v6572, %v7290
    %v7396 = vsub.f32 %v6573, %v7290
    %v7397 = vsub.f32 %v6574, %v7290
    %v7398 = vsub.f32 %v6575, %v7290
    %v7399 = vsub.f32 %v6576, %v7290
    %v7400 = vsub.f32 %v6577, %v7290
    %v7401 = vsub.f32 %v6578, %v7290
    %v7402 = vsub.f32 %v6579, %v7290
    %v7403 = vsub.f32 %v6580, %v7290
    %v7404 = vsub.f32 %v6581, %v7290
    %v7405 = vsub.f32 %v6582, %v7290
    %v7406 = vsub.f32 %v6583, %v7290
    %v7407 = vsub.f32 %v6584, %v7290
    %v7408 = vsub.f32 %v6585, %v7290
    %v7409 = vsub.f32 %v6586, %v7290
    %v7410 = vsub.f32 %v6587, %v7290
    %v7411 = vsub.f32 %v6588, %v7290
    %v7412 = vsub.f32 %v6589, %v7290
    %v7413 = vsub.f32 %v6590, %v7290
    %v7414 = vsub.f32 %v6591, %v7290
    %v7415 = vsub.f32 %v6592, %v7290
    %v7416 = vsub.f32 %v6593, %v7290
    %v7417 = vsub.f32 %v6594, %v7290
    %v7418 = vsub.f32 %v6595, %v7290
    %v7419 = vsub.f32 %v6596, %v7290
    %v7420 = vsub.f32 %v6597, %v7290
    %v7421 = vsub.f32 %v6598, %v7290
    %v7422 = vsub.f32 %v6599, %v7290
    %v7423 = vsub.f32 %v6600, %v7290
    %v7424 = vsub.f32 %v6601, %v7290
    %v7425 = vsub.f32 %v6602, %v7290
    %v7426 = vsub.f32 %v6603, %v7290
    %v7427 = vsub.f32 %v6604, %v7290
    %v7428 = vsub.f32 %v6605, %v7290
    %v7429 = vsub.f32 %v6606, %v7290
    %v7430 = vsub.f32 %v6607, %v7290
    %v7431 = vsub.f32 %v6608, %v7290
    %v7432 = vsub.f32 %v6609, %v7290
    %v7433 = vsub.f32 %v6610, %v7290
    %v7434 = vsub.f32 %v6611, %v7290
    %v7435 = vsub.f32 %v6612, %v7290
    %v7436 = vsub.f32 %v6613, %v7290
    %v7437 = vsub.f32 %v6614, %v7290
    %v7438 = vsub.f32 %v6615, %v7290
    %v7439 = vsub.f32 %v6616, %v7290
    %v7440 = vsub.f32 %v6617, %v7290
    %v7441 = vsub.f32 %v6618, %v7290
    %v7442 = vsub.f32 %v6619, %v7290
    %v7443 = vsub.f32 %v6620, %v7290
    %v7444 = vsub.f32 %v6621, %v7290
    %v7445 = vsub.f32 %v6622, %v7290
    %v7446 = vsub.f32 %v6623, %v7290
    %v7447 = vsub.f32 %v6624, %v7290
    %v7448 = vsub.f32 %v6625, %v7290
    %v7449 = vsub.f32 %v6626, %v7290
    %v7450 = vsub.f32 %v6627, %v7290
    %v7451 = vsub.f32 %v6628, %v7290
    %v7452 = vsub.f32 %v6629, %v7290
    %v7454 = vunpack.c.l.s4 1966171168
    %v7455 = vunpack.c.0.s8 %v7454
    %v7456 = vlaneseq
    %v7457 = vshrl.u32 %v7456, 7
    %v7458 = vsub.s32 %v7455, %v7457
    %v7459 = vrot.slane %v4071, %v7458
    %v7460 = vcombine.high %v7459, %v7459
    %v7462 = vunpack.c.l.s4 1966171168
    %v7463 = vunpack.c.0.s8 %v7462
    %v7464 = vlaneseq
    %v7465 = vshrl.u32 %v7464, 7
    %v7466 = vsub.s32 %v7463, %v7465
    %v7467 = vrot.slane %v7459, %v7466
    %v7469 = vunpack.c.l.s4 1966171168
    %v7470 = vunpack.c.0.s8 %v7469
    %v7471 = vlaneseq
    %v7472 = vshrl.u32 %v7471, 7
    %v7473 = vsub.s32 %v7470, %v7472
    %v7474 = vrot.slane %v7460, %v7473
    %v7475 = vcombine.high %v7467, %v7467
    %v7476 = vcombine.high %v7474, %v7474
    %v7477 = vlaneseq
    %v7478 = vshrl.u32 %v7477, 7
    %v7479 = vsub.s32 0, %v7478
    %v7480 = vrot.slane %v7475, %v7479
    %v7481 = vlaneseq
    %v7482 = vshrl.u32 %v7481, 7
    %v7483 = vsub.s32 0, %v7482
    %v7484 = vrot.slane %v7476, %v7483
    %7485 = vset.pattern.permute.xlu0 3
    %7486 = vperm.xlu0 %7485, %v7480
    %v7487 = vpop.permute.xlu0 %7486
    %7489 = vset.pattern.permute.xlu0 3
    %7490 = vperm.xlu0 %7489, %v7484
    %v7491 = vpop.permute.xlu0 %7490
    %v7493 = vmul.f32 %v7291, %v7487
    %v7494 = vmul.f32 %v7292, %v7487
    %v7495 = vmul.f32 %v7293, %v7487
    %v7496 = vmul.f32 %v7294, %v7487
    %v7497 = vmul.f32 %v7295, %v7487
    %v7498 = vmul.f32 %v7296, %v7487
    %v7499 = vmul.f32 %v7297, %v7487
    %v7500 = vmul.f32 %v7298, %v7487
    %v7501 = vmul.f32 %v7299, %v7487
    %v7502 = vmul.f32 %v7300, %v7487
    %v7503 = vmul.f32 %v7301, %v7487
    %v7504 = vmul.f32 %v7302, %v7487
    %v7505 = vmul.f32 %v7303, %v7487
    %v7506 = vmul.f32 %v7304, %v7487
    %v7507 = vmul.f32 %v7305, %v7487
    %v7508 = vmul.f32 %v7306, %v7487
    %v7509 = vmul.f32 %v7307, %v7487
    %v7510 = vmul.f32 %v7308, %v7487
    %v7511 = vmul.f32 %v7309, %v7487
    %v7512 = vmul.f32 %v7310, %v7487
    %v7513 = vmul.f32 %v7311, %v7487
    %v7514 = vmul.f32 %v7312, %v7487
    %v7515 = vmul.f32 %v7313, %v7487
    %v7516 = vmul.f32 %v7314, %v7487
    %v7517 = vmul.f32 %v7315, %v7487
    %v7518 = vmul.f32 %v7316, %v7487
    %v7519 = vmul.f32 %v7317, %v7487
    %v7520 = vmul.f32 %v7318, %v7487
    %v7521 = vmul.f32 %v7319, %v7487
    %v7522 = vmul.f32 %v7320, %v7487
    %v7523 = vmul.f32 %v7321, %v7487
    %v7524 = vmul.f32 %v7322, %v7487
    %v7525 = vmul.f32 %v7323, %v7487
    %v7526 = vmul.f32 %v7324, %v7487
    %v7527 = vmul.f32 %v7325, %v7487
    %v7528 = vmul.f32 %v7326, %v7487
    %v7529 = vmul.f32 %v7327, %v7487
    %v7530 = vmul.f32 %v7328, %v7487
    %v7531 = vmul.f32 %v7329, %v7487
    %v7532 = vmul.f32 %v7330, %v7487
    %v7533 = vmul.f32 %v7331, %v7487
    %v7534 = vmul.f32 %v7332, %v7487
    %v7535 = vmul.f32 %v7333, %v7487
    %v7536 = vmul.f32 %v7334, %v7487
    %v7537 = vmul.f32 %v7335, %v7487
    %v7538 = vmul.f32 %v7336, %v7487
    %v7539 = vmul.f32 %v7337, %v7487
    %v7540 = vmul.f32 %v7338, %v7487
    %v7541 = vmul.f32 %v7339, %v7487
    %v7542 = vmul.f32 %v7340, %v7487
    %v7543 = vmul.f32 %v7341, %v7487
    %v7544 = vmul.f32 %v7342, %v7487
    %v7545 = vmul.f32 %v7343, %v7487
    %v7546 = vmul.f32 %v7344, %v7487
    %v7547 = vmul.f32 %v7345, %v7487
    %v7548 = vmul.f32 %v7346, %v7487
    %v7549 = vmul.f32 %v7347, %v7487
    %v7550 = vmul.f32 %v7348, %v7487
    %v7551 = vmul.f32 %v7349, %v7487
    %v7552 = vmul.f32 %v7350, %v7487
    %v7553 = vmul.f32 %v7351, %v7487
    %v7554 = vmul.f32 %v7352, %v7487
    %v7555 = vmul.f32 %v7353, %v7487
    %v7556 = vmul.f32 %v7354, %v7487
    %v7557 = vmul.f32 %v7355, %v7487
    %v7558 = vmul.f32 %v7356, %v7487
    %v7559 = vmul.f32 %v7357, %v7487
    %v7560 = vmul.f32 %v7358, %v7487
    %v7561 = vmul.f32 %v7359, %v7487
    %v7562 = vmul.f32 %v7360, %v7487
    %v7563 = vmul.f32 %v7361, %v7487
    %v7564 = vmul.f32 %v7362, %v7487
    %v7565 = vmul.f32 %v7363, %v7487
    %v7566 = vmul.f32 %v7364, %v7487
    %v7567 = vmul.f32 %v7365, %v7487
    %v7568 = vmul.f32 %v7366, %v7487
    %v7569 = vmul.f32 %v7367, %v7487
    %v7570 = vmul.f32 %v7368, %v7487
    %v7571 = vmul.f32 %v7369, %v7487
    %v7572 = vmul.f32 %v7370, %v7487
    %v7573 = vmul.f32 %v7371, %v7487
    %v7574 = vmul.f32 %v7372, %v7491
    %v7575 = vmul.f32 %v7373, %v7491
    %v7576 = vmul.f32 %v7374, %v7491
    %v7577 = vmul.f32 %v7375, %v7491
    %v7578 = vmul.f32 %v7376, %v7491
    %v7579 = vmul.f32 %v7377, %v7491
    %v7580 = vmul.f32 %v7378, %v7491
    %v7581 = vmul.f32 %v7379, %v7491
    %v7582 = vmul.f32 %v7380, %v7491
    %v7583 = vmul.f32 %v7381, %v7491
    %v7584 = vmul.f32 %v7382, %v7491
    %v7585 = vmul.f32 %v7383, %v7491
    %v7586 = vmul.f32 %v7384, %v7491
    %v7587 = vmul.f32 %v7385, %v7491
    %v7588 = vmul.f32 %v7386, %v7491
    %v7589 = vmul.f32 %v7387, %v7491
    %v7590 = vmul.f32 %v7388, %v7491
    %v7591 = vmul.f32 %v7389, %v7491
    %v7592 = vmul.f32 %v7390, %v7491
    %v7593 = vmul.f32 %v7391, %v7491
    %v7594 = vmul.f32 %v7392, %v7491
    %v7595 = vmul.f32 %v7393, %v7491
    %v7596 = vmul.f32 %v7394, %v7491
    %v7597 = vmul.f32 %v7395, %v7491
    %v7598 = vmul.f32 %v7396, %v7491
    %v7599 = vmul.f32 %v7397, %v7491
    %v7600 = vmul.f32 %v7398, %v7491
    %v7601 = vmul.f32 %v7399, %v7491
    %v7602 = vmul.f32 %v7400, %v7491
    %v7603 = vmul.f32 %v7401, %v7491
    %v7604 = vmul.f32 %v7402, %v7491
    %v7605 = vmul.f32 %v7403, %v7491
    %v7606 = vmul.f32 %v7404, %v7491
    %v7607 = vmul.f32 %v7405, %v7491
    %v7608 = vmul.f32 %v7406, %v7491
    %v7609 = vmul.f32 %v7407, %v7491
    %v7610 = vmul.f32 %v7408, %v7491
    %v7611 = vmul.f32 %v7409, %v7491
    %v7612 = vmul.f32 %v7410, %v7491
    %v7613 = vmul.f32 %v7411, %v7491
    %v7614 = vmul.f32 %v7412, %v7491
    %v7615 = vmul.f32 %v7413, %v7491
    %v7616 = vmul.f32 %v7414, %v7491
    %v7617 = vmul.f32 %v7415, %v7491
    %v7618 = vmul.f32 %v7416, %v7491
    %v7619 = vmul.f32 %v7417, %v7491
    %v7620 = vmul.f32 %v7418, %v7491
    %v7621 = vmul.f32 %v7419, %v7491
    %v7622 = vmul.f32 %v7420, %v7491
    %v7623 = vmul.f32 %v7421, %v7491
    %v7624 = vmul.f32 %v7422, %v7491
    %v7625 = vmul.f32 %v7423, %v7491
    %v7626 = vmul.f32 %v7424, %v7491
    %v7627 = vmul.f32 %v7425, %v7491
    %v7628 = vmul.f32 %v7426, %v7491
    %v7629 = vmul.f32 %v7427, %v7491
    %v7630 = vmul.f32 %v7428, %v7491
    %v7631 = vmul.f32 %v7429, %v7491
    %v7632 = vmul.f32 %v7430, %v7491
    %v7633 = vmul.f32 %v7431, %v7491
    %v7634 = vmul.f32 %v7432, %v7491
    %v7635 = vmul.f32 %v7433, %v7491
    %v7636 = vmul.f32 %v7434, %v7491
    %v7637 = vmul.f32 %v7435, %v7491
    %v7638 = vmul.f32 %v7436, %v7491
    %v7639 = vmul.f32 %v7437, %v7491
    %v7640 = vmul.f32 %v7438, %v7491
    %v7641 = vmul.f32 %v7439, %v7491
    %v7642 = vmul.f32 %v7440, %v7491
    %v7643 = vmul.f32 %v7441, %v7491
    %v7644 = vmul.f32 %v7442, %v7491
    %v7645 = vmul.f32 %v7443, %v7491
    %v7646 = vmul.f32 %v7444, %v7491
    %v7647 = vmul.f32 %v7445, %v7491
    %v7648 = vmul.f32 %v7446, %v7491
    %v7649 = vmul.f32 %v7447, %v7491
    %v7650 = vmul.f32 %v7448, %v7491
    %v7651 = vmul.f32 %v7449, %v7491
    %v7652 = vmul.f32 %v7450, %v7491
    %v7653 = vmul.f32 %v7451, %v7491
    %v7654 = vmul.f32 %v7452, %v7491
    %7655 = vst [vmem:[%s8] sm:$0xff] %v7493
    %7656 = vst [vmem:[%s8 + $0x8] sm:$0xff] %v7494
    %7657 = vst [vmem:[%s8 + $0x10] sm:$0xff] %v7495
    %7658 = vst [vmem:[%s8 + $0x18] sm:$0xff] %v7496
    %7659 = vst [vmem:[%s8 + $0x20] sm:$0xff] %v7497
    %7660 = vst [vmem:[%s8 + $0x28] sm:$0xff] %v7498
    %7661 = vst [vmem:[%s8 + $0x30] sm:$0xff] %v7499
    %7662 = vst [vmem:[%s8 + $0x38] sm:$0xff] %v7500
    %7663 = vst [vmem:[%s8 + $0x40] sm:$0xff] %v7501
    %7664 = vst [vmem:[%s8 + $0x48] sm:$0xff] %v7502
    %7665 = vst [vmem:[%s8 + $0x50] sm:$0xff] %v7503
    %7666 = vst [vmem:[%s8 + $0x58] sm:$0xff] %v7504
    %7667 = vst [vmem:[%s8 + $0x60] sm:$0xff] %v7505
    %7668 = vst [vmem:[%s8 + $0x68] sm:$0xff] %v7506
    %7669 = vst [vmem:[%s8 + $0x70] sm:$0xff] %v7507
    %7670 = vst [vmem:[%s8 + $0x78] sm:$0xff] %v7508
    %7671 = vst [vmem:[%s8 + $0x80] sm:$0xff] %v7509
    %7672 = vst [vmem:[%s8 + $0x88] sm:$0xff] %v7510
    %7673 = vst [vmem:[%s8 + $0x90] sm:$0xff] %v7511
    %7674 = vst [vmem:[%s8 + $0x98] sm:$0xff] %v7512
    %7675 = vst [vmem:[%s8 + $0xa0] sm:$0xff] %v7513
    %7676 = vst [vmem:[%s8 + $0xa8] sm:$0xff] %v7514
    %7677 = vst [vmem:[%s8 + $0xb0] sm:$0xff] %v7515
    %7678 = vst [vmem:[%s8 + $0xb8] sm:$0xff] %v7516
    %7679 = vst [vmem:[%s8 + $0xc0] sm:$0xff] %v7517
    %7680 = vst [vmem:[%s8 + $0xc8] sm:$0xff] %v7518
    %7681 = vst [vmem:[%s8 + $0xd0] sm:$0xff] %v7519
    %7682 = vst [vmem:[%s8 + $0xd8] sm:$0xff] %v7520
    %7683 = vst [vmem:[%s8 + $0xe0] sm:$0xff] %v7521
    %7684 = vst [vmem:[%s8 + $0xe8] sm:$0xff] %v7522
    %7685 = vst [vmem:[%s8 + $0xf0] sm:$0xff] %v7523
    %7686 = vst [vmem:[%s8 + $0xf8] sm:$0xff] %v7524
    %7687 = vst [vmem:[%s8 + $0x100] sm:$0xff] %v7525
    %7688 = vst [vmem:[%s8 + $0x108] sm:$0xff] %v7526
    %7689 = vst [vmem:[%s8 + $0x110] sm:$0xff] %v7527
    %7690 = vst [vmem:[%s8 + $0x118] sm:$0xff] %v7528
    %7691 = vst [vmem:[%s8 + $0x120] sm:$0xff] %v7529
    %7692 = vst [vmem:[%s8 + $0x128] sm:$0xff] %v7530
    %7693 = vst [vmem:[%s8 + $0x130] sm:$0xff] %v7531
    %7694 = vst [vmem:[%s8 + $0x138] sm:$0xff] %v7532
    %7695 = vst [vmem:[%s8 + $0x140] sm:$0xff] %v7533
    %7696 = vst [vmem:[%s8 + $0x148] sm:$0xff] %v7534
    %7697 = vst [vmem:[%s8 + $0x150] sm:$0xff] %v7535
    %7698 = vst [vmem:[%s8 + $0x158] sm:$0xff] %v7536
    %7699 = vst [vmem:[%s8 + $0x160] sm:$0xff] %v7537
    %7700 = vst [vmem:[%s8 + $0x168] sm:$0xff] %v7538
    %7701 = vst [vmem:[%s8 + $0x170] sm:$0xff] %v7539
    %7702 = vst [vmem:[%s8 + $0x178] sm:$0xff] %v7540
    %7703 = vst [vmem:[%s8 + $0x180] sm:$0xff] %v7541
    %7704 = vst [vmem:[%s8 + $0x188] sm:$0xff] %v7542
    %7705 = vst [vmem:[%s8 + $0x190] sm:$0xff] %v7543
    %7706 = vst [vmem:[%s8 + $0x198] sm:$0xff] %v7544
    %7707 = vst [vmem:[%s8 + $0x1a0] sm:$0xff] %v7545
    %7708 = vst [vmem:[%s8 + $0x1a8] sm:$0xff] %v7546
    %7709 = vst [vmem:[%s8 + $0x1b0] sm:$0xff] %v7547
    %7710 = vst [vmem:[%s8 + $0x1b8] sm:$0xff] %v7548
    %7711 = vst [vmem:[%s8 + $0x1c0] sm:$0xff] %v7549
    %7712 = vst [vmem:[%s8 + $0x1c8] sm:$0xff] %v7550
    %7713 = vst [vmem:[%s8 + $0x1d0] sm:$0xff] %v7551
    %7714 = vst [vmem:[%s8 + $0x1d8] sm:$0xff] %v7552
    %7715 = vst [vmem:[%s8 + $0x1e0] sm:$0xff] %v7553
    %7716 = vst [vmem:[%s8 + $0x1e8] sm:$0xff] %v7554
    %7717 = vst [vmem:[%s8 + $0x1f0] sm:$0xff] %v7555
    %7718 = vst [vmem:[%s8 + $0x1f8] sm:$0xff] %v7556
    %7719 = vst [vmem:[%s8 + $0x200] sm:$0xff] %v7557
    %7720 = vst [vmem:[%s8 + $0x208] sm:$0xff] %v7558
    %7721 = vst [vmem:[%s8 + $0x210] sm:$0xff] %v7559
    %7722 = vst [vmem:[%s8 + $0x218] sm:$0xff] %v7560
    %7723 = vst [vmem:[%s8 + $0x220] sm:$0xff] %v7561
    %7724 = vst [vmem:[%s8 + $0x228] sm:$0xff] %v7562
    %7725 = vst [vmem:[%s8 + $0x230] sm:$0xff] %v7563
    %7726 = vst [vmem:[%s8 + $0x238] sm:$0xff] %v7564
    %7727 = vst [vmem:[%s8 + $0x240] sm:$0xff] %v7565
    %7728 = vst [vmem:[%s8 + $0x248] sm:$0xff] %v7566
    %7729 = vst [vmem:[%s8 + $0x250] sm:$0xff] %v7567
    %7730 = vst [vmem:[%s8 + $0x258] sm:$0xff] %v7568
    %7731 = vst [vmem:[%s8 + $0x260] sm:$0xff] %v7569
    %7732 = vst [vmem:[%s8 + $0x268] sm:$0xff] %v7570
    %7733 = vst [vmem:[%s8 + $0x270] sm:$0xff] %v7571
    %7734 = vst [vmem:[%s8 + $0x278] sm:$0xff] %v7572
    %7735 = vst [vmem:[%s8 + $0x280] sm:$0xff] %v7573
    %7736 = vst [vmem:[%s8 + $0x288] sm:$0xff] %v7574
    %7737 = vst [vmem:[%s8 + $0x290] sm:$0xff] %v7575
    %7738 = vst [vmem:[%s8 + $0x298] sm:$0xff] %v7576
    %7739 = vst [vmem:[%s8 + $0x2a0] sm:$0xff] %v7577
    %7740 = vst [vmem:[%s8 + $0x2a8] sm:$0xff] %v7578
    %7741 = vst [vmem:[%s8 + $0x2b0] sm:$0xff] %v7579
    %7742 = vst [vmem:[%s8 + $0x2b8] sm:$0xff] %v7580
    %7743 = vst [vmem:[%s8 + $0x2c0] sm:$0xff] %v7581
    %7744 = vst [vmem:[%s8 + $0x2c8] sm:$0xff] %v7582
    %7745 = vst [vmem:[%s8 + $0x2d0] sm:$0xff] %v7583
    %7746 = vst [vmem:[%s8 + $0x2d8] sm:$0xff] %v7584
    %7747 = vst [vmem:[%s8 + $0x2e0] sm:$0xff] %v7585
    %7748 = vst [vmem:[%s8 + $0x2e8] sm:$0xff] %v7586
    %7749 = vst [vmem:[%s8 + $0x2f0] sm:$0xff] %v7587
    %7750 = vst [vmem:[%s8 + $0x2f8] sm:$0xff] %v7588
    %7751 = vst [vmem:[%s8 + $0x300] sm:$0xff] %v7589
    %7752 = vst [vmem:[%s8 + $0x308] sm:$0xff] %v7590
    %7753 = vst [vmem:[%s8 + $0x310] sm:$0xff] %v7591
    %7754 = vst [vmem:[%s8 + $0x318] sm:$0xff] %v7592
    %7755 = vst [vmem:[%s8 + $0x320] sm:$0xff] %v7593
    %7756 = vst [vmem:[%s8 + $0x328] sm:$0xff] %v7594
    %7757 = vst [vmem:[%s8 + $0x330] sm:$0xff] %v7595
    %7758 = vst [vmem:[%s8 + $0x338] sm:$0xff] %v7596
    %7759 = vst [vmem:[%s8 + $0x340] sm:$0xff] %v7597
    %7760 = vst [vmem:[%s8 + $0x348] sm:$0xff] %v7598
    %7761 = vst [vmem:[%s8 + $0x350] sm:$0xff] %v7599
    %7762 = vst [vmem:[%s8 + $0x358] sm:$0xff] %v7600
    %7763 = vst [vmem:[%s8 + $0x360] sm:$0xff] %v7601
    %7764 = vst [vmem:[%s8 + $0x368] sm:$0xff] %v7602
    %7765 = vst [vmem:[%s8 + $0x370] sm:$0xff] %v7603
    %7766 = vst [vmem:[%s8 + $0x378] sm:$0xff] %v7604
    %7767 = vst [vmem:[%s8 + $0x380] sm:$0xff] %v7605
    %7768 = vst [vmem:[%s8 + $0x388] sm:$0xff] %v7606
    %7769 = vst [vmem:[%s8 + $0x390] sm:$0xff] %v7607
    %7770 = vst [vmem:[%s8 + $0x398] sm:$0xff] %v7608
    %7771 = vst [vmem:[%s8 + $0x3a0] sm:$0xff] %v7609
    %7772 = vst [vmem:[%s8 + $0x3a8] sm:$0xff] %v7610
    %7773 = vst [vmem:[%s8 + $0x3b0] sm:$0xff] %v7611
    %7774 = vst [vmem:[%s8 + $0x3b8] sm:$0xff] %v7612
    %7775 = vst [vmem:[%s8 + $0x3c0] sm:$0xff] %v7613
    %7776 = vst [vmem:[%s8 + $0x3c8] sm:$0xff] %v7614
    %7777 = vst [vmem:[%s8 + $0x3d0] sm:$0xff] %v7615
    %7778 = vst [vmem:[%s8 + $0x3d8] sm:$0xff] %v7616
    %7779 = vst [vmem:[%s8 + $0x3e0] sm:$0xff] %v7617
    %7780 = vst [vmem:[%s8 + $0x3e8] sm:$0xff] %v7618
    %7781 = vst [vmem:[%s8 + $0x3f0] sm:$0xff] %v7619
    %7782 = vst [vmem:[%s8 + $0x3f8] sm:$0xff] %v7620
    %7783 = vst [vmem:[%s8 + $0x400] sm:$0xff] %v7621
    %7784 = vst [vmem:[%s8 + $0x408] sm:$0xff] %v7622
    %7785 = vst [vmem:[%s8 + $0x410] sm:$0xff] %v7623
    %7786 = vst [vmem:[%s8 + $0x418] sm:$0xff] %v7624
    %7787 = vst [vmem:[%s8 + $0x420] sm:$0xff] %v7625
    %7788 = vst [vmem:[%s8 + $0x428] sm:$0xff] %v7626
    %7789 = vst [vmem:[%s8 + $0x430] sm:$0xff] %v7627
    %7790 = vst [vmem:[%s8 + $0x438] sm:$0xff] %v7628
    %7791 = vst [vmem:[%s8 + $0x440] sm:$0xff] %v7629
    %7792 = vst [vmem:[%s8 + $0x448] sm:$0xff] %v7630
    %7793 = vst [vmem:[%s8 + $0x450] sm:$0xff] %v7631
    %7794 = vst [vmem:[%s8 + $0x458] sm:$0xff] %v7632
    %7795 = vst [vmem:[%s8 + $0x460] sm:$0xff] %v7633
    %7796 = vst [vmem:[%s8 + $0x468] sm:$0xff] %v7634
    %7797 = vst [vmem:[%s8 + $0x470] sm:$0xff] %v7635
    %7798 = vst [vmem:[%s8 + $0x478] sm:$0xff] %v7636
    %7799 = vst [vmem:[%s8 + $0x480] sm:$0xff] %v7637
    %7800 = vst [vmem:[%s8 + $0x488] sm:$0xff] %v7638
    %7801 = vst [vmem:[%s8 + $0x490] sm:$0xff] %v7639
    %7802 = vst [vmem:[%s8 + $0x498] sm:$0xff] %v7640
    %7803 = vst [vmem:[%s8 + $0x4a0] sm:$0xff] %v7641
    %7804 = vst [vmem:[%s8 + $0x4a8] sm:$0xff] %v7642
    %7805 = vst [vmem:[%s8 + $0x4b0] sm:$0xff] %v7643
    %7806 = vst [vmem:[%s8 + $0x4b8] sm:$0xff] %v7644
    %7807 = vst [vmem:[%s8 + $0x4c0] sm:$0xff] %v7645
    %7808 = vst [vmem:[%s8 + $0x4c8] sm:$0xff] %v7646
    %7809 = vst [vmem:[%s8 + $0x4d0] sm:$0xff] %v7647
    %7810 = vst [vmem:[%s8 + $0x4d8] sm:$0xff] %v7648
    %7811 = vst [vmem:[%s8 + $0x4e0] sm:$0xff] %v7649
    %7812 = vst [vmem:[%s8 + $0x4e8] sm:$0xff] %v7650
    %7813 = vst [vmem:[%s8 + $0x4f0] sm:$0xff] %v7651
    %7814 = vst [vmem:[%s8 + $0x4f8] sm:$0xff] %v7652
    %7815 = vst [vmem:[%s8 + $0x500] sm:$0xff] %v7653
    %7816 = vst [vmem:[%s8 + $0x508] sm:$0xff] %v7654
    // Predicated region
    $region50: #{_lambda_.1} parent=1 // pred_check
      _
    $region51: #{_lambda_.1} parent=1 // pred_check_branch
      %7818 = sbr.rel (0) target = $region53
    $region52: #{_lambda_.1} parent=1 // pred_region
      _
    $region53: #{_lambda_.1} parent=1 // pred_fallthru
      _
    // Predicated region
    $region54: #{_lambda_.1} parent=1 // pred_check
      _
    $region55: #{_lambda_.1} parent=1 // pred_check_branch
      %7820 = sbr.rel (0) target = $region57
    $region56: #{_lambda_.1} parent=1 // pred_region
      _
    $region57: #{_lambda_.1} parent=1 // pred_fallthru
      _
    // Predicated region
    $region58: #{_lambda_.1} parent=1 // pred_check
      _
    $region59: #{_lambda_.1} parent=1 // pred_check_branch
      %7822 = sbr.rel (0) target = $region61
    $region60: #{_lambda_.1} parent=1 // pred_region
      _
    $region61: #{_lambda_.1} parent=1 // pred_fallthru
      _
    // Predicated region
    $region62: #{_lambda_.1} parent=1 // pred_check
      _
    $region63: #{_lambda_.1} parent=1 // pred_check_branch
      %7824 = sbr.rel (0) target = $region65
    $region64: #{_lambda_.1} parent=1 // pred_region
      _
    $region65: #{_lambda_.1} parent=1 // pred_fallthru
      _
    %7825 = vsyncpa [#allocation3], 1
    %7826 = vsyncpa [#allocation5], 1
    %7827 = vsyncpa [#allocation8], 1

</llo_original>
